<compile_context>
chip_gen: v7x
topology: tpu7x:2x2x1
jax: 0.10.0
libtpu: 0.0.40
codegen_flags: <defaults>
</compile_context>

<pallas_src>
import functools

import jax
import jax.numpy as jnp
from jax.experimental import pallas as pl
from jax.experimental.pallas import tpu as pltpu


# ----------------------------------------------------------------------------
# Pallas kernels
# ----------------------------------------------------------------------------
def _conv3x3_tap_kernel(*refs, taps, m_out, act, add_bias, use_mxu):
    """9-tap shift-and-accumulate 3x3 conv on a flattened padded/decimated input.

    x_ref: (1, L, Cin) bf16 -- per-sample prepared input (VMEM resident)
    w_ref: (9, Cin, TCout) bf16 (MXU path) or (9, 1, Cin) f32 (VPU path)
    b_ref: (1, TCout) f32 (optional)
    o_ref: (1, m_out, TCout)
    """
    if add_bias:
        x_ref, w_ref, b_ref, o_ref = refs
    else:
        x_ref, w_ref, o_ref = refs

    cout = o_ref.shape[-1]
    acc = jnp.zeros((m_out, cout), jnp.float32)
    for t, start in enumerate(taps):                       # static unrolled, 9 taps
        win = x_ref[0, start:start + m_out, :]             # (m_out, Cin) bf16
        if use_mxu:
            acc = acc + jnp.dot(win, w_ref[t],
                                preferred_element_type=jnp.float32)
        else:
            # tiny-Cout path (final 512->1 conv): VPU multiply + lane reduce
            wt = w_ref[t].astype(jnp.float32)               # (1, Cin)
            acc = acc + jnp.sum(win.astype(jnp.float32) * wt,
                                axis=1, keepdims=True)
    if add_bias:
        acc = acc + b_ref[...]                              # f32 epilogue
    if act == "leaky":
        acc = jnp.where(acc >= 0, acc, 0.2 * acc)
    o_ref[0] = acc.astype(o_ref.dtype)


def _instnorm_lrelu_kernel(x_ref, o_ref):
    """InstanceNorm2d(affine=False) + LeakyReLU(0.2), single-pass stats.

    Block (1, H*W, TC): channels lane-dense, reduce over H*W in sublanes.
    """
    x = x_ref[...].astype(jnp.float32)                      # (1, HW, TC)
    inv_hw = 1.0 / x.shape[1]
    mean = jnp.sum(x, axis=1, keepdims=True) * inv_hw
    msq = jnp.sum(x * x, axis=1, keepdims=True) * inv_hw
    var = jnp.maximum(msq - mean * mean, 0.0)               # biased var (PyTorch IN)
    y = (x - mean) * jax.lax.rsqrt(var + 1e-5)
    y = jnp.where(y >= 0, y, 0.2 * y)
    o_ref[...] = y.astype(o_ref.dtype)


# ----------------------------------------------------------------------------
# Conv wrapper: prep (1x pad / polyphase copy) + pallas_call + column extract
# ----------------------------------------------------------------------------
def conv2d_3x3(x_nhwc, w_pt, b, *, stride, act, add_bias, out_dtype):
    """3x3 conv, padding=1.  w_pt: PyTorch layout (Cout, Cin, 3, 3)."""
    n, h, w, cin = x_nhwc.shape
    cout = w_pt.shape[0]
    x = x_nhwc.astype(jnp.bfloat16)

    if stride == 1:
        ho, wo = h, w
        ws_row = w + 2
        # extra bottom row so the largest tap window stays in range
        xp = jnp.pad(x, ((0, 0), (1, 2), (1, 1), (0, 0)))   # (n, h+3, w+2, cin)
        xflat = xp.reshape(n, (h + 3) * ws_row, cin)
        taps = tuple(dh * ws_row + dw for dh in range(3) for dw in range(3))
    else:
        assert stride == 2 and h % 2 == 0 and w % 2 == 0
        ho, wo = h // 2, w // 2
        ws_row = wo + 1
        xp = jnp.pad(x, ((0, 0), (1, 1), (1, 1), (0, 0)))
        # 2x2 polyphase decimation: 1x copy, turns stride-2 taps into stride-1 reads
        planes = [xp[:, p::2, q::2, :] for p in range(2) for q in range(2)]
        xd = jnp.concatenate(planes, axis=1)                # (n, 4*(ho+1), wo+1, cin)
        xflat = xd.reshape(n, 4 * (ho + 1) * ws_row, cin)
        taps = tuple(
            (((dh % 2) * 2 + (dw % 2)) * (ho + 1) + dh // 2) * ws_row + dw // 2
            for dh in range(3) for dw in range(3))

    m_out = ho * ws_row                  # matmul M (includes <=2 wrap columns/row)
    l_flat = xflat.shape[1]
    use_mxu = cout > 1

    if use_mxu:
        w_op = jnp.transpose(w_pt, (2, 3, 1, 0)).reshape(9, cin, cout)
        w_op = w_op.astype(jnp.bfloat16)
        tcout = cout if cout <= 256 else 256
        w_spec = pl.BlockSpec((9, cin, tcout), lambda j, s: (0, 0, j))
    else:
        w_op = jnp.transpose(w_pt, (2, 3, 0, 1)).reshape(9, cout, cin)
        w_op = w_op.astype(jnp.float32)
        tcout = cout
        w_spec = pl.BlockSpec((9, cout, cin), lambda j, s: (0, 0, 0))
    ncout = cout // tcout

    in_specs = [
        pl.BlockSpec((1, l_flat, cin), lambda j, s: (s, 0, 0)),
        w_spec,
    ]
    operands = [xflat, w_op]
    if add_bias:
        in_specs.append(pl.BlockSpec((1, tcout), lambda j, s: (0, j)))
        operands.append(b.astype(jnp.float32).reshape(1, cout))

    kernel = functools.partial(_conv3x3_tap_kernel, taps=taps, m_out=m_out,
                               act=act, add_bias=add_bias, use_mxu=use_mxu)

    out_bytes = jnp.dtype(out_dtype).itemsize
    out_full = pl.pallas_call(
        kernel,
        out_shape=jax.ShapeDtypeStruct((n, m_out, cout), out_dtype),
        grid_spec=pltpu.PrefetchScalarGridSpec(
            num_scalar_prefetch=0,
            grid=(ncout, n),
            in_specs=in_specs,
            out_specs=pl.BlockSpec((1, m_out, tcout), lambda j, s: (s, 0, j)),
        ),
        compiler_params=pltpu.CompilerParams(
            dimension_semantics=("parallel", "parallel"),
            vmem_limit_bytes=32 * 1024 * 1024,
        ),
        cost_estimate=pl.CostEstimate(
            flops=2 * n * 9 * m_out * cin * cout,
            transcendentals=0,
            bytes_accessed=(n * l_flat * cin * 2
                            + int(w_op.size) * w_op.dtype.itemsize
                            + n * m_out * cout * out_bytes),
        ),
    )(*operands)

    # drop the <=2 wrap columns per row (layout plumbing, fuses with next prep)
    out = out_full.reshape(n, ho, ws_row, cout)[:, :, :wo, :]
    return out


def instance_norm_lrelu(x_nhwc, out_dtype=jnp.bfloat16):
    """InstanceNorm2d(affine=False) + LeakyReLU(0.2), NHWC in/out."""
    n, h, w, c = x_nhwc.shape
    hw = h * w
    x3 = x_nhwc.reshape(n, hw, c)                           # free reshape
    tc = 128 if c % 128 == 0 else c
    out = pl.pallas_call(
        _instnorm_lrelu_kernel,
        out_shape=jax.ShapeDtypeStruct((n, hw, c), out_dtype),
        grid_spec=pltpu.PrefetchScalarGridSpec(
            num_scalar_prefetch=0,
            grid=(n, c // tc),
            in_specs=[pl.BlockSpec((1, hw, tc), lambda s, j: (s, 0, j))],
            out_specs=pl.BlockSpec((1, hw, tc), lambda s, j: (s, 0, j)),
        ),
        compiler_params=pltpu.CompilerParams(
            dimension_semantics=("parallel", "parallel"),
            vmem_limit_bytes=32 * 1024 * 1024,
        ),
    )(x3)
    return out.reshape(n, h, w, c)


# ----------------------------------------------------------------------------
# Discriminator forward
# ----------------------------------------------------------------------------
# blocks: (out_filters, stride, normalize)
_BLOCK_CFG = [(64, 2, False), (128, 2, True), (256, 2, True), (512, 1, True)]


def init_params(key, in_channels):
    params = []
    cin = in_channels
    cfgs = _BLOCK_CFG + [(1, 1, False)]                     # final conv to 1 channel
    for i, (cout, _, _) in enumerate(cfgs):
        kw, kb = jax.random.split(jax.random.fold_in(key, i))
        fan_in = cin * 9
        bound = 1.0 / jnp.sqrt(fan_in)
        w = jax.random.uniform(kw, (cout, cin, 3, 3), jnp.float32, -bound, bound)
        b = jax.random.uniform(kb, (cout,), jnp.float32, -bound, bound)
        params.append((w, b))
        cin = cout
    return params


def discriminator_forward(img_nchw, params):
    x = jnp.transpose(img_nchw, (0, 2, 3, 1))               # NCHW -> NHWC
    for (w, b), (_, stride, normalize) in zip(params[:4], _BLOCK_CFG):
        if normalize:
            # bias cancels under InstanceNorm(affine=False) -> skip it entirely
            x = conv2d_3x3(x, w, b, stride=stride, act="none",
                           add_bias=False, out_dtype=jnp.bfloat16)
            x = instance_norm_lrelu(x, out_dtype=jnp.bfloat16)
        else:
            x = conv2d_3x3(x, w, b, stride=stride, act="leaky",
                           add_bias=True, out_dtype=jnp.bfloat16)
    w, b = params[4]
    x = conv2d_3x3(x, w, b, stride=1, act="none",
                   add_bias=True, out_dtype=jnp.float32)    # Conv2d(512 -> 1)
    return jnp.transpose(x, (0, 3, 1, 2))                   # NCHW: (N, 1, H/8, W/8)


if __name__ == "__main__":
    batch, channels, img_size = 2, 4, 16
    key = jax.random.PRNGKey(0)
    k_img, k_par = jax.random.split(key)

    img = jax.random.normal(k_img, (batch, channels, img_size, img_size), jnp.float32)
    params = init_params(k_par, channels)

    out = jax.jit(discriminator_forward)(img, params)
    out = jax.block_until_ready(out)

    expected = (batch, 1, img_size // 8, img_size // 8)
    assert out.shape == expected, (out.shape, expected)
    assert out.dtype == jnp.float32
    print("KERNEL_OK")
</pallas_src>

<mosaic_0001>
module attributes {stable_mosaic.version = 11 : i64} {
  func.func @_conv3x3_tap_kernel(%arg0: i32, %arg1: i32, %arg2: memref<1x324x4xbf16, #tpu.memory_space<vmem>>, %arg3: memref<9x4x64xbf16, #tpu.memory_space<vmem>>, %arg4: memref<1x64xf32, #tpu.memory_space<vmem>>, %arg5: memref<1x72x64xbf16, #tpu.memory_space<vmem>>) attributes {dimension_semantics = [#tpu.dimension_semantics<parallel>, #tpu.dimension_semantics<parallel>], iteration_bounds = array<i64: 1, 2>, scalar_prefetch = 0 : i64, scratch_operands = 0 : i64, tpu.core_type = #tpu.core_type<tc>, window_params = [{transform_indices = @transform_0, window_bounds = array<i64: 1, 324, 4>}, {transform_indices = @transform_1, window_bounds = array<i64: 9, 4, 64>}, {transform_indices = @transform_2, window_bounds = array<i64: 1, 64>}, {transform_indices = @transform_3, window_bounds = array<i64: 1, 72, 64>}]} {
    %cst = arith.constant 0.000000e+00 : f32
    %0 = vector.broadcast %cst : f32 to vector<72x64xf32>
    %c0 = arith.constant 0 : index
    %c0_0 = arith.constant 0 : index
    %c0_1 = arith.constant 0 : index
    %1 = vector.load %arg2[%c0, %c0_0, %c0_1] : memref<1x324x4xbf16, #tpu.memory_space<vmem>>, vector<1x72x4xbf16>
    %2 = vector.shape_cast %1 : vector<1x72x4xbf16> to vector<72x4xbf16>
    %c0_2 = arith.constant 0 : index
    %c0_3 = arith.constant 0 : index
    %c0_4 = arith.constant 0 : index
    %3 = vector.load %arg3[%c0_2, %c0_3, %c0_4] : memref<9x4x64xbf16, #tpu.memory_space<vmem>>, vector<1x4x64xbf16>
    %4 = vector.shape_cast %3 : vector<1x4x64xbf16> to vector<4x64xbf16>
    %cst_5 = arith.constant dense<0.000000e+00> : vector<72x64xf32>
    %5 = tpu.matmul %2, %4, %cst_5 {dimension_numbers = #tpu.dot_dimension_numbers<[1], [0], [0], [1], [0, 0, 1, 1], [], []>} : vector<72x4xbf16>, vector<4x64xbf16>, vector<72x64xf32> -> vector<72x64xf32>
    %6 = arith.addf %0, %5 : vector<72x64xf32>
    %c0_6 = arith.constant 0 : index
    %c81 = arith.constant 81 : index
    %c0_7 = arith.constant 0 : index
    %7 = vector.load %arg2[%c0_6, %c81, %c0_7] : memref<1x324x4xbf16, #tpu.memory_space<vmem>>, vector<1x72x4xbf16>
    %8 = vector.shape_cast %7 : vector<1x72x4xbf16> to vector<72x4xbf16>
    %c1 = arith.constant 1 : index
    %c0_8 = arith.constant 0 : index
    %c0_9 = arith.constant 0 : index
    %9 = vector.load %arg3[%c1, %c0_8, %c0_9] : memref<9x4x64xbf16, #tpu.memory_space<vmem>>, vector<1x4x64xbf16>
    %10 = vector.shape_cast %9 : vector<1x4x64xbf16> to vector<4x64xbf16>
    %cst_10 = arith.constant dense<0.000000e+00> : vector<72x64xf32>
    %11 = tpu.matmul %8, %10, %cst_10 {dimension_numbers = #tpu.dot_dimension_numbers<[1], [0], [0], [1], [0, 0, 1, 1], [], []>} : vector<72x4xbf16>, vector<4x64xbf16>, vector<72x64xf32> -> vector<72x64xf32>
    %12 = arith.addf %6, %11 : vector<72x64xf32>
    %c0_11 = arith.constant 0 : index
    %c1_12 = arith.constant 1 : index
    %c0_13 = arith.constant 0 : index
    %13 = vector.load %arg2[%c0_11, %c1_12, %c0_13] : memref<1x324x4xbf16, #tpu.memory_space<vmem>>, vector<1x72x4xbf16>
    %14 = vector.shape_cast %13 : vector<1x72x4xbf16> to vector<72x4xbf16>
    %c2 = arith.constant 2 : index
    %c0_14 = arith.constant 0 : index
    %c0_15 = arith.constant 0 : index
    %15 = vector.load %arg3[%c2, %c0_14, %c0_15] : memref<9x4x64xbf16, #tpu.memory_space<vmem>>, vector<1x4x64xbf16>
    %16 = vector.shape_cast %15 : vector<1x4x64xbf16> to vector<4x64xbf16>
    %cst_16 = arith.constant dense<0.000000e+00> : vector<72x64xf32>
    %17 = tpu.matmul %14, %16, %cst_16 {dimension_numbers = #tpu.dot_dimension_numbers<[1], [0], [0], [1], [0, 0, 1, 1], [], []>} : vector<72x4xbf16>, vector<4x64xbf16>, vector<72x64xf32> -> vector<72x64xf32>
    %18 = arith.addf %12, %17 : vector<72x64xf32>
    %c0_17 = arith.constant 0 : index
    %c162 = arith.constant 162 : index
    %c0_18 = arith.constant 0 : index
    %19 = vector.load %arg2[%c0_17, %c162, %c0_18] : memref<1x324x4xbf16, #tpu.memory_space<vmem>>, vector<1x72x4xbf16>
    %20 = vector.shape_cast %19 : vector<1x72x4xbf16> to vector<72x4xbf16>
    %c3 = arith.constant 3 : index
    %c0_19 = arith.constant 0 : index
    %c0_20 = arith.constant 0 : index
    %21 = vector.load %arg3[%c3, %c0_19, %c0_20] : memref<9x4x64xbf16, #tpu.memory_space<vmem>>, vector<1x4x64xbf16>
    %22 = vector.shape_cast %21 : vector<1x4x64xbf16> to vector<4x64xbf16>
    %cst_21 = arith.constant dense<0.000000e+00> : vector<72x64xf32>
    %23 = tpu.matmul %20, %22, %cst_21 {dimension_numbers = #tpu.dot_dimension_numbers<[1], [0], [0], [1], [0, 0, 1, 1], [], []>} : vector<72x4xbf16>, vector<4x64xbf16>, vector<72x64xf32> -> vector<72x64xf32>
    %24 = arith.addf %18, %23 : vector<72x64xf32>
    %c0_22 = arith.constant 0 : index
    %c243 = arith.constant 243 : index
    %c0_23 = arith.constant 0 : index
    %25 = vector.load %arg2[%c0_22, %c243, %c0_23] : memref<1x324x4xbf16, #tpu.memory_space<vmem>>, vector<1x72x4xbf16>
    %26 = vector.shape_cast %25 : vector<1x72x4xbf16> to vector<72x4xbf16>
    %c4 = arith.constant 4 : index
    %c0_24 = arith.constant 0 : index
    %c0_25 = arith.constant 0 : index
    %27 = vector.load %arg3[%c4, %c0_24, %c0_25] : memref<9x4x64xbf16, #tpu.memory_space<vmem>>, vector<1x4x64xbf16>
    %28 = vector.shape_cast %27 : vector<1x4x64xbf16> to vector<4x64xbf16>
    %cst_26 = arith.constant dense<0.000000e+00> : vector<72x64xf32>
    %29 = tpu.matmul %26, %28, %cst_26 {dimension_numbers = #tpu.dot_dimension_numbers<[1], [0], [0], [1], [0, 0, 1, 1], [], []>} : vector<72x4xbf16>, vector<4x64xbf16>, vector<72x64xf32> -> vector<72x64xf32>
    %30 = arith.addf %24, %29 : vector<72x64xf32>
    %c0_27 = arith.constant 0 : index
    %c163 = arith.constant 163 : index
    %c0_28 = arith.constant 0 : index
    %31 = vector.load %arg2[%c0_27, %c163, %c0_28] : memref<1x324x4xbf16, #tpu.memory_space<vmem>>, vector<1x72x4xbf16>
    %32 = vector.shape_cast %31 : vector<1x72x4xbf16> to vector<72x4xbf16>
    %c5 = arith.constant 5 : index
    %c0_29 = arith.constant 0 : index
    %c0_30 = arith.constant 0 : index
    %33 = vector.load %arg3[%c5, %c0_29, %c0_30] : memref<9x4x64xbf16, #tpu.memory_space<vmem>>, vector<1x4x64xbf16>
    %34 = vector.shape_cast %33 : vector<1x4x64xbf16> to vector<4x64xbf16>
    %cst_31 = arith.constant dense<0.000000e+00> : vector<72x64xf32>
    %35 = tpu.matmul %32, %34, %cst_31 {dimension_numbers = #tpu.dot_dimension_numbers<[1], [0], [0], [1], [0, 0, 1, 1], [], []>} : vector<72x4xbf16>, vector<4x64xbf16>, vector<72x64xf32> -> vector<72x64xf32>
    %36 = arith.addf %30, %35 : vector<72x64xf32>
    %c0_32 = arith.constant 0 : index
    %c9 = arith.constant 9 : index
    %c0_33 = arith.constant 0 : index
    %37 = vector.load %arg2[%c0_32, %c9, %c0_33] : memref<1x324x4xbf16, #tpu.memory_space<vmem>>, vector<1x72x4xbf16>
    %38 = vector.shape_cast %37 : vector<1x72x4xbf16> to vector<72x4xbf16>
    %c6 = arith.constant 6 : index
    %c0_34 = arith.constant 0 : index
    %c0_35 = arith.constant 0 : index
    %39 = vector.load %arg3[%c6, %c0_34, %c0_35] : memref<9x4x64xbf16, #tpu.memory_space<vmem>>, vector<1x4x64xbf16>
    %40 = vector.shape_cast %39 : vector<1x4x64xbf16> to vector<4x64xbf16>
    %cst_36 = arith.constant dense<0.000000e+00> : vector<72x64xf32>
    %41 = tpu.matmul %38, %40, %cst_36 {dimension_numbers = #tpu.dot_dimension_numbers<[1], [0], [0], [1], [0, 0, 1, 1], [], []>} : vector<72x4xbf16>, vector<4x64xbf16>, vector<72x64xf32> -> vector<72x64xf32>
    %42 = arith.addf %36, %41 : vector<72x64xf32>
    %c0_37 = arith.constant 0 : index
    %c90 = arith.constant 90 : index
    %c0_38 = arith.constant 0 : index
    %43 = vector.load %arg2[%c0_37, %c90, %c0_38] : memref<1x324x4xbf16, #tpu.memory_space<vmem>>, vector<1x72x4xbf16>
    %44 = vector.shape_cast %43 : vector<1x72x4xbf16> to vector<72x4xbf16>
    %c7 = arith.constant 7 : index
    %c0_39 = arith.constant 0 : index
    %c0_40 = arith.constant 0 : index
    %45 = vector.load %arg3[%c7, %c0_39, %c0_40] : memref<9x4x64xbf16, #tpu.memory_space<vmem>>, vector<1x4x64xbf16>
    %46 = vector.shape_cast %45 : vector<1x4x64xbf16> to vector<4x64xbf16>
    %cst_41 = arith.constant dense<0.000000e+00> : vector<72x64xf32>
    %47 = tpu.matmul %44, %46, %cst_41 {dimension_numbers = #tpu.dot_dimension_numbers<[1], [0], [0], [1], [0, 0, 1, 1], [], []>} : vector<72x4xbf16>, vector<4x64xbf16>, vector<72x64xf32> -> vector<72x64xf32>
    %48 = arith.addf %42, %47 : vector<72x64xf32>
    %c0_42 = arith.constant 0 : index
    %c10 = arith.constant 10 : index
    %c0_43 = arith.constant 0 : index
    %49 = vector.load %arg2[%c0_42, %c10, %c0_43] : memref<1x324x4xbf16, #tpu.memory_space<vmem>>, vector<1x72x4xbf16>
    %50 = vector.shape_cast %49 : vector<1x72x4xbf16> to vector<72x4xbf16>
    %c8 = arith.constant 8 : index
    %c0_44 = arith.constant 0 : index
    %c0_45 = arith.constant 0 : index
    %51 = vector.load %arg3[%c8, %c0_44, %c0_45] : memref<9x4x64xbf16, #tpu.memory_space<vmem>>, vector<1x4x64xbf16>
    %52 = vector.shape_cast %51 : vector<1x4x64xbf16> to vector<4x64xbf16>
    %cst_46 = arith.constant dense<0.000000e+00> : vector<72x64xf32>
    %53 = tpu.matmul %50, %52, %cst_46 {dimension_numbers = #tpu.dot_dimension_numbers<[1], [0], [0], [1], [0, 0, 1, 1], [], []>} : vector<72x4xbf16>, vector<4x64xbf16>, vector<72x64xf32> -> vector<72x64xf32>
    %54 = arith.addf %48, %53 : vector<72x64xf32>
    %c0_47 = arith.constant 0 : index
    %c0_48 = arith.constant 0 : index
    %55 = vector.load %arg4[%c0_47, %c0_48] : memref<1x64xf32, #tpu.memory_space<vmem>>, vector<1x64xf32>
    %56 = vector.broadcast %55 : vector<1x64xf32> to vector<72x64xf32>
    %57 = arith.addf %54, %56 : vector<72x64xf32>
    %cst_49 = arith.constant 0.000000e+00 : f32
    %58 = vector.broadcast %cst_49 : f32 to vector<72x64xf32>
    %59 = arith.cmpf oge, %57, %58 : vector<72x64xf32>
    %cst_50 = arith.constant 2.000000e-01 : f32
    %60 = vector.broadcast %cst_50 : f32 to vector<72x64xf32>
    %61 = arith.mulf %60, %57 : vector<72x64xf32>
    %62 = arith.select %59, %57, %61 : vector<72x64xi1>, vector<72x64xf32>
    %63 = arith.truncf %62 : vector<72x64xf32> to vector<72x64xbf16>
    %c0_51 = arith.constant 0 : index
    %c0_52 = arith.constant 0 : index
    %c0_53 = arith.constant 0 : index
    %64 = vector.load %arg5[%c0_51, %c0_52, %c0_53] : memref<1x72x64xbf16, #tpu.memory_space<vmem>>, vector<1x72x64xbf16>
    %65 = vector.shape_cast %64 : vector<1x72x64xbf16> to vector<72x64xbf16>
    %66 = vector.shape_cast %63 : vector<72x64xbf16> to vector<1x72x64xbf16>
    tpu.vector_store %arg5[%c0_51, %c0_52, %c0_53], %66 {strides = array<i32>} : memref<1x72x64xbf16, #tpu.memory_space<vmem>>, vector<1x72x64xbf16>,
    return
  }
  func.func @transform_0(%arg0: i32, %arg1: i32) -> (i32, i32, i32) {
    %c0_i32 = arith.constant 0 : i32
    %c0_i32_0 = arith.constant 0 : i32
    %c0_i32_1 = arith.constant 0 : i32
    return %arg1, %c0_i32, %c0_i32_0 : i32, i32, i32
  }
  func.func @transform_1(%arg0: i32, %arg1: i32) -> (i32, i32, i32) {
    %c0_i32 = arith.constant 0 : i32
    %c0_i32_0 = arith.constant 0 : i32
    %c0_i32_1 = arith.constant 0 : i32
    return %c0_i32, %c0_i32_0, %arg0 : i32, i32, i32
  }
  func.func @transform_2(%arg0: i32, %arg1: i32) -> (i32, i32) {
    %c0_i32 = arith.constant 0 : i32
    %c0_i32_0 = arith.constant 0 : i32
    return %c0_i32, %arg0 : i32, i32
  }
  func.func @transform_3(%arg0: i32, %arg1: i32) -> (i32, i32, i32) {
    %c0_i32 = arith.constant 0 : i32
    %c0_i32_0 = arith.constant 0 : i32
    return %arg1, %c0_i32, %arg0 : i32, i32, i32
  }
}

module attributes {stable_mosaic.version = 11 : i64} {
  func.func @_conv3x3_tap_kernel(%arg0: i32, %arg1: i32, %arg2: memref<1x100x64xbf16, #tpu.memory_space<vmem>>, %arg3: memref<9x64x128xbf16, #tpu.memory_space<vmem>>, %arg4: memref<1x20x128xbf16, #tpu.memory_space<vmem>>) attributes {dimension_semantics = [#tpu.dimension_semantics<parallel>, #tpu.dimension_semantics<parallel>], iteration_bounds = array<i64: 1, 2>, scalar_prefetch = 0 : i64, scratch_operands = 0 : i64, tpu.core_type = #tpu.core_type<tc>, window_params = [{transform_indices = @transform_0, window_bounds = array<i64: 1, 100, 64>}, {transform_indices = @transform_1, window_bounds = array<i64: 9, 64, 128>}, {transform_indices = @transform_2, window_bounds = array<i64: 1, 20, 128>}]} {
    %cst = arith.constant 0.000000e+00 : f32
    %0 = vector.broadcast %cst : f32 to vector<20x128xf32>
    %c0 = arith.constant 0 : index
    %c0_0 = arith.constant 0 : index
    %c0_1 = arith.constant 0 : index
    %1 = vector.load %arg2[%c0, %c0_0, %c0_1] : memref<1x100x64xbf16, #tpu.memory_space<vmem>>, vector<1x20x64xbf16>
    %2 = vector.shape_cast %1 : vector<1x20x64xbf16> to vector<20x64xbf16>
    %c0_2 = arith.constant 0 : index
    %c0_3 = arith.constant 0 : index
    %c0_4 = arith.constant 0 : index
    %3 = vector.load %arg3[%c0_2, %c0_3, %c0_4] : memref<9x64x128xbf16, #tpu.memory_space<vmem>>, vector<1x64x128xbf16>
    %4 = vector.shape_cast %3 : vector<1x64x128xbf16> to vector<64x128xbf16>
    %cst_5 = arith.constant dense<0.000000e+00> : vector<20x128xf32>
    %5 = tpu.matmul %2, %4, %cst_5 {dimension_numbers = #tpu.dot_dimension_numbers<[1], [0], [0], [1], [0, 0, 1, 1], [], []>} : vector<20x64xbf16>, vector<64x128xbf16>, vector<20x128xf32> -> vector<20x128xf32>
    %6 = arith.addf %0, %5 : vector<20x128xf32>
    %c0_6 = arith.constant 0 : index
    %c25 = arith.constant 25 : index
    %c0_7 = arith.constant 0 : index
    %7 = vector.load %arg2[%c0_6, %c25, %c0_7] : memref<1x100x64xbf16, #tpu.memory_space<vmem>>, vector<1x20x64xbf16>
    %8 = vector.shape_cast %7 : vector<1x20x64xbf16> to vector<20x64xbf16>
    %c1 = arith.constant 1 : index
    %c0_8 = arith.constant 0 : index
    %c0_9 = arith.constant 0 : index
    %9 = vector.load %arg3[%c1, %c0_8, %c0_9] : memref<9x64x128xbf16, #tpu.memory_space<vmem>>, vector<1x64x128xbf16>
    %10 = vector.shape_cast %9 : vector<1x64x128xbf16> to vector<64x128xbf16>
    %cst_10 = arith.constant dense<0.000000e+00> : vector<20x128xf32>
    %11 = tpu.matmul %8, %10, %cst_10 {dimension_numbers = #tpu.dot_dimension_numbers<[1], [0], [0], [1], [0, 0, 1, 1], [], []>} : vector<20x64xbf16>, vector<64x128xbf16>, vector<20x128xf32> -> vector<20x128xf32>
    %12 = arith.addf %6, %11 : vector<20x128xf32>
    %c0_11 = arith.constant 0 : index
    %c1_12 = arith.constant 1 : index
    %c0_13 = arith.constant 0 : index
    %13 = vector.load %arg2[%c0_11, %c1_12, %c0_13] : memref<1x100x64xbf16, #tpu.memory_space<vmem>>, vector<1x20x64xbf16>
    %14 = vector.shape_cast %13 : vector<1x20x64xbf16> to vector<20x64xbf16>
    %c2 = arith.constant 2 : index
    %c0_14 = arith.constant 0 : index
    %c0_15 = arith.constant 0 : index
    %15 = vector.load %arg3[%c2, %c0_14, %c0_15] : memref<9x64x128xbf16, #tpu.memory_space<vmem>>, vector<1x64x128xbf16>
    %16 = vector.shape_cast %15 : vector<1x64x128xbf16> to vector<64x128xbf16>
    %cst_16 = arith.constant dense<0.000000e+00> : vector<20x128xf32>
    %17 = tpu.matmul %14, %16, %cst_16 {dimension_numbers = #tpu.dot_dimension_numbers<[1], [0], [0], [1], [0, 0, 1, 1], [], []>} : vector<20x64xbf16>, vector<64x128xbf16>, vector<20x128xf32> -> vector<20x128xf32>
    %18 = arith.addf %12, %17 : vector<20x128xf32>
    %c0_17 = arith.constant 0 : index
    %c50 = arith.constant 50 : index
    %c0_18 = arith.constant 0 : index
    %19 = vector.load %arg2[%c0_17, %c50, %c0_18] : memref<1x100x64xbf16, #tpu.memory_space<vmem>>, vector<1x20x64xbf16>
    %20 = vector.shape_cast %19 : vector<1x20x64xbf16> to vector<20x64xbf16>
    %c3 = arith.constant 3 : index
    %c0_19 = arith.constant 0 : index
    %c0_20 = arith.constant 0 : index
    %21 = vector.load %arg3[%c3, %c0_19, %c0_20] : memref<9x64x128xbf16, #tpu.memory_space<vmem>>, vector<1x64x128xbf16>
    %22 = vector.shape_cast %21 : vector<1x64x128xbf16> to vector<64x128xbf16>
    %cst_21 = arith.constant dense<0.000000e+00> : vector<20x128xf32>
    %23 = tpu.matmul %20, %22, %cst_21 {dimension_numbers = #tpu.dot_dimension_numbers<[1], [0], [0], [1], [0, 0, 1, 1], [], []>} : vector<20x64xbf16>, vector<64x128xbf16>, vector<20x128xf32> -> vector<20x128xf32>
    %24 = arith.addf %18, %23 : vector<20x128xf32>
    %c0_22 = arith.constant 0 : index
    %c75 = arith.constant 75 : index
    %c0_23 = arith.constant 0 : index
    %25 = vector.load %arg2[%c0_22, %c75, %c0_23] : memref<1x100x64xbf16, #tpu.memory_space<vmem>>, vector<1x20x64xbf16>
    %26 = vector.shape_cast %25 : vector<1x20x64xbf16> to vector<20x64xbf16>
    %c4 = arith.constant 4 : index
    %c0_24 = arith.constant 0 : index
    %c0_25 = arith.constant 0 : index
    %27 = vector.load %arg3[%c4, %c0_24, %c0_25] : memref<9x64x128xbf16, #tpu.memory_space<vmem>>, vector<1x64x128xbf16>
    %28 = vector.shape_cast %27 : vector<1x64x128xbf16> to vector<64x128xbf16>
    %cst_26 = arith.constant dense<0.000000e+00> : vector<20x128xf32>
    %29 = tpu.matmul %26, %28, %cst_26 {dimension_numbers = #tpu.dot_dimension_numbers<[1], [0], [0], [1], [0, 0, 1, 1], [], []>} : vector<20x64xbf16>, vector<64x128xbf16>, vector<20x128xf32> -> vector<20x128xf32>
    %30 = arith.addf %24, %29 : vector<20x128xf32>
    %c0_27 = arith.constant 0 : index
    %c51 = arith.constant 51 : index
    %c0_28 = arith.constant 0 : index
    %31 = vector.load %arg2[%c0_27, %c51, %c0_28] : memref<1x100x64xbf16, #tpu.memory_space<vmem>>, vector<1x20x64xbf16>
    %32 = vector.shape_cast %31 : vector<1x20x64xbf16> to vector<20x64xbf16>
    %c5 = arith.constant 5 : index
    %c0_29 = arith.constant 0 : index
    %c0_30 = arith.constant 0 : index
    %33 = vector.load %arg3[%c5, %c0_29, %c0_30] : memref<9x64x128xbf16, #tpu.memory_space<vmem>>, vector<1x64x128xbf16>
    %34 = vector.shape_cast %33 : vector<1x64x128xbf16> to vector<64x128xbf16>
    %cst_31 = arith.constant dense<0.000000e+00> : vector<20x128xf32>
    %35 = tpu.matmul %32, %34, %cst_31 {dimension_numbers = #tpu.dot_dimension_numbers<[1], [0], [0], [1], [0, 0, 1, 1], [], []>} : vector<20x64xbf16>, vector<64x128xbf16>, vector<20x128xf32> -> vector<20x128xf32>
    %36 = arith.addf %30, %35 : vector<20x128xf32>
    %c0_32 = arith.constant 0 : index
    %c5_33 = arith.constant 5 : index
    %c0_34 = arith.constant 0 : index
    %37 = vector.load %arg2[%c0_32, %c5_33, %c0_34] : memref<1x100x64xbf16, #tpu.memory_space<vmem>>, vector<1x20x64xbf16>
    %38 = vector.shape_cast %37 : vector<1x20x64xbf16> to vector<20x64xbf16>
    %c6 = arith.constant 6 : index
    %c0_35 = arith.constant 0 : index
    %c0_36 = arith.constant 0 : index
    %39 = vector.load %arg3[%c6, %c0_35, %c0_36] : memref<9x64x128xbf16, #tpu.memory_space<vmem>>, vector<1x64x128xbf16>
    %40 = vector.shape_cast %39 : vector<1x64x128xbf16> to vector<64x128xbf16>
    %cst_37 = arith.constant dense<0.000000e+00> : vector<20x128xf32>
    %41 = tpu.matmul %38, %40, %cst_37 {dimension_numbers = #tpu.dot_dimension_numbers<[1], [0], [0], [1], [0, 0, 1, 1], [], []>} : vector<20x64xbf16>, vector<64x128xbf16>, vector<20x128xf32> -> vector<20x128xf32>
    %42 = arith.addf %36, %41 : vector<20x128xf32>
    %c0_38 = arith.constant 0 : index
    %c30 = arith.constant 30 : index
    %c0_39 = arith.constant 0 : index
    %43 = vector.load %arg2[%c0_38, %c30, %c0_39] : memref<1x100x64xbf16, #tpu.memory_space<vmem>>, vector<1x20x64xbf16>
    %44 = vector.shape_cast %43 : vector<1x20x64xbf16> to vector<20x64xbf16>
    %c7 = arith.constant 7 : index
    %c0_40 = arith.constant 0 : index
    %c0_41 = arith.constant 0 : index
    %45 = vector.load %arg3[%c7, %c0_40, %c0_41] : memref<9x64x128xbf16, #tpu.memory_space<vmem>>, vector<1x64x128xbf16>
    %46 = vector.shape_cast %45 : vector<1x64x128xbf16> to vector<64x128xbf16>
    %cst_42 = arith.constant dense<0.000000e+00> : vector<20x128xf32>
    %47 = tpu.matmul %44, %46, %cst_42 {dimension_numbers = #tpu.dot_dimension_numbers<[1], [0], [0], [1], [0, 0, 1, 1], [], []>} : vector<20x64xbf16>, vector<64x128xbf16>, vector<20x128xf32> -> vector<20x128xf32>
    %48 = arith.addf %42, %47 : vector<20x128xf32>
    %c0_43 = arith.constant 0 : index
    %c6_44 = arith.constant 6 : index
    %c0_45 = arith.constant 0 : index
    %49 = vector.load %arg2[%c0_43, %c6_44, %c0_45] : memref<1x100x64xbf16, #tpu.memory_space<vmem>>, vector<1x20x64xbf16>
    %50 = vector.shape_cast %49 : vector<1x20x64xbf16> to vector<20x64xbf16>
    %c8 = arith.constant 8 : index
    %c0_46 = arith.constant 0 : index
    %c0_47 = arith.constant 0 : index
    %51 = vector.load %arg3[%c8, %c0_46, %c0_47] : memref<9x64x128xbf16, #tpu.memory_space<vmem>>, vector<1x64x128xbf16>
    %52 = vector.shape_cast %51 : vector<1x64x128xbf16> to vector<64x128xbf16>
    %cst_48 = arith.constant dense<0.000000e+00> : vector<20x128xf32>
    %53 = tpu.matmul %50, %52, %cst_48 {dimension_numbers = #tpu.dot_dimension_numbers<[1], [0], [0], [1], [0, 0, 1, 1], [], []>} : vector<20x64xbf16>, vector<64x128xbf16>, vector<20x128xf32> -> vector<20x128xf32>
    %54 = arith.addf %48, %53 : vector<20x128xf32>
    %55 = arith.truncf %54 : vector<20x128xf32> to vector<20x128xbf16>
    %c0_49 = arith.constant 0 : index
    %c0_50 = arith.constant 0 : index
    %c0_51 = arith.constant 0 : index
    %56 = vector.load %arg4[%c0_49, %c0_50, %c0_51] : memref<1x20x128xbf16, #tpu.memory_space<vmem>>, vector<1x20x128xbf16>
    %57 = vector.shape_cast %56 : vector<1x20x128xbf16> to vector<20x128xbf16>
    %58 = vector.shape_cast %55 : vector<20x128xbf16> to vector<1x20x128xbf16>
    tpu.vector_store %arg4[%c0_49, %c0_50, %c0_51], %58 {strides = array<i32>} : memref<1x20x128xbf16, #tpu.memory_space<vmem>>, vector<1x20x128xbf16>,
    return
  }
  func.func @transform_0(%arg0: i32, %arg1: i32) -> (i32, i32, i32) {
    %c0_i32 = arith.constant 0 : i32
    %c0_i32_0 = arith.constant 0 : i32
    %c0_i32_1 = arith.constant 0 : i32
    return %arg1, %c0_i32, %c0_i32_0 : i32, i32, i32
  }
  func.func @transform_1(%arg0: i32, %arg1: i32) -> (i32, i32, i32) {
    %c0_i32 = arith.constant 0 : i32
    %c0_i32_0 = arith.constant 0 : i32
    %c0_i32_1 = arith.constant 0 : i32
    return %c0_i32, %c0_i32_0, %arg0 : i32, i32, i32
  }
  func.func @transform_2(%arg0: i32, %arg1: i32) -> (i32, i32, i32) {
    %c0_i32 = arith.constant 0 : i32
    %c0_i32_0 = arith.constant 0 : i32
    return %arg1, %c0_i32, %arg0 : i32, i32, i32
  }
}

module attributes {stable_mosaic.version = 11 : i64} {
  func.func @_instnorm_lrelu_kernel(%arg0: i32, %arg1: i32, %arg2: memref<1x16x128xbf16, #tpu.memory_space<vmem>>, %arg3: memref<1x16x128xbf16, #tpu.memory_space<vmem>>) attributes {dimension_semantics = [#tpu.dimension_semantics<parallel>, #tpu.dimension_semantics<parallel>], iteration_bounds = array<i64: 2, 1>, scalar_prefetch = 0 : i64, scratch_operands = 0 : i64, tpu.core_type = #tpu.core_type<tc>, window_params = [{transform_indices = @transform_0, window_bounds = array<i64: 1, 16, 128>}, {transform_indices = @transform_1, window_bounds = array<i64: 1, 16, 128>}]} {
    %c0 = arith.constant 0 : index
    %c0_0 = arith.constant 0 : index
    %c0_1 = arith.constant 0 : index
    %0 = vector.load %arg2[%c0, %c0_0, %c0_1] : memref<1x16x128xbf16, #tpu.memory_space<vmem>>, vector<1x16x128xbf16>
    %1 = arith.extf %0 : vector<1x16x128xbf16> to vector<1x16x128xf32>
    %cst = arith.constant dense<0.000000e+00> : vector<1x128xf32>
    %2 = vector.multi_reduction <add>, %1, %cst [1] : vector<1x16x128xf32> to vector<1x128xf32>
    %3 = vector.shape_cast %2 : vector<1x128xf32> to vector<1x1x128xf32>
    %cst_2 = arith.constant 6.250000e-02 : f32
    %4 = vector.broadcast %cst_2 : f32 to vector<1x1x128xf32>
    %5 = arith.mulf %3, %4 : vector<1x1x128xf32>
    %6 = arith.mulf %1, %1 : vector<1x16x128xf32>
    %cst_3 = arith.constant dense<0.000000e+00> : vector<1x128xf32>
    %7 = vector.multi_reduction <add>, %6, %cst_3 [1] : vector<1x16x128xf32> to vector<1x128xf32>
    %8 = vector.shape_cast %7 : vector<1x128xf32> to vector<1x1x128xf32>
    %cst_4 = arith.constant 6.250000e-02 : f32
    %9 = vector.broadcast %cst_4 : f32 to vector<1x1x128xf32>
    %10 = arith.mulf %8, %9 : vector<1x1x128xf32>
    %11 = arith.mulf %5, %5 : vector<1x1x128xf32>
    %12 = arith.subf %10, %11 : vector<1x1x128xf32>
    %cst_5 = arith.constant 0.000000e+00 : f32
    %13 = vector.broadcast %cst_5 : f32 to vector<1x1x128xf32>
    %14 = arith.maximumf %12, %13 : vector<1x1x128xf32>
    %15 = vector.broadcast %5 : vector<1x1x128xf32> to vector<1x16x128xf32>
    %16 = arith.subf %1, %15 : vector<1x16x128xf32>
    %cst_6 = arith.constant 9.99999974E-6 : f32
    %17 = vector.broadcast %cst_6 : f32 to vector<1x1x128xf32>
    %18 = arith.addf %14, %17 : vector<1x1x128xf32>
    %19 = math.rsqrt %18 : vector<1x1x128xf32>
    %20 = vector.broadcast %19 : vector<1x1x128xf32> to vector<1x16x128xf32>
    %21 = arith.mulf %16, %20 : vector<1x16x128xf32>
    %cst_7 = arith.constant 0.000000e+00 : f32
    %22 = vector.broadcast %cst_7 : f32 to vector<1x16x128xf32>
    %23 = arith.cmpf oge, %21, %22 : vector<1x16x128xf32>
    %cst_8 = arith.constant 2.000000e-01 : f32
    %24 = vector.broadcast %cst_8 : f32 to vector<1x16x128xf32>
    %25 = arith.mulf %24, %21 : vector<1x16x128xf32>
    %26 = arith.select %23, %21, %25 : vector<1x16x128xi1>, vector<1x16x128xf32>
    %27 = arith.truncf %26 : vector<1x16x128xf32> to vector<1x16x128xbf16>
    %c0_9 = arith.constant 0 : index
    %c0_10 = arith.constant 0 : index
    %c0_11 = arith.constant 0 : index
    %28 = vector.load %arg3[%c0_9, %c0_10, %c0_11] : memref<1x16x128xbf16, #tpu.memory_space<vmem>>, vector<1x16x128xbf16>
    tpu.vector_store %arg3[%c0_9, %c0_10, %c0_11], %27 {strides = array<i32>} : memref<1x16x128xbf16, #tpu.memory_space<vmem>>, vector<1x16x128xbf16>,
    return
  }
  func.func @transform_0(%arg0: i32, %arg1: i32) -> (i32, i32, i32) {
    %c0_i32 = arith.constant 0 : i32
    %c0_i32_0 = arith.constant 0 : i32
    return %arg0, %c0_i32, %arg1 : i32, i32, i32
  }
  func.func @transform_1(%arg0: i32, %arg1: i32) -> (i32, i32, i32) {
    %c0_i32 = arith.constant 0 : i32
    %c0_i32_0 = arith.constant 0 : i32
    return %arg0, %c0_i32, %arg1 : i32, i32, i32
  }
}

module attributes {stable_mosaic.version = 11 : i64} {
  func.func @_conv3x3_tap_kernel(%arg0: i32, %arg1: i32, %arg2: memref<1x36x128xbf16, #tpu.memory_space<vmem>>, %arg3: memref<9x128x256xbf16, #tpu.memory_space<vmem>>, %arg4: memref<1x6x256xbf16, #tpu.memory_space<vmem>>) attributes {dimension_semantics = [#tpu.dimension_semantics<parallel>, #tpu.dimension_semantics<parallel>], iteration_bounds = array<i64: 1, 2>, scalar_prefetch = 0 : i64, scratch_operands = 0 : i64, tpu.core_type = #tpu.core_type<tc>, window_params = [{transform_indices = @transform_0, window_bounds = array<i64: 1, 36, 128>}, {transform_indices = @transform_1, window_bounds = array<i64: 9, 128, 256>}, {transform_indices = @transform_2, window_bounds = array<i64: 1, 6, 256>}]} {
    %cst = arith.constant 0.000000e+00 : f32
    %0 = vector.broadcast %cst : f32 to vector<6x256xf32>
    %c0 = arith.constant 0 : index
    %c0_0 = arith.constant 0 : index
    %c0_1 = arith.constant 0 : index
    %1 = vector.load %arg2[%c0, %c0_0, %c0_1] : memref<1x36x128xbf16, #tpu.memory_space<vmem>>, vector<1x6x128xbf16>
    %2 = vector.shape_cast %1 : vector<1x6x128xbf16> to vector<6x128xbf16>
    %c0_2 = arith.constant 0 : index
    %c0_3 = arith.constant 0 : index
    %c0_4 = arith.constant 0 : index
    %3 = vector.load %arg3[%c0_2, %c0_3, %c0_4] : memref<9x128x256xbf16, #tpu.memory_space<vmem>>, vector<1x128x256xbf16>
    %4 = vector.shape_cast %3 : vector<1x128x256xbf16> to vector<128x256xbf16>
    %cst_5 = arith.constant dense<0.000000e+00> : vector<6x256xf32>
    %5 = tpu.matmul %2, %4, %cst_5 {dimension_numbers = #tpu.dot_dimension_numbers<[1], [0], [0], [1], [0, 0, 1, 1], [], []>} : vector<6x128xbf16>, vector<128x256xbf16>, vector<6x256xf32> -> vector<6x256xf32>
    %6 = arith.addf %0, %5 : vector<6x256xf32>
    %c0_6 = arith.constant 0 : index
    %c9 = arith.constant 9 : index
    %c0_7 = arith.constant 0 : index
    %7 = vector.load %arg2[%c0_6, %c9, %c0_7] : memref<1x36x128xbf16, #tpu.memory_space<vmem>>, vector<1x6x128xbf16>
    %8 = vector.shape_cast %7 : vector<1x6x128xbf16> to vector<6x128xbf16>
    %c1 = arith.constant 1 : index
    %c0_8 = arith.constant 0 : index
    %c0_9 = arith.constant 0 : index
    %9 = vector.load %arg3[%c1, %c0_8, %c0_9] : memref<9x128x256xbf16, #tpu.memory_space<vmem>>, vector<1x128x256xbf16>
    %10 = vector.shape_cast %9 : vector<1x128x256xbf16> to vector<128x256xbf16>
    %cst_10 = arith.constant dense<0.000000e+00> : vector<6x256xf32>
    %11 = tpu.matmul %8, %10, %cst_10 {dimension_numbers = #tpu.dot_dimension_numbers<[1], [0], [0], [1], [0, 0, 1, 1], [], []>} : vector<6x128xbf16>, vector<128x256xbf16>, vector<6x256xf32> -> vector<6x256xf32>
    %12 = arith.addf %6, %11 : vector<6x256xf32>
    %c0_11 = arith.constant 0 : index
    %c1_12 = arith.constant 1 : index
    %c0_13 = arith.constant 0 : index
    %13 = vector.load %arg2[%c0_11, %c1_12, %c0_13] : memref<1x36x128xbf16, #tpu.memory_space<vmem>>, vector<1x6x128xbf16>
    %14 = vector.shape_cast %13 : vector<1x6x128xbf16> to vector<6x128xbf16>
    %c2 = arith.constant 2 : index
    %c0_14 = arith.constant 0 : index
    %c0_15 = arith.constant 0 : index
    %15 = vector.load %arg3[%c2, %c0_14, %c0_15] : memref<9x128x256xbf16, #tpu.memory_space<vmem>>, vector<1x128x256xbf16>
    %16 = vector.shape_cast %15 : vector<1x128x256xbf16> to vector<128x256xbf16>
    %cst_16 = arith.constant dense<0.000000e+00> : vector<6x256xf32>
    %17 = tpu.matmul %14, %16, %cst_16 {dimension_numbers = #tpu.dot_dimension_numbers<[1], [0], [0], [1], [0, 0, 1, 1], [], []>} : vector<6x128xbf16>, vector<128x256xbf16>, vector<6x256xf32> -> vector<6x256xf32>
    %18 = arith.addf %12, %17 : vector<6x256xf32>
    %c0_17 = arith.constant 0 : index
    %c18 = arith.constant 18 : index
    %c0_18 = arith.constant 0 : index
    %19 = vector.load %arg2[%c0_17, %c18, %c0_18] : memref<1x36x128xbf16, #tpu.memory_space<vmem>>, vector<1x6x128xbf16>
    %20 = vector.shape_cast %19 : vector<1x6x128xbf16> to vector<6x128xbf16>
    %c3 = arith.constant 3 : index
    %c0_19 = arith.constant 0 : index
    %c0_20 = arith.constant 0 : index
    %21 = vector.load %arg3[%c3, %c0_19, %c0_20] : memref<9x128x256xbf16, #tpu.memory_space<vmem>>, vector<1x128x256xbf16>
    %22 = vector.shape_cast %21 : vector<1x128x256xbf16> to vector<128x256xbf16>
    %cst_21 = arith.constant dense<0.000000e+00> : vector<6x256xf32>
    %23 = tpu.matmul %20, %22, %cst_21 {dimension_numbers = #tpu.dot_dimension_numbers<[1], [0], [0], [1], [0, 0, 1, 1], [], []>} : vector<6x128xbf16>, vector<128x256xbf16>, vector<6x256xf32> -> vector<6x256xf32>
    %24 = arith.addf %18, %23 : vector<6x256xf32>
    %c0_22 = arith.constant 0 : index
    %c27 = arith.constant 27 : index
    %c0_23 = arith.constant 0 : index
    %25 = vector.load %arg2[%c0_22, %c27, %c0_23] : memref<1x36x128xbf16, #tpu.memory_space<vmem>>, vector<1x6x128xbf16>
    %26 = vector.shape_cast %25 : vector<1x6x128xbf16> to vector<6x128xbf16>
    %c4 = arith.constant 4 : index
    %c0_24 = arith.constant 0 : index
    %c0_25 = arith.constant 0 : index
    %27 = vector.load %arg3[%c4, %c0_24, %c0_25] : memref<9x128x256xbf16, #tpu.memory_space<vmem>>, vector<1x128x256xbf16>
    %28 = vector.shape_cast %27 : vector<1x128x256xbf16> to vector<128x256xbf16>
    %cst_26 = arith.constant dense<0.000000e+00> : vector<6x256xf32>
    %29 = tpu.matmul %26, %28, %cst_26 {dimension_numbers = #tpu.dot_dimension_numbers<[1], [0], [0], [1], [0, 0, 1, 1], [], []>} : vector<6x128xbf16>, vector<128x256xbf16>, vector<6x256xf32> -> vector<6x256xf32>
    %30 = arith.addf %24, %29 : vector<6x256xf32>
    %c0_27 = arith.constant 0 : index
    %c19 = arith.constant 19 : index
    %c0_28 = arith.constant 0 : index
    %31 = vector.load %arg2[%c0_27, %c19, %c0_28] : memref<1x36x128xbf16, #tpu.memory_space<vmem>>, vector<1x6x128xbf16>
    %32 = vector.shape_cast %31 : vector<1x6x128xbf16> to vector<6x128xbf16>
    %c5 = arith.constant 5 : index
    %c0_29 = arith.constant 0 : index
    %c0_30 = arith.constant 0 : index
    %33 = vector.load %arg3[%c5, %c0_29, %c0_30] : memref<9x128x256xbf16, #tpu.memory_space<vmem>>, vector<1x128x256xbf16>
    %34 = vector.shape_cast %33 : vector<1x128x256xbf16> to vector<128x256xbf16>
    %cst_31 = arith.constant dense<0.000000e+00> : vector<6x256xf32>
    %35 = tpu.matmul %32, %34, %cst_31 {dimension_numbers = #tpu.dot_dimension_numbers<[1], [0], [0], [1], [0, 0, 1, 1], [], []>} : vector<6x128xbf16>, vector<128x256xbf16>, vector<6x256xf32> -> vector<6x256xf32>
    %36 = arith.addf %30, %35 : vector<6x256xf32>
    %c0_32 = arith.constant 0 : index
    %c3_33 = arith.constant 3 : index
    %c0_34 = arith.constant 0 : index
    %37 = vector.load %arg2[%c0_32, %c3_33, %c0_34] : memref<1x36x128xbf16, #tpu.memory_space<vmem>>, vector<1x6x128xbf16>
    %38 = vector.shape_cast %37 : vector<1x6x128xbf16> to vector<6x128xbf16>
    %c6 = arith.constant 6 : index
    %c0_35 = arith.constant 0 : index
    %c0_36 = arith.constant 0 : index
    %39 = vector.load %arg3[%c6, %c0_35, %c0_36] : memref<9x128x256xbf16, #tpu.memory_space<vmem>>, vector<1x128x256xbf16>
    %40 = vector.shape_cast %39 : vector<1x128x256xbf16> to vector<128x256xbf16>
    %cst_37 = arith.constant dense<0.000000e+00> : vector<6x256xf32>
    %41 = tpu.matmul %38, %40, %cst_37 {dimension_numbers = #tpu.dot_dimension_numbers<[1], [0], [0], [1], [0, 0, 1, 1], [], []>} : vector<6x128xbf16>, vector<128x256xbf16>, vector<6x256xf32> -> vector<6x256xf32>
    %42 = arith.addf %36, %41 : vector<6x256xf32>
    %c0_38 = arith.constant 0 : index
    %c12 = arith.constant 12 : index
    %c0_39 = arith.constant 0 : index
    %43 = vector.load %arg2[%c0_38, %c12, %c0_39] : memref<1x36x128xbf16, #tpu.memory_space<vmem>>, vector<1x6x128xbf16>
    %44 = vector.shape_cast %43 : vector<1x6x128xbf16> to vector<6x128xbf16>
    %c7 = arith.constant 7 : index
    %c0_40 = arith.constant 0 : index
    %c0_41 = arith.constant 0 : index
    %45 = vector.load %arg3[%c7, %c0_40, %c0_41] : memref<9x128x256xbf16, #tpu.memory_space<vmem>>, vector<1x128x256xbf16>
    %46 = vector.shape_cast %45 : vector<1x128x256xbf16> to vector<128x256xbf16>
    %cst_42 = arith.constant dense<0.000000e+00> : vector<6x256xf32>
    %47 = tpu.matmul %44, %46, %cst_42 {dimension_numbers = #tpu.dot_dimension_numbers<[1], [0], [0], [1], [0, 0, 1, 1], [], []>} : vector<6x128xbf16>, vector<128x256xbf16>, vector<6x256xf32> -> vector<6x256xf32>
    %48 = arith.addf %42, %47 : vector<6x256xf32>
    %c0_43 = arith.constant 0 : index
    %c4_44 = arith.constant 4 : index
    %c0_45 = arith.constant 0 : index
    %49 = vector.load %arg2[%c0_43, %c4_44, %c0_45] : memref<1x36x128xbf16, #tpu.memory_space<vmem>>, vector<1x6x128xbf16>
    %50 = vector.shape_cast %49 : vector<1x6x128xbf16> to vector<6x128xbf16>
    %c8 = arith.constant 8 : index
    %c0_46 = arith.constant 0 : index
    %c0_47 = arith.constant 0 : index
    %51 = vector.load %arg3[%c8, %c0_46, %c0_47] : memref<9x128x256xbf16, #tpu.memory_space<vmem>>, vector<1x128x256xbf16>
    %52 = vector.shape_cast %51 : vector<1x128x256xbf16> to vector<128x256xbf16>
    %cst_48 = arith.constant dense<0.000000e+00> : vector<6x256xf32>
    %53 = tpu.matmul %50, %52, %cst_48 {dimension_numbers = #tpu.dot_dimension_numbers<[1], [0], [0], [1], [0, 0, 1, 1], [], []>} : vector<6x128xbf16>, vector<128x256xbf16>, vector<6x256xf32> -> vector<6x256xf32>
    %54 = arith.addf %48, %53 : vector<6x256xf32>
    %55 = arith.truncf %54 : vector<6x256xf32> to vector<6x256xbf16>
    %c0_49 = arith.constant 0 : index
    %c0_50 = arith.constant 0 : index
    %c0_51 = arith.constant 0 : index
    %56 = vector.load %arg4[%c0_49, %c0_50, %c0_51] : memref<1x6x256xbf16, #tpu.memory_space<vmem>>, vector<1x6x256xbf16>
    %57 = vector.shape_cast %56 : vector<1x6x256xbf16> to vector<6x256xbf16>
    %58 = vector.shape_cast %55 : vector<6x256xbf16> to vector<1x6x256xbf16>
    tpu.vector_store %arg4[%c0_49, %c0_50, %c0_51], %58 {strides = array<i32>} : memref<1x6x256xbf16, #tpu.memory_space<vmem>>, vector<1x6x256xbf16>,
    return
  }
  func.func @transform_0(%arg0: i32, %arg1: i32) -> (i32, i32, i32) {
    %c0_i32 = arith.constant 0 : i32
    %c0_i32_0 = arith.constant 0 : i32
    %c0_i32_1 = arith.constant 0 : i32
    return %arg1, %c0_i32, %c0_i32_0 : i32, i32, i32
  }
  func.func @transform_1(%arg0: i32, %arg1: i32) -> (i32, i32, i32) {
    %c0_i32 = arith.constant 0 : i32
    %c0_i32_0 = arith.constant 0 : i32
    %c0_i32_1 = arith.constant 0 : i32
    return %c0_i32, %c0_i32_0, %arg0 : i32, i32, i32
  }
  func.func @transform_2(%arg0: i32, %arg1: i32) -> (i32, i32, i32) {
    %c0_i32 = arith.constant 0 : i32
    %c0_i32_0 = arith.constant 0 : i32
    return %arg1, %c0_i32, %arg0 : i32, i32, i32
  }
}

module attributes {stable_mosaic.version = 11 : i64} {
  func.func @_instnorm_lrelu_kernel(%arg0: i32, %arg1: i32, %arg2: memref<1x4x128xbf16, #tpu.memory_space<vmem>>, %arg3: memref<1x4x128xbf16, #tpu.memory_space<vmem>>) attributes {dimension_semantics = [#tpu.dimension_semantics<parallel>, #tpu.dimension_semantics<parallel>], iteration_bounds = array<i64: 2, 2>, scalar_prefetch = 0 : i64, scratch_operands = 0 : i64, tpu.core_type = #tpu.core_type<tc>, window_params = [{transform_indices = @transform_0, window_bounds = array<i64: 1, 4, 128>}, {transform_indices = @transform_1, window_bounds = array<i64: 1, 4, 128>}]} {
    %c0 = arith.constant 0 : index
    %c0_0 = arith.constant 0 : index
    %c0_1 = arith.constant 0 : index
    %0 = vector.load %arg2[%c0, %c0_0, %c0_1] : memref<1x4x128xbf16, #tpu.memory_space<vmem>>, vector<1x4x128xbf16>
    %1 = arith.extf %0 : vector<1x4x128xbf16> to vector<1x4x128xf32>
    %cst = arith.constant dense<0.000000e+00> : vector<1x128xf32>
    %2 = vector.multi_reduction <add>, %1, %cst [1] : vector<1x4x128xf32> to vector<1x128xf32>
    %3 = vector.shape_cast %2 : vector<1x128xf32> to vector<1x1x128xf32>
    %cst_2 = arith.constant 2.500000e-01 : f32
    %4 = vector.broadcast %cst_2 : f32 to vector<1x1x128xf32>
    %5 = arith.mulf %3, %4 : vector<1x1x128xf32>
    %6 = arith.mulf %1, %1 : vector<1x4x128xf32>
    %cst_3 = arith.constant dense<0.000000e+00> : vector<1x128xf32>
    %7 = vector.multi_reduction <add>, %6, %cst_3 [1] : vector<1x4x128xf32> to vector<1x128xf32>
    %8 = vector.shape_cast %7 : vector<1x128xf32> to vector<1x1x128xf32>
    %cst_4 = arith.constant 2.500000e-01 : f32
    %9 = vector.broadcast %cst_4 : f32 to vector<1x1x128xf32>
    %10 = arith.mulf %8, %9 : vector<1x1x128xf32>
    %11 = arith.mulf %5, %5 : vector<1x1x128xf32>
    %12 = arith.subf %10, %11 : vector<1x1x128xf32>
    %cst_5 = arith.constant 0.000000e+00 : f32
    %13 = vector.broadcast %cst_5 : f32 to vector<1x1x128xf32>
    %14 = arith.maximumf %12, %13 : vector<1x1x128xf32>
    %15 = vector.broadcast %5 : vector<1x1x128xf32> to vector<1x4x128xf32>
    %16 = arith.subf %1, %15 : vector<1x4x128xf32>
    %cst_6 = arith.constant 9.99999974E-6 : f32
    %17 = vector.broadcast %cst_6 : f32 to vector<1x1x128xf32>
    %18 = arith.addf %14, %17 : vector<1x1x128xf32>
    %19 = math.rsqrt %18 : vector<1x1x128xf32>
    %20 = vector.broadcast %19 : vector<1x1x128xf32> to vector<1x4x128xf32>
    %21 = arith.mulf %16, %20 : vector<1x4x128xf32>
    %cst_7 = arith.constant 0.000000e+00 : f32
    %22 = vector.broadcast %cst_7 : f32 to vector<1x4x128xf32>
    %23 = arith.cmpf oge, %21, %22 : vector<1x4x128xf32>
    %cst_8 = arith.constant 2.000000e-01 : f32
    %24 = vector.broadcast %cst_8 : f32 to vector<1x4x128xf32>
    %25 = arith.mulf %24, %21 : vector<1x4x128xf32>
    %26 = arith.select %23, %21, %25 : vector<1x4x128xi1>, vector<1x4x128xf32>
    %27 = arith.truncf %26 : vector<1x4x128xf32> to vector<1x4x128xbf16>
    %c0_9 = arith.constant 0 : index
    %c0_10 = arith.constant 0 : index
    %c0_11 = arith.constant 0 : index
    %28 = vector.load %arg3[%c0_9, %c0_10, %c0_11] : memref<1x4x128xbf16, #tpu.memory_space<vmem>>, vector<1x4x128xbf16>
    tpu.vector_store %arg3[%c0_9, %c0_10, %c0_11], %27 {strides = array<i32>} : memref<1x4x128xbf16, #tpu.memory_space<vmem>>, vector<1x4x128xbf16>,
    return
  }
  func.func @transform_0(%arg0: i32, %arg1: i32) -> (i32, i32, i32) {
    %c0_i32 = arith.constant 0 : i32
    %c0_i32_0 = arith.constant 0 : i32
    return %arg0, %c0_i32, %arg1 : i32, i32, i32
  }
  func.func @transform_1(%arg0: i32, %arg1: i32) -> (i32, i32, i32) {
    %c0_i32 = arith.constant 0 : i32
    %c0_i32_0 = arith.constant 0 : i32
    return %arg0, %c0_i32, %arg1 : i32, i32, i32
  }
}

module attributes {stable_mosaic.version = 11 : i64} {
  func.func @_conv3x3_tap_kernel(%arg0: i32, %arg1: i32, %arg2: memref<1x20x256xbf16, #tpu.memory_space<vmem>>, %arg3: memref<9x256x256xbf16, #tpu.memory_space<vmem>>, %arg4: memref<1x8x256xbf16, #tpu.memory_space<vmem>>) attributes {dimension_semantics = [#tpu.dimension_semantics<parallel>, #tpu.dimension_semantics<parallel>], iteration_bounds = array<i64: 2, 2>, scalar_prefetch = 0 : i64, scratch_operands = 0 : i64, tpu.core_type = #tpu.core_type<tc>, window_params = [{transform_indices = @transform_0, window_bounds = array<i64: 1, 20, 256>}, {transform_indices = @transform_1, window_bounds = array<i64: 9, 256, 256>}, {transform_indices = @transform_2, window_bounds = array<i64: 1, 8, 256>}]} {
    %cst = arith.constant 0.000000e+00 : f32
    %0 = vector.broadcast %cst : f32 to vector<8x256xf32>
    %c0 = arith.constant 0 : index
    %c0_0 = arith.constant 0 : index
    %c0_1 = arith.constant 0 : index
    %1 = vector.load %arg2[%c0, %c0_0, %c0_1] : memref<1x20x256xbf16, #tpu.memory_space<vmem>>, vector<1x8x256xbf16>
    %2 = vector.shape_cast %1 : vector<1x8x256xbf16> to vector<8x256xbf16>
    %c0_2 = arith.constant 0 : index
    %c0_3 = arith.constant 0 : index
    %c0_4 = arith.constant 0 : index
    %3 = vector.load %arg3[%c0_2, %c0_3, %c0_4] : memref<9x256x256xbf16, #tpu.memory_space<vmem>>, vector<1x256x256xbf16>
    %4 = vector.shape_cast %3 : vector<1x256x256xbf16> to vector<256x256xbf16>
    %cst_5 = arith.constant dense<0.000000e+00> : vector<8x256xf32>
    %5 = tpu.matmul %2, %4, %cst_5 {dimension_numbers = #tpu.dot_dimension_numbers<[1], [0], [0], [1], [0, 0, 1, 1], [], []>} : vector<8x256xbf16>, vector<256x256xbf16>, vector<8x256xf32> -> vector<8x256xf32>
    %6 = arith.addf %0, %5 : vector<8x256xf32>
    %c0_6 = arith.constant 0 : index
    %c1 = arith.constant 1 : index
    %c0_7 = arith.constant 0 : index
    %7 = vector.load %arg2[%c0_6, %c1, %c0_7] : memref<1x20x256xbf16, #tpu.memory_space<vmem>>, vector<1x8x256xbf16>
    %8 = vector.shape_cast %7 : vector<1x8x256xbf16> to vector<8x256xbf16>
    %c1_8 = arith.constant 1 : index
    %c0_9 = arith.constant 0 : index
    %c0_10 = arith.constant 0 : index
    %9 = vector.load %arg3[%c1_8, %c0_9, %c0_10] : memref<9x256x256xbf16, #tpu.memory_space<vmem>>, vector<1x256x256xbf16>
    %10 = vector.shape_cast %9 : vector<1x256x256xbf16> to vector<256x256xbf16>
    %cst_11 = arith.constant dense<0.000000e+00> : vector<8x256xf32>
    %11 = tpu.matmul %8, %10, %cst_11 {dimension_numbers = #tpu.dot_dimension_numbers<[1], [0], [0], [1], [0, 0, 1, 1], [], []>} : vector<8x256xbf16>, vector<256x256xbf16>, vector<8x256xf32> -> vector<8x256xf32>
    %12 = arith.addf %6, %11 : vector<8x256xf32>
    %c0_12 = arith.constant 0 : index
    %c2 = arith.constant 2 : index
    %c0_13 = arith.constant 0 : index
    %13 = vector.load %arg2[%c0_12, %c2, %c0_13] : memref<1x20x256xbf16, #tpu.memory_space<vmem>>, vector<1x8x256xbf16>
    %14 = vector.shape_cast %13 : vector<1x8x256xbf16> to vector<8x256xbf16>
    %c2_14 = arith.constant 2 : index
    %c0_15 = arith.constant 0 : index
    %c0_16 = arith.constant 0 : index
    %15 = vector.load %arg3[%c2_14, %c0_15, %c0_16] : memref<9x256x256xbf16, #tpu.memory_space<vmem>>, vector<1x256x256xbf16>
    %16 = vector.shape_cast %15 : vector<1x256x256xbf16> to vector<256x256xbf16>
    %cst_17 = arith.constant dense<0.000000e+00> : vector<8x256xf32>
    %17 = tpu.matmul %14, %16, %cst_17 {dimension_numbers = #tpu.dot_dimension_numbers<[1], [0], [0], [1], [0, 0, 1, 1], [], []>} : vector<8x256xbf16>, vector<256x256xbf16>, vector<8x256xf32> -> vector<8x256xf32>
    %18 = arith.addf %12, %17 : vector<8x256xf32>
    %c0_18 = arith.constant 0 : index
    %c4 = arith.constant 4 : index
    %c0_19 = arith.constant 0 : index
    %19 = vector.load %arg2[%c0_18, %c4, %c0_19] : memref<1x20x256xbf16, #tpu.memory_space<vmem>>, vector<1x8x256xbf16>
    %20 = vector.shape_cast %19 : vector<1x8x256xbf16> to vector<8x256xbf16>
    %c3 = arith.constant 3 : index
    %c0_20 = arith.constant 0 : index
    %c0_21 = arith.constant 0 : index
    %21 = vector.load %arg3[%c3, %c0_20, %c0_21] : memref<9x256x256xbf16, #tpu.memory_space<vmem>>, vector<1x256x256xbf16>
    %22 = vector.shape_cast %21 : vector<1x256x256xbf16> to vector<256x256xbf16>
    %cst_22 = arith.constant dense<0.000000e+00> : vector<8x256xf32>
    %23 = tpu.matmul %20, %22, %cst_22 {dimension_numbers = #tpu.dot_dimension_numbers<[1], [0], [0], [1], [0, 0, 1, 1], [], []>} : vector<8x256xbf16>, vector<256x256xbf16>, vector<8x256xf32> -> vector<8x256xf32>
    %24 = arith.addf %18, %23 : vector<8x256xf32>
    %c0_23 = arith.constant 0 : index
    %c5 = arith.constant 5 : index
    %c0_24 = arith.constant 0 : index
    %25 = vector.load %arg2[%c0_23, %c5, %c0_24] : memref<1x20x256xbf16, #tpu.memory_space<vmem>>, vector<1x8x256xbf16>
    %26 = vector.shape_cast %25 : vector<1x8x256xbf16> to vector<8x256xbf16>
    %c4_25 = arith.constant 4 : index
    %c0_26 = arith.constant 0 : index
    %c0_27 = arith.constant 0 : index
    %27 = vector.load %arg3[%c4_25, %c0_26, %c0_27] : memref<9x256x256xbf16, #tpu.memory_space<vmem>>, vector<1x256x256xbf16>
    %28 = vector.shape_cast %27 : vector<1x256x256xbf16> to vector<256x256xbf16>
    %cst_28 = arith.constant dense<0.000000e+00> : vector<8x256xf32>
    %29 = tpu.matmul %26, %28, %cst_28 {dimension_numbers = #tpu.dot_dimension_numbers<[1], [0], [0], [1], [0, 0, 1, 1], [], []>} : vector<8x256xbf16>, vector<256x256xbf16>, vector<8x256xf32> -> vector<8x256xf32>
    %30 = arith.addf %24, %29 : vector<8x256xf32>
    %c0_29 = arith.constant 0 : index
    %c6 = arith.constant 6 : index
    %c0_30 = arith.constant 0 : index
    %31 = vector.load %arg2[%c0_29, %c6, %c0_30] : memref<1x20x256xbf16, #tpu.memory_space<vmem>>, vector<1x8x256xbf16>
    %32 = vector.shape_cast %31 : vector<1x8x256xbf16> to vector<8x256xbf16>
    %c5_31 = arith.constant 5 : index
    %c0_32 = arith.constant 0 : index
    %c0_33 = arith.constant 0 : index
    %33 = vector.load %arg3[%c5_31, %c0_32, %c0_33] : memref<9x256x256xbf16, #tpu.memory_space<vmem>>, vector<1x256x256xbf16>
    %34 = vector.shape_cast %33 : vector<1x256x256xbf16> to vector<256x256xbf16>
    %cst_34 = arith.constant dense<0.000000e+00> : vector<8x256xf32>
    %35 = tpu.matmul %32, %34, %cst_34 {dimension_numbers = #tpu.dot_dimension_numbers<[1], [0], [0], [1], [0, 0, 1, 1], [], []>} : vector<8x256xbf16>, vector<256x256xbf16>, vector<8x256xf32> -> vector<8x256xf32>
    %36 = arith.addf %30, %35 : vector<8x256xf32>
    %c0_35 = arith.constant 0 : index
    %c8 = arith.constant 8 : index
    %c0_36 = arith.constant 0 : index
    %37 = vector.load %arg2[%c0_35, %c8, %c0_36] : memref<1x20x256xbf16, #tpu.memory_space<vmem>>, vector<1x8x256xbf16>
    %38 = vector.shape_cast %37 : vector<1x8x256xbf16> to vector<8x256xbf16>
    %c6_37 = arith.constant 6 : index
    %c0_38 = arith.constant 0 : index
    %c0_39 = arith.constant 0 : index
    %39 = vector.load %arg3[%c6_37, %c0_38, %c0_39] : memref<9x256x256xbf16, #tpu.memory_space<vmem>>, vector<1x256x256xbf16>
    %40 = vector.shape_cast %39 : vector<1x256x256xbf16> to vector<256x256xbf16>
    %cst_40 = arith.constant dense<0.000000e+00> : vector<8x256xf32>
    %41 = tpu.matmul %38, %40, %cst_40 {dimension_numbers = #tpu.dot_dimension_numbers<[1], [0], [0], [1], [0, 0, 1, 1], [], []>} : vector<8x256xbf16>, vector<256x256xbf16>, vector<8x256xf32> -> vector<8x256xf32>
    %42 = arith.addf %36, %41 : vector<8x256xf32>
    %c0_41 = arith.constant 0 : index
    %c9 = arith.constant 9 : index
    %c0_42 = arith.constant 0 : index
    %43 = vector.load %arg2[%c0_41, %c9, %c0_42] : memref<1x20x256xbf16, #tpu.memory_space<vmem>>, vector<1x8x256xbf16>
    %44 = vector.shape_cast %43 : vector<1x8x256xbf16> to vector<8x256xbf16>
    %c7 = arith.constant 7 : index
    %c0_43 = arith.constant 0 : index
    %c0_44 = arith.constant 0 : index
    %45 = vector.load %arg3[%c7, %c0_43, %c0_44] : memref<9x256x256xbf16, #tpu.memory_space<vmem>>, vector<1x256x256xbf16>
    %46 = vector.shape_cast %45 : vector<1x256x256xbf16> to vector<256x256xbf16>
    %cst_45 = arith.constant dense<0.000000e+00> : vector<8x256xf32>
    %47 = tpu.matmul %44, %46, %cst_45 {dimension_numbers = #tpu.dot_dimension_numbers<[1], [0], [0], [1], [0, 0, 1, 1], [], []>} : vector<8x256xbf16>, vector<256x256xbf16>, vector<8x256xf32> -> vector<8x256xf32>
    %48 = arith.addf %42, %47 : vector<8x256xf32>
    %c0_46 = arith.constant 0 : index
    %c10 = arith.constant 10 : index
    %c0_47 = arith.constant 0 : index
    %49 = vector.load %arg2[%c0_46, %c10, %c0_47] : memref<1x20x256xbf16, #tpu.memory_space<vmem>>, vector<1x8x256xbf16>
    %50 = vector.shape_cast %49 : vector<1x8x256xbf16> to vector<8x256xbf16>
    %c8_48 = arith.constant 8 : index
    %c0_49 = arith.constant 0 : index
    %c0_50 = arith.constant 0 : index
    %51 = vector.load %arg3[%c8_48, %c0_49, %c0_50] : memref<9x256x256xbf16, #tpu.memory_space<vmem>>, vector<1x256x256xbf16>
    %52 = vector.shape_cast %51 : vector<1x256x256xbf16> to vector<256x256xbf16>
    %cst_51 = arith.constant dense<0.000000e+00> : vector<8x256xf32>
    %53 = tpu.matmul %50, %52, %cst_51 {dimension_numbers = #tpu.dot_dimension_numbers<[1], [0], [0], [1], [0, 0, 1, 1], [], []>} : vector<8x256xbf16>, vector<256x256xbf16>, vector<8x256xf32> -> vector<8x256xf32>
    %54 = arith.addf %48, %53 : vector<8x256xf32>
    %55 = arith.truncf %54 : vector<8x256xf32> to vector<8x256xbf16>
    %c0_52 = arith.constant 0 : index
    %c0_53 = arith.constant 0 : index
    %c0_54 = arith.constant 0 : index
    %56 = vector.load %arg4[%c0_52, %c0_53, %c0_54] : memref<1x8x256xbf16, #tpu.memory_space<vmem>>, vector<1x8x256xbf16>
    %57 = vector.shape_cast %56 : vector<1x8x256xbf16> to vector<8x256xbf16>
    %58 = vector.shape_cast %55 : vector<8x256xbf16> to vector<1x8x256xbf16>
    tpu.vector_store %arg4[%c0_52, %c0_53, %c0_54], %58 {strides = array<i32>} : memref<1x8x256xbf16, #tpu.memory_space<vmem>>, vector<1x8x256xbf16>,
    return
  }
  func.func @transform_0(%arg0: i32, %arg1: i32) -> (i32, i32, i32) {
    %c0_i32 = arith.constant 0 : i32
    %c0_i32_0 = arith.constant 0 : i32
    %c0_i32_1 = arith.constant 0 : i32
    return %arg1, %c0_i32, %c0_i32_0 : i32, i32, i32
  }
  func.func @transform_1(%arg0: i32, %arg1: i32) -> (i32, i32, i32) {
    %c0_i32 = arith.constant 0 : i32
    %c0_i32_0 = arith.constant 0 : i32
    %c0_i32_1 = arith.constant 0 : i32
    return %c0_i32, %c0_i32_0, %arg0 : i32, i32, i32
  }
  func.func @transform_2(%arg0: i32, %arg1: i32) -> (i32, i32, i32) {
    %c0_i32 = arith.constant 0 : i32
    %c0_i32_0 = arith.constant 0 : i32
    return %arg1, %c0_i32, %arg0 : i32, i32, i32
  }
}

module attributes {stable_mosaic.version = 11 : i64} {
  func.func @_instnorm_lrelu_kernel(%arg0: i32, %arg1: i32, %arg2: memref<1x4x128xbf16, #tpu.memory_space<vmem>>, %arg3: memref<1x4x128xbf16, #tpu.memory_space<vmem>>) attributes {dimension_semantics = [#tpu.dimension_semantics<parallel>, #tpu.dimension_semantics<parallel>], iteration_bounds = array<i64: 2, 4>, scalar_prefetch = 0 : i64, scratch_operands = 0 : i64, tpu.core_type = #tpu.core_type<tc>, window_params = [{transform_indices = @transform_0, window_bounds = array<i64: 1, 4, 128>}, {transform_indices = @transform_1, window_bounds = array<i64: 1, 4, 128>}]} {
    %c0 = arith.constant 0 : index
    %c0_0 = arith.constant 0 : index
    %c0_1 = arith.constant 0 : index
    %0 = vector.load %arg2[%c0, %c0_0, %c0_1] : memref<1x4x128xbf16, #tpu.memory_space<vmem>>, vector<1x4x128xbf16>
    %1 = arith.extf %0 : vector<1x4x128xbf16> to vector<1x4x128xf32>
    %cst = arith.constant dense<0.000000e+00> : vector<1x128xf32>
    %2 = vector.multi_reduction <add>, %1, %cst [1] : vector<1x4x128xf32> to vector<1x128xf32>
    %3 = vector.shape_cast %2 : vector<1x128xf32> to vector<1x1x128xf32>
    %cst_2 = arith.constant 2.500000e-01 : f32
    %4 = vector.broadcast %cst_2 : f32 to vector<1x1x128xf32>
    %5 = arith.mulf %3, %4 : vector<1x1x128xf32>
    %6 = arith.mulf %1, %1 : vector<1x4x128xf32>
    %cst_3 = arith.constant dense<0.000000e+00> : vector<1x128xf32>
    %7 = vector.multi_reduction <add>, %6, %cst_3 [1] : vector<1x4x128xf32> to vector<1x128xf32>
    %8 = vector.shape_cast %7 : vector<1x128xf32> to vector<1x1x128xf32>
    %cst_4 = arith.constant 2.500000e-01 : f32
    %9 = vector.broadcast %cst_4 : f32 to vector<1x1x128xf32>
    %10 = arith.mulf %8, %9 : vector<1x1x128xf32>
    %11 = arith.mulf %5, %5 : vector<1x1x128xf32>
    %12 = arith.subf %10, %11 : vector<1x1x128xf32>
    %cst_5 = arith.constant 0.000000e+00 : f32
    %13 = vector.broadcast %cst_5 : f32 to vector<1x1x128xf32>
    %14 = arith.maximumf %12, %13 : vector<1x1x128xf32>
    %15 = vector.broadcast %5 : vector<1x1x128xf32> to vector<1x4x128xf32>
    %16 = arith.subf %1, %15 : vector<1x4x128xf32>
    %cst_6 = arith.constant 9.99999974E-6 : f32
    %17 = vector.broadcast %cst_6 : f32 to vector<1x1x128xf32>
    %18 = arith.addf %14, %17 : vector<1x1x128xf32>
    %19 = math.rsqrt %18 : vector<1x1x128xf32>
    %20 = vector.broadcast %19 : vector<1x1x128xf32> to vector<1x4x128xf32>
    %21 = arith.mulf %16, %20 : vector<1x4x128xf32>
    %cst_7 = arith.constant 0.000000e+00 : f32
    %22 = vector.broadcast %cst_7 : f32 to vector<1x4x128xf32>
    %23 = arith.cmpf oge, %21, %22 : vector<1x4x128xf32>
    %cst_8 = arith.constant 2.000000e-01 : f32
    %24 = vector.broadcast %cst_8 : f32 to vector<1x4x128xf32>
    %25 = arith.mulf %24, %21 : vector<1x4x128xf32>
    %26 = arith.select %23, %21, %25 : vector<1x4x128xi1>, vector<1x4x128xf32>
    %27 = arith.truncf %26 : vector<1x4x128xf32> to vector<1x4x128xbf16>
    %c0_9 = arith.constant 0 : index
    %c0_10 = arith.constant 0 : index
    %c0_11 = arith.constant 0 : index
    %28 = vector.load %arg3[%c0_9, %c0_10, %c0_11] : memref<1x4x128xbf16, #tpu.memory_space<vmem>>, vector<1x4x128xbf16>
    tpu.vector_store %arg3[%c0_9, %c0_10, %c0_11], %27 {strides = array<i32>} : memref<1x4x128xbf16, #tpu.memory_space<vmem>>, vector<1x4x128xbf16>,
    return
  }
  func.func @transform_0(%arg0: i32, %arg1: i32) -> (i32, i32, i32) {
    %c0_i32 = arith.constant 0 : i32
    %c0_i32_0 = arith.constant 0 : i32
    return %arg0, %c0_i32, %arg1 : i32, i32, i32
  }
  func.func @transform_1(%arg0: i32, %arg1: i32) -> (i32, i32, i32) {
    %c0_i32 = arith.constant 0 : i32
    %c0_i32_0 = arith.constant 0 : i32
    return %arg0, %c0_i32, %arg1 : i32, i32, i32
  }
}

module attributes {stable_mosaic.version = 11 : i64} {
  func.func @_conv3x3_tap_kernel(%arg0: i32, %arg1: i32, %arg2: memref<1x20x512xbf16, #tpu.memory_space<vmem>>, %arg3: memref<9x1x512xf32, #tpu.memory_space<vmem>>, %arg4: memref<1x1xf32, #tpu.memory_space<vmem>>, %arg5: memref<1x8x1xf32, #tpu.memory_space<vmem>>) attributes {dimension_semantics = [#tpu.dimension_semantics<parallel>, #tpu.dimension_semantics<parallel>], iteration_bounds = array<i64: 1, 2>, scalar_prefetch = 0 : i64, scratch_operands = 0 : i64, tpu.core_type = #tpu.core_type<tc>, window_params = [{transform_indices = @transform_0, window_bounds = array<i64: 1, 20, 512>}, {pipeline_mode = #tpu.pipeline_mode<synchronous>, transform_indices = @transform_1, window_bounds = array<i64: 9, 1, 512>}, {transform_indices = @transform_2, window_bounds = array<i64: 1, 1>}, {transform_indices = @transform_3, window_bounds = array<i64: 1, 8, 1>}]} {
    %cst = arith.constant 0.000000e+00 : f32
    %0 = vector.broadcast %cst : f32 to vector<8x1xf32>
    %c0 = arith.constant 0 : index
    %c0_0 = arith.constant 0 : index
    %c0_1 = arith.constant 0 : index
    %1 = vector.load %arg2[%c0, %c0_0, %c0_1] : memref<1x20x512xbf16, #tpu.memory_space<vmem>>, vector<1x8x512xbf16>
    %2 = vector.shape_cast %1 : vector<1x8x512xbf16> to vector<8x512xbf16>
    %c0_2 = arith.constant 0 : index
    %c0_3 = arith.constant 0 : index
    %c0_4 = arith.constant 0 : index
    %3 = vector.load %arg3[%c0_2, %c0_3, %c0_4] : memref<9x1x512xf32, #tpu.memory_space<vmem>>, vector<1x1x512xf32>
    %4 = vector.shape_cast %3 : vector<1x1x512xf32> to vector<1x512xf32>
    %5 = arith.extf %2 : vector<8x512xbf16> to vector<8x512xf32>
    %6 = vector.broadcast %4 : vector<1x512xf32> to vector<8x512xf32>
    %7 = arith.mulf %5, %6 : vector<8x512xf32>
    %cst_5 = arith.constant dense<0.000000e+00> : vector<8xf32>
    %8 = vector.multi_reduction <add>, %7, %cst_5 [1] : vector<8x512xf32> to vector<8xf32>
    %9 = vector.shape_cast %8 : vector<8xf32> to vector<8x1xf32>
    %10 = arith.addf %0, %9 : vector<8x1xf32>
    %c0_6 = arith.constant 0 : index
    %c1 = arith.constant 1 : index
    %c0_7 = arith.constant 0 : index
    %11 = vector.load %arg2[%c0_6, %c1, %c0_7] : memref<1x20x512xbf16, #tpu.memory_space<vmem>>, vector<1x8x512xbf16>
    %12 = vector.shape_cast %11 : vector<1x8x512xbf16> to vector<8x512xbf16>
    %c1_8 = arith.constant 1 : index
    %c0_9 = arith.constant 0 : index
    %c0_10 = arith.constant 0 : index
    %13 = vector.load %arg3[%c1_8, %c0_9, %c0_10] : memref<9x1x512xf32, #tpu.memory_space<vmem>>, vector<1x1x512xf32>
    %14 = vector.shape_cast %13 : vector<1x1x512xf32> to vector<1x512xf32>
    %15 = arith.extf %12 : vector<8x512xbf16> to vector<8x512xf32>
    %16 = vector.broadcast %14 : vector<1x512xf32> to vector<8x512xf32>
    %17 = arith.mulf %15, %16 : vector<8x512xf32>
    %cst_11 = arith.constant dense<0.000000e+00> : vector<8xf32>
    %18 = vector.multi_reduction <add>, %17, %cst_11 [1] : vector<8x512xf32> to vector<8xf32>
    %19 = vector.shape_cast %18 : vector<8xf32> to vector<8x1xf32>
    %20 = arith.addf %10, %19 : vector<8x1xf32>
    %c0_12 = arith.constant 0 : index
    %c2 = arith.constant 2 : index
    %c0_13 = arith.constant 0 : index
    %21 = vector.load %arg2[%c0_12, %c2, %c0_13] : memref<1x20x512xbf16, #tpu.memory_space<vmem>>, vector<1x8x512xbf16>
    %22 = vector.shape_cast %21 : vector<1x8x512xbf16> to vector<8x512xbf16>
    %c2_14 = arith.constant 2 : index
    %c0_15 = arith.constant 0 : index
    %c0_16 = arith.constant 0 : index
    %23 = vector.load %arg3[%c2_14, %c0_15, %c0_16] : memref<9x1x512xf32, #tpu.memory_space<vmem>>, vector<1x1x512xf32>
    %24 = vector.shape_cast %23 : vector<1x1x512xf32> to vector<1x512xf32>
    %25 = arith.extf %22 : vector<8x512xbf16> to vector<8x512xf32>
    %26 = vector.broadcast %24 : vector<1x512xf32> to vector<8x512xf32>
    %27 = arith.mulf %25, %26 : vector<8x512xf32>
    %cst_17 = arith.constant dense<0.000000e+00> : vector<8xf32>
    %28 = vector.multi_reduction <add>, %27, %cst_17 [1] : vector<8x512xf32> to vector<8xf32>
    %29 = vector.shape_cast %28 : vector<8xf32> to vector<8x1xf32>
    %30 = arith.addf %20, %29 : vector<8x1xf32>
    %c0_18 = arith.constant 0 : index
    %c4 = arith.constant 4 : index
    %c0_19 = arith.constant 0 : index
    %31 = vector.load %arg2[%c0_18, %c4, %c0_19] : memref<1x20x512xbf16, #tpu.memory_space<vmem>>, vector<1x8x512xbf16>
    %32 = vector.shape_cast %31 : vector<1x8x512xbf16> to vector<8x512xbf16>
    %c3 = arith.constant 3 : index
    %c0_20 = arith.constant 0 : index
    %c0_21 = arith.constant 0 : index
    %33 = vector.load %arg3[%c3, %c0_20, %c0_21] : memref<9x1x512xf32, #tpu.memory_space<vmem>>, vector<1x1x512xf32>
    %34 = vector.shape_cast %33 : vector<1x1x512xf32> to vector<1x512xf32>
    %35 = arith.extf %32 : vector<8x512xbf16> to vector<8x512xf32>
    %36 = vector.broadcast %34 : vector<1x512xf32> to vector<8x512xf32>
    %37 = arith.mulf %35, %36 : vector<8x512xf32>
    %cst_22 = arith.constant dense<0.000000e+00> : vector<8xf32>
    %38 = vector.multi_reduction <add>, %37, %cst_22 [1] : vector<8x512xf32> to vector<8xf32>
    %39 = vector.shape_cast %38 : vector<8xf32> to vector<8x1xf32>
    %40 = arith.addf %30, %39 : vector<8x1xf32>
    %c0_23 = arith.constant 0 : index
    %c5 = arith.constant 5 : index
    %c0_24 = arith.constant 0 : index
    %41 = vector.load %arg2[%c0_23, %c5, %c0_24] : memref<1x20x512xbf16, #tpu.memory_space<vmem>>, vector<1x8x512xbf16>
    %42 = vector.shape_cast %41 : vector<1x8x512xbf16> to vector<8x512xbf16>
    %c4_25 = arith.constant 4 : index
    %c0_26 = arith.constant 0 : index
    %c0_27 = arith.constant 0 : index
    %43 = vector.load %arg3[%c4_25, %c0_26, %c0_27] : memref<9x1x512xf32, #tpu.memory_space<vmem>>, vector<1x1x512xf32>
    %44 = vector.shape_cast %43 : vector<1x1x512xf32> to vector<1x512xf32>
    %45 = arith.extf %42 : vector<8x512xbf16> to vector<8x512xf32>
    %46 = vector.broadcast %44 : vector<1x512xf32> to vector<8x512xf32>
    %47 = arith.mulf %45, %46 : vector<8x512xf32>
    %cst_28 = arith.constant dense<0.000000e+00> : vector<8xf32>
    %48 = vector.multi_reduction <add>, %47, %cst_28 [1] : vector<8x512xf32> to vector<8xf32>
    %49 = vector.shape_cast %48 : vector<8xf32> to vector<8x1xf32>
    %50 = arith.addf %40, %49 : vector<8x1xf32>
    %c0_29 = arith.constant 0 : index
    %c6 = arith.constant 6 : index
    %c0_30 = arith.constant 0 : index
    %51 = vector.load %arg2[%c0_29, %c6, %c0_30] : memref<1x20x512xbf16, #tpu.memory_space<vmem>>, vector<1x8x512xbf16>
    %52 = vector.shape_cast %51 : vector<1x8x512xbf16> to vector<8x512xbf16>
    %c5_31 = arith.constant 5 : index
    %c0_32 = arith.constant 0 : index
    %c0_33 = arith.constant 0 : index
    %53 = vector.load %arg3[%c5_31, %c0_32, %c0_33] : memref<9x1x512xf32, #tpu.memory_space<vmem>>, vector<1x1x512xf32>
    %54 = vector.shape_cast %53 : vector<1x1x512xf32> to vector<1x512xf32>
    %55 = arith.extf %52 : vector<8x512xbf16> to vector<8x512xf32>
    %56 = vector.broadcast %54 : vector<1x512xf32> to vector<8x512xf32>
    %57 = arith.mulf %55, %56 : vector<8x512xf32>
    %cst_34 = arith.constant dense<0.000000e+00> : vector<8xf32>
    %58 = vector.multi_reduction <add>, %57, %cst_34 [1] : vector<8x512xf32> to vector<8xf32>
    %59 = vector.shape_cast %58 : vector<8xf32> to vector<8x1xf32>
    %60 = arith.addf %50, %59 : vector<8x1xf32>
    %c0_35 = arith.constant 0 : index
    %c8 = arith.constant 8 : index
    %c0_36 = arith.constant 0 : index
    %61 = vector.load %arg2[%c0_35, %c8, %c0_36] : memref<1x20x512xbf16, #tpu.memory_space<vmem>>, vector<1x8x512xbf16>
    %62 = vector.shape_cast %61 : vector<1x8x512xbf16> to vector<8x512xbf16>
    %c6_37 = arith.constant 6 : index
    %c0_38 = arith.constant 0 : index
    %c0_39 = arith.constant 0 : index
    %63 = vector.load %arg3[%c6_37, %c0_38, %c0_39] : memref<9x1x512xf32, #tpu.memory_space<vmem>>, vector<1x1x512xf32>
    %64 = vector.shape_cast %63 : vector<1x1x512xf32> to vector<1x512xf32>
    %65 = arith.extf %62 : vector<8x512xbf16> to vector<8x512xf32>
    %66 = vector.broadcast %64 : vector<1x512xf32> to vector<8x512xf32>
    %67 = arith.mulf %65, %66 : vector<8x512xf32>
    %cst_40 = arith.constant dense<0.000000e+00> : vector<8xf32>
    %68 = vector.multi_reduction <add>, %67, %cst_40 [1] : vector<8x512xf32> to vector<8xf32>
    %69 = vector.shape_cast %68 : vector<8xf32> to vector<8x1xf32>
    %70 = arith.addf %60, %69 : vector<8x1xf32>
    %c0_41 = arith.constant 0 : index
    %c9 = arith.constant 9 : index
    %c0_42 = arith.constant 0 : index
    %71 = vector.load %arg2[%c0_41, %c9, %c0_42] : memref<1x20x512xbf16, #tpu.memory_space<vmem>>, vector<1x8x512xbf16>
    %72 = vector.shape_cast %71 : vector<1x8x512xbf16> to vector<8x512xbf16>
    %c7 = arith.constant 7 : index
    %c0_43 = arith.constant 0 : index
    %c0_44 = arith.constant 0 : index
    %73 = vector.load %arg3[%c7, %c0_43, %c0_44] : memref<9x1x512xf32, #tpu.memory_space<vmem>>, vector<1x1x512xf32>
    %74 = vector.shape_cast %73 : vector<1x1x512xf32> to vector<1x512xf32>
    %75 = arith.extf %72 : vector<8x512xbf16> to vector<8x512xf32>
    %76 = vector.broadcast %74 : vector<1x512xf32> to vector<8x512xf32>
    %77 = arith.mulf %75, %76 : vector<8x512xf32>
    %cst_45 = arith.constant dense<0.000000e+00> : vector<8xf32>
    %78 = vector.multi_reduction <add>, %77, %cst_45 [1] : vector<8x512xf32> to vector<8xf32>
    %79 = vector.shape_cast %78 : vector<8xf32> to vector<8x1xf32>
    %80 = arith.addf %70, %79 : vector<8x1xf32>
    %c0_46 = arith.constant 0 : index
    %c10 = arith.constant 10 : index
    %c0_47 = arith.constant 0 : index
    %81 = vector.load %arg2[%c0_46, %c10, %c0_47] : memref<1x20x512xbf16, #tpu.memory_space<vmem>>, vector<1x8x512xbf16>
    %82 = vector.shape_cast %81 : vector<1x8x512xbf16> to vector<8x512xbf16>
    %c8_48 = arith.constant 8 : index
    %c0_49 = arith.constant 0 : index
    %c0_50 = arith.constant 0 : index
    %83 = vector.load %arg3[%c8_48, %c0_49, %c0_50] : memref<9x1x512xf32, #tpu.memory_space<vmem>>, vector<1x1x512xf32>
    %84 = vector.shape_cast %83 : vector<1x1x512xf32> to vector<1x512xf32>
    %85 = arith.extf %82 : vector<8x512xbf16> to vector<8x512xf32>
    %86 = vector.broadcast %84 : vector<1x512xf32> to vector<8x512xf32>
    %87 = arith.mulf %85, %86 : vector<8x512xf32>
    %cst_51 = arith.constant dense<0.000000e+00> : vector<8xf32>
    %88 = vector.multi_reduction <add>, %87, %cst_51 [1] : vector<8x512xf32> to vector<8xf32>
    %89 = vector.shape_cast %88 : vector<8xf32> to vector<8x1xf32>
    %90 = arith.addf %80, %89 : vector<8x1xf32>
    %c0_52 = arith.constant 0 : index
    %c0_53 = arith.constant 0 : index
    %91 = vector.load %arg4[%c0_52, %c0_53] : memref<1x1xf32, #tpu.memory_space<vmem>>, vector<1x1xf32>
    %92 = vector.broadcast %91 : vector<1x1xf32> to vector<8x1xf32>
    %93 = arith.addf %90, %92 : vector<8x1xf32>
    %c0_54 = arith.constant 0 : index
    %c0_55 = arith.constant 0 : index
    %c0_56 = arith.constant 0 : index
    %94 = vector.load %arg5[%c0_54, %c0_55, %c0_56] : memref<1x8x1xf32, #tpu.memory_space<vmem>>, vector<1x8x1xf32>
    %95 = vector.shape_cast %94 : vector<1x8x1xf32> to vector<8x1xf32>
    %96 = vector.shape_cast %93 : vector<8x1xf32> to vector<1x8x1xf32>
    tpu.vector_store %arg5[%c0_54, %c0_55, %c0_56], %96 {strides = array<i32>} : memref<1x8x1xf32, #tpu.memory_space<vmem>>, vector<1x8x1xf32>,
    return
  }
  func.func @transform_0(%arg0: i32, %arg1: i32) -> (i32, i32, i32) {
    %c0_i32 = arith.constant 0 : i32
    %c0_i32_0 = arith.constant 0 : i32
    %c0_i32_1 = arith.constant 0 : i32
    return %arg1, %c0_i32, %c0_i32_0 : i32, i32, i32
  }
  func.func @transform_1(%arg0: i32, %arg1: i32) -> (i32, i32, i32) {
    %c0_i32 = arith.constant 0 : i32
    %c0_i32_0 = arith.constant 0 : i32
    %c0_i32_1 = arith.constant 0 : i32
    %c0_i32_2 = arith.constant 0 : i32
    return %c0_i32, %c0_i32_0, %c0_i32_1 : i32, i32, i32
  }
  func.func @transform_2(%arg0: i32, %arg1: i32) -> (i32, i32) {
    %c0_i32 = arith.constant 0 : i32
    %c0_i32_0 = arith.constant 0 : i32
    return %c0_i32, %arg0 : i32, i32
  }
  func.func @transform_3(%arg0: i32, %arg1: i32) -> (i32, i32, i32) {
    %c0_i32 = arith.constant 0 : i32
    %c0_i32_0 = arith.constant 0 : i32
    return %arg1, %c0_i32, %arg0 : i32, i32, i32
  }
}

</mosaic_0001>

<llo_original>
// kernel: discriminator_forward.10
$region0: #{discriminator_forward.10}
  #allocation0 [shape = 'u32[]', space=smem, size = 0x4, offset = 0x4, fixed_abs, tag = 'smem constant byte address 0x4 - core index']
  #allocation1 [shape = 'u32[144,128]{1,0:T(1,128)}', space=vmem, size = 0x12000, scoped, tag = 'internal scratch']
  %s0 = inlined_call_operand.vmem [shape: bf16[2,16,128], index: 0, kind: input, shape index: {}]
  %s1 = inlined_call_operand.vmem [shape: bf16[2,16,128], index: 1, kind: output, shape index: {}]
  %s2 = sld [smem:[#allocation0]]
  $region37: #{discriminator_forward.10} parent=0
    _
  %s4 = ssub.s32 1, %s2
  %s5 = scalar_select 0, %s4, %s2
  loop: start=0, step=1, limit=4
  $region2: #{discriminator_forward.10} parent=0 // loop_pre_header
    _
  $region3: #{discriminator_forward.10} parent=0 // loop_header
    %s7 = sphi 0, %s11
    %p8 = scmp.ge.s32.totalorder %s7, 4
    %s14 = sphi 0, %s26
    %s15 = sphi 0, %s22
    %s16 = sphi 0, %s14
    %s17 = sphi 0, %s15
    %s18 = sphi 0, %s16
    %s19 = sphi 0, %s17
    %s31 = sphi 0, %s33
    %s34 = sphi 0, %s31
    %s35 = sphi 0, %s34
    %s51 = sphi 0, %s35
    %s59 = sphi 0, %s61
    %s62 = sphi 0, %s59
    %s63 = sphi 0, %s62
    %s79 = sphi 0, %s63
  $region4: #{discriminator_forward.10} parent=0 // loop_header_branch
    %10 = sbr.rel (%p8) target = $region8
  $region5: #{discriminator_forward.10} parent=0 // loop_body
    %s12 = ssub.s32 %s7, 1
    %s13 = ssub.s32 %s7, 2
    %s20 = sadd.s32 1, %s15
    %p21 = scmp.ge.s32.totalorder %s20, 1
    %s22 = scalar_select %p21, 0, %s20
    %s23 = sadd.s32 1, %s14
    %s24 = scalar_select %p21, %s23, %s14
    %p25 = scmp.ge.s32.totalorder %s24, 2
    %s26 = scalar_select %p25, 0, %s24
    %s27 = ssub.s32 %s14, %s26
    %s28 = ssub.s32 %s15, %s22
    %s29 = sor.u32 %s27, %s28
    %p30 = scmp.eq.s32.totalorder %s29, 0
    %s32 = sadd.s32 %s31, 1
    %s33 = scalar_select %p30, %s31, %s32
    %p36 = pneg %p30
    %p37 = scmp.eq.s32.totalorder %s7, 1
    %p38 = por %p36, %p37
    %p39 = scmp.ne.s32.totalorder %s31, %s34
    %p40 = scmp.eq.s32.totalorder %s7, 0
    %p41 = por %p39, %p40
    %p42 = scmp.ne.s32.totalorder %s31, %s34
    %p43 = scmp.eq.s32.totalorder %s12, 1
    %p44 = por %p42, %p43
    %p45 = scmp.ne.s32.totalorder %s34, %s35
    %p46 = scmp.eq.s32.totalorder %s12, 0
    %p47 = por %p45, %p46
    %p48 = scmp.ne.s32.totalorder %s34, %s35
    %p49 = scmp.eq.s32.totalorder %s13, 1
    %p50 = por %p48, %p49
    %p52 = scmp.ne.s32.totalorder %s35, %s51
    %p53 = scmp.eq.s32.totalorder %s13, 0
    %p54 = por %p52, %p53
    %s55 = ssub.s32 %s14, %s26
    %s56 = ssub.s32 %s15, %s22
    %s57 = sor.u32 %s55, %s56
    %p58 = scmp.eq.s32.totalorder %s57, 0
    %s60 = sadd.s32 %s59, 1
    %s61 = scalar_select %p58, %s59, %s60
    %p64 = pneg %p58
    %p65 = scmp.eq.s32.totalorder %s7, 1
    %p66 = por %p64, %p65
    %p67 = scmp.ne.s32.totalorder %s59, %s62
    %p68 = scmp.eq.s32.totalorder %s7, 0
    %p69 = por %p67, %p68
    %p70 = scmp.ne.s32.totalorder %s59, %s62
    %p71 = scmp.eq.s32.totalorder %s12, 1
    %p72 = por %p70, %p71
    %p73 = scmp.ne.s32.totalorder %s62, %s63
    %p74 = scmp.eq.s32.totalorder %s12, 0
    %p75 = por %p73, %p74
    %p76 = scmp.ne.s32.totalorder %s62, %s63
    %p77 = scmp.eq.s32.totalorder %s13, 1
    %p78 = por %p76, %p77
    %p80 = scmp.ne.s32.totalorder %s63, %s79
    %p81 = scmp.eq.s32.totalorder %s13, 0
    %p82 = por %p80, %p81
    %p83 = scmp.le.s32.totalorder 1, %s7
    %p84 = scmp.lt.s32.totalorder %s7, 3
    %p85 = pnand %p83, %p84
    %p86 = pneg %p85
    // Predicated region
    $region9: #{discriminator_forward.10} parent=5 // pred_check
      _
    $region10: #{discriminator_forward.10} parent=5 // pred_check_branch
      %88 = sbr.rel (%p85) target = $region12
    $region11: #{discriminator_forward.10} parent=5 // pred_region
      %s89 = ssub.s32 %s7, 1
    $region12: #{discriminator_forward.10} parent=5 // pred_fallthru
      _
    %p90 = scmp.lt.s32.totalorder %s7, 2
    // Predicated region
    $region13: #{discriminator_forward.10} parent=5 // pred_check
      %p91 = pneg %p90
    $region14: #{discriminator_forward.10} parent=5 // pred_check_branch
      %93 = sbr.rel (%p91) target = $region16
    $region15: #{discriminator_forward.10} parent=5 // pred_region
      // Predicated region
      $region17: #{discriminator_forward.10} parent=15 // pred_check
        %p94 = pneg %p41
      $region18: #{discriminator_forward.10} parent=15 // pred_check_branch
        %96 = sbr.rel (%p94) target = $region20
      $region19: #{discriminator_forward.10} parent=15 // pred_region
        %p97 = scmp.lt.s32.totalorder %s14, 1
        %s98 = scalar_select %p97, %s14, 1
        %p99 = scmp.lt.s32.totalorder %s15, 0
        %s100 = scalar_select %p99, %s15, 0
        %s101 = smul.addr %s98, 2
        %s102 = sadd.s32 %s100, %s101
        %s103 = smul.addr %s102, 4
        %s104 = scalar_lea.vmem %s0, %s103
      $region20: #{discriminator_forward.10} parent=15 // pred_fallthru
        _
    $region16: #{discriminator_forward.10} parent=5 // pred_fallthru
      _
    %p105 = scmp.le.s32.totalorder 1, %s7
    %p106 = scmp.lt.s32.totalorder %s7, 3
    %p107 = pnand %p105, %p106
    %p108 = pneg %p107
    // Predicated region
    $region21: #{discriminator_forward.10} parent=5 // pred_check
      _
    $region22: #{discriminator_forward.10} parent=5 // pred_check_branch
      %110 = sbr.rel (%p107) target = $region24
    $region23: #{discriminator_forward.10} parent=5 // pred_region
      %s111 = ssub.s32 %s7, 1
      %p112 = scmp.lt.s32.totalorder %s16, 1
      %s113 = scalar_select %p112, %s16, 1
      %p114 = scmp.lt.s32.totalorder %s17, 0
      %s115 = scalar_select %p114, %s17, 0
      %s116 = smul.addr %s113, 2
      %s117 = sadd.s32 %s115, %s116
      %s118 = smul.addr %s117, 4
      %s119 = scalar_lea.vmem %s0, %s118
      %p120 = pneg %p47
      %p121 = pneg %p44
      %p122 = pneg %p75
      %p123 = pneg %p72
      %p124 = scmp.lt.s32.totalorder %s16, 1
      %s125 = scalar_select %p124, %s16, 1
      %p126 = scmp.lt.s32.totalorder %s17, 0
      %s127 = scalar_select %p126, %s17, 0
      %s128 = smul.addr %s125, 2
      %s129 = sadd.s32 %s127, %s128
      %s130 = smul.addr %s129, 4
      %s131 = scalar_lea.vmem %s1, %s130
      %p132 = scmp.lt.s32.totalorder %s16, 1
      %s133 = scalar_select %p132, %s16, 1
      %p134 = scmp.lt.s32.totalorder %s17, 0
      %s135 = scalar_select %p134, %s17, 0
      %s136 = smul.addr %s133, 2
      %s137 = sadd.s32 %s135, %s136
      %s138 = smul.addr %s137, 4
      %s139 = scalar_lea.vmem %s0, %s138
      %p140 = scmp.lt.s32.totalorder %s16, 1
      %s141 = scalar_select %p140, %s16, 1
      %p142 = scmp.lt.s32.totalorder %s17, 0
      %s143 = scalar_select %p142, %s17, 0
      %s144 = smul.addr %s141, 2
      %s145 = sadd.s32 %s143, %s144
      %s146 = smul.addr %s145, 4
      %s147 = scalar_lea.vmem %s1, %s146
      %v148 = vld [vmem:[%s139] sm:$0xf]
      %v149 = vld [vmem:[%s139 + $0x4] sm:$0xf]
      %v150 = vunpack.c.l.bf16 %v148
      %v151 = vunpack.c.l.bf16 %v149
      %v152 = vadd.f32 %v150, %v151
      %v153 = vrot.slane %v152, 4
      %v154 = vadd.f32 %v152, %v153
      %v155 = vrot.slane %v154, 2
      %v156 = vadd.f32 %v154, %v155
      %v157 = vrot.slane %v156, 1
      %v158 = vadd.f32 %v156, %v157
      %v159 = vmul.f32 %v158, 0.0625
      %v160 = vmul.f32 %v150, %v150
      %v161 = vmul.f32 %v151, %v151
      %v162 = vadd.f32 %v160, %v161
      %v163 = vrot.slane %v162, 4
      %v164 = vadd.f32 %v162, %v163
      %v165 = vrot.slane %v164, 2
      %v166 = vadd.f32 %v164, %v165
      %v167 = vrot.slane %v166, 1
      %v168 = vadd.f32 %v166, %v167
      %v169 = vmul.f32 %v168, 0.0625
      %v170 = vmul.f32 %v159, %v159
      %v171 = vsub.f32 %v169, %v170
      %v172 = vmax.f32 %v171, 0.0
      %v173 = vsub.f32 %v150, %v159
      %v174 = vsub.f32 %v151, %v159
      %v175 = vadd.f32 %v172, 1e-05
      %v176 = vrsqrt.pop %v175
      %v177 = vmul.f32 %v173, %v176
      %v178 = vmul.f32 %v174, %v176
      %vm179 = vcmp.ge.f32.partialorder %v177, 0.0
      %vm180 = vcmp.ge.f32.partialorder %v178, 0.0
      %v181 = vmul.f32 %v177, 0.2
      %v182 = vmul.f32 %v178, 0.2
      %v183 = vsel %vm179, %v177, %v181
      %v184 = vsel %vm180, %v178, %v182
      %v185 = vpack.c.bf16 %v184, %v183
      %v187 = vunpack.c.l.b16 %v185
      %v188 = vunpack.c.h.b16 %v185
      %v189 = vpack.c.b16 %v187, %v187
      %v190 = vpack.c.b16 %v188, %v188
      %193 = vst [vmem:[%s147] sm:$0xf] %v189
      %194 = vst [vmem:[%s147 + $0x4] sm:$0xf] %v190
      %p195 = scmp.lt.s32.totalorder %s16, 1
      %s196 = scalar_select %p195, %s16, 1
      %p197 = scmp.lt.s32.totalorder %s17, 0
      %s198 = scalar_select %p197, %s17, 0
      %s199 = smul.addr %s196, 2
      %s200 = sadd.s32 %s198, %s199
      %s201 = smul.addr %s200, 4
      %s202 = scalar_lea.vmem %s1, %s201
      // Predicated region
      $region25: #{discriminator_forward.10} parent=23 // pred_check
        %p203 = pneg %p72
      $region26: #{discriminator_forward.10} parent=23 // pred_check_branch
        %205 = sbr.rel (%p203) target = $region28
      $region27: #{discriminator_forward.10} parent=23 // pred_region
        _
      $region28: #{discriminator_forward.10} parent=23 // pred_fallthru
        _
    $region24: #{discriminator_forward.10} parent=5 // pred_fallthru
      _
    %p206 = scmp.le.s32.totalorder 2, %s7
    // Predicated region
    $region29: #{discriminator_forward.10} parent=5 // pred_check
      %p207 = pneg %p206
    $region30: #{discriminator_forward.10} parent=5 // pred_check_branch
      %209 = sbr.rel (%p207) target = $region32
    $region31: #{discriminator_forward.10} parent=5 // pred_region
      %s210 = ssub.s32 %s7, 2
      // Predicated region
      $region33: #{discriminator_forward.10} parent=31 // pred_check
        %p211 = pneg %p78
      $region34: #{discriminator_forward.10} parent=31 // pred_check_branch
        %213 = sbr.rel (%p211) target = $region36
      $region35: #{discriminator_forward.10} parent=31 // pred_region
        %p214 = scmp.lt.s32.totalorder %s18, 1
        %s215 = scalar_select %p214, %s18, 1
        %p216 = scmp.lt.s32.totalorder %s19, 0
        %s217 = scalar_select %p216, %s19, 0
        %s218 = smul.addr %s215, 2
        %s219 = sadd.s32 %s217, %s218
        %s220 = smul.addr %s219, 4
        %s221 = scalar_lea.vmem %s1, %s220
      $region36: #{discriminator_forward.10} parent=31 // pred_fallthru
        _
    $region32: #{discriminator_forward.10} parent=5 // pred_fallthru
      _
  $region6: #{discriminator_forward.10} parent=0 // loop_footer
    %s11 = sadd.s32 1, %s7
  $region7: #{discriminator_forward.10} parent=0 // loop_footer_branch
    %6 = sbr.rel target = $region3
  $region8: #{discriminator_forward.10} parent=0 // loop_exit
    _

// kernel: discriminator_forward.9
$region0: #{discriminator_forward.9}
  #allocation0 [shape = 'u32[]', space=smem, size = 0x4, offset = 0x4, fixed_abs, tag = 'smem constant byte address 0x4 - core index']
  #allocation1 [shape = 'u32[144,128]{1,0:T(1,128)}', space=vmem, size = 0x12000, scoped, tag = 'internal scratch']
  %s0 = inlined_call_operand.vmem [shape: bf16[2,100,64], index: 0, kind: input, shape index: {}]
  %s1 = inlined_call_operand.vmem [shape: bf16[9,64,128], index: 1, kind: input, shape index: {}]
  %s2 = inlined_call_operand.vmem [shape: bf16[2,20,128], index: 2, kind: output, shape index: {}]
  %s3 = sld [smem:[#allocation0]]
  $region41: #{discriminator_forward.9} parent=0
    _
  %s5 = ssub.s32 1, %s3
  %s6 = scalar_select 0, %s5, %s3
  loop: start=0, step=1, limit=4
  $region2: #{discriminator_forward.9} parent=0 // loop_pre_header
    _
  $region3: #{discriminator_forward.9} parent=0 // loop_header
    %s8 = sphi 0, %s12
    %p9 = scmp.ge.s32.totalorder %s8, 4
    %s15 = sphi 0, %s27
    %s16 = sphi 0, %s23
    %s17 = sphi 0, %s15
    %s18 = sphi 0, %s16
    %s19 = sphi 0, %s17
    %s20 = sphi 0, %s18
    %s30 = sphi 0, %s32
    %s33 = sphi 0, %s30
    %s34 = sphi 0, %s33
    %s50 = sphi 0, %s34
    %s56 = sphi 0, %s58
    %s59 = sphi 0, %s56
    %s60 = sphi 0, %s59
    %s76 = sphi 0, %s60
    %s84 = sphi 0, %s86
    %s87 = sphi 0, %s84
    %s88 = sphi 0, %s87
    %s104 = sphi 0, %s88
  $region4: #{discriminator_forward.9} parent=0 // loop_header_branch
    %11 = sbr.rel (%p9) target = $region8
  $region5: #{discriminator_forward.9} parent=0 // loop_body
    %s13 = ssub.s32 %s8, 1
    %s14 = ssub.s32 %s8, 2
    %s21 = sadd.s32 1, %s16
    %p22 = scmp.ge.s32.totalorder %s21, 2
    %s23 = scalar_select %p22, 0, %s21
    %s24 = sadd.s32 1, %s15
    %s25 = scalar_select %p22, %s24, %s15
    %p26 = scmp.ge.s32.totalorder %s25, 1
    %s27 = scalar_select %p26, 0, %s25
    %s28 = ssub.s32 %s16, %s23
    %p29 = scmp.eq.s32.totalorder %s28, 0
    %s31 = sadd.s32 %s30, 1
    %s32 = scalar_select %p29, %s30, %s31
    %p35 = pneg %p29
    %p36 = scmp.eq.s32.totalorder %s8, 1
    %p37 = por %p35, %p36
    %p38 = scmp.ne.s32.totalorder %s30, %s33
    %p39 = scmp.eq.s32.totalorder %s8, 0
    %p40 = por %p38, %p39
    %p41 = scmp.ne.s32.totalorder %s30, %s33
    %p42 = scmp.eq.s32.totalorder %s13, 1
    %p43 = por %p41, %p42
    %p44 = scmp.ne.s32.totalorder %s33, %s34
    %p45 = scmp.eq.s32.totalorder %s13, 0
    %p46 = por %p44, %p45
    %p47 = scmp.ne.s32.totalorder %s33, %s34
    %p48 = scmp.eq.s32.totalorder %s14, 1
    %p49 = por %p47, %p48
    %p51 = scmp.ne.s32.totalorder %s34, %s50
    %p52 = scmp.eq.s32.totalorder %s14, 0
    %p53 = por %p51, %p52
    %s54 = ssub.s32 %s15, %s27
    %p55 = scmp.eq.s32.totalorder %s54, 0
    %s57 = sadd.s32 %s56, 1
    %s58 = scalar_select %p55, %s56, %s57
    %p61 = pneg %p55
    %p62 = scmp.eq.s32.totalorder %s8, 1
    %p63 = por %p61, %p62
    %p64 = scmp.ne.s32.totalorder %s56, %s59
    %p65 = scmp.eq.s32.totalorder %s8, 0
    %p66 = por %p64, %p65
    %p67 = scmp.ne.s32.totalorder %s56, %s59
    %p68 = scmp.eq.s32.totalorder %s13, 1
    %p69 = por %p67, %p68
    %p70 = scmp.ne.s32.totalorder %s59, %s60
    %p71 = scmp.eq.s32.totalorder %s13, 0
    %p72 = por %p70, %p71
    %p73 = scmp.ne.s32.totalorder %s59, %s60
    %p74 = scmp.eq.s32.totalorder %s14, 1
    %p75 = por %p73, %p74
    %p77 = scmp.ne.s32.totalorder %s60, %s76
    %p78 = scmp.eq.s32.totalorder %s14, 0
    %p79 = por %p77, %p78
    %s80 = ssub.s32 %s16, %s23
    %s81 = ssub.s32 %s15, %s27
    %s82 = sor.u32 %s80, %s81
    %p83 = scmp.eq.s32.totalorder %s82, 0
    %s85 = sadd.s32 %s84, 1
    %s86 = scalar_select %p83, %s84, %s85
    %p89 = pneg %p83
    %p90 = scmp.eq.s32.totalorder %s8, 1
    %p91 = por %p89, %p90
    %p92 = scmp.ne.s32.totalorder %s84, %s87
    %p93 = scmp.eq.s32.totalorder %s8, 0
    %p94 = por %p92, %p93
    %p95 = scmp.ne.s32.totalorder %s84, %s87
    %p96 = scmp.eq.s32.totalorder %s13, 1
    %p97 = por %p95, %p96
    %p98 = scmp.ne.s32.totalorder %s87, %s88
    %p99 = scmp.eq.s32.totalorder %s13, 0
    %p100 = por %p98, %p99
    %p101 = scmp.ne.s32.totalorder %s87, %s88
    %p102 = scmp.eq.s32.totalorder %s14, 1
    %p103 = por %p101, %p102
    %p105 = scmp.ne.s32.totalorder %s88, %s104
    %p106 = scmp.eq.s32.totalorder %s14, 0
    %p107 = por %p105, %p106
    %p108 = scmp.le.s32.totalorder 1, %s8
    %p109 = scmp.lt.s32.totalorder %s8, 3
    %p110 = pnand %p108, %p109
    %p111 = pneg %p110
    // Predicated region
    $region9: #{discriminator_forward.9} parent=5 // pred_check
      _
    $region10: #{discriminator_forward.9} parent=5 // pred_check_branch
      %113 = sbr.rel (%p110) target = $region12
    $region11: #{discriminator_forward.9} parent=5 // pred_region
      %s114 = ssub.s32 %s8, 1
      // Predicated region
      $region13: #{discriminator_forward.9} parent=11 // pred_check
        %p115 = pneg %p72
      $region14: #{discriminator_forward.9} parent=11 // pred_check_branch
        %117 = sbr.rel (%p115) target = $region16
      $region15: #{discriminator_forward.9} parent=11 // pred_region
        %p118 = scmp.lt.s32.totalorder %s17, 0
        %s119 = scalar_select %p118, %s17, 0
        %s120 = smul.addr %s119, 4
        %s121 = scalar_lea.vmem %s1, %s120
      $region16: #{discriminator_forward.9} parent=11 // pred_fallthru
        _
    $region12: #{discriminator_forward.9} parent=5 // pred_fallthru
      _
    %p122 = scmp.lt.s32.totalorder %s8, 2
    // Predicated region
    $region17: #{discriminator_forward.9} parent=5 // pred_check
      %p123 = pneg %p122
    $region18: #{discriminator_forward.9} parent=5 // pred_check_branch
      %125 = sbr.rel (%p123) target = $region20
    $region19: #{discriminator_forward.9} parent=5 // pred_region
      // Predicated region
      $region21: #{discriminator_forward.9} parent=19 // pred_check
        %p126 = pneg %p40
      $region22: #{discriminator_forward.9} parent=19 // pred_check_branch
        %128 = sbr.rel (%p126) target = $region24
      $region23: #{discriminator_forward.9} parent=19 // pred_region
        %p129 = scmp.lt.s32.totalorder %s16, 1
        %s130 = scalar_select %p129, %s16, 1
        %s131 = smul.addr %s130, 13
        %s132 = smul.addr %s131, 4
        %s133 = scalar_lea.vmem %s0, %s132
      $region24: #{discriminator_forward.9} parent=19 // pred_fallthru
        _
    $region20: #{discriminator_forward.9} parent=5 // pred_fallthru
      _
    %p134 = scmp.le.s32.totalorder 1, %s8
    %p135 = scmp.lt.s32.totalorder %s8, 3
    %p136 = pnand %p134, %p135
    %p137 = pneg %p136
    // Predicated region
    $region25: #{discriminator_forward.9} parent=5 // pred_check
      _
    $region26: #{discriminator_forward.9} parent=5 // pred_check_branch
      %139 = sbr.rel (%p136) target = $region28
    $region27: #{discriminator_forward.9} parent=5 // pred_region
      %s140 = ssub.s32 %s8, 1
      %p141 = scmp.lt.s32.totalorder %s18, 1
      %s142 = scalar_select %p141, %s18, 1
      %s143 = smul.addr %s142, 13
      %s144 = smul.addr %s143, 4
      %s145 = scalar_lea.vmem %s0, %s144
      %p146 = pneg %p46
      %p147 = pneg %p43
      %p148 = scmp.lt.s32.totalorder %s17, 0
      %s149 = scalar_select %p148, %s17, 0
      %s150 = smul.addr %s149, 4
      %s151 = scalar_lea.vmem %s1, %s150
      %p152 = pneg %p72
      %p153 = pneg %p69
      %p154 = pneg %p100
      %p155 = pneg %p97
      %p156 = scmp.lt.s32.totalorder %s18, 1
      %s157 = scalar_select %p156, %s18, 1
      %p158 = scmp.lt.s32.totalorder %s17, 0
      %s159 = scalar_select %p158, %s17, 0
      %s160 = smul.addr %s157, 3
      %s161 = sadd.s32 %s159, %s160
      %s162 = smul.addr %s161, 4
      %s163 = scalar_lea.vmem %s2, %s162
      %p164 = scmp.lt.s32.totalorder %s18, 1
      %s165 = scalar_select %p164, %s18, 1
      %s166 = smul.addr %s165, 13
      %s167 = smul.addr %s166, 4
      %s168 = scalar_lea.vmem %s0, %s167
      %p169 = scmp.lt.s32.totalorder %s17, 0
      %s170 = scalar_select %p169, %s17, 0
      %s171 = smul.addr %s170, 4
      %s172 = scalar_lea.vmem %s1, %s171
      %p173 = scmp.lt.s32.totalorder %s18, 1
      %s174 = scalar_select %p173, %s18, 1
      %p175 = scmp.lt.s32.totalorder %s17, 0
      %s176 = scalar_select %p175, %s17, 0
      %s177 = smul.addr %s174, 3
      %s178 = sadd.s32 %s176, %s177
      %s179 = smul.addr %s178, 4
      %s180 = scalar_lea.vmem %s2, %s179
      %v182 = vld [vmem:[%s168] sm:$0xf]
      %v183 = vld [vmem:[%s168 + $0x4] sm:$0xf]
      %v184 = vld [vmem:[%s168 + $0x8] sm:$0x3]
      %v185 = vld [vmem:[%s172] sm:$0xf]
      %v186 = vld [vmem:[%s172 + $0x4] sm:$0xf]
      %v187 = vld [vmem:[%s172 + $0x8] sm:$0xf]
      %v188 = vld [vmem:[%s172 + $0xc] sm:$0xf]
      %v189 = vld [vmem:[%s172 + $0x10] sm:$0xf]
      %v190 = vld [vmem:[%s172 + $0x14] sm:$0xf]
      %v191 = vld [vmem:[%s172 + $0x18] sm:$0xf]
      %v192 = vld [vmem:[%s172 + $0x1c] sm:$0xf]
      %v193 = vld [vmem:[%s168 + $0xc] sm:$0xf]
      %v194 = vld [vmem:[%s168 + $0x10] sm:$0xf]
      %v195 = vld [vmem:[%s168 + $0x14] sm:$0x7]
      %s196 = scalar_lea.vmem %s172, 32
      %v197 = vld [vmem:[%s196] sm:$0xf]
      %v198 = vld [vmem:[%s196 + $0x4] sm:$0xf]
      %v199 = vld [vmem:[%s196 + $0x8] sm:$0xf]
      %v200 = vld [vmem:[%s196 + $0xc] sm:$0xf]
      %v201 = vld [vmem:[%s196 + $0x10] sm:$0xf]
      %v202 = vld [vmem:[%s196 + $0x14] sm:$0xf]
      %v203 = vld [vmem:[%s196 + $0x18] sm:$0xf]
      %v204 = vld [vmem:[%s196 + $0x1c] sm:$0xf]
      %v208 = vunpack.c.l.b16 %v193
      %v209 = vunpack.c.l.b16 %v194
      %v210 = vunpack.c.l.b16 %v195
      %v211 = vpack.c.b16 %v209, %v208
      %v212 = vpack.c.b16 %v210, %v210
      %vm213 = vsmask.f32 7424
      %v215 = vshrl.u32 %v211, 16
      %v217 = vshll.u32 %v211, 16
      %v219 = vrot.slane %v217, 1
      %v220 = vor.u32 %v215, %v219
      %v222 = vshll.u32 %v212, 16
      %v224 = vrot.slane %v222, 1
      %v225 = vsel %vm213, %v220, %v224
      %v226 = vshrl.u32 %v212, 16
      %v228 = vor.u32 %v226, %v224
      %v237 = vunpack.c.l.b16 %v197
      %v238 = vunpack.c.l.b16 %v198
      %v239 = vunpack.c.l.b16 %v199
      %v240 = vunpack.c.l.b16 %v200
      %v241 = vunpack.c.l.b16 %v201
      %v242 = vunpack.c.l.b16 %v202
      %v243 = vunpack.c.l.b16 %v203
      %v244 = vunpack.c.l.b16 %v204
      %v245 = vpack.c.b16 %v238, %v237
      %v246 = vpack.c.b16 %v240, %v239
      %v247 = vpack.c.b16 %v242, %v241
      %v248 = vpack.c.b16 %v244, %v243
      %vm253 = vcmask 523264
      %v255 = vsel %vm253, %v225, 0
      %v258 = vsel %vm253, %v228, 0
      %260 = vmatprep.subr.bf16.mxu0 0
      %261 = vmatpush1.bf16.msra.mxu0 %v245
      %262 = vmatprep.subr.bf16.mxu0 0
      %263 = vmatpush1.bf16.msra.mxu0 %v246
      %264 = vmatprep.subr.bf16.mxu0 0
      %265 = vmatpush1.bf16.msra.mxu0 %v247
      %266 = vmatprep.subr.bf16.mxu0 0
      %267 = vmatpush1.bf16.msra.mxu0 %v248
      %268 = vmatprep.subr.bf16.mxu0 0
      %269 = vmatpush1.bf16.msra.mxu0 0
      %270 = vmatprep.subr.bf16.mxu0 0
      %271 = vmatpush1.bf16.msra.mxu0 0
      %272 = vmatprep.subr.bf16.mxu0 0
      %273 = vmatpush1.bf16.msra.mxu0 0
      %274 = vmatprep.subr.bf16.mxu0 0
      %275 = vmatpush1.bf16.msra.mxu0 0
      %276 = vmatprep.subr.bf16.mxu0 0
      %277 = vmatpush1.bf16.msra.mxu0 0
      %278 = vmatprep.subr.bf16.mxu0 0
      %279 = vmatpush1.bf16.msra.mxu0 0
      %280 = vmatprep.subr.bf16.mxu0 0
      %281 = vmatpush1.bf16.msra.mxu0 0
      %282 = vmatprep.subr.bf16.mxu0 0
      %283 = vmatpush1.bf16.msra.mxu0 0
      %284 = vmatprep.subr.bf16.mxu0 0
      %285 = vmatpush1.bf16.msra.mxu0 0
      %286 = vmatprep.subr.bf16.mxu0 0
      %287 = vmatpush1.bf16.msra.mxu0 0
      %288 = vmatprep.subr.bf16.mxu0 0
      %289 = vmatpush1.bf16.msra.mxu0 0
      %290 = vmatprep.subr.bf16.mxu0 0
      %291 = vmatpush1.bf16.msra.mxu0 0
      %292 = vmatprep.mubr.bf16.mxu0 0
      %293 = vmatmul.mubr.bf16.gmra.mrb[0].mxu0 %v255
      %v294 = vpop.f32.mrb[0].mxu0
      %v295 = vadd.f32 0.0, %v294
      %v296 = vpop.f32.mrb[0].mxu0
      %v297 = vpop.f32.mrb[0].mxu0
      %v298 = vadd.f32 0.0, %v297
      %v299 = vpop.f32.mrb[0].mxu0
      %300 = vmatprep.mubr.bf16.mxu0 0
      %301 = vmatmul.mubr.bf16.gmra.mrb[0].mxu0 %v258
      %v302 = vpop.f32.mrb[0].mxu0
      %v303 = vadd.f32 0.0, %v302
      %v304 = vpop.f32.mrb[0].mxu0
      %v305 = vpop.f32.mrb[0].mxu0
      %v306 = vpop.f32.mrb[0].mxu0
      %307 = vdwg.mxu0
      %v311 = vunpack.c.l.b16 %v182
      %v312 = vunpack.c.l.b16 %v183
      %v313 = vunpack.c.l.b16 %v184
      %v314 = vpack.c.b16 %v312, %v311
      %v315 = vpack.c.b16 %v313, %v313
      %v324 = vunpack.c.l.b16 %v185
      %v325 = vunpack.c.l.b16 %v186
      %v326 = vunpack.c.l.b16 %v187
      %v327 = vunpack.c.l.b16 %v188
      %v328 = vunpack.c.l.b16 %v189
      %v329 = vunpack.c.l.b16 %v190
      %v330 = vunpack.c.l.b16 %v191
      %v331 = vunpack.c.l.b16 %v192
      %v332 = vpack.c.b16 %v325, %v324
      %v333 = vpack.c.b16 %v327, %v326
      %v334 = vpack.c.b16 %v329, %v328
      %v335 = vpack.c.b16 %v331, %v330
      %v341 = vsel %vm253, %v314, 0
      %v344 = vsel %vm253, %v315, 0
      %346 = vmatprep.subr.bf16.mxu0 0
      %347 = vmatpush1.bf16.msra.mxu0 %v332
      %348 = vmatprep.subr.bf16.mxu0 0
      %349 = vmatpush1.bf16.msra.mxu0 %v333
      %350 = vmatprep.subr.bf16.mxu0 0
      %351 = vmatpush1.bf16.msra.mxu0 %v334
      %352 = vmatprep.subr.bf16.mxu0 0
      %353 = vmatpush1.bf16.msra.mxu0 %v335
      %354 = vmatprep.subr.bf16.mxu0 0
      %355 = vmatpush1.bf16.msra.mxu0 0
      %356 = vmatprep.subr.bf16.mxu0 0
      %357 = vmatpush1.bf16.msra.mxu0 0
      %358 = vmatprep.subr.bf16.mxu0 0
      %359 = vmatpush1.bf16.msra.mxu0 0
      %360 = vmatprep.subr.bf16.mxu0 0
      %361 = vmatpush1.bf16.msra.mxu0 0
      %362 = vmatprep.subr.bf16.mxu0 0
      %363 = vmatpush1.bf16.msra.mxu0 0
      %364 = vmatprep.subr.bf16.mxu0 0
      %365 = vmatpush1.bf16.msra.mxu0 0
      %366 = vmatprep.subr.bf16.mxu0 0
      %367 = vmatpush1.bf16.msra.mxu0 0
      %368 = vmatprep.subr.bf16.mxu0 0
      %369 = vmatpush1.bf16.msra.mxu0 0
      %370 = vmatprep.subr.bf16.mxu0 0
      %371 = vmatpush1.bf16.msra.mxu0 0
      %372 = vmatprep.subr.bf16.mxu0 0
      %373 = vmatpush1.bf16.msra.mxu0 0
      %374 = vmatprep.subr.bf16.mxu0 0
      %375 = vmatpush1.bf16.msra.mxu0 0
      %376 = vmatprep.subr.bf16.mxu0 0
      %377 = vmatpush1.bf16.msra.mxu0 0
      %378 = vmatprep.mubr.bf16.mxu0 0
      %379 = vmatmul.mubr.bf16.gmra.mrb[0].mxu0 %v341
      %v380 = vpop.f32.mrb[0].mxu0
      %v381 = vadd.f32 %v295, %v380
      %v382 = vpop.f32.mrb[0].mxu0
      %v383 = vpop.f32.mrb[0].mxu0
      %v384 = vadd.f32 %v298, %v383
      %v385 = vpop.f32.mrb[0].mxu0
      %386 = vmatprep.mubr.bf16.mxu0 0
      %387 = vmatmul.mubr.bf16.gmra.mrb[0].mxu0 %v344
      %v388 = vpop.f32.mrb[0].mxu0
      %v389 = vadd.f32 %v303, %v388
      %v390 = vpop.f32.mrb[0].mxu0
      %v391 = vpop.f32.mrb[0].mxu0
      %v392 = vpop.f32.mrb[0].mxu0
      %393 = vdwg.mxu0
      %v394 = vld [vmem:[%s168 + $0x8] sm:$0x7]
      %s395 = scalar_lea.vmem %s172, 64
      %v396 = vld [vmem:[%s395] sm:$0xf]
      %v397 = vld [vmem:[%s395 + $0x4] sm:$0xf]
      %v398 = vld [vmem:[%s395 + $0x8] sm:$0xf]
      %v399 = vld [vmem:[%s395 + $0xc] sm:$0xf]
      %v400 = vld [vmem:[%s395 + $0x10] sm:$0xf]
      %v401 = vld [vmem:[%s395 + $0x14] sm:$0xf]
      %v402 = vld [vmem:[%s395 + $0x18] sm:$0xf]
      %v403 = vld [vmem:[%s395 + $0x1c] sm:$0xf]
      %v405 = vunpack.c.l.b16 %v394
      %v406 = vpack.c.b16 %v405, %v405
      %v407 = vshrl.u32 %v314, 16
      %v409 = vshll.u32 %v314, 16
      %v411 = vrot.slane %v409, 1
      %v412 = vor.u32 %v407, %v411
      %v414 = vshll.u32 %v406, 16
      %v416 = vrot.slane %v414, 1
      %v417 = vsel %vm213, %v412, %v416
      %v418 = vshrl.u32 %v406, 16
      %v420 = vor.u32 %v418, %v416
      %v429 = vunpack.c.l.b16 %v396
      %v430 = vunpack.c.l.b16 %v397
      %v431 = vunpack.c.l.b16 %v398
      %v432 = vunpack.c.l.b16 %v399
      %v433 = vunpack.c.l.b16 %v400
      %v434 = vunpack.c.l.b16 %v401
      %v435 = vunpack.c.l.b16 %v402
      %v436 = vunpack.c.l.b16 %v403
      %v437 = vpack.c.b16 %v430, %v429
      %v438 = vpack.c.b16 %v432, %v431
      %v439 = vpack.c.b16 %v434, %v433
      %v440 = vpack.c.b16 %v436, %v435
      %v446 = vsel %vm253, %v417, 0
      %v449 = vsel %vm253, %v420, 0
      %451 = vmatprep.subr.bf16.mxu0 0
      %452 = vmatpush1.bf16.msra.mxu0 %v437
      %453 = vmatprep.subr.bf16.mxu0 0
      %454 = vmatpush1.bf16.msra.mxu0 %v438
      %455 = vmatprep.subr.bf16.mxu0 0
      %456 = vmatpush1.bf16.msra.mxu0 %v439
      %457 = vmatprep.subr.bf16.mxu0 0
      %458 = vmatpush1.bf16.msra.mxu0 %v440
      %459 = vmatprep.subr.bf16.mxu0 0
      %460 = vmatpush1.bf16.msra.mxu0 0
      %461 = vmatprep.subr.bf16.mxu0 0
      %462 = vmatpush1.bf16.msra.mxu0 0
      %463 = vmatprep.subr.bf16.mxu0 0
      %464 = vmatpush1.bf16.msra.mxu0 0
      %465 = vmatprep.subr.bf16.mxu0 0
      %466 = vmatpush1.bf16.msra.mxu0 0
      %467 = vmatprep.subr.bf16.mxu0 0
      %468 = vmatpush1.bf16.msra.mxu0 0
      %469 = vmatprep.subr.bf16.mxu0 0
      %470 = vmatpush1.bf16.msra.mxu0 0
      %471 = vmatprep.subr.bf16.mxu0 0
      %472 = vmatpush1.bf16.msra.mxu0 0
      %473 = vmatprep.subr.bf16.mxu0 0
      %474 = vmatpush1.bf16.msra.mxu0 0
      %475 = vmatprep.subr.bf16.mxu0 0
      %476 = vmatpush1.bf16.msra.mxu0 0
      %477 = vmatprep.subr.bf16.mxu0 0
      %478 = vmatpush1.bf16.msra.mxu0 0
      %479 = vmatprep.subr.bf16.mxu0 0
      %480 = vmatpush1.bf16.msra.mxu0 0
      %481 = vmatprep.subr.bf16.mxu0 0
      %482 = vmatpush1.bf16.msra.mxu0 0
      %483 = vmatprep.mubr.bf16.mxu0 0
      %484 = vmatmul.mubr.bf16.gmra.mrb[0].mxu0 %v446
      %v485 = vpop.f32.mrb[0].mxu0
      %v486 = vadd.f32 0.0, %v485
      %v487 = vpop.f32.mrb[0].mxu0
      %v488 = vpop.f32.mrb[0].mxu0
      %v489 = vadd.f32 0.0, %v488
      %v490 = vpop.f32.mrb[0].mxu0
      %491 = vmatprep.mubr.bf16.mxu0 0
      %492 = vmatmul.mubr.bf16.gmra.mrb[0].mxu0 %v449
      %v493 = vpop.f32.mrb[0].mxu0
      %v494 = vadd.f32 0.0, %v493
      %v495 = vpop.f32.mrb[0].mxu0
      %v496 = vpop.f32.mrb[0].mxu0
      %v497 = vpop.f32.mrb[0].mxu0
      %498 = vdwg.mxu0
      %v499 = vadd.f32 %v381, %v486
      %v500 = vadd.f32 %v384, %v489
      %v501 = vadd.f32 %v389, %v494
      %v502 = vld [vmem:[%s168 + $0x18] sm:$0xe]
      %v503 = vld [vmem:[%s168 + $0x1c] sm:$0xf]
      %v504 = vld [vmem:[%s168 + $0x20] sm:$0x7]
      %s505 = scalar_lea.vmem %s172, 96
      %v506 = vld [vmem:[%s505] sm:$0xf]
      %v507 = vld [vmem:[%s505 + $0x4] sm:$0xf]
      %v508 = vld [vmem:[%s505 + $0x8] sm:$0xf]
      %v509 = vld [vmem:[%s505 + $0xc] sm:$0xf]
      %v510 = vld [vmem:[%s505 + $0x10] sm:$0xf]
      %v511 = vld [vmem:[%s505 + $0x14] sm:$0xf]
      %v512 = vld [vmem:[%s505 + $0x18] sm:$0xf]
      %v513 = vld [vmem:[%s505 + $0x1c] sm:$0xf]
      %v517 = vunpack.c.l.b16 %v502
      %v518 = vunpack.c.l.b16 %v503
      %v519 = vunpack.c.l.b16 %v504
      %v520 = vpack.c.b16 %v518, %v517
      %v521 = vpack.c.b16 %v519, %v519
      %vm522 = vcmask 1046528
      %v523 = vrot.slane %v520, 1
      %v524 = vrot.slane %v521, 1
      %v525 = vsel %vm522, %v523, %v524
      %v534 = vunpack.c.l.b16 %v506
      %v535 = vunpack.c.l.b16 %v507
      %v536 = vunpack.c.l.b16 %v508
      %v537 = vunpack.c.l.b16 %v509
      %v538 = vunpack.c.l.b16 %v510
      %v539 = vunpack.c.l.b16 %v511
      %v540 = vunpack.c.l.b16 %v512
      %v541 = vunpack.c.l.b16 %v513
      %v542 = vpack.c.b16 %v535, %v534
      %v543 = vpack.c.b16 %v537, %v536
      %v544 = vpack.c.b16 %v539, %v538
      %v545 = vpack.c.b16 %v541, %v540
      %v551 = vsel %vm253, %v525, 0
      %v554 = vsel %vm253, %v524, 0
      %556 = vmatprep.subr.bf16.mxu0 0
      %557 = vmatpush1.bf16.msra.mxu0 %v542
      %558 = vmatprep.subr.bf16.mxu0 0
      %559 = vmatpush1.bf16.msra.mxu0 %v543
      %560 = vmatprep.subr.bf16.mxu0 0
      %561 = vmatpush1.bf16.msra.mxu0 %v544
      %562 = vmatprep.subr.bf16.mxu0 0
      %563 = vmatpush1.bf16.msra.mxu0 %v545
      %564 = vmatprep.subr.bf16.mxu0 0
      %565 = vmatpush1.bf16.msra.mxu0 0
      %566 = vmatprep.subr.bf16.mxu0 0
      %567 = vmatpush1.bf16.msra.mxu0 0
      %568 = vmatprep.subr.bf16.mxu0 0
      %569 = vmatpush1.bf16.msra.mxu0 0
      %570 = vmatprep.subr.bf16.mxu0 0
      %571 = vmatpush1.bf16.msra.mxu0 0
      %572 = vmatprep.subr.bf16.mxu0 0
      %573 = vmatpush1.bf16.msra.mxu0 0
      %574 = vmatprep.subr.bf16.mxu0 0
      %575 = vmatpush1.bf16.msra.mxu0 0
      %576 = vmatprep.subr.bf16.mxu0 0
      %577 = vmatpush1.bf16.msra.mxu0 0
      %578 = vmatprep.subr.bf16.mxu0 0
      %579 = vmatpush1.bf16.msra.mxu0 0
      %580 = vmatprep.subr.bf16.mxu0 0
      %581 = vmatpush1.bf16.msra.mxu0 0
      %582 = vmatprep.subr.bf16.mxu0 0
      %583 = vmatpush1.bf16.msra.mxu0 0
      %584 = vmatprep.subr.bf16.mxu0 0
      %585 = vmatpush1.bf16.msra.mxu0 0
      %586 = vmatprep.subr.bf16.mxu0 0
      %587 = vmatpush1.bf16.msra.mxu0 0
      %588 = vmatprep.mubr.bf16.mxu0 0
      %589 = vmatmul.mubr.bf16.gmra.mrb[0].mxu0 %v551
      %v590 = vpop.f32.mrb[0].mxu0
      %v591 = vadd.f32 0.0, %v590
      %v592 = vpop.f32.mrb[0].mxu0
      %v593 = vpop.f32.mrb[0].mxu0
      %v594 = vadd.f32 0.0, %v593
      %v595 = vpop.f32.mrb[0].mxu0
      %596 = vmatprep.mubr.bf16.mxu0 0
      %597 = vmatmul.mubr.bf16.gmra.mrb[0].mxu0 %v554
      %v598 = vpop.f32.mrb[0].mxu0
      %v599 = vadd.f32 0.0, %v598
      %v600 = vpop.f32.mrb[0].mxu0
      %v601 = vpop.f32.mrb[0].mxu0
      %v602 = vpop.f32.mrb[0].mxu0
      %603 = vdwg.mxu0
      %v604 = vadd.f32 %v499, %v591
      %v605 = vadd.f32 %v500, %v594
      %v606 = vadd.f32 %v501, %v599
      %v607 = vld [vmem:[%s168 + $0x24] sm:$0xe]
      %v608 = vld [vmem:[%s168 + $0x28] sm:$0xf]
      %v609 = vld [vmem:[%s168 + $0x2c] sm:$0xf]
      %s610 = scalar_lea.vmem %s172, 128
      %v611 = vld [vmem:[%s610] sm:$0xf]
      %v612 = vld [vmem:[%s610 + $0x4] sm:$0xf]
      %v613 = vld [vmem:[%s610 + $0x8] sm:$0xf]
      %v614 = vld [vmem:[%s610 + $0xc] sm:$0xf]
      %v615 = vld [vmem:[%s610 + $0x10] sm:$0xf]
      %v616 = vld [vmem:[%s610 + $0x14] sm:$0xf]
      %v617 = vld [vmem:[%s610 + $0x18] sm:$0xf]
      %v618 = vld [vmem:[%s610 + $0x1c] sm:$0xf]
      %v622 = vunpack.c.l.b16 %v607
      %v623 = vunpack.c.l.b16 %v608
      %v624 = vunpack.c.l.b16 %v609
      %v625 = vpack.c.b16 %v623, %v622
      %v626 = vpack.c.b16 %v624, %v624
      %vm627 = vsmask.f32 6400
      %v629 = vshrl.u32 %v625, 16
      %v631 = vrot.slane %v629, 1
      %v632 = vshll.u32 %v625, 16
      %v634 = vrot.slane %v632, 2
      %v635 = vor.u32 %v631, %v634
      %v637 = vshrl.u32 %v626, 16
      %v639 = vrot.slane %v637, 1
      %v640 = vshll.u32 %v626, 16
      %v642 = vrot.slane %v640, 2
      %v643 = vor.u32 %v639, %v642
      %v644 = vsel %vm627, %v635, %v643
      %v653 = vunpack.c.l.b16 %v611
      %v654 = vunpack.c.l.b16 %v612
      %v655 = vunpack.c.l.b16 %v613
      %v656 = vunpack.c.l.b16 %v614
      %v657 = vunpack.c.l.b16 %v615
      %v658 = vunpack.c.l.b16 %v616
      %v659 = vunpack.c.l.b16 %v617
      %v660 = vunpack.c.l.b16 %v618
      %v661 = vpack.c.b16 %v654, %v653
      %v662 = vpack.c.b16 %v656, %v655
      %v663 = vpack.c.b16 %v658, %v657
      %v664 = vpack.c.b16 %v660, %v659
      %v670 = vsel %vm253, %v644, 0
      %v673 = vsel %vm253, %v643, 0
      %675 = vmatprep.subr.bf16.mxu0 0
      %676 = vmatpush1.bf16.msra.mxu0 %v661
      %677 = vmatprep.subr.bf16.mxu0 0
      %678 = vmatpush1.bf16.msra.mxu0 %v662
      %679 = vmatprep.subr.bf16.mxu0 0
      %680 = vmatpush1.bf16.msra.mxu0 %v663
      %681 = vmatprep.subr.bf16.mxu0 0
      %682 = vmatpush1.bf16.msra.mxu0 %v664
      %683 = vmatprep.subr.bf16.mxu0 0
      %684 = vmatpush1.bf16.msra.mxu0 0
      %685 = vmatprep.subr.bf16.mxu0 0
      %686 = vmatpush1.bf16.msra.mxu0 0
      %687 = vmatprep.subr.bf16.mxu0 0
      %688 = vmatpush1.bf16.msra.mxu0 0
      %689 = vmatprep.subr.bf16.mxu0 0
      %690 = vmatpush1.bf16.msra.mxu0 0
      %691 = vmatprep.subr.bf16.mxu0 0
      %692 = vmatpush1.bf16.msra.mxu0 0
      %693 = vmatprep.subr.bf16.mxu0 0
      %694 = vmatpush1.bf16.msra.mxu0 0
      %695 = vmatprep.subr.bf16.mxu0 0
      %696 = vmatpush1.bf16.msra.mxu0 0
      %697 = vmatprep.subr.bf16.mxu0 0
      %698 = vmatpush1.bf16.msra.mxu0 0
      %699 = vmatprep.subr.bf16.mxu0 0
      %700 = vmatpush1.bf16.msra.mxu0 0
      %701 = vmatprep.subr.bf16.mxu0 0
      %702 = vmatpush1.bf16.msra.mxu0 0
      %703 = vmatprep.subr.bf16.mxu0 0
      %704 = vmatpush1.bf16.msra.mxu0 0
      %705 = vmatprep.subr.bf16.mxu0 0
      %706 = vmatpush1.bf16.msra.mxu0 0
      %707 = vmatprep.mubr.bf16.mxu0 0
      %708 = vmatmul.mubr.bf16.gmra.mrb[0].mxu0 %v670
      %v709 = vpop.f32.mrb[0].mxu0
      %v710 = vadd.f32 0.0, %v709
      %v711 = vpop.f32.mrb[0].mxu0
      %v712 = vpop.f32.mrb[0].mxu0
      %v713 = vadd.f32 0.0, %v712
      %v714 = vpop.f32.mrb[0].mxu0
      %715 = vmatprep.mubr.bf16.mxu0 0
      %716 = vmatmul.mubr.bf16.gmra.mrb[0].mxu0 %v673
      %v717 = vpop.f32.mrb[0].mxu0
      %v718 = vadd.f32 0.0, %v717
      %v719 = vpop.f32.mrb[0].mxu0
      %v720 = vpop.f32.mrb[0].mxu0
      %v721 = vpop.f32.mrb[0].mxu0
      %722 = vdwg.mxu0
      %v723 = vadd.f32 %v604, %v710
      %v724 = vadd.f32 %v605, %v713
      %v725 = vadd.f32 %v606, %v718
      %v726 = vld [vmem:[%s168 + $0x20] sm:$0xf]
      %s727 = scalar_lea.vmem %s172, 160
      %v728 = vld [vmem:[%s727] sm:$0xf]
      %v729 = vld [vmem:[%s727 + $0x4] sm:$0xf]
      %v730 = vld [vmem:[%s727 + $0x8] sm:$0xf]
      %v731 = vld [vmem:[%s727 + $0xc] sm:$0xf]
      %v732 = vld [vmem:[%s727 + $0x10] sm:$0xf]
      %v733 = vld [vmem:[%s727 + $0x14] sm:$0xf]
      %v734 = vld [vmem:[%s727 + $0x18] sm:$0xf]
      %v735 = vld [vmem:[%s727 + $0x1c] sm:$0xf]
      %v737 = vunpack.c.l.b16 %v726
      %v738 = vpack.c.b16 %v737, %v737
      %v740 = vshrl.u32 %v520, 16
      %v742 = vrot.slane %v740, 1
      %v743 = vshll.u32 %v520, 16
      %v745 = vrot.slane %v743, 2
      %v746 = vor.u32 %v742, %v745
      %v748 = vshrl.u32 %v738, 16
      %v750 = vrot.slane %v748, 1
      %v751 = vshll.u32 %v738, 16
      %v753 = vrot.slane %v751, 2
      %v754 = vor.u32 %v750, %v753
      %v755 = vsel %vm627, %v746, %v754
      %v764 = vunpack.c.l.b16 %v728
      %v765 = vunpack.c.l.b16 %v729
      %v766 = vunpack.c.l.b16 %v730
      %v767 = vunpack.c.l.b16 %v731
      %v768 = vunpack.c.l.b16 %v732
      %v769 = vunpack.c.l.b16 %v733
      %v770 = vunpack.c.l.b16 %v734
      %v771 = vunpack.c.l.b16 %v735
      %v772 = vpack.c.b16 %v765, %v764
      %v773 = vpack.c.b16 %v767, %v766
      %v774 = vpack.c.b16 %v769, %v768
      %v775 = vpack.c.b16 %v771, %v770
      %v781 = vsel %vm253, %v755, 0
      %v784 = vsel %vm253, %v754, 0
      %786 = vmatprep.subr.bf16.mxu0 0
      %787 = vmatpush1.bf16.msra.mxu0 %v772
      %788 = vmatprep.subr.bf16.mxu0 0
      %789 = vmatpush1.bf16.msra.mxu0 %v773
      %790 = vmatprep.subr.bf16.mxu0 0
      %791 = vmatpush1.bf16.msra.mxu0 %v774
      %792 = vmatprep.subr.bf16.mxu0 0
      %793 = vmatpush1.bf16.msra.mxu0 %v775
      %794 = vmatprep.subr.bf16.mxu0 0
      %795 = vmatpush1.bf16.msra.mxu0 0
      %796 = vmatprep.subr.bf16.mxu0 0
      %797 = vmatpush1.bf16.msra.mxu0 0
      %798 = vmatprep.subr.bf16.mxu0 0
      %799 = vmatpush1.bf16.msra.mxu0 0
      %800 = vmatprep.subr.bf16.mxu0 0
      %801 = vmatpush1.bf16.msra.mxu0 0
      %802 = vmatprep.subr.bf16.mxu0 0
      %803 = vmatpush1.bf16.msra.mxu0 0
      %804 = vmatprep.subr.bf16.mxu0 0
      %805 = vmatpush1.bf16.msra.mxu0 0
      %806 = vmatprep.subr.bf16.mxu0 0
      %807 = vmatpush1.bf16.msra.mxu0 0
      %808 = vmatprep.subr.bf16.mxu0 0
      %809 = vmatpush1.bf16.msra.mxu0 0
      %810 = vmatprep.subr.bf16.mxu0 0
      %811 = vmatpush1.bf16.msra.mxu0 0
      %812 = vmatprep.subr.bf16.mxu0 0
      %813 = vmatpush1.bf16.msra.mxu0 0
      %814 = vmatprep.subr.bf16.mxu0 0
      %815 = vmatpush1.bf16.msra.mxu0 0
      %816 = vmatprep.subr.bf16.mxu0 0
      %817 = vmatpush1.bf16.msra.mxu0 0
      %818 = vmatprep.mubr.bf16.mxu0 0
      %819 = vmatmul.mubr.bf16.gmra.mrb[0].mxu0 %v781
      %v820 = vpop.f32.mrb[0].mxu0
      %v821 = vadd.f32 0.0, %v820
      %v822 = vpop.f32.mrb[0].mxu0
      %v823 = vpop.f32.mrb[0].mxu0
      %v824 = vadd.f32 0.0, %v823
      %v825 = vpop.f32.mrb[0].mxu0
      %826 = vmatprep.mubr.bf16.mxu0 0
      %827 = vmatmul.mubr.bf16.gmra.mrb[0].mxu0 %v784
      %v828 = vpop.f32.mrb[0].mxu0
      %v829 = vadd.f32 0.0, %v828
      %v830 = vpop.f32.mrb[0].mxu0
      %v831 = vpop.f32.mrb[0].mxu0
      %v832 = vpop.f32.mrb[0].mxu0
      %833 = vdwg.mxu0
      %v834 = vadd.f32 %v723, %v821
      %v835 = vadd.f32 %v724, %v824
      %v836 = vadd.f32 %v725, %v829
      %v837 = vld [vmem:[%s168] sm:$0xc]
      %v838 = vld [vmem:[%s168 + $0x4] sm:$0xf]
      %v839 = vld [vmem:[%s168 + $0x8] sm:$0xf]
      %v840 = vld [vmem:[%s168 + $0xc] sm:$0x1]
      %s841 = scalar_lea.vmem %s172, 192
      %v842 = vld [vmem:[%s841] sm:$0xf]
      %v843 = vld [vmem:[%s841 + $0x4] sm:$0xf]
      %v844 = vld [vmem:[%s841 + $0x8] sm:$0xf]
      %v845 = vld [vmem:[%s841 + $0xc] sm:$0xf]
      %v846 = vld [vmem:[%s841 + $0x10] sm:$0xf]
      %v847 = vld [vmem:[%s841 + $0x14] sm:$0xf]
      %v848 = vld [vmem:[%s841 + $0x18] sm:$0xf]
      %v849 = vld [vmem:[%s841 + $0x1c] sm:$0xf]
      %v854 = vunpack.c.l.b16 %v837
      %v855 = vunpack.c.l.b16 %v838
      %v856 = vunpack.c.l.b16 %v839
      %v857 = vunpack.c.l.b16 %v840
      %v858 = vpack.c.b16 %v855, %v854
      %v859 = vpack.c.b16 %v857, %v856
      %vm860 = vsmask.f32 5376
      %v862 = vshrl.u32 %v858, 16
      %v864 = vrot.slane %v862, 2
      %v865 = vshll.u32 %v858, 16
      %v867 = vrot.slane %v865, 3
      %v868 = vor.u32 %v864, %v867
      %v870 = vshrl.u32 %v859, 16
      %v872 = vrot.slane %v870, 2
      %v873 = vshll.u32 %v859, 16
      %v875 = vrot.slane %v873, 3
      %v876 = vor.u32 %v872, %v875
      %v877 = vsel %vm860, %v868, %v876
      %v886 = vunpack.c.l.b16 %v842
      %v887 = vunpack.c.l.b16 %v843
      %v888 = vunpack.c.l.b16 %v844
      %v889 = vunpack.c.l.b16 %v845
      %v890 = vunpack.c.l.b16 %v846
      %v891 = vunpack.c.l.b16 %v847
      %v892 = vunpack.c.l.b16 %v848
      %v893 = vunpack.c.l.b16 %v849
      %v894 = vpack.c.b16 %v887, %v886
      %v895 = vpack.c.b16 %v889, %v888
      %v896 = vpack.c.b16 %v891, %v890
      %v897 = vpack.c.b16 %v893, %v892
      %v903 = vsel %vm253, %v877, 0
      %v906 = vsel %vm253, %v876, 0
      %908 = vmatprep.subr.bf16.mxu0 0
      %909 = vmatpush1.bf16.msra.mxu0 %v894
      %910 = vmatprep.subr.bf16.mxu0 0
      %911 = vmatpush1.bf16.msra.mxu0 %v895
      %912 = vmatprep.subr.bf16.mxu0 0
      %913 = vmatpush1.bf16.msra.mxu0 %v896
      %914 = vmatprep.subr.bf16.mxu0 0
      %915 = vmatpush1.bf16.msra.mxu0 %v897
      %916 = vmatprep.subr.bf16.mxu0 0
      %917 = vmatpush1.bf16.msra.mxu0 0
      %918 = vmatprep.subr.bf16.mxu0 0
      %919 = vmatpush1.bf16.msra.mxu0 0
      %920 = vmatprep.subr.bf16.mxu0 0
      %921 = vmatpush1.bf16.msra.mxu0 0
      %922 = vmatprep.subr.bf16.mxu0 0
      %923 = vmatpush1.bf16.msra.mxu0 0
      %924 = vmatprep.subr.bf16.mxu0 0
      %925 = vmatpush1.bf16.msra.mxu0 0
      %926 = vmatprep.subr.bf16.mxu0 0
      %927 = vmatpush1.bf16.msra.mxu0 0
      %928 = vmatprep.subr.bf16.mxu0 0
      %929 = vmatpush1.bf16.msra.mxu0 0
      %930 = vmatprep.subr.bf16.mxu0 0
      %931 = vmatpush1.bf16.msra.mxu0 0
      %932 = vmatprep.subr.bf16.mxu0 0
      %933 = vmatpush1.bf16.msra.mxu0 0
      %934 = vmatprep.subr.bf16.mxu0 0
      %935 = vmatpush1.bf16.msra.mxu0 0
      %936 = vmatprep.subr.bf16.mxu0 0
      %937 = vmatpush1.bf16.msra.mxu0 0
      %938 = vmatprep.subr.bf16.mxu0 0
      %939 = vmatpush1.bf16.msra.mxu0 0
      %940 = vmatprep.mubr.bf16.mxu0 0
      %941 = vmatmul.mubr.bf16.gmra.mrb[0].mxu0 %v903
      %v942 = vpop.f32.mrb[0].mxu0
      %v943 = vadd.f32 0.0, %v942
      %v944 = vpop.f32.mrb[0].mxu0
      %v945 = vpop.f32.mrb[0].mxu0
      %v946 = vadd.f32 0.0, %v945
      %v947 = vpop.f32.mrb[0].mxu0
      %948 = vmatprep.mubr.bf16.mxu0 0
      %949 = vmatmul.mubr.bf16.gmra.mrb[0].mxu0 %v906
      %v950 = vpop.f32.mrb[0].mxu0
      %v951 = vadd.f32 0.0, %v950
      %v952 = vpop.f32.mrb[0].mxu0
      %v953 = vpop.f32.mrb[0].mxu0
      %v954 = vpop.f32.mrb[0].mxu0
      %955 = vdwg.mxu0
      %v956 = vadd.f32 %v834, %v943
      %v957 = vadd.f32 %v835, %v946
      %v958 = vadd.f32 %v836, %v951
      %v959 = vld [vmem:[%s168 + $0xc] sm:$0x8]
      %v960 = vld [vmem:[%s168 + $0x10] sm:$0xf]
      %v961 = vld [vmem:[%s168 + $0x14] sm:$0xf]
      %v962 = vld [vmem:[%s168 + $0x18] sm:$0x1]
      %s963 = scalar_lea.vmem %s172, 224
      %v964 = vld [vmem:[%s963] sm:$0xf]
      %v965 = vld [vmem:[%s963 + $0x4] sm:$0xf]
      %v966 = vld [vmem:[%s963 + $0x8] sm:$0xf]
      %v967 = vld [vmem:[%s963 + $0xc] sm:$0xf]
      %v968 = vld [vmem:[%s963 + $0x10] sm:$0xf]
      %v969 = vld [vmem:[%s963 + $0x14] sm:$0xf]
      %v970 = vld [vmem:[%s963 + $0x18] sm:$0xf]
      %v971 = vld [vmem:[%s963 + $0x1c] sm:$0xf]
      %v976 = vunpack.c.l.b16 %v959
      %v977 = vunpack.c.l.b16 %v960
      %v978 = vunpack.c.l.b16 %v961
      %v979 = vunpack.c.l.b16 %v962
      %v980 = vpack.c.b16 %v977, %v976
      %v981 = vpack.c.b16 %v979, %v978
      %vm982 = vcmask 1044480
      %v983 = vrot.slane %v980, 3
      %v984 = vrot.slane %v981, 3
      %v985 = vsel %vm982, %v983, %v984
      %v994 = vunpack.c.l.b16 %v964
      %v995 = vunpack.c.l.b16 %v965
      %v996 = vunpack.c.l.b16 %v966
      %v997 = vunpack.c.l.b16 %v967
      %v998 = vunpack.c.l.b16 %v968
      %v999 = vunpack.c.l.b16 %v969
      %v1000 = vunpack.c.l.b16 %v970
      %v1001 = vunpack.c.l.b16 %v971
      %v1002 = vpack.c.b16 %v995, %v994
      %v1003 = vpack.c.b16 %v997, %v996
      %v1004 = vpack.c.b16 %v999, %v998
      %v1005 = vpack.c.b16 %v1001, %v1000
      %v1011 = vsel %vm253, %v985, 0
      %v1014 = vsel %vm253, %v984, 0
      %1016 = vmatprep.subr.bf16.mxu0 0
      %1017 = vmatpush1.bf16.msra.mxu0 %v1002
      %1018 = vmatprep.subr.bf16.mxu0 0
      %1019 = vmatpush1.bf16.msra.mxu0 %v1003
      %1020 = vmatprep.subr.bf16.mxu0 0
      %1021 = vmatpush1.bf16.msra.mxu0 %v1004
      %1022 = vmatprep.subr.bf16.mxu0 0
      %1023 = vmatpush1.bf16.msra.mxu0 %v1005
      %1024 = vmatprep.subr.bf16.mxu0 0
      %1025 = vmatpush1.bf16.msra.mxu0 0
      %1026 = vmatprep.subr.bf16.mxu0 0
      %1027 = vmatpush1.bf16.msra.mxu0 0
      %1028 = vmatprep.subr.bf16.mxu0 0
      %1029 = vmatpush1.bf16.msra.mxu0 0
      %1030 = vmatprep.subr.bf16.mxu0 0
      %1031 = vmatpush1.bf16.msra.mxu0 0
      %1032 = vmatprep.subr.bf16.mxu0 0
      %1033 = vmatpush1.bf16.msra.mxu0 0
      %1034 = vmatprep.subr.bf16.mxu0 0
      %1035 = vmatpush1.bf16.msra.mxu0 0
      %1036 = vmatprep.subr.bf16.mxu0 0
      %1037 = vmatpush1.bf16.msra.mxu0 0
      %1038 = vmatprep.subr.bf16.mxu0 0
      %1039 = vmatpush1.bf16.msra.mxu0 0
      %1040 = vmatprep.subr.bf16.mxu0 0
      %1041 = vmatpush1.bf16.msra.mxu0 0
      %1042 = vmatprep.subr.bf16.mxu0 0
      %1043 = vmatpush1.bf16.msra.mxu0 0
      %1044 = vmatprep.subr.bf16.mxu0 0
      %1045 = vmatpush1.bf16.msra.mxu0 0
      %1046 = vmatprep.subr.bf16.mxu0 0
      %1047 = vmatpush1.bf16.msra.mxu0 0
      %1048 = vmatprep.mubr.bf16.mxu0 0
      %1049 = vmatmul.mubr.bf16.gmra.mrb[0].mxu0 %v1011
      %v1050 = vpop.f32.mrb[0].mxu0
      %v1051 = vadd.f32 0.0, %v1050
      %v1052 = vpop.f32.mrb[0].mxu0
      %v1053 = vpop.f32.mrb[0].mxu0
      %v1054 = vadd.f32 0.0, %v1053
      %v1055 = vpop.f32.mrb[0].mxu0
      %1056 = vmatprep.mubr.bf16.mxu0 0
      %1057 = vmatmul.mubr.bf16.gmra.mrb[0].mxu0 %v1014
      %v1058 = vpop.f32.mrb[0].mxu0
      %v1059 = vadd.f32 0.0, %v1058
      %v1060 = vpop.f32.mrb[0].mxu0
      %v1061 = vpop.f32.mrb[0].mxu0
      %v1062 = vpop.f32.mrb[0].mxu0
      %1063 = vdwg.mxu0
      %v1064 = vadd.f32 %v956, %v1051
      %v1065 = vadd.f32 %v957, %v1054
      %v1066 = vadd.f32 %v958, %v1059
      %v1067 = vld [vmem:[%s168] sm:$0x8]
      %s1068 = scalar_lea.vmem %s172, 256
      %v1069 = vld [vmem:[%s1068] sm:$0xf]
      %v1070 = vld [vmem:[%s1068 + $0x4] sm:$0xf]
      %v1071 = vld [vmem:[%s1068 + $0x8] sm:$0xf]
      %v1072 = vld [vmem:[%s1068 + $0xc] sm:$0xf]
      %v1073 = vld [vmem:[%s1068 + $0x10] sm:$0xf]
      %v1074 = vld [vmem:[%s1068 + $0x14] sm:$0xf]
      %v1075 = vld [vmem:[%s1068 + $0x18] sm:$0xf]
      %v1076 = vld [vmem:[%s1068 + $0x1c] sm:$0xf]
      %v1078 = vunpack.c.l.b16 %v1067
      %v1079 = vpack.c.b16 %v855, %v1078
      %v1080 = vrot.slane %v1079, 3
      %v1081 = vrot.slane %v859, 3
      %v1082 = vsel %vm982, %v1080, %v1081
      %v1091 = vunpack.c.l.b16 %v1069
      %v1092 = vunpack.c.l.b16 %v1070
      %v1093 = vunpack.c.l.b16 %v1071
      %v1094 = vunpack.c.l.b16 %v1072
      %v1095 = vunpack.c.l.b16 %v1073
      %v1096 = vunpack.c.l.b16 %v1074
      %v1097 = vunpack.c.l.b16 %v1075
      %v1098 = vunpack.c.l.b16 %v1076
      %v1099 = vpack.c.b16 %v1092, %v1091
      %v1100 = vpack.c.b16 %v1094, %v1093
      %v1101 = vpack.c.b16 %v1096, %v1095
      %v1102 = vpack.c.b16 %v1098, %v1097
      %v1108 = vsel %vm253, %v1082, 0
      %v1111 = vsel %vm253, %v1081, 0
      %1113 = vmatprep.subr.bf16.mxu0 0
      %1114 = vmatpush1.bf16.msra.mxu0 %v1099
      %1115 = vmatprep.subr.bf16.mxu0 0
      %1116 = vmatpush1.bf16.msra.mxu0 %v1100
      %1117 = vmatprep.subr.bf16.mxu0 0
      %1118 = vmatpush1.bf16.msra.mxu0 %v1101
      %1119 = vmatprep.subr.bf16.mxu0 0
      %1120 = vmatpush1.bf16.msra.mxu0 %v1102
      %1121 = vmatprep.subr.bf16.mxu0 0
      %1122 = vmatpush1.bf16.msra.mxu0 0
      %1123 = vmatprep.subr.bf16.mxu0 0
      %1124 = vmatpush1.bf16.msra.mxu0 0
      %1125 = vmatprep.subr.bf16.mxu0 0
      %1126 = vmatpush1.bf16.msra.mxu0 0
      %1127 = vmatprep.subr.bf16.mxu0 0
      %1128 = vmatpush1.bf16.msra.mxu0 0
      %1129 = vmatprep.subr.bf16.mxu0 0
      %1130 = vmatpush1.bf16.msra.mxu0 0
      %1131 = vmatprep.subr.bf16.mxu0 0
      %1132 = vmatpush1.bf16.msra.mxu0 0
      %1133 = vmatprep.subr.bf16.mxu0 0
      %1134 = vmatpush1.bf16.msra.mxu0 0
      %1135 = vmatprep.subr.bf16.mxu0 0
      %1136 = vmatpush1.bf16.msra.mxu0 0
      %1137 = vmatprep.subr.bf16.mxu0 0
      %1138 = vmatpush1.bf16.msra.mxu0 0
      %1139 = vmatprep.subr.bf16.mxu0 0
      %1140 = vmatpush1.bf16.msra.mxu0 0
      %1141 = vmatprep.subr.bf16.mxu0 0
      %1142 = vmatpush1.bf16.msra.mxu0 0
      %1143 = vmatprep.subr.bf16.mxu0 0
      %1144 = vmatpush1.bf16.msra.mxu0 0
      %1145 = vmatprep.mubr.bf16.mxu0 0
      %1146 = vmatmul.mubr.bf16.gmra.mrb[0].mxu0 %v1108
      %v1147 = vpop.f32.mrb[0].mxu0
      %v1148 = vadd.f32 0.0, %v1147
      %v1149 = vpop.f32.mrb[0].mxu0
      %v1150 = vpop.f32.mrb[0].mxu0
      %v1151 = vadd.f32 0.0, %v1150
      %v1152 = vpop.f32.mrb[0].mxu0
      %1153 = vmatprep.mubr.bf16.mxu0 0
      %1154 = vmatmul.mubr.bf16.gmra.mrb[0].mxu0 %v1111
      %v1155 = vpop.f32.mrb[0].mxu0
      %v1156 = vadd.f32 0.0, %v1155
      %v1157 = vpop.f32.mrb[0].mxu0
      %v1158 = vpop.f32.mrb[0].mxu0
      %v1159 = vpop.f32.mrb[0].mxu0
      %1160 = vdwg.mxu0
      %v1161 = vadd.f32 %v1064, %v1148
      %v1162 = vadd.f32 %v1065, %v1151
      %v1163 = vadd.f32 %v1066, %v1156
      %v1164 = vpack.c.bf16 %v1162, %v1161
      %v1165 = vpack.c.bf16 %v1163, %v1163
      %v1168 = vunpack.c.l.b16 %v1164
      %v1169 = vunpack.c.h.b16 %v1164
      %v1170 = vunpack.c.l.b16 %v1165
      %v1171 = vpack.c.b16 %v1168, %v1168
      %v1172 = vpack.c.b16 %v1169, %v1169
      %v1173 = vpack.c.b16 %v1170, %v1170
      %1177 = vst [vmem:[%s180] sm:$0xf] %v1171
      %1178 = vst [vmem:[%s180 + $0x4] sm:$0xf] %v1172
      %1179 = vst [vmem:[%s180 + $0x8] sm:$0x3] %v1173
      %p1180 = scmp.lt.s32.totalorder %s18, 1
      %s1181 = scalar_select %p1180, %s18, 1
      %p1182 = scmp.lt.s32.totalorder %s17, 0
      %s1183 = scalar_select %p1182, %s17, 0
      %s1184 = smul.addr %s1181, 3
      %s1185 = sadd.s32 %s1183, %s1184
      %s1186 = smul.addr %s1185, 4
      %s1187 = scalar_lea.vmem %s2, %s1186
      // Predicated region
      $region29: #{discriminator_forward.9} parent=27 // pred_check
        %p1188 = pneg %p97
      $region30: #{discriminator_forward.9} parent=27 // pred_check_branch
        %1190 = sbr.rel (%p1188) target = $region32
      $region31: #{discriminator_forward.9} parent=27 // pred_region
        _
      $region32: #{discriminator_forward.9} parent=27 // pred_fallthru
        _
    $region28: #{discriminator_forward.9} parent=5 // pred_fallthru
      _
    %p1191 = scmp.le.s32.totalorder 2, %s8
    // Predicated region
    $region33: #{discriminator_forward.9} parent=5 // pred_check
      %p1192 = pneg %p1191
    $region34: #{discriminator_forward.9} parent=5 // pred_check_branch
      %1194 = sbr.rel (%p1192) target = $region36
    $region35: #{discriminator_forward.9} parent=5 // pred_region
      %s1195 = ssub.s32 %s8, 2
      // Predicated region
      $region37: #{discriminator_forward.9} parent=35 // pred_check
        %p1196 = pneg %p103
      $region38: #{discriminator_forward.9} parent=35 // pred_check_branch
        %1198 = sbr.rel (%p1196) target = $region40
      $region39: #{discriminator_forward.9} parent=35 // pred_region
        %p1199 = scmp.lt.s32.totalorder %s20, 1
        %s1200 = scalar_select %p1199, %s20, 1
        %p1201 = scmp.lt.s32.totalorder %s19, 0
        %s1202 = scalar_select %p1201, %s19, 0
        %s1203 = smul.addr %s1200, 3
        %s1204 = sadd.s32 %s1202, %s1203
        %s1205 = smul.addr %s1204, 4
        %s1206 = scalar_lea.vmem %s2, %s1205
      $region40: #{discriminator_forward.9} parent=35 // pred_fallthru
        _
    $region36: #{discriminator_forward.9} parent=5 // pred_fallthru
      _
  $region6: #{discriminator_forward.9} parent=0 // loop_footer
    %s12 = sadd.s32 1, %s8
  $region7: #{discriminator_forward.9} parent=0 // loop_footer_branch
    %7 = sbr.rel target = $region3
  $region8: #{discriminator_forward.9} parent=0 // loop_exit
    _

// kernel: discriminator_forward.8
$region0: #{discriminator_forward.8}
  #allocation0 [shape = 'u32[]', space=smem, size = 0x4, offset = 0x4, fixed_abs, tag = 'smem constant byte address 0x4 - core index']
  #allocation1 [shape = 'u32[144,128]{1,0:T(1,128)}', space=vmem, size = 0x12000, scoped, tag = 'internal scratch']
  %s0 = inlined_call_operand.vmem [shape: bf16[2,324,4], index: 0, kind: input, shape index: {}]
  %s1 = inlined_call_operand.vmem [shape: bf16[9,4,64], index: 1, kind: input, shape index: {}]
  %s2 = inlined_call_operand.hbm [shape: f32[1,64], index: 2, kind: input, shape index: {}]
  %s3 = inlined_call_operand.vmem [shape: bf16[2,72,64], index: 3, kind: output, shape index: {}]
  %s4 = sld [smem:[#allocation0]]
  $region49: #{discriminator_forward.8} parent=0
    _
  %s6 = ssub.s32 1, %s4
  %s7 = scalar_select 0, %s6, %s4
  $region1: #{discriminator_forward.8} parent=0
    #allocation2 [shape = 'u8[512]{0}', space=vmem, size = 0x400, scoped, tag = 'input window, operand 2, single buffered']
    #allocation3 [shape = 's32[2]{0}', space=sflag, size = 0x8, scoped, tag = 'scoped memory for discriminator_forward.8']
    %8 = vsyncpa [#allocation3], 0
    loop: start=0, step=1, limit=4
    $region2: #{discriminator_forward.8} parent=1 // loop_pre_header
      _
    $region3: #{discriminator_forward.8} parent=1 // loop_header
      %s10 = sphi 0, %s14
      %p11 = scmp.ge.s32.totalorder %s10, 4
      %s17 = sphi 0, %s29
      %s18 = sphi 0, %s25
      %s19 = sphi 0, %s17
      %s20 = sphi 0, %s18
      %s21 = sphi 0, %s19
      %s22 = sphi 0, %s20
      %s32 = sphi 0, %s34
      %s35 = sphi 0, %s32
      %s36 = sphi 0, %s35
      %s52 = sphi 0, %s36
      %s58 = sphi 0, %s60
      %s61 = sphi 0, %s58
      %s62 = sphi 0, %s61
      %s78 = sphi 0, %s62
      %s84 = sphi 0, %s86
      %s87 = sphi 0, %s84
      %s88 = sphi 0, %s87
      %s104 = sphi 0, %s88
      %s112 = sphi 0, %s114
      %s115 = sphi 0, %s112
      %s116 = sphi 0, %s115
      %s132 = sphi 0, %s116
    $region4: #{discriminator_forward.8} parent=1 // loop_header_branch
      %13 = sbr.rel (%p11) target = $region8
    $region5: #{discriminator_forward.8} parent=1 // loop_body
      %s15 = ssub.s32 %s10, 1
      %s16 = ssub.s32 %s10, 2
      %s23 = sadd.s32 1, %s18
      %p24 = scmp.ge.s32.totalorder %s23, 2
      %s25 = scalar_select %p24, 0, %s23
      %s26 = sadd.s32 1, %s17
      %s27 = scalar_select %p24, %s26, %s17
      %p28 = scmp.ge.s32.totalorder %s27, 1
      %s29 = scalar_select %p28, 0, %s27
      %s30 = ssub.s32 %s18, %s25
      %p31 = scmp.eq.s32.totalorder %s30, 0
      %s33 = sadd.s32 %s32, 1
      %s34 = scalar_select %p31, %s32, %s33
      %p37 = pneg %p31
      %p38 = scmp.eq.s32.totalorder %s10, 1
      %p39 = por %p37, %p38
      %p40 = scmp.ne.s32.totalorder %s32, %s35
      %p41 = scmp.eq.s32.totalorder %s10, 0
      %p42 = por %p40, %p41
      %p43 = scmp.ne.s32.totalorder %s32, %s35
      %p44 = scmp.eq.s32.totalorder %s15, 1
      %p45 = por %p43, %p44
      %p46 = scmp.ne.s32.totalorder %s35, %s36
      %p47 = scmp.eq.s32.totalorder %s15, 0
      %p48 = por %p46, %p47
      %p49 = scmp.ne.s32.totalorder %s35, %s36
      %p50 = scmp.eq.s32.totalorder %s16, 1
      %p51 = por %p49, %p50
      %p53 = scmp.ne.s32.totalorder %s36, %s52
      %p54 = scmp.eq.s32.totalorder %s16, 0
      %p55 = por %p53, %p54
      %s56 = ssub.s32 %s17, %s29
      %p57 = scmp.eq.s32.totalorder %s56, 0
      %s59 = sadd.s32 %s58, 1
      %s60 = scalar_select %p57, %s58, %s59
      %p63 = pneg %p57
      %p64 = scmp.eq.s32.totalorder %s10, 1
      %p65 = por %p63, %p64
      %p66 = scmp.ne.s32.totalorder %s58, %s61
      %p67 = scmp.eq.s32.totalorder %s10, 0
      %p68 = por %p66, %p67
      %p69 = scmp.ne.s32.totalorder %s58, %s61
      %p70 = scmp.eq.s32.totalorder %s15, 1
      %p71 = por %p69, %p70
      %p72 = scmp.ne.s32.totalorder %s61, %s62
      %p73 = scmp.eq.s32.totalorder %s15, 0
      %p74 = por %p72, %p73
      %p75 = scmp.ne.s32.totalorder %s61, %s62
      %p76 = scmp.eq.s32.totalorder %s16, 1
      %p77 = por %p75, %p76
      %p79 = scmp.ne.s32.totalorder %s62, %s78
      %p80 = scmp.eq.s32.totalorder %s16, 0
      %p81 = por %p79, %p80
      %s82 = ssub.s32 %s17, %s29
      %p83 = scmp.eq.s32.totalorder %s82, 0
      %s85 = sadd.s32 %s84, 1
      %s86 = scalar_select %p83, %s84, %s85
      %p89 = pneg %p83
      %p90 = scmp.eq.s32.totalorder %s10, 1
      %p91 = por %p89, %p90
      %p92 = scmp.ne.s32.totalorder %s84, %s87
      %p93 = scmp.eq.s32.totalorder %s10, 0
      %p94 = por %p92, %p93
      %p95 = scmp.ne.s32.totalorder %s84, %s87
      %p96 = scmp.eq.s32.totalorder %s15, 1
      %p97 = por %p95, %p96
      %p98 = scmp.ne.s32.totalorder %s87, %s88
      %p99 = scmp.eq.s32.totalorder %s15, 0
      %p100 = por %p98, %p99
      %p101 = scmp.ne.s32.totalorder %s87, %s88
      %p102 = scmp.eq.s32.totalorder %s16, 1
      %p103 = por %p101, %p102
      %p105 = scmp.ne.s32.totalorder %s88, %s104
      %p106 = scmp.eq.s32.totalorder %s16, 0
      %p107 = por %p105, %p106
      %s108 = ssub.s32 %s18, %s25
      %s109 = ssub.s32 %s17, %s29
      %s110 = sor.u32 %s108, %s109
      %p111 = scmp.eq.s32.totalorder %s110, 0
      %s113 = sadd.s32 %s112, 1
      %s114 = scalar_select %p111, %s112, %s113
      %p117 = pneg %p111
      %p118 = scmp.eq.s32.totalorder %s10, 1
      %p119 = por %p117, %p118
      %p120 = scmp.ne.s32.totalorder %s112, %s115
      %p121 = scmp.eq.s32.totalorder %s10, 0
      %p122 = por %p120, %p121
      %p123 = scmp.ne.s32.totalorder %s112, %s115
      %p124 = scmp.eq.s32.totalorder %s15, 1
      %p125 = por %p123, %p124
      %p126 = scmp.ne.s32.totalorder %s115, %s116
      %p127 = scmp.eq.s32.totalorder %s15, 0
      %p128 = por %p126, %p127
      %p129 = scmp.ne.s32.totalorder %s115, %s116
      %p130 = scmp.eq.s32.totalorder %s16, 1
      %p131 = por %p129, %p130
      %p133 = scmp.ne.s32.totalorder %s116, %s132
      %p134 = scmp.eq.s32.totalorder %s16, 0
      %p135 = por %p133, %p134
      %p136 = scmp.le.s32.totalorder 1, %s10
      %p137 = scmp.lt.s32.totalorder %s10, 3
      %p138 = pnand %p136, %p137
      %p139 = pneg %p138
      // Predicated region
      $region9: #{discriminator_forward.8} parent=5 // pred_check
        _
      $region10: #{discriminator_forward.8} parent=5 // pred_check_branch
        %141 = sbr.rel (%p138) target = $region12
      $region11: #{discriminator_forward.8} parent=5 // pred_region
        %s142 = ssub.s32 %s10, 1
        // Predicated region
        $region13: #{discriminator_forward.8} parent=11 // pred_check
          %p143 = pneg %p74
        $region14: #{discriminator_forward.8} parent=11 // pred_check_branch
          %145 = sbr.rel (%p143) target = $region16
        $region15: #{discriminator_forward.8} parent=11 // pred_region
          %p146 = scmp.lt.s32.totalorder %s19, 0
          %s147 = scalar_select %p146, %s19, 0
          %s148 = smul.addr %s147, 2
          %s149 = scalar_lea.vmem %s1, %s148
        $region16: #{discriminator_forward.8} parent=11 // pred_fallthru
          _
        // Predicated region
        $region17: #{discriminator_forward.8} parent=11 // pred_check
          %p150 = pneg %p100
        $region18: #{discriminator_forward.8} parent=11 // pred_check_branch
          %152 = sbr.rel (%p150) target = $region20
        $region19: #{discriminator_forward.8} parent=11 // pred_region
          %s154 = ssub.s32 16, 16
          %155 = vsyncadd [#allocation3], %s154
          %s156 = smul.addr %s19, 16
          %s157 = scalar_lea.hbm %s2, %s156
          %s159 = sshll.u32 [#allocation2], 4
          %s160 = int_to_ptr.vmem [resolvable:$true] %s159
          %162 = dma.hbm_to_vmem [thread:$0]  %s157, 16, %s160, [#allocation3]
        $region20: #{discriminator_forward.8} parent=11 // pred_fallthru
          _
      $region12: #{discriminator_forward.8} parent=5 // pred_fallthru
        _
      %p163 = scmp.lt.s32.totalorder %s10, 2
      // Predicated region
      $region21: #{discriminator_forward.8} parent=5 // pred_check
        %p164 = pneg %p163
      $region22: #{discriminator_forward.8} parent=5 // pred_check_branch
        %166 = sbr.rel (%p164) target = $region24
      $region23: #{discriminator_forward.8} parent=5 // pred_region
        // Predicated region
        $region25: #{discriminator_forward.8} parent=23 // pred_check
          %p167 = pneg %p42
        $region26: #{discriminator_forward.8} parent=23 // pred_check_branch
          %169 = sbr.rel (%p167) target = $region28
        $region27: #{discriminator_forward.8} parent=23 // pred_region
          %p170 = scmp.lt.s32.totalorder %s18, 1
          %s171 = scalar_select %p170, %s18, 1
          %s172 = smul.addr %s171, 41
          %s173 = smul.addr %s172, 4
          %s174 = scalar_lea.vmem %s0, %s173
        $region28: #{discriminator_forward.8} parent=23 // pred_fallthru
          _
      $region24: #{discriminator_forward.8} parent=5 // pred_fallthru
        _
      %p175 = scmp.le.s32.totalorder 1, %s10
      %p176 = scmp.lt.s32.totalorder %s10, 3
      %p177 = pnand %p175, %p176
      %p178 = pneg %p177
      // Predicated region
      $region29: #{discriminator_forward.8} parent=5 // pred_check
        _
      $region30: #{discriminator_forward.8} parent=5 // pred_check_branch
        %180 = sbr.rel (%p177) target = $region32
      $region31: #{discriminator_forward.8} parent=5 // pred_region
        %s181 = ssub.s32 %s10, 1
        // Predicated region
        $region33: #{discriminator_forward.8} parent=31 // pred_check
          %p182 = pneg %p100
        $region34: #{discriminator_forward.8} parent=31 // pred_check_branch
          %184 = sbr.rel (%p182) target = $region36
        $region35: #{discriminator_forward.8} parent=31 // pred_region
          %185 = dma.done [#allocation3], 16
        $region36: #{discriminator_forward.8} parent=31 // pred_fallthru
          _
        %p186 = scmp.lt.s32.totalorder %s20, 1
        %s187 = scalar_select %p186, %s20, 1
        %s188 = smul.addr %s187, 41
        %s189 = smul.addr %s188, 4
        %s190 = scalar_lea.vmem %s0, %s189
        %p191 = pneg %p48
        %p192 = pneg %p45
        %p193 = scmp.lt.s32.totalorder %s19, 0
        %s194 = scalar_select %p193, %s19, 0
        %s195 = smul.addr %s194, 2
        %s196 = scalar_lea.vmem %s1, %s195
        %p197 = pneg %p74
        %p198 = pneg %p71
        %p199 = pneg %p100
        %p200 = pneg %p97
        %p201 = pneg %p128
        %p202 = pneg %p125
        %p203 = scmp.lt.s32.totalorder %s20, 1
        %s204 = scalar_select %p203, %s20, 1
        %p205 = scmp.lt.s32.totalorder %s19, 0
        %s206 = scalar_select %p205, %s19, 0
        %s207 = smul.addr %s204, 9
        %s208 = sadd.s32 %s206, %s207
        %s209 = smul.addr %s208, 4
        %s210 = scalar_lea.vmem %s3, %s209
        %p211 = scmp.lt.s32.totalorder %s20, 1
        %s212 = scalar_select %p211, %s20, 1
        %s213 = smul.addr %s212, 41
        %s214 = smul.addr %s213, 4
        %s215 = scalar_lea.vmem %s0, %s214
        %p216 = scmp.lt.s32.totalorder %s19, 0
        %s217 = scalar_select %p216, %s19, 0
        %s218 = smul.addr %s217, 2
        %s219 = scalar_lea.vmem %s1, %s218
        %p220 = scmp.lt.s32.totalorder %s20, 1
        %s221 = scalar_select %p220, %s20, 1
        %p222 = scmp.lt.s32.totalorder %s19, 0
        %s223 = scalar_select %p222, %s19, 0
        %s224 = smul.addr %s221, 9
        %s225 = sadd.s32 %s223, %s224
        %s226 = smul.addr %s225, 4
        %s227 = scalar_lea.vmem %s3, %s226
        %v229 = vld [vmem:[%s215] sm:$0xf]
        %v230 = vld [vmem:[%s215 + $0x4] sm:$0xf]
        %v231 = vld [vmem:[%s215 + $0x8] sm:$0xf]
        %v232 = vld [vmem:[%s215 + $0xc] sm:$0xf]
        %v233 = vld [vmem:[%s215 + $0x10] sm:$0xf]
        %v234 = vld [vmem:[%s215 + $0x14] sm:$0xf]
        %v235 = vld [vmem:[%s215 + $0x18] sm:$0xf]
        %v236 = vld [vmem:[%s215 + $0x1c] sm:$0xf]
        %v237 = vld [vmem:[%s215 + $0x20] sm:$0xf]
        %v238 = vld [vmem:[%s219] sm:$0x3]
        %v239 = vld [vmem:[%s215 + $0x28] sm:$0xf]
        %v240 = vld [vmem:[%s215 + $0x2c] sm:$0xf]
        %v241 = vld [vmem:[%s215 + $0x30] sm:$0xf]
        %v242 = vld [vmem:[%s215 + $0x34] sm:$0xf]
        %v243 = vld [vmem:[%s215 + $0x38] sm:$0xf]
        %v244 = vld [vmem:[%s215 + $0x3c] sm:$0xf]
        %v245 = vld [vmem:[%s215 + $0x40] sm:$0xf]
        %v246 = vld [vmem:[%s215 + $0x44] sm:$0xf]
        %v247 = vld [vmem:[%s215 + $0x48] sm:$0xf]
        %v248 = vld [vmem:[%s215 + $0x4c] sm:$0x1]
        %s249 = scalar_lea.vmem %s219, 2
        %v250 = vld [vmem:[%s249] sm:$0x3]
        %v261 = vunpack.c.l.b16 %v239
        %v262 = vunpack.c.l.b16 %v240
        %v263 = vunpack.c.l.b16 %v241
        %v264 = vunpack.c.l.b16 %v242
        %v265 = vunpack.c.l.b16 %v243
        %v266 = vunpack.c.l.b16 %v244
        %v267 = vunpack.c.l.b16 %v245
        %v268 = vunpack.c.l.b16 %v246
        %v269 = vunpack.c.l.b16 %v247
        %v270 = vunpack.c.l.b16 %v248
        %v271 = vpack.c.b16 %v262, %v261
        %v272 = vpack.c.b16 %v264, %v263
        %v273 = vpack.c.b16 %v266, %v265
        %v274 = vpack.c.b16 %v268, %v267
        %v275 = vpack.c.b16 %v270, %v269
        %vm276 = vsmask.f32 7424
        %v278 = vshrl.u32 %v271, 16
        %v280 = vshll.u32 %v271, 16
        %v282 = vrot.slane %v280, 1
        %v283 = vor.u32 %v278, %v282
        %v285 = vshll.u32 %v272, 16
        %v287 = vrot.slane %v285, 1
        %v288 = vsel %vm276, %v283, %v287
        %v289 = vshrl.u32 %v272, 16
        %v291 = vor.u32 %v289, %v287
        %v293 = vshll.u32 %v273, 16
        %v295 = vrot.slane %v293, 1
        %v296 = vsel %vm276, %v291, %v295
        %v297 = vshrl.u32 %v273, 16
        %v299 = vor.u32 %v297, %v295
        %v301 = vshll.u32 %v274, 16
        %v303 = vrot.slane %v301, 1
        %v304 = vsel %vm276, %v299, %v303
        %v305 = vshrl.u32 %v274, 16
        %v307 = vor.u32 %v305, %v303
        %v309 = vshll.u32 %v275, 16
        %v311 = vrot.slane %v309, 1
        %v312 = vsel %vm276, %v307, %v311
        %v313 = vshrl.u32 %v275, 16
        %v315 = vor.u32 %v313, %v311
        %vm316 = vcmask 31744
        %v318 = vsel %vm316, %v288, 0
        %v321 = vsel %vm316, %v296, 0
        %v324 = vsel %vm316, %v304, 0
        %v327 = vsel %vm316, %v312, 0
        %v330 = vsel %vm316, %v315, 0
        %vm332 = vcmask 1041408
        %v334 = vsel %vm332, %v250, 0
        %336 = vmatprep.subr.bf16.mxu0 0
        %337 = vmatpush1.bf16.msra.mxu0 %v334
        %338 = vmatprep.subr.bf16.mxu0 0
        %339 = vmatpush1.bf16.msra.mxu0 0
        %340 = vmatprep.subr.bf16.mxu0 0
        %341 = vmatpush1.bf16.msra.mxu0 0
        %342 = vmatprep.subr.bf16.mxu0 0
        %343 = vmatpush1.bf16.msra.mxu0 0
        %344 = vmatprep.subr.bf16.mxu0 0
        %345 = vmatpush1.bf16.msra.mxu0 0
        %346 = vmatprep.subr.bf16.mxu0 0
        %347 = vmatpush1.bf16.msra.mxu0 0
        %348 = vmatprep.subr.bf16.mxu0 0
        %349 = vmatpush1.bf16.msra.mxu0 0
        %350 = vmatprep.subr.bf16.mxu0 0
        %351 = vmatpush1.bf16.msra.mxu0 0
        %352 = vmatprep.subr.bf16.mxu0 0
        %353 = vmatpush1.bf16.msra.mxu0 0
        %354 = vmatprep.subr.bf16.mxu0 0
        %355 = vmatpush1.bf16.msra.mxu0 0
        %356 = vmatprep.subr.bf16.mxu0 0
        %357 = vmatpush1.bf16.msra.mxu0 0
        %358 = vmatprep.subr.bf16.mxu0 0
        %359 = vmatpush1.bf16.msra.mxu0 0
        %360 = vmatprep.subr.bf16.mxu0 0
        %361 = vmatpush1.bf16.msra.mxu0 0
        %362 = vmatprep.subr.bf16.mxu0 0
        %363 = vmatpush1.bf16.msra.mxu0 0
        %364 = vmatprep.subr.bf16.mxu0 0
        %365 = vmatpush1.bf16.msra.mxu0 0
        %366 = vmatprep.subr.bf16.mxu0 0
        %367 = vmatpush1.bf16.msra.mxu0 0
        %368 = vmatprep.mubr.bf16.mxu0 0
        %369 = vmatmul.mubr.bf16.gmra.mrb[0].mxu0 %v318
        %v370 = vpop.f32.mrb[0].mxu0
        %v371 = vadd.f32 0.0, %v370
        %v372 = vpop.f32.mrb[0].mxu0
        %v373 = vpop.f32.mrb[0].mxu0
        %v374 = vadd.f32 0.0, %v373
        %v375 = vpop.f32.mrb[0].mxu0
        %376 = vmatprep.mubr.bf16.mxu0 0
        %377 = vmatmul.mubr.bf16.gmra.mrb[0].mxu0 %v321
        %v378 = vpop.f32.mrb[0].mxu0
        %v379 = vadd.f32 0.0, %v378
        %v380 = vpop.f32.mrb[0].mxu0
        %v381 = vpop.f32.mrb[0].mxu0
        %v382 = vadd.f32 0.0, %v381
        %v383 = vpop.f32.mrb[0].mxu0
        %384 = vmatprep.mubr.bf16.mxu0 0
        %385 = vmatmul.mubr.bf16.gmra.mrb[0].mxu0 %v324
        %v386 = vpop.f32.mrb[0].mxu0
        %v387 = vadd.f32 0.0, %v386
        %v388 = vpop.f32.mrb[0].mxu0
        %v389 = vpop.f32.mrb[0].mxu0
        %v390 = vadd.f32 0.0, %v389
        %v391 = vpop.f32.mrb[0].mxu0
        %392 = vmatprep.mubr.bf16.mxu0 0
        %393 = vmatmul.mubr.bf16.gmra.mrb[0].mxu0 %v327
        %v394 = vpop.f32.mrb[0].mxu0
        %v395 = vadd.f32 0.0, %v394
        %v396 = vpop.f32.mrb[0].mxu0
        %v397 = vpop.f32.mrb[0].mxu0
        %v398 = vadd.f32 0.0, %v397
        %v399 = vpop.f32.mrb[0].mxu0
        %400 = vmatprep.mubr.bf16.mxu0 0
        %401 = vmatmul.mubr.bf16.gmra.mrb[0].mxu0 %v330
        %v402 = vpop.f32.mrb[0].mxu0
        %v403 = vadd.f32 0.0, %v402
        %v404 = vpop.f32.mrb[0].mxu0
        %v405 = vpop.f32.mrb[0].mxu0
        %v406 = vpop.f32.mrb[0].mxu0
        %407 = vdwg.mxu0
        %v417 = vunpack.c.l.b16 %v229
        %v418 = vunpack.c.l.b16 %v230
        %v419 = vunpack.c.l.b16 %v231
        %v420 = vunpack.c.l.b16 %v232
        %v421 = vunpack.c.l.b16 %v233
        %v422 = vunpack.c.l.b16 %v234
        %v423 = vunpack.c.l.b16 %v235
        %v424 = vunpack.c.l.b16 %v236
        %v425 = vunpack.c.l.b16 %v237
        %v426 = vpack.c.b16 %v418, %v417
        %v427 = vpack.c.b16 %v420, %v419
        %v428 = vpack.c.b16 %v422, %v421
        %v429 = vpack.c.b16 %v424, %v423
        %v430 = vpack.c.b16 %v425, %v425
        %v432 = vsel %vm316, %v426, 0
        %v435 = vsel %vm316, %v427, 0
        %v438 = vsel %vm316, %v428, 0
        %v441 = vsel %vm316, %v429, 0
        %v444 = vsel %vm316, %v430, 0
        %v447 = vsel %vm332, %v238, 0
        %449 = vmatprep.subr.bf16.mxu0 0
        %450 = vmatpush1.bf16.msra.mxu0 %v447
        %451 = vmatprep.subr.bf16.mxu0 0
        %452 = vmatpush1.bf16.msra.mxu0 0
        %453 = vmatprep.subr.bf16.mxu0 0
        %454 = vmatpush1.bf16.msra.mxu0 0
        %455 = vmatprep.subr.bf16.mxu0 0
        %456 = vmatpush1.bf16.msra.mxu0 0
        %457 = vmatprep.subr.bf16.mxu0 0
        %458 = vmatpush1.bf16.msra.mxu0 0
        %459 = vmatprep.subr.bf16.mxu0 0
        %460 = vmatpush1.bf16.msra.mxu0 0
        %461 = vmatprep.subr.bf16.mxu0 0
        %462 = vmatpush1.bf16.msra.mxu0 0
        %463 = vmatprep.subr.bf16.mxu0 0
        %464 = vmatpush1.bf16.msra.mxu0 0
        %465 = vmatprep.subr.bf16.mxu0 0
        %466 = vmatpush1.bf16.msra.mxu0 0
        %467 = vmatprep.subr.bf16.mxu0 0
        %468 = vmatpush1.bf16.msra.mxu0 0
        %469 = vmatprep.subr.bf16.mxu0 0
        %470 = vmatpush1.bf16.msra.mxu0 0
        %471 = vmatprep.subr.bf16.mxu0 0
        %472 = vmatpush1.bf16.msra.mxu0 0
        %473 = vmatprep.subr.bf16.mxu0 0
        %474 = vmatpush1.bf16.msra.mxu0 0
        %475 = vmatprep.subr.bf16.mxu0 0
        %476 = vmatpush1.bf16.msra.mxu0 0
        %477 = vmatprep.subr.bf16.mxu0 0
        %478 = vmatpush1.bf16.msra.mxu0 0
        %479 = vmatprep.subr.bf16.mxu0 0
        %480 = vmatpush1.bf16.msra.mxu0 0
        %481 = vmatprep.mubr.bf16.mxu0 0
        %482 = vmatmul.mubr.bf16.gmra.mrb[0].mxu0 %v432
        %v483 = vpop.f32.mrb[0].mxu0
        %v484 = vadd.f32 %v371, %v483
        %v485 = vpop.f32.mrb[0].mxu0
        %v486 = vpop.f32.mrb[0].mxu0
        %v487 = vadd.f32 %v374, %v486
        %v488 = vpop.f32.mrb[0].mxu0
        %489 = vmatprep.mubr.bf16.mxu0 0
        %490 = vmatmul.mubr.bf16.gmra.mrb[0].mxu0 %v435
        %v491 = vpop.f32.mrb[0].mxu0
        %v492 = vadd.f32 %v379, %v491
        %v493 = vpop.f32.mrb[0].mxu0
        %v494 = vpop.f32.mrb[0].mxu0
        %v495 = vadd.f32 %v382, %v494
        %v496 = vpop.f32.mrb[0].mxu0
        %497 = vmatprep.mubr.bf16.mxu0 0
        %498 = vmatmul.mubr.bf16.gmra.mrb[0].mxu0 %v438
        %v499 = vpop.f32.mrb[0].mxu0
        %v500 = vadd.f32 %v387, %v499
        %v501 = vpop.f32.mrb[0].mxu0
        %v502 = vpop.f32.mrb[0].mxu0
        %v503 = vadd.f32 %v390, %v502
        %v504 = vpop.f32.mrb[0].mxu0
        %505 = vmatprep.mubr.bf16.mxu0 0
        %506 = vmatmul.mubr.bf16.gmra.mrb[0].mxu0 %v441
        %v507 = vpop.f32.mrb[0].mxu0
        %v508 = vadd.f32 %v395, %v507
        %v509 = vpop.f32.mrb[0].mxu0
        %v510 = vpop.f32.mrb[0].mxu0
        %v511 = vadd.f32 %v398, %v510
        %v512 = vpop.f32.mrb[0].mxu0
        %513 = vmatprep.mubr.bf16.mxu0 0
        %514 = vmatmul.mubr.bf16.gmra.mrb[0].mxu0 %v444
        %v515 = vpop.f32.mrb[0].mxu0
        %v516 = vadd.f32 %v403, %v515
        %v517 = vpop.f32.mrb[0].mxu0
        %v518 = vpop.f32.mrb[0].mxu0
        %v519 = vpop.f32.mrb[0].mxu0
        %520 = vdwg.mxu0
        %v521 = vld [vmem:[%s215] sm:$0xf]
        %v522 = vld [vmem:[%s215 + $0x4] sm:$0xf]
        %v523 = vld [vmem:[%s215 + $0x8] sm:$0xf]
        %v524 = vld [vmem:[%s215 + $0xc] sm:$0xf]
        %v525 = vld [vmem:[%s215 + $0x10] sm:$0xf]
        %v526 = vld [vmem:[%s215 + $0x14] sm:$0xf]
        %v527 = vld [vmem:[%s215 + $0x18] sm:$0xf]
        %v528 = vld [vmem:[%s215 + $0x1c] sm:$0xf]
        %v529 = vld [vmem:[%s215 + $0x20] sm:$0xf]
        %v530 = vld [vmem:[%s215 + $0x24] sm:$0x1]
        %s531 = scalar_lea.vmem %s219, 4
        %v532 = vld [vmem:[%s531] sm:$0x3]
        %v543 = vunpack.c.l.b16 %v521
        %v544 = vunpack.c.l.b16 %v522
        %v545 = vunpack.c.l.b16 %v523
        %v546 = vunpack.c.l.b16 %v524
        %v547 = vunpack.c.l.b16 %v525
        %v548 = vunpack.c.l.b16 %v526
        %v549 = vunpack.c.l.b16 %v527
        %v550 = vunpack.c.l.b16 %v528
        %v551 = vunpack.c.l.b16 %v529
        %v552 = vunpack.c.l.b16 %v530
        %v553 = vpack.c.b16 %v544, %v543
        %v554 = vpack.c.b16 %v546, %v545
        %v555 = vpack.c.b16 %v548, %v547
        %v556 = vpack.c.b16 %v550, %v549
        %v557 = vpack.c.b16 %v552, %v551
        %v559 = vshrl.u32 %v553, 16
        %v561 = vshll.u32 %v553, 16
        %v563 = vrot.slane %v561, 1
        %v564 = vor.u32 %v559, %v563
        %v566 = vshll.u32 %v554, 16
        %v568 = vrot.slane %v566, 1
        %v569 = vsel %vm276, %v564, %v568
        %v570 = vshrl.u32 %v554, 16
        %v572 = vor.u32 %v570, %v568
        %v574 = vshll.u32 %v555, 16
        %v576 = vrot.slane %v574, 1
        %v577 = vsel %vm276, %v572, %v576
        %v578 = vshrl.u32 %v555, 16
        %v580 = vor.u32 %v578, %v576
        %v582 = vshll.u32 %v556, 16
        %v584 = vrot.slane %v582, 1
        %v585 = vsel %vm276, %v580, %v584
        %v586 = vshrl.u32 %v556, 16
        %v588 = vor.u32 %v586, %v584
        %v590 = vshll.u32 %v557, 16
        %v592 = vrot.slane %v590, 1
        %v593 = vsel %vm276, %v588, %v592
        %v594 = vshrl.u32 %v557, 16
        %v596 = vor.u32 %v594, %v592
        %v598 = vsel %vm316, %v569, 0
        %v601 = vsel %vm316, %v577, 0
        %v604 = vsel %vm316, %v585, 0
        %v607 = vsel %vm316, %v593, 0
        %v610 = vsel %vm316, %v596, 0
        %v613 = vsel %vm332, %v532, 0
        %615 = vmatprep.subr.bf16.mxu0 0
        %616 = vmatpush1.bf16.msra.mxu0 %v613
        %617 = vmatprep.subr.bf16.mxu0 0
        %618 = vmatpush1.bf16.msra.mxu0 0
        %619 = vmatprep.subr.bf16.mxu0 0
        %620 = vmatpush1.bf16.msra.mxu0 0
        %621 = vmatprep.subr.bf16.mxu0 0
        %622 = vmatpush1.bf16.msra.mxu0 0
        %623 = vmatprep.subr.bf16.mxu0 0
        %624 = vmatpush1.bf16.msra.mxu0 0
        %625 = vmatprep.subr.bf16.mxu0 0
        %626 = vmatpush1.bf16.msra.mxu0 0
        %627 = vmatprep.subr.bf16.mxu0 0
        %628 = vmatpush1.bf16.msra.mxu0 0
        %629 = vmatprep.subr.bf16.mxu0 0
        %630 = vmatpush1.bf16.msra.mxu0 0
        %631 = vmatprep.subr.bf16.mxu0 0
        %632 = vmatpush1.bf16.msra.mxu0 0
        %633 = vmatprep.subr.bf16.mxu0 0
        %634 = vmatpush1.bf16.msra.mxu0 0
        %635 = vmatprep.subr.bf16.mxu0 0
        %636 = vmatpush1.bf16.msra.mxu0 0
        %637 = vmatprep.subr.bf16.mxu0 0
        %638 = vmatpush1.bf16.msra.mxu0 0
        %639 = vmatprep.subr.bf16.mxu0 0
        %640 = vmatpush1.bf16.msra.mxu0 0
        %641 = vmatprep.subr.bf16.mxu0 0
        %642 = vmatpush1.bf16.msra.mxu0 0
        %643 = vmatprep.subr.bf16.mxu0 0
        %644 = vmatpush1.bf16.msra.mxu0 0
        %645 = vmatprep.subr.bf16.mxu0 0
        %646 = vmatpush1.bf16.msra.mxu0 0
        %647 = vmatprep.mubr.bf16.mxu0 0
        %648 = vmatmul.mubr.bf16.gmra.mrb[0].mxu0 %v598
        %v649 = vpop.f32.mrb[0].mxu0
        %v650 = vadd.f32 0.0, %v649
        %v651 = vpop.f32.mrb[0].mxu0
        %v652 = vpop.f32.mrb[0].mxu0
        %v653 = vadd.f32 0.0, %v652
        %v654 = vpop.f32.mrb[0].mxu0
        %655 = vmatprep.mubr.bf16.mxu0 0
        %656 = vmatmul.mubr.bf16.gmra.mrb[0].mxu0 %v601
        %v657 = vpop.f32.mrb[0].mxu0
        %v658 = vadd.f32 0.0, %v657
        %v659 = vpop.f32.mrb[0].mxu0
        %v660 = vpop.f32.mrb[0].mxu0
        %v661 = vadd.f32 0.0, %v660
        %v662 = vpop.f32.mrb[0].mxu0
        %663 = vmatprep.mubr.bf16.mxu0 0
        %664 = vmatmul.mubr.bf16.gmra.mrb[0].mxu0 %v604
        %v665 = vpop.f32.mrb[0].mxu0
        %v666 = vadd.f32 0.0, %v665
        %v667 = vpop.f32.mrb[0].mxu0
        %v668 = vpop.f32.mrb[0].mxu0
        %v669 = vadd.f32 0.0, %v668
        %v670 = vpop.f32.mrb[0].mxu0
        %671 = vmatprep.mubr.bf16.mxu0 0
        %672 = vmatmul.mubr.bf16.gmra.mrb[0].mxu0 %v607
        %v673 = vpop.f32.mrb[0].mxu0
        %v674 = vadd.f32 0.0, %v673
        %v675 = vpop.f32.mrb[0].mxu0
        %v676 = vpop.f32.mrb[0].mxu0
        %v677 = vadd.f32 0.0, %v676
        %v678 = vpop.f32.mrb[0].mxu0
        %679 = vmatprep.mubr.bf16.mxu0 0
        %680 = vmatmul.mubr.bf16.gmra.mrb[0].mxu0 %v610
        %v681 = vpop.f32.mrb[0].mxu0
        %v682 = vadd.f32 0.0, %v681
        %v683 = vpop.f32.mrb[0].mxu0
        %v684 = vpop.f32.mrb[0].mxu0
        %v685 = vpop.f32.mrb[0].mxu0
        %686 = vdwg.mxu0
        %v687 = vadd.f32 %v484, %v650
        %v688 = vadd.f32 %v487, %v653
        %v689 = vadd.f32 %v492, %v658
        %v690 = vadd.f32 %v495, %v661
        %v691 = vadd.f32 %v500, %v666
        %v692 = vadd.f32 %v503, %v669
        %v693 = vadd.f32 %v508, %v674
        %v694 = vadd.f32 %v511, %v677
        %v695 = vadd.f32 %v516, %v682
        %v696 = vld [vmem:[%s215 + $0x50] sm:$0xe]
        %v697 = vld [vmem:[%s215 + $0x54] sm:$0xf]
        %v698 = vld [vmem:[%s215 + $0x58] sm:$0xf]
        %v699 = vld [vmem:[%s215 + $0x5c] sm:$0xf]
        %v700 = vld [vmem:[%s215 + $0x60] sm:$0xf]
        %v701 = vld [vmem:[%s215 + $0x64] sm:$0xf]
        %v702 = vld [vmem:[%s215 + $0x68] sm:$0xf]
        %v703 = vld [vmem:[%s215 + $0x6c] sm:$0xf]
        %v704 = vld [vmem:[%s215 + $0x70] sm:$0xf]
        %v705 = vld [vmem:[%s215 + $0x74] sm:$0x1]
        %s706 = scalar_lea.vmem %s219, 6
        %v707 = vld [vmem:[%s706] sm:$0x3]
        %v718 = vunpack.c.l.b16 %v696
        %v719 = vunpack.c.l.b16 %v697
        %v720 = vunpack.c.l.b16 %v698
        %v721 = vunpack.c.l.b16 %v699
        %v722 = vunpack.c.l.b16 %v700
        %v723 = vunpack.c.l.b16 %v701
        %v724 = vunpack.c.l.b16 %v702
        %v725 = vunpack.c.l.b16 %v703
        %v726 = vunpack.c.l.b16 %v704
        %v727 = vunpack.c.l.b16 %v705
        %v728 = vpack.c.b16 %v719, %v718
        %v729 = vpack.c.b16 %v721, %v720
        %v730 = vpack.c.b16 %v723, %v722
        %v731 = vpack.c.b16 %v725, %v724
        %v732 = vpack.c.b16 %v727, %v726
        %vm733 = vcmask 1046528
        %v734 = vrot.slane %v728, 1
        %v735 = vrot.slane %v729, 1
        %v736 = vsel %vm733, %v734, %v735
        %v737 = vrot.slane %v730, 1
        %v738 = vsel %vm733, %v735, %v737
        %v739 = vrot.slane %v731, 1
        %v740 = vsel %vm733, %v737, %v739
        %v741 = vrot.slane %v732, 1
        %v742 = vsel %vm733, %v739, %v741
        %v744 = vsel %vm316, %v736, 0
        %v747 = vsel %vm316, %v738, 0
        %v750 = vsel %vm316, %v740, 0
        %v753 = vsel %vm316, %v742, 0
        %v756 = vsel %vm316, %v741, 0
        %v759 = vsel %vm332, %v707, 0
        %761 = vmatprep.subr.bf16.mxu0 0
        %762 = vmatpush1.bf16.msra.mxu0 %v759
        %763 = vmatprep.subr.bf16.mxu0 0
        %764 = vmatpush1.bf16.msra.mxu0 0
        %765 = vmatprep.subr.bf16.mxu0 0
        %766 = vmatpush1.bf16.msra.mxu0 0
        %767 = vmatprep.subr.bf16.mxu0 0
        %768 = vmatpush1.bf16.msra.mxu0 0
        %769 = vmatprep.subr.bf16.mxu0 0
        %770 = vmatpush1.bf16.msra.mxu0 0
        %771 = vmatprep.subr.bf16.mxu0 0
        %772 = vmatpush1.bf16.msra.mxu0 0
        %773 = vmatprep.subr.bf16.mxu0 0
        %774 = vmatpush1.bf16.msra.mxu0 0
        %775 = vmatprep.subr.bf16.mxu0 0
        %776 = vmatpush1.bf16.msra.mxu0 0
        %777 = vmatprep.subr.bf16.mxu0 0
        %778 = vmatpush1.bf16.msra.mxu0 0
        %779 = vmatprep.subr.bf16.mxu0 0
        %780 = vmatpush1.bf16.msra.mxu0 0
        %781 = vmatprep.subr.bf16.mxu0 0
        %782 = vmatpush1.bf16.msra.mxu0 0
        %783 = vmatprep.subr.bf16.mxu0 0
        %784 = vmatpush1.bf16.msra.mxu0 0
        %785 = vmatprep.subr.bf16.mxu0 0
        %786 = vmatpush1.bf16.msra.mxu0 0
        %787 = vmatprep.subr.bf16.mxu0 0
        %788 = vmatpush1.bf16.msra.mxu0 0
        %789 = vmatprep.subr.bf16.mxu0 0
        %790 = vmatpush1.bf16.msra.mxu0 0
        %791 = vmatprep.subr.bf16.mxu0 0
        %792 = vmatpush1.bf16.msra.mxu0 0
        %793 = vmatprep.mubr.bf16.mxu0 0
        %794 = vmatmul.mubr.bf16.gmra.mrb[0].mxu0 %v744
        %v795 = vpop.f32.mrb[0].mxu0
        %v796 = vadd.f32 0.0, %v795
        %v797 = vpop.f32.mrb[0].mxu0
        %v798 = vpop.f32.mrb[0].mxu0
        %v799 = vadd.f32 0.0, %v798
        %v800 = vpop.f32.mrb[0].mxu0
        %801 = vmatprep.mubr.bf16.mxu0 0
        %802 = vmatmul.mubr.bf16.gmra.mrb[0].mxu0 %v747
        %v803 = vpop.f32.mrb[0].mxu0
        %v804 = vadd.f32 0.0, %v803
        %v805 = vpop.f32.mrb[0].mxu0
        %v806 = vpop.f32.mrb[0].mxu0
        %v807 = vadd.f32 0.0, %v806
        %v808 = vpop.f32.mrb[0].mxu0
        %809 = vmatprep.mubr.bf16.mxu0 0
        %810 = vmatmul.mubr.bf16.gmra.mrb[0].mxu0 %v750
        %v811 = vpop.f32.mrb[0].mxu0
        %v812 = vadd.f32 0.0, %v811
        %v813 = vpop.f32.mrb[0].mxu0
        %v814 = vpop.f32.mrb[0].mxu0
        %v815 = vadd.f32 0.0, %v814
        %v816 = vpop.f32.mrb[0].mxu0
        %817 = vmatprep.mubr.bf16.mxu0 0
        %818 = vmatmul.mubr.bf16.gmra.mrb[0].mxu0 %v753
        %v819 = vpop.f32.mrb[0].mxu0
        %v820 = vadd.f32 0.0, %v819
        %v821 = vpop.f32.mrb[0].mxu0
        %v822 = vpop.f32.mrb[0].mxu0
        %v823 = vadd.f32 0.0, %v822
        %v824 = vpop.f32.mrb[0].mxu0
        %825 = vmatprep.mubr.bf16.mxu0 0
        %826 = vmatmul.mubr.bf16.gmra.mrb[0].mxu0 %v756
        %v827 = vpop.f32.mrb[0].mxu0
        %v828 = vadd.f32 0.0, %v827
        %v829 = vpop.f32.mrb[0].mxu0
        %v830 = vpop.f32.mrb[0].mxu0
        %v831 = vpop.f32.mrb[0].mxu0
        %832 = vdwg.mxu0
        %v833 = vadd.f32 %v687, %v796
        %v834 = vadd.f32 %v688, %v799
        %v835 = vadd.f32 %v689, %v804
        %v836 = vadd.f32 %v690, %v807
        %v837 = vadd.f32 %v691, %v812
        %v838 = vadd.f32 %v692, %v815
        %v839 = vadd.f32 %v693, %v820
        %v840 = vadd.f32 %v694, %v823
        %v841 = vadd.f32 %v695, %v828
        %v842 = vld [vmem:[%s215 + $0x78] sm:$0xe]
        %v843 = vld [vmem:[%s215 + $0x7c] sm:$0xf]
        %v844 = vld [vmem:[%s215 + $0x80] sm:$0xf]
        %v845 = vld [vmem:[%s215 + $0x84] sm:$0xf]
        %v846 = vld [vmem:[%s215 + $0x88] sm:$0xf]
        %v847 = vld [vmem:[%s215 + $0x8c] sm:$0xf]
        %v848 = vld [vmem:[%s215 + $0x90] sm:$0xf]
        %v849 = vld [vmem:[%s215 + $0x94] sm:$0xf]
        %v850 = vld [vmem:[%s215 + $0x98] sm:$0xf]
        %v851 = vld [vmem:[%s215 + $0x9c] sm:$0x3]
        %s852 = scalar_lea.vmem %s219, 8
        %v853 = vld [vmem:[%s852] sm:$0x3]
        %v864 = vunpack.c.l.b16 %v842
        %v865 = vunpack.c.l.b16 %v843
        %v866 = vunpack.c.l.b16 %v844
        %v867 = vunpack.c.l.b16 %v845
        %v868 = vunpack.c.l.b16 %v846
        %v869 = vunpack.c.l.b16 %v847
        %v870 = vunpack.c.l.b16 %v848
        %v871 = vunpack.c.l.b16 %v849
        %v872 = vunpack.c.l.b16 %v850
        %v873 = vunpack.c.l.b16 %v851
        %v874 = vpack.c.b16 %v865, %v864
        %v875 = vpack.c.b16 %v867, %v866
        %v876 = vpack.c.b16 %v869, %v868
        %v877 = vpack.c.b16 %v871, %v870
        %v878 = vpack.c.b16 %v873, %v872
        %vm879 = vsmask.f32 6400
        %v881 = vshrl.u32 %v874, 16
        %v883 = vrot.slane %v881, 1
        %v884 = vshll.u32 %v874, 16
        %v886 = vrot.slane %v884, 2
        %v887 = vor.u32 %v883, %v886
        %v889 = vshrl.u32 %v875, 16
        %v891 = vrot.slane %v889, 1
        %v892 = vshll.u32 %v875, 16
        %v894 = vrot.slane %v892, 2
        %v895 = vor.u32 %v891, %v894
        %v896 = vsel %vm879, %v887, %v895
        %v898 = vshrl.u32 %v876, 16
        %v900 = vrot.slane %v898, 1
        %v901 = vshll.u32 %v876, 16
        %v903 = vrot.slane %v901, 2
        %v904 = vor.u32 %v900, %v903
        %v905 = vsel %vm879, %v895, %v904
        %v907 = vshrl.u32 %v877, 16
        %v909 = vrot.slane %v907, 1
        %v910 = vshll.u32 %v877, 16
        %v912 = vrot.slane %v910, 2
        %v913 = vor.u32 %v909, %v912
        %v914 = vsel %vm879, %v904, %v913
        %v916 = vshrl.u32 %v878, 16
        %v918 = vrot.slane %v916, 1
        %v919 = vshll.u32 %v878, 16
        %v921 = vrot.slane %v919, 2
        %v922 = vor.u32 %v918, %v921
        %v923 = vsel %vm879, %v913, %v922
        %v925 = vsel %vm316, %v896, 0
        %v928 = vsel %vm316, %v905, 0
        %v931 = vsel %vm316, %v914, 0
        %v934 = vsel %vm316, %v923, 0
        %v937 = vsel %vm316, %v922, 0
        %v940 = vsel %vm332, %v853, 0
        %942 = vmatprep.subr.bf16.mxu0 0
        %943 = vmatpush1.bf16.msra.mxu0 %v940
        %944 = vmatprep.subr.bf16.mxu0 0
        %945 = vmatpush1.bf16.msra.mxu0 0
        %946 = vmatprep.subr.bf16.mxu0 0
        %947 = vmatpush1.bf16.msra.mxu0 0
        %948 = vmatprep.subr.bf16.mxu0 0
        %949 = vmatpush1.bf16.msra.mxu0 0
        %950 = vmatprep.subr.bf16.mxu0 0
        %951 = vmatpush1.bf16.msra.mxu0 0
        %952 = vmatprep.subr.bf16.mxu0 0
        %953 = vmatpush1.bf16.msra.mxu0 0
        %954 = vmatprep.subr.bf16.mxu0 0
        %955 = vmatpush1.bf16.msra.mxu0 0
        %956 = vmatprep.subr.bf16.mxu0 0
        %957 = vmatpush1.bf16.msra.mxu0 0
        %958 = vmatprep.subr.bf16.mxu0 0
        %959 = vmatpush1.bf16.msra.mxu0 0
        %960 = vmatprep.subr.bf16.mxu0 0
        %961 = vmatpush1.bf16.msra.mxu0 0
        %962 = vmatprep.subr.bf16.mxu0 0
        %963 = vmatpush1.bf16.msra.mxu0 0
        %964 = vmatprep.subr.bf16.mxu0 0
        %965 = vmatpush1.bf16.msra.mxu0 0
        %966 = vmatprep.subr.bf16.mxu0 0
        %967 = vmatpush1.bf16.msra.mxu0 0
        %968 = vmatprep.subr.bf16.mxu0 0
        %969 = vmatpush1.bf16.msra.mxu0 0
        %970 = vmatprep.subr.bf16.mxu0 0
        %971 = vmatpush1.bf16.msra.mxu0 0
        %972 = vmatprep.subr.bf16.mxu0 0
        %973 = vmatpush1.bf16.msra.mxu0 0
        %974 = vmatprep.mubr.bf16.mxu0 0
        %975 = vmatmul.mubr.bf16.gmra.mrb[0].mxu0 %v925
        %v976 = vpop.f32.mrb[0].mxu0
        %v977 = vadd.f32 0.0, %v976
        %v978 = vpop.f32.mrb[0].mxu0
        %v979 = vpop.f32.mrb[0].mxu0
        %v980 = vadd.f32 0.0, %v979
        %v981 = vpop.f32.mrb[0].mxu0
        %982 = vmatprep.mubr.bf16.mxu0 0
        %983 = vmatmul.mubr.bf16.gmra.mrb[0].mxu0 %v928
        %v984 = vpop.f32.mrb[0].mxu0
        %v985 = vadd.f32 0.0, %v984
        %v986 = vpop.f32.mrb[0].mxu0
        %v987 = vpop.f32.mrb[0].mxu0
        %v988 = vadd.f32 0.0, %v987
        %v989 = vpop.f32.mrb[0].mxu0
        %990 = vmatprep.mubr.bf16.mxu0 0
        %991 = vmatmul.mubr.bf16.gmra.mrb[0].mxu0 %v931
        %v992 = vpop.f32.mrb[0].mxu0
        %v993 = vadd.f32 0.0, %v992
        %v994 = vpop.f32.mrb[0].mxu0
        %v995 = vpop.f32.mrb[0].mxu0
        %v996 = vadd.f32 0.0, %v995
        %v997 = vpop.f32.mrb[0].mxu0
        %998 = vmatprep.mubr.bf16.mxu0 0
        %999 = vmatmul.mubr.bf16.gmra.mrb[0].mxu0 %v934
        %v1000 = vpop.f32.mrb[0].mxu0
        %v1001 = vadd.f32 0.0, %v1000
        %v1002 = vpop.f32.mrb[0].mxu0
        %v1003 = vpop.f32.mrb[0].mxu0
        %v1004 = vadd.f32 0.0, %v1003
        %v1005 = vpop.f32.mrb[0].mxu0
        %1006 = vmatprep.mubr.bf16.mxu0 0
        %1007 = vmatmul.mubr.bf16.gmra.mrb[0].mxu0 %v937
        %v1008 = vpop.f32.mrb[0].mxu0
        %v1009 = vadd.f32 0.0, %v1008
        %v1010 = vpop.f32.mrb[0].mxu0
        %v1011 = vpop.f32.mrb[0].mxu0
        %v1012 = vpop.f32.mrb[0].mxu0
        %1013 = vdwg.mxu0
        %v1014 = vadd.f32 %v833, %v977
        %v1015 = vadd.f32 %v834, %v980
        %v1016 = vadd.f32 %v835, %v985
        %v1017 = vadd.f32 %v836, %v988
        %v1018 = vadd.f32 %v837, %v993
        %v1019 = vadd.f32 %v838, %v996
        %v1020 = vadd.f32 %v839, %v1001
        %v1021 = vadd.f32 %v840, %v1004
        %v1022 = vadd.f32 %v841, %v1009
        %v1023 = vld [vmem:[%s215 + $0x74] sm:$0x3]
        %s1024 = scalar_lea.vmem %s219, 10
        %v1025 = vld [vmem:[%s1024] sm:$0x3]
        %v1027 = vunpack.c.l.b16 %v1023
        %v1028 = vpack.c.b16 %v1027, %v726
        %v1030 = vshrl.u32 %v728, 16
        %v1032 = vrot.slane %v1030, 1
        %v1033 = vshll.u32 %v728, 16
        %v1035 = vrot.slane %v1033, 2
        %v1036 = vor.u32 %v1032, %v1035
        %v1038 = vshrl.u32 %v729, 16
        %v1040 = vrot.slane %v1038, 1
        %v1041 = vshll.u32 %v729, 16
        %v1043 = vrot.slane %v1041, 2
        %v1044 = vor.u32 %v1040, %v1043
        %v1045 = vsel %vm879, %v1036, %v1044
        %v1047 = vshrl.u32 %v730, 16
        %v1049 = vrot.slane %v1047, 1
        %v1050 = vshll.u32 %v730, 16
        %v1052 = vrot.slane %v1050, 2
        %v1053 = vor.u32 %v1049, %v1052
        %v1054 = vsel %vm879, %v1044, %v1053
        %v1056 = vshrl.u32 %v731, 16
        %v1058 = vrot.slane %v1056, 1
        %v1059 = vshll.u32 %v731, 16
        %v1061 = vrot.slane %v1059, 2
        %v1062 = vor.u32 %v1058, %v1061
        %v1063 = vsel %vm879, %v1053, %v1062
        %v1065 = vshrl.u32 %v1028, 16
        %v1067 = vrot.slane %v1065, 1
        %v1068 = vshll.u32 %v1028, 16
        %v1070 = vrot.slane %v1068, 2
        %v1071 = vor.u32 %v1067, %v1070
        %v1072 = vsel %vm879, %v1062, %v1071
        %v1074 = vsel %vm316, %v1045, 0
        %v1077 = vsel %vm316, %v1054, 0
        %v1080 = vsel %vm316, %v1063, 0
        %v1083 = vsel %vm316, %v1072, 0
        %v1086 = vsel %vm316, %v1071, 0
        %v1089 = vsel %vm332, %v1025, 0
        %1091 = vmatprep.subr.bf16.mxu0 0
        %1092 = vmatpush1.bf16.msra.mxu0 %v1089
        %1093 = vmatprep.subr.bf16.mxu0 0
        %1094 = vmatpush1.bf16.msra.mxu0 0
        %1095 = vmatprep.subr.bf16.mxu0 0
        %1096 = vmatpush1.bf16.msra.mxu0 0
        %1097 = vmatprep.subr.bf16.mxu0 0
        %1098 = vmatpush1.bf16.msra.mxu0 0
        %1099 = vmatprep.subr.bf16.mxu0 0
        %1100 = vmatpush1.bf16.msra.mxu0 0
        %1101 = vmatprep.subr.bf16.mxu0 0
        %1102 = vmatpush1.bf16.msra.mxu0 0
        %1103 = vmatprep.subr.bf16.mxu0 0
        %1104 = vmatpush1.bf16.msra.mxu0 0
        %1105 = vmatprep.subr.bf16.mxu0 0
        %1106 = vmatpush1.bf16.msra.mxu0 0
        %1107 = vmatprep.subr.bf16.mxu0 0
        %1108 = vmatpush1.bf16.msra.mxu0 0
        %1109 = vmatprep.subr.bf16.mxu0 0
        %1110 = vmatpush1.bf16.msra.mxu0 0
        %1111 = vmatprep.subr.bf16.mxu0 0
        %1112 = vmatpush1.bf16.msra.mxu0 0
        %1113 = vmatprep.subr.bf16.mxu0 0
        %1114 = vmatpush1.bf16.msra.mxu0 0
        %1115 = vmatprep.subr.bf16.mxu0 0
        %1116 = vmatpush1.bf16.msra.mxu0 0
        %1117 = vmatprep.subr.bf16.mxu0 0
        %1118 = vmatpush1.bf16.msra.mxu0 0
        %1119 = vmatprep.subr.bf16.mxu0 0
        %1120 = vmatpush1.bf16.msra.mxu0 0
        %1121 = vmatprep.subr.bf16.mxu0 0
        %1122 = vmatpush1.bf16.msra.mxu0 0
        %1123 = vmatprep.mubr.bf16.mxu0 0
        %1124 = vmatmul.mubr.bf16.gmra.mrb[0].mxu0 %v1074
        %v1125 = vpop.f32.mrb[0].mxu0
        %v1126 = vadd.f32 0.0, %v1125
        %v1127 = vpop.f32.mrb[0].mxu0
        %v1128 = vpop.f32.mrb[0].mxu0
        %v1129 = vadd.f32 0.0, %v1128
        %v1130 = vpop.f32.mrb[0].mxu0
        %1131 = vmatprep.mubr.bf16.mxu0 0
        %1132 = vmatmul.mubr.bf16.gmra.mrb[0].mxu0 %v1077
        %v1133 = vpop.f32.mrb[0].mxu0
        %v1134 = vadd.f32 0.0, %v1133
        %v1135 = vpop.f32.mrb[0].mxu0
        %v1136 = vpop.f32.mrb[0].mxu0
        %v1137 = vadd.f32 0.0, %v1136
        %v1138 = vpop.f32.mrb[0].mxu0
        %1139 = vmatprep.mubr.bf16.mxu0 0
        %1140 = vmatmul.mubr.bf16.gmra.mrb[0].mxu0 %v1080
        %v1141 = vpop.f32.mrb[0].mxu0
        %v1142 = vadd.f32 0.0, %v1141
        %v1143 = vpop.f32.mrb[0].mxu0
        %v1144 = vpop.f32.mrb[0].mxu0
        %v1145 = vadd.f32 0.0, %v1144
        %v1146 = vpop.f32.mrb[0].mxu0
        %1147 = vmatprep.mubr.bf16.mxu0 0
        %1148 = vmatmul.mubr.bf16.gmra.mrb[0].mxu0 %v1083
        %v1149 = vpop.f32.mrb[0].mxu0
        %v1150 = vadd.f32 0.0, %v1149
        %v1151 = vpop.f32.mrb[0].mxu0
        %v1152 = vpop.f32.mrb[0].mxu0
        %v1153 = vadd.f32 0.0, %v1152
        %v1154 = vpop.f32.mrb[0].mxu0
        %1155 = vmatprep.mubr.bf16.mxu0 0
        %1156 = vmatmul.mubr.bf16.gmra.mrb[0].mxu0 %v1086
        %v1157 = vpop.f32.mrb[0].mxu0
        %v1158 = vadd.f32 0.0, %v1157
        %v1159 = vpop.f32.mrb[0].mxu0
        %v1160 = vpop.f32.mrb[0].mxu0
        %v1161 = vpop.f32.mrb[0].mxu0
        %1162 = vdwg.mxu0
        %v1163 = vadd.f32 %v1014, %v1126
        %v1164 = vadd.f32 %v1015, %v1129
        %v1165 = vadd.f32 %v1016, %v1134
        %v1166 = vadd.f32 %v1017, %v1137
        %v1167 = vadd.f32 %v1018, %v1142
        %v1168 = vadd.f32 %v1019, %v1145
        %v1169 = vadd.f32 %v1020, %v1150
        %v1170 = vadd.f32 %v1021, %v1153
        %v1171 = vadd.f32 %v1022, %v1158
        %v1172 = vld [vmem:[%s215 + $0x4] sm:$0xf]
        %v1173 = vld [vmem:[%s215 + $0x8] sm:$0xf]
        %v1174 = vld [vmem:[%s215 + $0xc] sm:$0xf]
        %v1175 = vld [vmem:[%s215 + $0x10] sm:$0xf]
        %v1176 = vld [vmem:[%s215 + $0x14] sm:$0xf]
        %v1177 = vld [vmem:[%s215 + $0x18] sm:$0xf]
        %v1178 = vld [vmem:[%s215 + $0x1c] sm:$0xf]
        %v1179 = vld [vmem:[%s215 + $0x20] sm:$0xf]
        %v1180 = vld [vmem:[%s215 + $0x24] sm:$0xf]
        %v1181 = vld [vmem:[%s215 + $0x28] sm:$0x1]
        %s1182 = scalar_lea.vmem %s219, 12
        %v1183 = vld [vmem:[%s1182] sm:$0x3]
        %v1194 = vunpack.c.l.b16 %v1172
        %v1195 = vunpack.c.l.b16 %v1173
        %v1196 = vunpack.c.l.b16 %v1174
        %v1197 = vunpack.c.l.b16 %v1175
        %v1198 = vunpack.c.l.b16 %v1176
        %v1199 = vunpack.c.l.b16 %v1177
        %v1200 = vunpack.c.l.b16 %v1178
        %v1201 = vunpack.c.l.b16 %v1179
        %v1202 = vunpack.c.l.b16 %v1180
        %v1203 = vunpack.c.l.b16 %v1181
        %v1204 = vpack.c.b16 %v1195, %v1194
        %v1205 = vpack.c.b16 %v1197, %v1196
        %v1206 = vpack.c.b16 %v1199, %v1198
        %v1207 = vpack.c.b16 %v1201, %v1200
        %v1208 = vpack.c.b16 %v1203, %v1202
        %v1210 = vshrl.u32 %v1204, 16
        %v1212 = vshll.u32 %v1204, 16
        %v1214 = vrot.slane %v1212, 1
        %v1215 = vor.u32 %v1210, %v1214
        %v1217 = vshll.u32 %v1205, 16
        %v1219 = vrot.slane %v1217, 1
        %v1220 = vsel %vm276, %v1215, %v1219
        %v1221 = vshrl.u32 %v1205, 16
        %v1223 = vor.u32 %v1221, %v1219
        %v1225 = vshll.u32 %v1206, 16
        %v1227 = vrot.slane %v1225, 1
        %v1228 = vsel %vm276, %v1223, %v1227
        %v1229 = vshrl.u32 %v1206, 16
        %v1231 = vor.u32 %v1229, %v1227
        %v1233 = vshll.u32 %v1207, 16
        %v1235 = vrot.slane %v1233, 1
        %v1236 = vsel %vm276, %v1231, %v1235
        %v1237 = vshrl.u32 %v1207, 16
        %v1239 = vor.u32 %v1237, %v1235
        %v1241 = vshll.u32 %v1208, 16
        %v1243 = vrot.slane %v1241, 1
        %v1244 = vsel %vm276, %v1239, %v1243
        %v1245 = vshrl.u32 %v1208, 16
        %v1247 = vor.u32 %v1245, %v1243
        %v1249 = vsel %vm316, %v1220, 0
        %v1252 = vsel %vm316, %v1228, 0
        %v1255 = vsel %vm316, %v1236, 0
        %v1258 = vsel %vm316, %v1244, 0
        %v1261 = vsel %vm316, %v1247, 0
        %v1264 = vsel %vm332, %v1183, 0
        %1266 = vmatprep.subr.bf16.mxu0 0
        %1267 = vmatpush1.bf16.msra.mxu0 %v1264
        %1268 = vmatprep.subr.bf16.mxu0 0
        %1269 = vmatpush1.bf16.msra.mxu0 0
        %1270 = vmatprep.subr.bf16.mxu0 0
        %1271 = vmatpush1.bf16.msra.mxu0 0
        %1272 = vmatprep.subr.bf16.mxu0 0
        %1273 = vmatpush1.bf16.msra.mxu0 0
        %1274 = vmatprep.subr.bf16.mxu0 0
        %1275 = vmatpush1.bf16.msra.mxu0 0
        %1276 = vmatprep.subr.bf16.mxu0 0
        %1277 = vmatpush1.bf16.msra.mxu0 0
        %1278 = vmatprep.subr.bf16.mxu0 0
        %1279 = vmatpush1.bf16.msra.mxu0 0
        %1280 = vmatprep.subr.bf16.mxu0 0
        %1281 = vmatpush1.bf16.msra.mxu0 0
        %1282 = vmatprep.subr.bf16.mxu0 0
        %1283 = vmatpush1.bf16.msra.mxu0 0
        %1284 = vmatprep.subr.bf16.mxu0 0
        %1285 = vmatpush1.bf16.msra.mxu0 0
        %1286 = vmatprep.subr.bf16.mxu0 0
        %1287 = vmatpush1.bf16.msra.mxu0 0
        %1288 = vmatprep.subr.bf16.mxu0 0
        %1289 = vmatpush1.bf16.msra.mxu0 0
        %1290 = vmatprep.subr.bf16.mxu0 0
        %1291 = vmatpush1.bf16.msra.mxu0 0
        %1292 = vmatprep.subr.bf16.mxu0 0
        %1293 = vmatpush1.bf16.msra.mxu0 0
        %1294 = vmatprep.subr.bf16.mxu0 0
        %1295 = vmatpush1.bf16.msra.mxu0 0
        %1296 = vmatprep.subr.bf16.mxu0 0
        %1297 = vmatpush1.bf16.msra.mxu0 0
        %1298 = vmatprep.mubr.bf16.mxu0 0
        %1299 = vmatmul.mubr.bf16.gmra.mrb[0].mxu0 %v1249
        %v1300 = vpop.f32.mrb[0].mxu0
        %v1301 = vadd.f32 0.0, %v1300
        %v1302 = vpop.f32.mrb[0].mxu0
        %v1303 = vpop.f32.mrb[0].mxu0
        %v1304 = vadd.f32 0.0, %v1303
        %v1305 = vpop.f32.mrb[0].mxu0
        %1306 = vmatprep.mubr.bf16.mxu0 0
        %1307 = vmatmul.mubr.bf16.gmra.mrb[0].mxu0 %v1252
        %v1308 = vpop.f32.mrb[0].mxu0
        %v1309 = vadd.f32 0.0, %v1308
        %v1310 = vpop.f32.mrb[0].mxu0
        %v1311 = vpop.f32.mrb[0].mxu0
        %v1312 = vadd.f32 0.0, %v1311
        %v1313 = vpop.f32.mrb[0].mxu0
        %1314 = vmatprep.mubr.bf16.mxu0 0
        %1315 = vmatmul.mubr.bf16.gmra.mrb[0].mxu0 %v1255
        %v1316 = vpop.f32.mrb[0].mxu0
        %v1317 = vadd.f32 0.0, %v1316
        %v1318 = vpop.f32.mrb[0].mxu0
        %v1319 = vpop.f32.mrb[0].mxu0
        %v1320 = vadd.f32 0.0, %v1319
        %v1321 = vpop.f32.mrb[0].mxu0
        %1322 = vmatprep.mubr.bf16.mxu0 0
        %1323 = vmatmul.mubr.bf16.gmra.mrb[0].mxu0 %v1258
        %v1324 = vpop.f32.mrb[0].mxu0
        %v1325 = vadd.f32 0.0, %v1324
        %v1326 = vpop.f32.mrb[0].mxu0
        %v1327 = vpop.f32.mrb[0].mxu0
        %v1328 = vadd.f32 0.0, %v1327
        %v1329 = vpop.f32.mrb[0].mxu0
        %1330 = vmatprep.mubr.bf16.mxu0 0
        %1331 = vmatmul.mubr.bf16.gmra.mrb[0].mxu0 %v1261
        %v1332 = vpop.f32.mrb[0].mxu0
        %v1333 = vadd.f32 0.0, %v1332
        %v1334 = vpop.f32.mrb[0].mxu0
        %v1335 = vpop.f32.mrb[0].mxu0
        %v1336 = vpop.f32.mrb[0].mxu0
        %1337 = vdwg.mxu0
        %v1338 = vadd.f32 %v1163, %v1301
        %v1339 = vadd.f32 %v1164, %v1304
        %v1340 = vadd.f32 %v1165, %v1309
        %v1341 = vadd.f32 %v1166, %v1312
        %v1342 = vadd.f32 %v1167, %v1317
        %v1343 = vadd.f32 %v1168, %v1320
        %v1344 = vadd.f32 %v1169, %v1325
        %v1345 = vadd.f32 %v1170, %v1328
        %v1346 = vadd.f32 %v1171, %v1333
        %v1347 = vld [vmem:[%s215 + $0x2c] sm:$0xe]
        %v1348 = vld [vmem:[%s215 + $0x30] sm:$0xf]
        %v1349 = vld [vmem:[%s215 + $0x34] sm:$0xf]
        %v1350 = vld [vmem:[%s215 + $0x38] sm:$0xf]
        %v1351 = vld [vmem:[%s215 + $0x3c] sm:$0xf]
        %v1352 = vld [vmem:[%s215 + $0x40] sm:$0xf]
        %v1353 = vld [vmem:[%s215 + $0x44] sm:$0xf]
        %v1354 = vld [vmem:[%s215 + $0x48] sm:$0xf]
        %v1355 = vld [vmem:[%s215 + $0x4c] sm:$0xf]
        %v1356 = vld [vmem:[%s215 + $0x50] sm:$0x1]
        %s1357 = scalar_lea.vmem %s219, 14
        %v1358 = vld [vmem:[%s1357] sm:$0x3]
        %v1369 = vunpack.c.l.b16 %v1347
        %v1370 = vunpack.c.l.b16 %v1348
        %v1371 = vunpack.c.l.b16 %v1349
        %v1372 = vunpack.c.l.b16 %v1350
        %v1373 = vunpack.c.l.b16 %v1351
        %v1374 = vunpack.c.l.b16 %v1352
        %v1375 = vunpack.c.l.b16 %v1353
        %v1376 = vunpack.c.l.b16 %v1354
        %v1377 = vunpack.c.l.b16 %v1355
        %v1378 = vunpack.c.l.b16 %v1356
        %v1379 = vpack.c.b16 %v1370, %v1369
        %v1380 = vpack.c.b16 %v1372, %v1371
        %v1381 = vpack.c.b16 %v1374, %v1373
        %v1382 = vpack.c.b16 %v1376, %v1375
        %v1383 = vpack.c.b16 %v1378, %v1377
        %v1384 = vrot.slane %v1379, 1
        %v1385 = vrot.slane %v1380, 1
        %v1386 = vsel %vm733, %v1384, %v1385
        %v1387 = vrot.slane %v1381, 1
        %v1388 = vsel %vm733, %v1385, %v1387
        %v1389 = vrot.slane %v1382, 1
        %v1390 = vsel %vm733, %v1387, %v1389
        %v1391 = vrot.slane %v1383, 1
        %v1392 = vsel %vm733, %v1389, %v1391
        %v1394 = vsel %vm316, %v1386, 0
        %v1397 = vsel %vm316, %v1388, 0
        %v1400 = vsel %vm316, %v1390, 0
        %v1403 = vsel %vm316, %v1392, 0
        %v1406 = vsel %vm316, %v1391, 0
        %v1409 = vsel %vm332, %v1358, 0
        %1411 = vmatprep.subr.bf16.mxu0 0
        %1412 = vmatpush1.bf16.msra.mxu0 %v1409
        %1413 = vmatprep.subr.bf16.mxu0 0
        %1414 = vmatpush1.bf16.msra.mxu0 0
        %1415 = vmatprep.subr.bf16.mxu0 0
        %1416 = vmatpush1.bf16.msra.mxu0 0
        %1417 = vmatprep.subr.bf16.mxu0 0
        %1418 = vmatpush1.bf16.msra.mxu0 0
        %1419 = vmatprep.subr.bf16.mxu0 0
        %1420 = vmatpush1.bf16.msra.mxu0 0
        %1421 = vmatprep.subr.bf16.mxu0 0
        %1422 = vmatpush1.bf16.msra.mxu0 0
        %1423 = vmatprep.subr.bf16.mxu0 0
        %1424 = vmatpush1.bf16.msra.mxu0 0
        %1425 = vmatprep.subr.bf16.mxu0 0
        %1426 = vmatpush1.bf16.msra.mxu0 0
        %1427 = vmatprep.subr.bf16.mxu0 0
        %1428 = vmatpush1.bf16.msra.mxu0 0
        %1429 = vmatprep.subr.bf16.mxu0 0
        %1430 = vmatpush1.bf16.msra.mxu0 0
        %1431 = vmatprep.subr.bf16.mxu0 0
        %1432 = vmatpush1.bf16.msra.mxu0 0
        %1433 = vmatprep.subr.bf16.mxu0 0
        %1434 = vmatpush1.bf16.msra.mxu0 0
        %1435 = vmatprep.subr.bf16.mxu0 0
        %1436 = vmatpush1.bf16.msra.mxu0 0
        %1437 = vmatprep.subr.bf16.mxu0 0
        %1438 = vmatpush1.bf16.msra.mxu0 0
        %1439 = vmatprep.subr.bf16.mxu0 0
        %1440 = vmatpush1.bf16.msra.mxu0 0
        %1441 = vmatprep.subr.bf16.mxu0 0
        %1442 = vmatpush1.bf16.msra.mxu0 0
        %1443 = vmatprep.mubr.bf16.mxu0 0
        %1444 = vmatmul.mubr.bf16.gmra.mrb[0].mxu0 %v1394
        %v1445 = vpop.f32.mrb[0].mxu0
        %v1446 = vadd.f32 0.0, %v1445
        %v1447 = vpop.f32.mrb[0].mxu0
        %v1448 = vpop.f32.mrb[0].mxu0
        %v1449 = vadd.f32 0.0, %v1448
        %v1450 = vpop.f32.mrb[0].mxu0
        %1451 = vmatprep.mubr.bf16.mxu0 0
        %1452 = vmatmul.mubr.bf16.gmra.mrb[0].mxu0 %v1397
        %v1453 = vpop.f32.mrb[0].mxu0
        %v1454 = vadd.f32 0.0, %v1453
        %v1455 = vpop.f32.mrb[0].mxu0
        %v1456 = vpop.f32.mrb[0].mxu0
        %v1457 = vadd.f32 0.0, %v1456
        %v1458 = vpop.f32.mrb[0].mxu0
        %1459 = vmatprep.mubr.bf16.mxu0 0
        %1460 = vmatmul.mubr.bf16.gmra.mrb[0].mxu0 %v1400
        %v1461 = vpop.f32.mrb[0].mxu0
        %v1462 = vadd.f32 0.0, %v1461
        %v1463 = vpop.f32.mrb[0].mxu0
        %v1464 = vpop.f32.mrb[0].mxu0
        %v1465 = vadd.f32 0.0, %v1464
        %v1466 = vpop.f32.mrb[0].mxu0
        %1467 = vmatprep.mubr.bf16.mxu0 0
        %1468 = vmatmul.mubr.bf16.gmra.mrb[0].mxu0 %v1403
        %v1469 = vpop.f32.mrb[0].mxu0
        %v1470 = vadd.f32 0.0, %v1469
        %v1471 = vpop.f32.mrb[0].mxu0
        %v1472 = vpop.f32.mrb[0].mxu0
        %v1473 = vadd.f32 0.0, %v1472
        %v1474 = vpop.f32.mrb[0].mxu0
        %1475 = vmatprep.mubr.bf16.mxu0 0
        %1476 = vmatmul.mubr.bf16.gmra.mrb[0].mxu0 %v1406
        %v1477 = vpop.f32.mrb[0].mxu0
        %v1478 = vadd.f32 0.0, %v1477
        %v1479 = vpop.f32.mrb[0].mxu0
        %v1480 = vpop.f32.mrb[0].mxu0
        %v1481 = vpop.f32.mrb[0].mxu0
        %1482 = vdwg.mxu0
        %v1483 = vadd.f32 %v1338, %v1446
        %v1484 = vadd.f32 %v1339, %v1449
        %v1485 = vadd.f32 %v1340, %v1454
        %v1486 = vadd.f32 %v1341, %v1457
        %v1487 = vadd.f32 %v1342, %v1462
        %v1488 = vadd.f32 %v1343, %v1465
        %v1489 = vadd.f32 %v1344, %v1470
        %v1490 = vadd.f32 %v1345, %v1473
        %v1491 = vadd.f32 %v1346, %v1478
        %v1492 = vld [vmem:[%s215 + $0x4] sm:$0xe]
        %s1493 = scalar_lea.vmem %s219, 16
        %v1494 = vld [vmem:[%s1493] sm:$0x3]
        %v1496 = vunpack.c.l.b16 %v1492
        %v1497 = vpack.c.b16 %v1195, %v1496
        %v1498 = vrot.slane %v1497, 1
        %v1499 = vrot.slane %v1205, 1
        %v1500 = vsel %vm733, %v1498, %v1499
        %v1501 = vrot.slane %v1206, 1
        %v1502 = vsel %vm733, %v1499, %v1501
        %v1503 = vrot.slane %v1207, 1
        %v1504 = vsel %vm733, %v1501, %v1503
        %v1505 = vrot.slane %v1208, 1
        %v1506 = vsel %vm733, %v1503, %v1505
        %v1508 = vsel %vm316, %v1500, 0
        %v1511 = vsel %vm316, %v1502, 0
        %v1514 = vsel %vm316, %v1504, 0
        %v1517 = vsel %vm316, %v1506, 0
        %v1520 = vsel %vm316, %v1505, 0
        %v1523 = vsel %vm332, %v1494, 0
        %1525 = vmatprep.subr.bf16.mxu0 0
        %1526 = vmatpush1.bf16.msra.mxu0 %v1523
        %1527 = vmatprep.subr.bf16.mxu0 0
        %1528 = vmatpush1.bf16.msra.mxu0 0
        %1529 = vmatprep.subr.bf16.mxu0 0
        %1530 = vmatpush1.bf16.msra.mxu0 0
        %1531 = vmatprep.subr.bf16.mxu0 0
        %1532 = vmatpush1.bf16.msra.mxu0 0
        %1533 = vmatprep.subr.bf16.mxu0 0
        %1534 = vmatpush1.bf16.msra.mxu0 0
        %1535 = vmatprep.subr.bf16.mxu0 0
        %1536 = vmatpush1.bf16.msra.mxu0 0
        %1537 = vmatprep.subr.bf16.mxu0 0
        %1538 = vmatpush1.bf16.msra.mxu0 0
        %1539 = vmatprep.subr.bf16.mxu0 0
        %1540 = vmatpush1.bf16.msra.mxu0 0
        %1541 = vmatprep.subr.bf16.mxu0 0
        %1542 = vmatpush1.bf16.msra.mxu0 0
        %1543 = vmatprep.subr.bf16.mxu0 0
        %1544 = vmatpush1.bf16.msra.mxu0 0
        %1545 = vmatprep.subr.bf16.mxu0 0
        %1546 = vmatpush1.bf16.msra.mxu0 0
        %1547 = vmatprep.subr.bf16.mxu0 0
        %1548 = vmatpush1.bf16.msra.mxu0 0
        %1549 = vmatprep.subr.bf16.mxu0 0
        %1550 = vmatpush1.bf16.msra.mxu0 0
        %1551 = vmatprep.subr.bf16.mxu0 0
        %1552 = vmatpush1.bf16.msra.mxu0 0
        %1553 = vmatprep.subr.bf16.mxu0 0
        %1554 = vmatpush1.bf16.msra.mxu0 0
        %1555 = vmatprep.subr.bf16.mxu0 0
        %1556 = vmatpush1.bf16.msra.mxu0 0
        %1557 = vmatprep.mubr.bf16.mxu0 0
        %1558 = vmatmul.mubr.bf16.gmra.mrb[0].mxu0 %v1508
        %v1559 = vpop.f32.mrb[0].mxu0
        %v1560 = vadd.f32 0.0, %v1559
        %v1561 = vpop.f32.mrb[0].mxu0
        %v1562 = vpop.f32.mrb[0].mxu0
        %v1563 = vadd.f32 0.0, %v1562
        %v1564 = vpop.f32.mrb[0].mxu0
        %1565 = vmatprep.mubr.bf16.mxu0 0
        %1566 = vmatmul.mubr.bf16.gmra.mrb[0].mxu0 %v1511
        %v1567 = vpop.f32.mrb[0].mxu0
        %v1568 = vadd.f32 0.0, %v1567
        %v1569 = vpop.f32.mrb[0].mxu0
        %v1570 = vpop.f32.mrb[0].mxu0
        %v1571 = vadd.f32 0.0, %v1570
        %v1572 = vpop.f32.mrb[0].mxu0
        %1573 = vmatprep.mubr.bf16.mxu0 0
        %1574 = vmatmul.mubr.bf16.gmra.mrb[0].mxu0 %v1514
        %v1575 = vpop.f32.mrb[0].mxu0
        %v1576 = vadd.f32 0.0, %v1575
        %v1577 = vpop.f32.mrb[0].mxu0
        %v1578 = vpop.f32.mrb[0].mxu0
        %v1579 = vadd.f32 0.0, %v1578
        %v1580 = vpop.f32.mrb[0].mxu0
        %1581 = vmatprep.mubr.bf16.mxu0 0
        %1582 = vmatmul.mubr.bf16.gmra.mrb[0].mxu0 %v1517
        %v1583 = vpop.f32.mrb[0].mxu0
        %v1584 = vadd.f32 0.0, %v1583
        %v1585 = vpop.f32.mrb[0].mxu0
        %v1586 = vpop.f32.mrb[0].mxu0
        %v1587 = vadd.f32 0.0, %v1586
        %v1588 = vpop.f32.mrb[0].mxu0
        %1589 = vmatprep.mubr.bf16.mxu0 0
        %1590 = vmatmul.mubr.bf16.gmra.mrb[0].mxu0 %v1520
        %v1591 = vpop.f32.mrb[0].mxu0
        %v1592 = vadd.f32 0.0, %v1591
        %v1593 = vpop.f32.mrb[0].mxu0
        %v1594 = vpop.f32.mrb[0].mxu0
        %v1595 = vpop.f32.mrb[0].mxu0
        %1596 = vdwg.mxu0
        %v1597 = vadd.f32 %v1483, %v1560
        %v1598 = vadd.f32 %v1484, %v1563
        %v1599 = vadd.f32 %v1485, %v1568
        %v1600 = vadd.f32 %v1486, %v1571
        %v1601 = vadd.f32 %v1487, %v1576
        %v1602 = vadd.f32 %v1488, %v1579
        %v1603 = vadd.f32 %v1489, %v1584
        %v1604 = vadd.f32 %v1490, %v1587
        %v1605 = vadd.f32 %v1491, %v1592
        %v1606 = vld [vmem:[#allocation2] sm:$0x1]
        %v1608 = vlaneseq
        %v1609 = vshrl.u32 %v1608, 7
        %v1610 = vsub.s32 0, %v1609
        %v1611 = vrot.slane %v1606, %v1610
        %v1613 = vadd.f32 %v1597, %v1611
        %v1614 = vadd.f32 %v1598, %v1611
        %v1615 = vadd.f32 %v1599, %v1611
        %v1616 = vadd.f32 %v1600, %v1611
        %v1617 = vadd.f32 %v1601, %v1611
        %v1618 = vadd.f32 %v1602, %v1611
        %v1619 = vadd.f32 %v1603, %v1611
        %v1620 = vadd.f32 %v1604, %v1611
        %v1621 = vadd.f32 %v1605, %v1611
        %vm1622 = vcmp.ge.f32.partialorder %v1613, 0.0
        %vm1623 = vcmp.ge.f32.partialorder %v1614, 0.0
        %vm1624 = vcmp.ge.f32.partialorder %v1615, 0.0
        %vm1625 = vcmp.ge.f32.partialorder %v1616, 0.0
        %vm1626 = vcmp.ge.f32.partialorder %v1617, 0.0
        %vm1627 = vcmp.ge.f32.partialorder %v1618, 0.0
        %vm1628 = vcmp.ge.f32.partialorder %v1619, 0.0
        %vm1629 = vcmp.ge.f32.partialorder %v1620, 0.0
        %vm1630 = vcmp.ge.f32.partialorder %v1621, 0.0
        %v1631 = vmul.f32 %v1613, 0.2
        %v1632 = vmul.f32 %v1614, 0.2
        %v1633 = vmul.f32 %v1615, 0.2
        %v1634 = vmul.f32 %v1616, 0.2
        %v1635 = vmul.f32 %v1617, 0.2
        %v1636 = vmul.f32 %v1618, 0.2
        %v1637 = vmul.f32 %v1619, 0.2
        %v1638 = vmul.f32 %v1620, 0.2
        %v1639 = vmul.f32 %v1621, 0.2
        %v1640 = vsel %vm1622, %v1613, %v1631
        %v1641 = vsel %vm1623, %v1614, %v1632
        %v1642 = vsel %vm1624, %v1615, %v1633
        %v1643 = vsel %vm1625, %v1616, %v1634
        %v1644 = vsel %vm1626, %v1617, %v1635
        %v1645 = vsel %vm1627, %v1618, %v1636
        %v1646 = vsel %vm1628, %v1619, %v1637
        %v1647 = vsel %vm1629, %v1620, %v1638
        %v1648 = vsel %vm1630, %v1621, %v1639
        %v1649 = vpack.c.bf16 %v1641, %v1640
        %v1650 = vpack.c.bf16 %v1643, %v1642
        %v1651 = vpack.c.bf16 %v1645, %v1644
        %v1652 = vpack.c.bf16 %v1647, %v1646
        %v1653 = vpack.c.bf16 %v1648, %v1648
        %v1659 = vunpack.c.l.b16 %v1649
        %v1660 = vunpack.c.h.b16 %v1649
        %v1661 = vunpack.c.l.b16 %v1650
        %v1662 = vunpack.c.h.b16 %v1650
        %v1663 = vunpack.c.l.b16 %v1651
        %v1664 = vunpack.c.h.b16 %v1651
        %v1665 = vunpack.c.l.b16 %v1652
        %v1666 = vunpack.c.h.b16 %v1652
        %v1667 = vunpack.c.l.b16 %v1653
        %v1668 = vpack.c.b16 %v1659, %v1659
        %v1669 = vpack.c.b16 %v1660, %v1660
        %v1670 = vpack.c.b16 %v1661, %v1661
        %v1671 = vpack.c.b16 %v1662, %v1662
        %v1672 = vpack.c.b16 %v1663, %v1663
        %v1673 = vpack.c.b16 %v1664, %v1664
        %v1674 = vpack.c.b16 %v1665, %v1665
        %v1675 = vpack.c.b16 %v1666, %v1666
        %v1676 = vpack.c.b16 %v1667, %v1667
        %vm1686 = vcmask 519168
        %1687 = vst.msk [vmem:[%s227] sm:$0xf] %vm1686, %v1668
        %1688 = vst.msk [vmem:[%s227 + $0x4] sm:$0xf] %vm1686, %v1669
        %1689 = vst.msk [vmem:[%s227 + $0x8] sm:$0xf] %vm1686, %v1670
        %1690 = vst.msk [vmem:[%s227 + $0xc] sm:$0xf] %vm1686, %v1671
        %1691 = vst.msk [vmem:[%s227 + $0x10] sm:$0xf] %vm1686, %v1672
        %1692 = vst.msk [vmem:[%s227 + $0x14] sm:$0xf] %vm1686, %v1673
        %1693 = vst.msk [vmem:[%s227 + $0x18] sm:$0xf] %vm1686, %v1674
        %1694 = vst.msk [vmem:[%s227 + $0x1c] sm:$0xf] %vm1686, %v1675
        %1695 = vst.msk [vmem:[%s227 + $0x20] sm:$0xf] %vm1686, %v1676
        %p1696 = scmp.lt.s32.totalorder %s20, 1
        %s1697 = scalar_select %p1696, %s20, 1
        %p1698 = scmp.lt.s32.totalorder %s19, 0
        %s1699 = scalar_select %p1698, %s19, 0
        %s1700 = smul.addr %s1697, 9
        %s1701 = sadd.s32 %s1699, %s1700
        %s1702 = smul.addr %s1701, 4
        %s1703 = scalar_lea.vmem %s3, %s1702
        // Predicated region
        $region37: #{discriminator_forward.8} parent=31 // pred_check
          %p1704 = pneg %p125
        $region38: #{discriminator_forward.8} parent=31 // pred_check_branch
          %1706 = sbr.rel (%p1704) target = $region40
        $region39: #{discriminator_forward.8} parent=31 // pred_region
          _
        $region40: #{discriminator_forward.8} parent=31 // pred_fallthru
          _
      $region32: #{discriminator_forward.8} parent=5 // pred_fallthru
        _
      %p1707 = scmp.le.s32.totalorder 2, %s10
      // Predicated region
      $region41: #{discriminator_forward.8} parent=5 // pred_check
        %p1708 = pneg %p1707
      $region42: #{discriminator_forward.8} parent=5 // pred_check_branch
        %1710 = sbr.rel (%p1708) target = $region44
      $region43: #{discriminator_forward.8} parent=5 // pred_region
        %s1711 = ssub.s32 %s10, 2
        // Predicated region
        $region45: #{discriminator_forward.8} parent=43 // pred_check
          %p1712 = pneg %p131
        $region46: #{discriminator_forward.8} parent=43 // pred_check_branch
          %1714 = sbr.rel (%p1712) target = $region48
        $region47: #{discriminator_forward.8} parent=43 // pred_region
          %p1715 = scmp.lt.s32.totalorder %s22, 1
          %s1716 = scalar_select %p1715, %s22, 1
          %p1717 = scmp.lt.s32.totalorder %s21, 0
          %s1718 = scalar_select %p1717, %s21, 0
          %s1719 = smul.addr %s1716, 9
          %s1720 = sadd.s32 %s1718, %s1719
          %s1721 = smul.addr %s1720, 4
          %s1722 = scalar_lea.vmem %s3, %s1721
        $region48: #{discriminator_forward.8} parent=43 // pred_fallthru
          _
      $region44: #{discriminator_forward.8} parent=5 // pred_fallthru
        _
    $region6: #{discriminator_forward.8} parent=1 // loop_footer
      %s14 = sadd.s32 1, %s10
    $region7: #{discriminator_forward.8} parent=1 // loop_footer_branch
      %9 = sbr.rel target = $region3
    $region8: #{discriminator_forward.8} parent=1 // loop_exit
      _
    %1723 = vsyncpa [#allocation3], 1
    %s1724 = scalar_lea.sflag [#allocation3], 1
    %1725 = vsyncpa %s1724, 1

// kernel: discriminator_forward.12
$region0: #{discriminator_forward.12}
  #allocation0 [shape = 'u32[]', space=smem, size = 0x4, offset = 0x4, fixed_abs, tag = 'smem constant byte address 0x4 - core index']
  #allocation1 [shape = 'u32[144,128]{1,0:T(1,128)}', space=vmem, size = 0x12000, scoped, tag = 'internal scratch']
  %s0 = inlined_call_operand.vmem [shape: bf16[2,4,256], index: 0, kind: input, shape index: {}]
  %s1 = inlined_call_operand.vmem [shape: bf16[2,4,256], index: 1, kind: output, shape index: {}]
  %s2 = sld [smem:[#allocation0]]
  $region37: #{discriminator_forward.12} parent=0
    _
  %s4 = ssub.s32 1, %s2
  %s5 = scalar_select 0, %s4, %s2
  loop: start=0, step=1, limit=6
  $region2: #{discriminator_forward.12} parent=0 // loop_pre_header
    _
  $region3: #{discriminator_forward.12} parent=0 // loop_header
    %s7 = sphi 0, %s11
    %p8 = scmp.ge.s32.totalorder %s7, 6
    %s14 = sphi 0, %s26
    %s15 = sphi 0, %s22
    %s16 = sphi 0, %s14
    %s17 = sphi 0, %s15
    %s18 = sphi 0, %s16
    %s19 = sphi 0, %s17
    %s31 = sphi 0, %s33
    %s34 = sphi 0, %s31
    %s35 = sphi 0, %s34
    %s51 = sphi 0, %s35
    %s59 = sphi 0, %s61
    %s62 = sphi 0, %s59
    %s63 = sphi 0, %s62
    %s79 = sphi 0, %s63
  $region4: #{discriminator_forward.12} parent=0 // loop_header_branch
    %10 = sbr.rel (%p8) target = $region8
  $region5: #{discriminator_forward.12} parent=0 // loop_body
    %s12 = ssub.s32 %s7, 1
    %s13 = ssub.s32 %s7, 2
    %s20 = sadd.s32 1, %s15
    %p21 = scmp.ge.s32.totalorder %s20, 2
    %s22 = scalar_select %p21, 0, %s20
    %s23 = sadd.s32 1, %s14
    %s24 = scalar_select %p21, %s23, %s14
    %p25 = scmp.ge.s32.totalorder %s24, 2
    %s26 = scalar_select %p25, 0, %s24
    %s27 = ssub.s32 %s14, %s26
    %s28 = ssub.s32 %s15, %s22
    %s29 = sor.u32 %s27, %s28
    %p30 = scmp.eq.s32.totalorder %s29, 0
    %s32 = sadd.s32 %s31, 1
    %s33 = scalar_select %p30, %s31, %s32
    %p36 = pneg %p30
    %p37 = scmp.eq.s32.totalorder %s7, 3
    %p38 = por %p36, %p37
    %p39 = scmp.ne.s32.totalorder %s31, %s34
    %p40 = scmp.eq.s32.totalorder %s7, 0
    %p41 = por %p39, %p40
    %p42 = scmp.ne.s32.totalorder %s31, %s34
    %p43 = scmp.eq.s32.totalorder %s12, 3
    %p44 = por %p42, %p43
    %p45 = scmp.ne.s32.totalorder %s34, %s35
    %p46 = scmp.eq.s32.totalorder %s12, 0
    %p47 = por %p45, %p46
    %p48 = scmp.ne.s32.totalorder %s34, %s35
    %p49 = scmp.eq.s32.totalorder %s13, 3
    %p50 = por %p48, %p49
    %p52 = scmp.ne.s32.totalorder %s35, %s51
    %p53 = scmp.eq.s32.totalorder %s13, 0
    %p54 = por %p52, %p53
    %s55 = ssub.s32 %s14, %s26
    %s56 = ssub.s32 %s15, %s22
    %s57 = sor.u32 %s55, %s56
    %p58 = scmp.eq.s32.totalorder %s57, 0
    %s60 = sadd.s32 %s59, 1
    %s61 = scalar_select %p58, %s59, %s60
    %p64 = pneg %p58
    %p65 = scmp.eq.s32.totalorder %s7, 3
    %p66 = por %p64, %p65
    %p67 = scmp.ne.s32.totalorder %s59, %s62
    %p68 = scmp.eq.s32.totalorder %s7, 0
    %p69 = por %p67, %p68
    %p70 = scmp.ne.s32.totalorder %s59, %s62
    %p71 = scmp.eq.s32.totalorder %s12, 3
    %p72 = por %p70, %p71
    %p73 = scmp.ne.s32.totalorder %s62, %s63
    %p74 = scmp.eq.s32.totalorder %s12, 0
    %p75 = por %p73, %p74
    %p76 = scmp.ne.s32.totalorder %s62, %s63
    %p77 = scmp.eq.s32.totalorder %s13, 3
    %p78 = por %p76, %p77
    %p80 = scmp.ne.s32.totalorder %s63, %s79
    %p81 = scmp.eq.s32.totalorder %s13, 0
    %p82 = por %p80, %p81
    %p83 = scmp.le.s32.totalorder 1, %s7
    %p84 = scmp.lt.s32.totalorder %s7, 5
    %p85 = pnand %p83, %p84
    %p86 = pneg %p85
    // Predicated region
    $region9: #{discriminator_forward.12} parent=5 // pred_check
      _
    $region10: #{discriminator_forward.12} parent=5 // pred_check_branch
      %88 = sbr.rel (%p85) target = $region12
    $region11: #{discriminator_forward.12} parent=5 // pred_region
      %s89 = ssub.s32 %s7, 1
    $region12: #{discriminator_forward.12} parent=5 // pred_fallthru
      _
    %p90 = scmp.lt.s32.totalorder %s7, 4
    // Predicated region
    $region13: #{discriminator_forward.12} parent=5 // pred_check
      %p91 = pneg %p90
    $region14: #{discriminator_forward.12} parent=5 // pred_check_branch
      %93 = sbr.rel (%p91) target = $region16
    $region15: #{discriminator_forward.12} parent=5 // pred_region
      // Predicated region
      $region17: #{discriminator_forward.12} parent=15 // pred_check
        %p94 = pneg %p41
      $region18: #{discriminator_forward.12} parent=15 // pred_check_branch
        %96 = sbr.rel (%p94) target = $region20
      $region19: #{discriminator_forward.12} parent=15 // pred_region
        %p97 = scmp.lt.s32.totalorder %s14, 1
        %s98 = scalar_select %p97, %s14, 1
        %p99 = scmp.lt.s32.totalorder %s15, 1
        %s100 = scalar_select %p99, %s15, 1
        %s101 = smul.addr %s98, 2
        %s102 = sadd.s32 %s100, %s101
        %s103 = smul.addr %s102, 2
        %s104 = scalar_lea.vmem %s0, %s103
      $region20: #{discriminator_forward.12} parent=15 // pred_fallthru
        _
    $region16: #{discriminator_forward.12} parent=5 // pred_fallthru
      _
    %p105 = scmp.le.s32.totalorder 1, %s7
    %p106 = scmp.lt.s32.totalorder %s7, 5
    %p107 = pnand %p105, %p106
    %p108 = pneg %p107
    // Predicated region
    $region21: #{discriminator_forward.12} parent=5 // pred_check
      _
    $region22: #{discriminator_forward.12} parent=5 // pred_check_branch
      %110 = sbr.rel (%p107) target = $region24
    $region23: #{discriminator_forward.12} parent=5 // pred_region
      %s111 = ssub.s32 %s7, 1
      %p112 = scmp.lt.s32.totalorder %s16, 1
      %s113 = scalar_select %p112, %s16, 1
      %p114 = scmp.lt.s32.totalorder %s17, 1
      %s115 = scalar_select %p114, %s17, 1
      %s116 = smul.addr %s113, 2
      %s117 = sadd.s32 %s115, %s116
      %s118 = smul.addr %s117, 2
      %s119 = scalar_lea.vmem %s0, %s118
      %p120 = pneg %p47
      %p121 = pneg %p44
      %p122 = pneg %p75
      %p123 = pneg %p72
      %p124 = scmp.lt.s32.totalorder %s16, 1
      %s125 = scalar_select %p124, %s16, 1
      %p126 = scmp.lt.s32.totalorder %s17, 1
      %s127 = scalar_select %p126, %s17, 1
      %s128 = smul.addr %s125, 2
      %s129 = sadd.s32 %s127, %s128
      %s130 = smul.addr %s129, 2
      %s131 = scalar_lea.vmem %s1, %s130
      %p132 = scmp.lt.s32.totalorder %s16, 1
      %s133 = scalar_select %p132, %s16, 1
      %p134 = scmp.lt.s32.totalorder %s17, 1
      %s135 = scalar_select %p134, %s17, 1
      %s136 = smul.addr %s133, 2
      %s137 = sadd.s32 %s135, %s136
      %s138 = smul.addr %s137, 2
      %s139 = scalar_lea.vmem %s0, %s138
      %p140 = scmp.lt.s32.totalorder %s16, 1
      %s141 = scalar_select %p140, %s16, 1
      %p142 = scmp.lt.s32.totalorder %s17, 1
      %s143 = scalar_select %p142, %s17, 1
      %s144 = smul.addr %s141, 2
      %s145 = sadd.s32 %s143, %s144
      %s146 = smul.addr %s145, 2
      %s147 = scalar_lea.vmem %s1, %s146
      %v148 = vld [vmem:[%s139] sm:$0x3]
      %v149 = vunpack.c.l.bf16 %v148
      %vm150 = vcmask 1043456
      %v151 = vsel %vm150, %v149, 0.0
      %v152 = vrot.slane %v151, 4
      %v153 = vadd.f32 %v151, %v152
      %v154 = vrot.slane %v153, 2
      %v155 = vadd.f32 %v153, %v154
      %v156 = vrot.slane %v155, 1
      %v157 = vadd.f32 %v155, %v156
      %v158 = vmul.f32 %v157, 0.25
      %v159 = vmul.f32 %v149, %v149
      %v160 = vsel %vm150, %v159, 0.0
      %v161 = vrot.slane %v160, 4
      %v162 = vadd.f32 %v160, %v161
      %v163 = vrot.slane %v162, 2
      %v164 = vadd.f32 %v162, %v163
      %v165 = vrot.slane %v164, 1
      %v166 = vadd.f32 %v164, %v165
      %v167 = vmul.f32 %v166, 0.25
      %v168 = vmul.f32 %v158, %v158
      %v169 = vsub.f32 %v167, %v168
      %v170 = vmax.f32 %v169, 0.0
      %v171 = vsub.f32 %v149, %v158
      %v172 = vadd.f32 %v170, 1e-05
      %v173 = vrsqrt.pop %v172
      %v174 = vmul.f32 %v171, %v173
      %vm175 = vcmp.ge.f32.partialorder %v174, 0.0
      %v176 = vmul.f32 %v174, 0.2
      %v177 = vsel %vm175, %v174, %v176
      %v178 = vpack.c.bf16 %v177, %v177
      %179 = vst [vmem:[%s147] sm:$0x3] %v178
      %p180 = scmp.lt.s32.totalorder %s16, 1
      %s181 = scalar_select %p180, %s16, 1
      %p182 = scmp.lt.s32.totalorder %s17, 1
      %s183 = scalar_select %p182, %s17, 1
      %s184 = smul.addr %s181, 2
      %s185 = sadd.s32 %s183, %s184
      %s186 = smul.addr %s185, 2
      %s187 = scalar_lea.vmem %s1, %s186
      // Predicated region
      $region25: #{discriminator_forward.12} parent=23 // pred_check
        %p188 = pneg %p72
      $region26: #{discriminator_forward.12} parent=23 // pred_check_branch
        %190 = sbr.rel (%p188) target = $region28
      $region27: #{discriminator_forward.12} parent=23 // pred_region
        _
      $region28: #{discriminator_forward.12} parent=23 // pred_fallthru
        _
    $region24: #{discriminator_forward.12} parent=5 // pred_fallthru
      _
    %p191 = scmp.le.s32.totalorder 2, %s7
    // Predicated region
    $region29: #{discriminator_forward.12} parent=5 // pred_check
      %p192 = pneg %p191
    $region30: #{discriminator_forward.12} parent=5 // pred_check_branch
      %194 = sbr.rel (%p192) target = $region32
    $region31: #{discriminator_forward.12} parent=5 // pred_region
      %s195 = ssub.s32 %s7, 2
      // Predicated region
      $region33: #{discriminator_forward.12} parent=31 // pred_check
        %p196 = pneg %p78
      $region34: #{discriminator_forward.12} parent=31 // pred_check_branch
        %198 = sbr.rel (%p196) target = $region36
      $region35: #{discriminator_forward.12} parent=31 // pred_region
        %p199 = scmp.lt.s32.totalorder %s18, 1
        %s200 = scalar_select %p199, %s18, 1
        %p201 = scmp.lt.s32.totalorder %s19, 1
        %s202 = scalar_select %p201, %s19, 1
        %s203 = smul.addr %s200, 2
        %s204 = sadd.s32 %s202, %s203
        %s205 = smul.addr %s204, 2
        %s206 = scalar_lea.vmem %s1, %s205
      $region36: #{discriminator_forward.12} parent=31 // pred_fallthru
        _
    $region32: #{discriminator_forward.12} parent=5 // pred_fallthru
      _
  $region6: #{discriminator_forward.12} parent=0 // loop_footer
    %s11 = sadd.s32 1, %s7
  $region7: #{discriminator_forward.12} parent=0 // loop_footer_branch
    %6 = sbr.rel target = $region3
  $region8: #{discriminator_forward.12} parent=0 // loop_exit
    _

// kernel: discriminator_forward.11
$region0: #{discriminator_forward.11}
  #allocation0 [shape = 'u32[]', space=smem, size = 0x4, offset = 0x4, fixed_abs, tag = 'smem constant byte address 0x4 - core index']
  #allocation1 [shape = 'u32[144,128]{1,0:T(1,128)}', space=vmem, size = 0x12000, scoped, tag = 'internal scratch']
  %s0 = inlined_call_operand.vmem [shape: bf16[2,36,128], index: 0, kind: input, shape index: {}]
  %s1 = inlined_call_operand.vmem [shape: bf16[9,128,256], index: 1, kind: input, shape index: {}]
  %s2 = inlined_call_operand.vmem [shape: bf16[2,6,256], index: 2, kind: output, shape index: {}]
  %s3 = sld [smem:[#allocation0]]
  $region41: #{discriminator_forward.11} parent=0
    _
  %s5 = ssub.s32 1, %s3
  %s6 = scalar_select 0, %s5, %s3
  loop: start=0, step=1, limit=4
  $region2: #{discriminator_forward.11} parent=0 // loop_pre_header
    _
  $region3: #{discriminator_forward.11} parent=0 // loop_header
    %s8 = sphi 0, %s12
    %p9 = scmp.ge.s32.totalorder %s8, 4
    %s15 = sphi 0, %s27
    %s16 = sphi 0, %s23
    %s17 = sphi 0, %s15
    %s18 = sphi 0, %s16
    %s19 = sphi 0, %s17
    %s20 = sphi 0, %s18
    %s30 = sphi 0, %s32
    %s33 = sphi 0, %s30
    %s34 = sphi 0, %s33
    %s50 = sphi 0, %s34
    %s56 = sphi 0, %s58
    %s59 = sphi 0, %s56
    %s60 = sphi 0, %s59
    %s76 = sphi 0, %s60
    %s84 = sphi 0, %s86
    %s87 = sphi 0, %s84
    %s88 = sphi 0, %s87
    %s104 = sphi 0, %s88
  $region4: #{discriminator_forward.11} parent=0 // loop_header_branch
    %11 = sbr.rel (%p9) target = $region8
  $region5: #{discriminator_forward.11} parent=0 // loop_body
    %s13 = ssub.s32 %s8, 1
    %s14 = ssub.s32 %s8, 2
    %s21 = sadd.s32 1, %s16
    %p22 = scmp.ge.s32.totalorder %s21, 2
    %s23 = scalar_select %p22, 0, %s21
    %s24 = sadd.s32 1, %s15
    %s25 = scalar_select %p22, %s24, %s15
    %p26 = scmp.ge.s32.totalorder %s25, 1
    %s27 = scalar_select %p26, 0, %s25
    %s28 = ssub.s32 %s16, %s23
    %p29 = scmp.eq.s32.totalorder %s28, 0
    %s31 = sadd.s32 %s30, 1
    %s32 = scalar_select %p29, %s30, %s31
    %p35 = pneg %p29
    %p36 = scmp.eq.s32.totalorder %s8, 1
    %p37 = por %p35, %p36
    %p38 = scmp.ne.s32.totalorder %s30, %s33
    %p39 = scmp.eq.s32.totalorder %s8, 0
    %p40 = por %p38, %p39
    %p41 = scmp.ne.s32.totalorder %s30, %s33
    %p42 = scmp.eq.s32.totalorder %s13, 1
    %p43 = por %p41, %p42
    %p44 = scmp.ne.s32.totalorder %s33, %s34
    %p45 = scmp.eq.s32.totalorder %s13, 0
    %p46 = por %p44, %p45
    %p47 = scmp.ne.s32.totalorder %s33, %s34
    %p48 = scmp.eq.s32.totalorder %s14, 1
    %p49 = por %p47, %p48
    %p51 = scmp.ne.s32.totalorder %s34, %s50
    %p52 = scmp.eq.s32.totalorder %s14, 0
    %p53 = por %p51, %p52
    %s54 = ssub.s32 %s15, %s27
    %p55 = scmp.eq.s32.totalorder %s54, 0
    %s57 = sadd.s32 %s56, 1
    %s58 = scalar_select %p55, %s56, %s57
    %p61 = pneg %p55
    %p62 = scmp.eq.s32.totalorder %s8, 1
    %p63 = por %p61, %p62
    %p64 = scmp.ne.s32.totalorder %s56, %s59
    %p65 = scmp.eq.s32.totalorder %s8, 0
    %p66 = por %p64, %p65
    %p67 = scmp.ne.s32.totalorder %s56, %s59
    %p68 = scmp.eq.s32.totalorder %s13, 1
    %p69 = por %p67, %p68
    %p70 = scmp.ne.s32.totalorder %s59, %s60
    %p71 = scmp.eq.s32.totalorder %s13, 0
    %p72 = por %p70, %p71
    %p73 = scmp.ne.s32.totalorder %s59, %s60
    %p74 = scmp.eq.s32.totalorder %s14, 1
    %p75 = por %p73, %p74
    %p77 = scmp.ne.s32.totalorder %s60, %s76
    %p78 = scmp.eq.s32.totalorder %s14, 0
    %p79 = por %p77, %p78
    %s80 = ssub.s32 %s16, %s23
    %s81 = ssub.s32 %s15, %s27
    %s82 = sor.u32 %s80, %s81
    %p83 = scmp.eq.s32.totalorder %s82, 0
    %s85 = sadd.s32 %s84, 1
    %s86 = scalar_select %p83, %s84, %s85
    %p89 = pneg %p83
    %p90 = scmp.eq.s32.totalorder %s8, 1
    %p91 = por %p89, %p90
    %p92 = scmp.ne.s32.totalorder %s84, %s87
    %p93 = scmp.eq.s32.totalorder %s8, 0
    %p94 = por %p92, %p93
    %p95 = scmp.ne.s32.totalorder %s84, %s87
    %p96 = scmp.eq.s32.totalorder %s13, 1
    %p97 = por %p95, %p96
    %p98 = scmp.ne.s32.totalorder %s87, %s88
    %p99 = scmp.eq.s32.totalorder %s13, 0
    %p100 = por %p98, %p99
    %p101 = scmp.ne.s32.totalorder %s87, %s88
    %p102 = scmp.eq.s32.totalorder %s14, 1
    %p103 = por %p101, %p102
    %p105 = scmp.ne.s32.totalorder %s88, %s104
    %p106 = scmp.eq.s32.totalorder %s14, 0
    %p107 = por %p105, %p106
    %p108 = scmp.le.s32.totalorder 1, %s8
    %p109 = scmp.lt.s32.totalorder %s8, 3
    %p110 = pnand %p108, %p109
    %p111 = pneg %p110
    // Predicated region
    $region9: #{discriminator_forward.11} parent=5 // pred_check
      _
    $region10: #{discriminator_forward.11} parent=5 // pred_check_branch
      %113 = sbr.rel (%p110) target = $region12
    $region11: #{discriminator_forward.11} parent=5 // pred_region
      %s114 = ssub.s32 %s8, 1
      // Predicated region
      $region13: #{discriminator_forward.11} parent=11 // pred_check
        %p115 = pneg %p72
      $region14: #{discriminator_forward.11} parent=11 // pred_check_branch
        %117 = sbr.rel (%p115) target = $region16
      $region15: #{discriminator_forward.11} parent=11 // pred_region
        %s118 = smul.u32 2, %s17
        %p119 = scmp.lt.s32.totalorder %s118, 1
        %s120 = scalar_select %p119, %s118, 1
        %s121 = smul.addr %s120, 4
        %s122 = scalar_lea.vmem %s1, %s121
        %s123 = smul.u32 2, %s17
      $region16: #{discriminator_forward.11} parent=11 // pred_fallthru
        _
    $region12: #{discriminator_forward.11} parent=5 // pred_fallthru
      _
    %p124 = scmp.lt.s32.totalorder %s8, 2
    // Predicated region
    $region17: #{discriminator_forward.11} parent=5 // pred_check
      %p125 = pneg %p124
    $region18: #{discriminator_forward.11} parent=5 // pred_check_branch
      %127 = sbr.rel (%p125) target = $region20
    $region19: #{discriminator_forward.11} parent=5 // pred_region
      // Predicated region
      $region21: #{discriminator_forward.11} parent=19 // pred_check
        %p128 = pneg %p40
      $region22: #{discriminator_forward.11} parent=19 // pred_check_branch
        %130 = sbr.rel (%p128) target = $region24
      $region23: #{discriminator_forward.11} parent=19 // pred_region
        %p131 = scmp.lt.s32.totalorder %s16, 1
        %s132 = scalar_select %p131, %s16, 1
        %s133 = smul.addr %s132, 5
        %s134 = smul.addr %s133, 4
        %s135 = scalar_lea.vmem %s0, %s134
      $region24: #{discriminator_forward.11} parent=19 // pred_fallthru
        _
    $region20: #{discriminator_forward.11} parent=5 // pred_fallthru
      _
    %p136 = scmp.le.s32.totalorder 1, %s8
    %p137 = scmp.lt.s32.totalorder %s8, 3
    %p138 = pnand %p136, %p137
    %p139 = pneg %p138
    // Predicated region
    $region25: #{discriminator_forward.11} parent=5 // pred_check
      _
    $region26: #{discriminator_forward.11} parent=5 // pred_check_branch
      %141 = sbr.rel (%p138) target = $region28
    $region27: #{discriminator_forward.11} parent=5 // pred_region
      %s142 = ssub.s32 %s8, 1
      %p143 = scmp.lt.s32.totalorder %s18, 1
      %s144 = scalar_select %p143, %s18, 1
      %s145 = smul.addr %s144, 5
      %s146 = smul.addr %s145, 4
      %s147 = scalar_lea.vmem %s0, %s146
      %p148 = pneg %p46
      %p149 = pneg %p43
      %s150 = smul.u32 2, %s17
      %p151 = scmp.lt.s32.totalorder %s150, 1
      %s152 = scalar_select %p151, %s150, 1
      %s153 = smul.addr %s152, 4
      %s154 = scalar_lea.vmem %s1, %s153
      %p155 = pneg %p72
      %p156 = pneg %p69
      %p157 = pneg %p100
      %p158 = pneg %p97
      %s159 = smul.u32 2, %s17
      %p160 = scmp.lt.s32.totalorder %s18, 1
      %s161 = scalar_select %p160, %s18, 1
      %p162 = scmp.lt.s32.totalorder %s159, 1
      %s163 = scalar_select %p162, %s159, 1
      %s164 = smul.addr %s161, 2
      %s165 = sadd.s32 %s163, %s164
      %s166 = smul.addr %s165, 4
      %s167 = scalar_lea.vmem %s2, %s166
      %p168 = scmp.lt.s32.totalorder %s18, 1
      %s169 = scalar_select %p168, %s18, 1
      %s170 = smul.addr %s169, 5
      %s171 = smul.addr %s170, 4
      %s172 = scalar_lea.vmem %s0, %s171
      %s173 = smul.u32 2, %s17
      %p174 = scmp.lt.s32.totalorder %s173, 1
      %s175 = scalar_select %p174, %s173, 1
      %s176 = smul.addr %s175, 4
      %s177 = scalar_lea.vmem %s1, %s176
      %s178 = smul.u32 2, %s17
      %s179 = smul.u32 2, %s17
      %p180 = scmp.lt.s32.totalorder %s18, 1
      %s181 = scalar_select %p180, %s18, 1
      %p182 = scmp.lt.s32.totalorder %s179, 1
      %s183 = scalar_select %p182, %s179, 1
      %s184 = smul.addr %s181, 2
      %s185 = sadd.s32 %s183, %s184
      %s186 = smul.addr %s185, 4
      %s187 = scalar_lea.vmem %s2, %s186
      %s188 = smul.u32 2, %s17
      %v190 = vld [vmem:[%s172] sm:$0x7]
      %v191 = vld [vmem:[%s177] sm:$0xff]
      %v192 = vld [vmem:[%s177 + $0x8] sm:$0xff]
      %v193 = vld [vmem:[%s177 + $0x10] sm:$0xff]
      %v194 = vld [vmem:[%s177 + $0x18] sm:$0xff]
      %v195 = vld [vmem:[%s177 + $0x20] sm:$0xff]
      %v196 = vld [vmem:[%s177 + $0x28] sm:$0xff]
      %v197 = vld [vmem:[%s177 + $0x30] sm:$0xff]
      %v198 = vld [vmem:[%s177 + $0x38] sm:$0xff]
      %v199 = vld [vmem:[%s177 + $0x40] sm:$0xff]
      %v200 = vld [vmem:[%s177 + $0x48] sm:$0xff]
      %v201 = vld [vmem:[%s177 + $0x50] sm:$0xff]
      %v202 = vld [vmem:[%s177 + $0x58] sm:$0xff]
      %v203 = vld [vmem:[%s177 + $0x60] sm:$0xff]
      %v204 = vld [vmem:[%s177 + $0x68] sm:$0xff]
      %v205 = vld [vmem:[%s177 + $0x70] sm:$0xff]
      %v206 = vld [vmem:[%s177 + $0x78] sm:$0xff]
      %v207 = vld [vmem:[%s172 + $0x4] sm:$0xf]
      %s208 = scalar_lea.vmem %s177, 128
      %v209 = vld [vmem:[%s208] sm:$0xff]
      %v210 = vld [vmem:[%s208 + $0x8] sm:$0xff]
      %v211 = vld [vmem:[%s208 + $0x10] sm:$0xff]
      %v212 = vld [vmem:[%s208 + $0x18] sm:$0xff]
      %v213 = vld [vmem:[%s208 + $0x20] sm:$0xff]
      %v214 = vld [vmem:[%s208 + $0x28] sm:$0xff]
      %v215 = vld [vmem:[%s208 + $0x30] sm:$0xff]
      %v216 = vld [vmem:[%s208 + $0x38] sm:$0xff]
      %v217 = vld [vmem:[%s208 + $0x40] sm:$0xff]
      %v218 = vld [vmem:[%s208 + $0x48] sm:$0xff]
      %v219 = vld [vmem:[%s208 + $0x50] sm:$0xff]
      %v220 = vld [vmem:[%s208 + $0x58] sm:$0xff]
      %v221 = vld [vmem:[%s208 + $0x60] sm:$0xff]
      %v222 = vld [vmem:[%s208 + $0x68] sm:$0xff]
      %v223 = vld [vmem:[%s208 + $0x70] sm:$0xff]
      %v224 = vld [vmem:[%s208 + $0x78] sm:$0xff]
      %v226 = vunpack.c.l.b16 %v207
      %v227 = vpack.c.b16 %v226, %v226
      %v229 = vshrl.u32 %v227, 16
      %v231 = vshll.u32 %v227, 16
      %v233 = vrot.slane %v231, 1
      %v234 = vor.u32 %v229, %v233
      %v252 = vunpack.c.l.b16 %v209
      %v253 = vunpack.c.h.b16 %v209
      %v254 = vunpack.c.l.b16 %v210
      %v255 = vunpack.c.h.b16 %v210
      %v256 = vunpack.c.l.b16 %v211
      %v257 = vunpack.c.h.b16 %v211
      %v258 = vunpack.c.l.b16 %v212
      %v259 = vunpack.c.h.b16 %v212
      %v260 = vunpack.c.l.b16 %v213
      %v261 = vunpack.c.h.b16 %v213
      %v262 = vunpack.c.l.b16 %v214
      %v263 = vunpack.c.h.b16 %v214
      %v264 = vunpack.c.l.b16 %v215
      %v265 = vunpack.c.h.b16 %v215
      %v266 = vunpack.c.l.b16 %v216
      %v267 = vunpack.c.h.b16 %v216
      %v268 = vunpack.c.l.b16 %v217
      %v269 = vunpack.c.h.b16 %v217
      %v270 = vunpack.c.l.b16 %v218
      %v271 = vunpack.c.h.b16 %v218
      %v272 = vunpack.c.l.b16 %v219
      %v273 = vunpack.c.h.b16 %v219
      %v274 = vunpack.c.l.b16 %v220
      %v275 = vunpack.c.h.b16 %v220
      %v276 = vunpack.c.l.b16 %v221
      %v277 = vunpack.c.h.b16 %v221
      %v278 = vunpack.c.l.b16 %v222
      %v279 = vunpack.c.h.b16 %v222
      %v280 = vunpack.c.l.b16 %v223
      %v281 = vunpack.c.h.b16 %v223
      %v282 = vunpack.c.l.b16 %v224
      %v283 = vunpack.c.h.b16 %v224
      %v284 = vpack.c.b16 %v254, %v252
      %v285 = vpack.c.b16 %v255, %v253
      %v286 = vpack.c.b16 %v258, %v256
      %v287 = vpack.c.b16 %v259, %v257
      %v288 = vpack.c.b16 %v262, %v260
      %v289 = vpack.c.b16 %v263, %v261
      %v290 = vpack.c.b16 %v266, %v264
      %v291 = vpack.c.b16 %v267, %v265
      %v292 = vpack.c.b16 %v270, %v268
      %v293 = vpack.c.b16 %v271, %v269
      %v294 = vpack.c.b16 %v274, %v272
      %v295 = vpack.c.b16 %v275, %v273
      %v296 = vpack.c.b16 %v278, %v276
      %v297 = vpack.c.b16 %v279, %v277
      %v298 = vpack.c.b16 %v282, %v280
      %v299 = vpack.c.b16 %v283, %v281
      %316 = vmatprep.subr.bf16.mxu0 %v285
      %317 = vmatpush1.bf16.msra.mxu0 %v284
      %318 = vmatprep.subr.bf16.mxu0 %v287
      %319 = vmatpush1.bf16.msra.mxu0 %v286
      %320 = vmatprep.subr.bf16.mxu0 %v289
      %321 = vmatpush1.bf16.msra.mxu0 %v288
      %322 = vmatprep.subr.bf16.mxu0 %v291
      %323 = vmatpush1.bf16.msra.mxu0 %v290
      %324 = vmatprep.subr.bf16.mxu0 %v293
      %325 = vmatpush1.bf16.msra.mxu0 %v292
      %326 = vmatprep.subr.bf16.mxu0 %v295
      %327 = vmatpush1.bf16.msra.mxu0 %v294
      %328 = vmatprep.subr.bf16.mxu0 %v297
      %329 = vmatpush1.bf16.msra.mxu0 %v296
      %330 = vmatprep.subr.bf16.mxu0 %v299
      %331 = vmatpush1.bf16.msra.mxu0 %v298
      %332 = vmatprep.subr.bf16.mxu0 0
      %333 = vmatpush1.bf16.msra.mxu0 0
      %334 = vmatprep.subr.bf16.mxu0 0
      %335 = vmatpush1.bf16.msra.mxu0 0
      %336 = vmatprep.subr.bf16.mxu0 0
      %337 = vmatpush1.bf16.msra.mxu0 0
      %338 = vmatprep.subr.bf16.mxu0 0
      %339 = vmatpush1.bf16.msra.mxu0 0
      %340 = vmatprep.subr.bf16.mxu0 0
      %341 = vmatpush1.bf16.msra.mxu0 0
      %342 = vmatprep.subr.bf16.mxu0 0
      %343 = vmatpush1.bf16.msra.mxu0 0
      %344 = vmatprep.subr.bf16.mxu0 0
      %345 = vmatpush1.bf16.msra.mxu0 0
      %346 = vmatprep.subr.bf16.mxu0 0
      %347 = vmatpush1.bf16.msra.mxu0 0
      %348 = vmatprep.mubr.bf16.mxu0 0
      %349 = vmatmul.mubr.bf16.gmra.mrb[0].mxu0 %v234
      %v350 = vpop.f32.mrb[0].mxu0
      %v351 = vadd.f32 0.0, %v350
      %v352 = vpop.f32.mrb[0].mxu0
      %v353 = vadd.f32 0.0, %v352
      %v354 = vpop.f32.mrb[0].mxu0
      %v355 = vpop.f32.mrb[0].mxu0
      %356 = vdwg.mxu0
      %v373 = vunpack.c.l.b16 %v191
      %v374 = vunpack.c.h.b16 %v191
      %v375 = vunpack.c.l.b16 %v192
      %v376 = vunpack.c.h.b16 %v192
      %v377 = vunpack.c.l.b16 %v193
      %v378 = vunpack.c.h.b16 %v193
      %v379 = vunpack.c.l.b16 %v194
      %v380 = vunpack.c.h.b16 %v194
      %v381 = vunpack.c.l.b16 %v195
      %v382 = vunpack.c.h.b16 %v195
      %v383 = vunpack.c.l.b16 %v196
      %v384 = vunpack.c.h.b16 %v196
      %v385 = vunpack.c.l.b16 %v197
      %v386 = vunpack.c.h.b16 %v197
      %v387 = vunpack.c.l.b16 %v198
      %v388 = vunpack.c.h.b16 %v198
      %v389 = vunpack.c.l.b16 %v199
      %v390 = vunpack.c.h.b16 %v199
      %v391 = vunpack.c.l.b16 %v200
      %v392 = vunpack.c.h.b16 %v200
      %v393 = vunpack.c.l.b16 %v201
      %v394 = vunpack.c.h.b16 %v201
      %v395 = vunpack.c.l.b16 %v202
      %v396 = vunpack.c.h.b16 %v202
      %v397 = vunpack.c.l.b16 %v203
      %v398 = vunpack.c.h.b16 %v203
      %v399 = vunpack.c.l.b16 %v204
      %v400 = vunpack.c.h.b16 %v204
      %v401 = vunpack.c.l.b16 %v205
      %v402 = vunpack.c.h.b16 %v205
      %v403 = vunpack.c.l.b16 %v206
      %v404 = vunpack.c.h.b16 %v206
      %v405 = vpack.c.b16 %v375, %v373
      %v406 = vpack.c.b16 %v376, %v374
      %v407 = vpack.c.b16 %v379, %v377
      %v408 = vpack.c.b16 %v380, %v378
      %v409 = vpack.c.b16 %v383, %v381
      %v410 = vpack.c.b16 %v384, %v382
      %v411 = vpack.c.b16 %v387, %v385
      %v412 = vpack.c.b16 %v388, %v386
      %v413 = vpack.c.b16 %v391, %v389
      %v414 = vpack.c.b16 %v392, %v390
      %v415 = vpack.c.b16 %v395, %v393
      %v416 = vpack.c.b16 %v396, %v394
      %v417 = vpack.c.b16 %v399, %v397
      %v418 = vpack.c.b16 %v400, %v398
      %v419 = vpack.c.b16 %v403, %v401
      %v420 = vpack.c.b16 %v404, %v402
      %437 = vmatprep.subr.bf16.mxu0 %v406
      %438 = vmatpush1.bf16.msra.mxu0 %v405
      %439 = vmatprep.subr.bf16.mxu0 %v408
      %440 = vmatpush1.bf16.msra.mxu0 %v407
      %441 = vmatprep.subr.bf16.mxu0 %v410
      %442 = vmatpush1.bf16.msra.mxu0 %v409
      %443 = vmatprep.subr.bf16.mxu0 %v412
      %444 = vmatpush1.bf16.msra.mxu0 %v411
      %445 = vmatprep.subr.bf16.mxu0 %v414
      %446 = vmatpush1.bf16.msra.mxu0 %v413
      %447 = vmatprep.subr.bf16.mxu0 %v416
      %448 = vmatpush1.bf16.msra.mxu0 %v415
      %449 = vmatprep.subr.bf16.mxu0 %v418
      %450 = vmatpush1.bf16.msra.mxu0 %v417
      %451 = vmatprep.subr.bf16.mxu0 %v420
      %452 = vmatpush1.bf16.msra.mxu0 %v419
      %453 = vmatprep.subr.bf16.mxu0 0
      %454 = vmatpush1.bf16.msra.mxu0 0
      %455 = vmatprep.subr.bf16.mxu0 0
      %456 = vmatpush1.bf16.msra.mxu0 0
      %457 = vmatprep.subr.bf16.mxu0 0
      %458 = vmatpush1.bf16.msra.mxu0 0
      %459 = vmatprep.subr.bf16.mxu0 0
      %460 = vmatpush1.bf16.msra.mxu0 0
      %461 = vmatprep.subr.bf16.mxu0 0
      %462 = vmatpush1.bf16.msra.mxu0 0
      %463 = vmatprep.subr.bf16.mxu0 0
      %464 = vmatpush1.bf16.msra.mxu0 0
      %465 = vmatprep.subr.bf16.mxu0 0
      %466 = vmatpush1.bf16.msra.mxu0 0
      %467 = vmatprep.subr.bf16.mxu0 0
      %468 = vmatpush1.bf16.msra.mxu0 0
      %469 = vmatprep.mubr.bf16.mxu0 0
      %470 = vmatmul.mubr.bf16.gmra.mrb[0].mxu0 %v190
      %v471 = vpop.f32.mrb[0].mxu0
      %v472 = vadd.f32 %v351, %v471
      %v473 = vpop.f32.mrb[0].mxu0
      %v474 = vadd.f32 %v353, %v473
      %v475 = vpop.f32.mrb[0].mxu0
      %v476 = vpop.f32.mrb[0].mxu0
      %477 = vdwg.mxu0
      %v478 = vld [vmem:[%s172] sm:$0xf]
      %s479 = scalar_lea.vmem %s177, 256
      %v480 = vld [vmem:[%s479] sm:$0xff]
      %v481 = vld [vmem:[%s479 + $0x8] sm:$0xff]
      %v482 = vld [vmem:[%s479 + $0x10] sm:$0xff]
      %v483 = vld [vmem:[%s479 + $0x18] sm:$0xff]
      %v484 = vld [vmem:[%s479 + $0x20] sm:$0xff]
      %v485 = vld [vmem:[%s479 + $0x28] sm:$0xff]
      %v486 = vld [vmem:[%s479 + $0x30] sm:$0xff]
      %v487 = vld [vmem:[%s479 + $0x38] sm:$0xff]
      %v488 = vld [vmem:[%s479 + $0x40] sm:$0xff]
      %v489 = vld [vmem:[%s479 + $0x48] sm:$0xff]
      %v490 = vld [vmem:[%s479 + $0x50] sm:$0xff]
      %v491 = vld [vmem:[%s479 + $0x58] sm:$0xff]
      %v492 = vld [vmem:[%s479 + $0x60] sm:$0xff]
      %v493 = vld [vmem:[%s479 + $0x68] sm:$0xff]
      %v494 = vld [vmem:[%s479 + $0x70] sm:$0xff]
      %v495 = vld [vmem:[%s479 + $0x78] sm:$0xff]
      %v497 = vunpack.c.l.b16 %v478
      %v498 = vpack.c.b16 %v497, %v497
      %v500 = vshrl.u32 %v498, 16
      %v502 = vshll.u32 %v498, 16
      %v504 = vrot.slane %v502, 1
      %v505 = vor.u32 %v500, %v504
      %v523 = vunpack.c.l.b16 %v480
      %v524 = vunpack.c.h.b16 %v480
      %v525 = vunpack.c.l.b16 %v481
      %v526 = vunpack.c.h.b16 %v481
      %v527 = vunpack.c.l.b16 %v482
      %v528 = vunpack.c.h.b16 %v482
      %v529 = vunpack.c.l.b16 %v483
      %v530 = vunpack.c.h.b16 %v483
      %v531 = vunpack.c.l.b16 %v484
      %v532 = vunpack.c.h.b16 %v484
      %v533 = vunpack.c.l.b16 %v485
      %v534 = vunpack.c.h.b16 %v485
      %v535 = vunpack.c.l.b16 %v486
      %v536 = vunpack.c.h.b16 %v486
      %v537 = vunpack.c.l.b16 %v487
      %v538 = vunpack.c.h.b16 %v487
      %v539 = vunpack.c.l.b16 %v488
      %v540 = vunpack.c.h.b16 %v488
      %v541 = vunpack.c.l.b16 %v489
      %v542 = vunpack.c.h.b16 %v489
      %v543 = vunpack.c.l.b16 %v490
      %v544 = vunpack.c.h.b16 %v490
      %v545 = vunpack.c.l.b16 %v491
      %v546 = vunpack.c.h.b16 %v491
      %v547 = vunpack.c.l.b16 %v492
      %v548 = vunpack.c.h.b16 %v492
      %v549 = vunpack.c.l.b16 %v493
      %v550 = vunpack.c.h.b16 %v493
      %v551 = vunpack.c.l.b16 %v494
      %v552 = vunpack.c.h.b16 %v494
      %v553 = vunpack.c.l.b16 %v495
      %v554 = vunpack.c.h.b16 %v495
      %v555 = vpack.c.b16 %v525, %v523
      %v556 = vpack.c.b16 %v526, %v524
      %v557 = vpack.c.b16 %v529, %v527
      %v558 = vpack.c.b16 %v530, %v528
      %v559 = vpack.c.b16 %v533, %v531
      %v560 = vpack.c.b16 %v534, %v532
      %v561 = vpack.c.b16 %v537, %v535
      %v562 = vpack.c.b16 %v538, %v536
      %v563 = vpack.c.b16 %v541, %v539
      %v564 = vpack.c.b16 %v542, %v540
      %v565 = vpack.c.b16 %v545, %v543
      %v566 = vpack.c.b16 %v546, %v544
      %v567 = vpack.c.b16 %v549, %v547
      %v568 = vpack.c.b16 %v550, %v548
      %v569 = vpack.c.b16 %v553, %v551
      %v570 = vpack.c.b16 %v554, %v552
      %587 = vmatprep.subr.bf16.mxu0 %v556
      %588 = vmatpush1.bf16.msra.mxu0 %v555
      %589 = vmatprep.subr.bf16.mxu0 %v558
      %590 = vmatpush1.bf16.msra.mxu0 %v557
      %591 = vmatprep.subr.bf16.mxu0 %v560
      %592 = vmatpush1.bf16.msra.mxu0 %v559
      %593 = vmatprep.subr.bf16.mxu0 %v562
      %594 = vmatpush1.bf16.msra.mxu0 %v561
      %595 = vmatprep.subr.bf16.mxu0 %v564
      %596 = vmatpush1.bf16.msra.mxu0 %v563
      %597 = vmatprep.subr.bf16.mxu0 %v566
      %598 = vmatpush1.bf16.msra.mxu0 %v565
      %599 = vmatprep.subr.bf16.mxu0 %v568
      %600 = vmatpush1.bf16.msra.mxu0 %v567
      %601 = vmatprep.subr.bf16.mxu0 %v570
      %602 = vmatpush1.bf16.msra.mxu0 %v569
      %603 = vmatprep.subr.bf16.mxu0 0
      %604 = vmatpush1.bf16.msra.mxu0 0
      %605 = vmatprep.subr.bf16.mxu0 0
      %606 = vmatpush1.bf16.msra.mxu0 0
      %607 = vmatprep.subr.bf16.mxu0 0
      %608 = vmatpush1.bf16.msra.mxu0 0
      %609 = vmatprep.subr.bf16.mxu0 0
      %610 = vmatpush1.bf16.msra.mxu0 0
      %611 = vmatprep.subr.bf16.mxu0 0
      %612 = vmatpush1.bf16.msra.mxu0 0
      %613 = vmatprep.subr.bf16.mxu0 0
      %614 = vmatpush1.bf16.msra.mxu0 0
      %615 = vmatprep.subr.bf16.mxu0 0
      %616 = vmatpush1.bf16.msra.mxu0 0
      %617 = vmatprep.subr.bf16.mxu0 0
      %618 = vmatpush1.bf16.msra.mxu0 0
      %619 = vmatprep.mubr.bf16.mxu0 0
      %620 = vmatmul.mubr.bf16.gmra.mrb[0].mxu0 %v505
      %v621 = vpop.f32.mrb[0].mxu0
      %v622 = vadd.f32 0.0, %v621
      %v623 = vpop.f32.mrb[0].mxu0
      %v624 = vadd.f32 0.0, %v623
      %v625 = vpop.f32.mrb[0].mxu0
      %v626 = vpop.f32.mrb[0].mxu0
      %627 = vdwg.mxu0
      %v628 = vadd.f32 %v472, %v622
      %v629 = vadd.f32 %v474, %v624
      %v630 = vld [vmem:[%s172 + $0x8] sm:$0xe]
      %s631 = scalar_lea.vmem %s177, 384
      %v632 = vld [vmem:[%s631] sm:$0xff]
      %v633 = vld [vmem:[%s631 + $0x8] sm:$0xff]
      %v634 = vld [vmem:[%s631 + $0x10] sm:$0xff]
      %v635 = vld [vmem:[%s631 + $0x18] sm:$0xff]
      %v636 = vld [vmem:[%s631 + $0x20] sm:$0xff]
      %v637 = vld [vmem:[%s631 + $0x28] sm:$0xff]
      %v638 = vld [vmem:[%s631 + $0x30] sm:$0xff]
      %v639 = vld [vmem:[%s631 + $0x38] sm:$0xff]
      %v640 = vld [vmem:[%s631 + $0x40] sm:$0xff]
      %v641 = vld [vmem:[%s631 + $0x48] sm:$0xff]
      %v642 = vld [vmem:[%s631 + $0x50] sm:$0xff]
      %v643 = vld [vmem:[%s631 + $0x58] sm:$0xff]
      %v644 = vld [vmem:[%s631 + $0x60] sm:$0xff]
      %v645 = vld [vmem:[%s631 + $0x68] sm:$0xff]
      %v646 = vld [vmem:[%s631 + $0x70] sm:$0xff]
      %v647 = vld [vmem:[%s631 + $0x78] sm:$0xff]
      %v649 = vunpack.c.l.b16 %v630
      %v650 = vpack.c.b16 %v649, %v649
      %v651 = vrot.slane %v650, 1
      %v669 = vunpack.c.l.b16 %v632
      %v670 = vunpack.c.h.b16 %v632
      %v671 = vunpack.c.l.b16 %v633
      %v672 = vunpack.c.h.b16 %v633
      %v673 = vunpack.c.l.b16 %v634
      %v674 = vunpack.c.h.b16 %v634
      %v675 = vunpack.c.l.b16 %v635
      %v676 = vunpack.c.h.b16 %v635
      %v677 = vunpack.c.l.b16 %v636
      %v678 = vunpack.c.h.b16 %v636
      %v679 = vunpack.c.l.b16 %v637
      %v680 = vunpack.c.h.b16 %v637
      %v681 = vunpack.c.l.b16 %v638
      %v682 = vunpack.c.h.b16 %v638
      %v683 = vunpack.c.l.b16 %v639
      %v684 = vunpack.c.h.b16 %v639
      %v685 = vunpack.c.l.b16 %v640
      %v686 = vunpack.c.h.b16 %v640
      %v687 = vunpack.c.l.b16 %v641
      %v688 = vunpack.c.h.b16 %v641
      %v689 = vunpack.c.l.b16 %v642
      %v690 = vunpack.c.h.b16 %v642
      %v691 = vunpack.c.l.b16 %v643
      %v692 = vunpack.c.h.b16 %v643
      %v693 = vunpack.c.l.b16 %v644
      %v694 = vunpack.c.h.b16 %v644
      %v695 = vunpack.c.l.b16 %v645
      %v696 = vunpack.c.h.b16 %v645
      %v697 = vunpack.c.l.b16 %v646
      %v698 = vunpack.c.h.b16 %v646
      %v699 = vunpack.c.l.b16 %v647
      %v700 = vunpack.c.h.b16 %v647
      %v701 = vpack.c.b16 %v671, %v669
      %v702 = vpack.c.b16 %v672, %v670
      %v703 = vpack.c.b16 %v675, %v673
      %v704 = vpack.c.b16 %v676, %v674
      %v705 = vpack.c.b16 %v679, %v677
      %v706 = vpack.c.b16 %v680, %v678
      %v707 = vpack.c.b16 %v683, %v681
      %v708 = vpack.c.b16 %v684, %v682
      %v709 = vpack.c.b16 %v687, %v685
      %v710 = vpack.c.b16 %v688, %v686
      %v711 = vpack.c.b16 %v691, %v689
      %v712 = vpack.c.b16 %v692, %v690
      %v713 = vpack.c.b16 %v695, %v693
      %v714 = vpack.c.b16 %v696, %v694
      %v715 = vpack.c.b16 %v699, %v697
      %v716 = vpack.c.b16 %v700, %v698
      %733 = vmatprep.subr.bf16.mxu0 %v702
      %734 = vmatpush1.bf16.msra.mxu0 %v701
      %735 = vmatprep.subr.bf16.mxu0 %v704
      %736 = vmatpush1.bf16.msra.mxu0 %v703
      %737 = vmatprep.subr.bf16.mxu0 %v706
      %738 = vmatpush1.bf16.msra.mxu0 %v705
      %739 = vmatprep.subr.bf16.mxu0 %v708
      %740 = vmatpush1.bf16.msra.mxu0 %v707
      %741 = vmatprep.subr.bf16.mxu0 %v710
      %742 = vmatpush1.bf16.msra.mxu0 %v709
      %743 = vmatprep.subr.bf16.mxu0 %v712
      %744 = vmatpush1.bf16.msra.mxu0 %v711
      %745 = vmatprep.subr.bf16.mxu0 %v714
      %746 = vmatpush1.bf16.msra.mxu0 %v713
      %747 = vmatprep.subr.bf16.mxu0 %v716
      %748 = vmatpush1.bf16.msra.mxu0 %v715
      %749 = vmatprep.subr.bf16.mxu0 0
      %750 = vmatpush1.bf16.msra.mxu0 0
      %751 = vmatprep.subr.bf16.mxu0 0
      %752 = vmatpush1.bf16.msra.mxu0 0
      %753 = vmatprep.subr.bf16.mxu0 0
      %754 = vmatpush1.bf16.msra.mxu0 0
      %755 = vmatprep.subr.bf16.mxu0 0
      %756 = vmatpush1.bf16.msra.mxu0 0
      %757 = vmatprep.subr.bf16.mxu0 0
      %758 = vmatpush1.bf16.msra.mxu0 0
      %759 = vmatprep.subr.bf16.mxu0 0
      %760 = vmatpush1.bf16.msra.mxu0 0
      %761 = vmatprep.subr.bf16.mxu0 0
      %762 = vmatpush1.bf16.msra.mxu0 0
      %763 = vmatprep.subr.bf16.mxu0 0
      %764 = vmatpush1.bf16.msra.mxu0 0
      %765 = vmatprep.mubr.bf16.mxu0 0
      %766 = vmatmul.mubr.bf16.gmra.mrb[0].mxu0 %v651
      %v767 = vpop.f32.mrb[0].mxu0
      %v768 = vadd.f32 0.0, %v767
      %v769 = vpop.f32.mrb[0].mxu0
      %v770 = vadd.f32 0.0, %v769
      %v771 = vpop.f32.mrb[0].mxu0
      %v772 = vpop.f32.mrb[0].mxu0
      %773 = vdwg.mxu0
      %v774 = vadd.f32 %v628, %v768
      %v775 = vadd.f32 %v629, %v770
      %v776 = vld [vmem:[%s172 + $0xc] sm:$0xe]
      %v777 = vld [vmem:[%s172 + $0x10] sm:$0x1]
      %s778 = scalar_lea.vmem %s177, 512
      %v779 = vld [vmem:[%s778] sm:$0xff]
      %v780 = vld [vmem:[%s778 + $0x8] sm:$0xff]
      %v781 = vld [vmem:[%s778 + $0x10] sm:$0xff]
      %v782 = vld [vmem:[%s778 + $0x18] sm:$0xff]
      %v783 = vld [vmem:[%s778 + $0x20] sm:$0xff]
      %v784 = vld [vmem:[%s778 + $0x28] sm:$0xff]
      %v785 = vld [vmem:[%s778 + $0x30] sm:$0xff]
      %v786 = vld [vmem:[%s778 + $0x38] sm:$0xff]
      %v787 = vld [vmem:[%s778 + $0x40] sm:$0xff]
      %v788 = vld [vmem:[%s778 + $0x48] sm:$0xff]
      %v789 = vld [vmem:[%s778 + $0x50] sm:$0xff]
      %v790 = vld [vmem:[%s778 + $0x58] sm:$0xff]
      %v791 = vld [vmem:[%s778 + $0x60] sm:$0xff]
      %v792 = vld [vmem:[%s778 + $0x68] sm:$0xff]
      %v793 = vld [vmem:[%s778 + $0x70] sm:$0xff]
      %v794 = vld [vmem:[%s778 + $0x78] sm:$0xff]
      %v797 = vunpack.c.l.b16 %v776
      %v798 = vunpack.c.l.b16 %v777
      %v799 = vpack.c.b16 %v798, %v797
      %v801 = vshrl.u32 %v799, 16
      %v803 = vrot.slane %v801, 1
      %v804 = vshll.u32 %v799, 16
      %v806 = vrot.slane %v804, 2
      %v807 = vor.u32 %v803, %v806
      %v825 = vunpack.c.l.b16 %v779
      %v826 = vunpack.c.h.b16 %v779
      %v827 = vunpack.c.l.b16 %v780
      %v828 = vunpack.c.h.b16 %v780
      %v829 = vunpack.c.l.b16 %v781
      %v830 = vunpack.c.h.b16 %v781
      %v831 = vunpack.c.l.b16 %v782
      %v832 = vunpack.c.h.b16 %v782
      %v833 = vunpack.c.l.b16 %v783
      %v834 = vunpack.c.h.b16 %v783
      %v835 = vunpack.c.l.b16 %v784
      %v836 = vunpack.c.h.b16 %v784
      %v837 = vunpack.c.l.b16 %v785
      %v838 = vunpack.c.h.b16 %v785
      %v839 = vunpack.c.l.b16 %v786
      %v840 = vunpack.c.h.b16 %v786
      %v841 = vunpack.c.l.b16 %v787
      %v842 = vunpack.c.h.b16 %v787
      %v843 = vunpack.c.l.b16 %v788
      %v844 = vunpack.c.h.b16 %v788
      %v845 = vunpack.c.l.b16 %v789
      %v846 = vunpack.c.h.b16 %v789
      %v847 = vunpack.c.l.b16 %v790
      %v848 = vunpack.c.h.b16 %v790
      %v849 = vunpack.c.l.b16 %v791
      %v850 = vunpack.c.h.b16 %v791
      %v851 = vunpack.c.l.b16 %v792
      %v852 = vunpack.c.h.b16 %v792
      %v853 = vunpack.c.l.b16 %v793
      %v854 = vunpack.c.h.b16 %v793
      %v855 = vunpack.c.l.b16 %v794
      %v856 = vunpack.c.h.b16 %v794
      %v857 = vpack.c.b16 %v827, %v825
      %v858 = vpack.c.b16 %v828, %v826
      %v859 = vpack.c.b16 %v831, %v829
      %v860 = vpack.c.b16 %v832, %v830
      %v861 = vpack.c.b16 %v835, %v833
      %v862 = vpack.c.b16 %v836, %v834
      %v863 = vpack.c.b16 %v839, %v837
      %v864 = vpack.c.b16 %v840, %v838
      %v865 = vpack.c.b16 %v843, %v841
      %v866 = vpack.c.b16 %v844, %v842
      %v867 = vpack.c.b16 %v847, %v845
      %v868 = vpack.c.b16 %v848, %v846
      %v869 = vpack.c.b16 %v851, %v849
      %v870 = vpack.c.b16 %v852, %v850
      %v871 = vpack.c.b16 %v855, %v853
      %v872 = vpack.c.b16 %v856, %v854
      %889 = vmatprep.subr.bf16.mxu0 %v858
      %890 = vmatpush1.bf16.msra.mxu0 %v857
      %891 = vmatprep.subr.bf16.mxu0 %v860
      %892 = vmatpush1.bf16.msra.mxu0 %v859
      %893 = vmatprep.subr.bf16.mxu0 %v862
      %894 = vmatpush1.bf16.msra.mxu0 %v861
      %895 = vmatprep.subr.bf16.mxu0 %v864
      %896 = vmatpush1.bf16.msra.mxu0 %v863
      %897 = vmatprep.subr.bf16.mxu0 %v866
      %898 = vmatpush1.bf16.msra.mxu0 %v865
      %899 = vmatprep.subr.bf16.mxu0 %v868
      %900 = vmatpush1.bf16.msra.mxu0 %v867
      %901 = vmatprep.subr.bf16.mxu0 %v870
      %902 = vmatpush1.bf16.msra.mxu0 %v869
      %903 = vmatprep.subr.bf16.mxu0 %v872
      %904 = vmatpush1.bf16.msra.mxu0 %v871
      %905 = vmatprep.subr.bf16.mxu0 0
      %906 = vmatpush1.bf16.msra.mxu0 0
      %907 = vmatprep.subr.bf16.mxu0 0
      %908 = vmatpush1.bf16.msra.mxu0 0
      %909 = vmatprep.subr.bf16.mxu0 0
      %910 = vmatpush1.bf16.msra.mxu0 0
      %911 = vmatprep.subr.bf16.mxu0 0
      %912 = vmatpush1.bf16.msra.mxu0 0
      %913 = vmatprep.subr.bf16.mxu0 0
      %914 = vmatpush1.bf16.msra.mxu0 0
      %915 = vmatprep.subr.bf16.mxu0 0
      %916 = vmatpush1.bf16.msra.mxu0 0
      %917 = vmatprep.subr.bf16.mxu0 0
      %918 = vmatpush1.bf16.msra.mxu0 0
      %919 = vmatprep.subr.bf16.mxu0 0
      %920 = vmatpush1.bf16.msra.mxu0 0
      %921 = vmatprep.mubr.bf16.mxu0 0
      %922 = vmatmul.mubr.bf16.gmra.mrb[0].mxu0 %v807
      %v923 = vpop.f32.mrb[0].mxu0
      %v924 = vadd.f32 0.0, %v923
      %v925 = vpop.f32.mrb[0].mxu0
      %v926 = vadd.f32 0.0, %v925
      %v927 = vpop.f32.mrb[0].mxu0
      %v928 = vpop.f32.mrb[0].mxu0
      %929 = vdwg.mxu0
      %v930 = vadd.f32 %v774, %v924
      %v931 = vadd.f32 %v775, %v926
      %v932 = vld [vmem:[%s172 + $0x8] sm:$0xe]
      %v933 = vld [vmem:[%s172 + $0xc] sm:$0x1]
      %s934 = scalar_lea.vmem %s177, 640
      %v935 = vld [vmem:[%s934] sm:$0xff]
      %v936 = vld [vmem:[%s934 + $0x8] sm:$0xff]
      %v937 = vld [vmem:[%s934 + $0x10] sm:$0xff]
      %v938 = vld [vmem:[%s934 + $0x18] sm:$0xff]
      %v939 = vld [vmem:[%s934 + $0x20] sm:$0xff]
      %v940 = vld [vmem:[%s934 + $0x28] sm:$0xff]
      %v941 = vld [vmem:[%s934 + $0x30] sm:$0xff]
      %v942 = vld [vmem:[%s934 + $0x38] sm:$0xff]
      %v943 = vld [vmem:[%s934 + $0x40] sm:$0xff]
      %v944 = vld [vmem:[%s934 + $0x48] sm:$0xff]
      %v945 = vld [vmem:[%s934 + $0x50] sm:$0xff]
      %v946 = vld [vmem:[%s934 + $0x58] sm:$0xff]
      %v947 = vld [vmem:[%s934 + $0x60] sm:$0xff]
      %v948 = vld [vmem:[%s934 + $0x68] sm:$0xff]
      %v949 = vld [vmem:[%s934 + $0x70] sm:$0xff]
      %v950 = vld [vmem:[%s934 + $0x78] sm:$0xff]
      %v953 = vunpack.c.l.b16 %v932
      %v954 = vunpack.c.l.b16 %v933
      %v955 = vpack.c.b16 %v954, %v953
      %v957 = vshrl.u32 %v955, 16
      %v959 = vrot.slane %v957, 1
      %v960 = vshll.u32 %v955, 16
      %v962 = vrot.slane %v960, 2
      %v963 = vor.u32 %v959, %v962
      %v981 = vunpack.c.l.b16 %v935
      %v982 = vunpack.c.h.b16 %v935
      %v983 = vunpack.c.l.b16 %v936
      %v984 = vunpack.c.h.b16 %v936
      %v985 = vunpack.c.l.b16 %v937
      %v986 = vunpack.c.h.b16 %v937
      %v987 = vunpack.c.l.b16 %v938
      %v988 = vunpack.c.h.b16 %v938
      %v989 = vunpack.c.l.b16 %v939
      %v990 = vunpack.c.h.b16 %v939
      %v991 = vunpack.c.l.b16 %v940
      %v992 = vunpack.c.h.b16 %v940
      %v993 = vunpack.c.l.b16 %v941
      %v994 = vunpack.c.h.b16 %v941
      %v995 = vunpack.c.l.b16 %v942
      %v996 = vunpack.c.h.b16 %v942
      %v997 = vunpack.c.l.b16 %v943
      %v998 = vunpack.c.h.b16 %v943
      %v999 = vunpack.c.l.b16 %v944
      %v1000 = vunpack.c.h.b16 %v944
      %v1001 = vunpack.c.l.b16 %v945
      %v1002 = vunpack.c.h.b16 %v945
      %v1003 = vunpack.c.l.b16 %v946
      %v1004 = vunpack.c.h.b16 %v946
      %v1005 = vunpack.c.l.b16 %v947
      %v1006 = vunpack.c.h.b16 %v947
      %v1007 = vunpack.c.l.b16 %v948
      %v1008 = vunpack.c.h.b16 %v948
      %v1009 = vunpack.c.l.b16 %v949
      %v1010 = vunpack.c.h.b16 %v949
      %v1011 = vunpack.c.l.b16 %v950
      %v1012 = vunpack.c.h.b16 %v950
      %v1013 = vpack.c.b16 %v983, %v981
      %v1014 = vpack.c.b16 %v984, %v982
      %v1015 = vpack.c.b16 %v987, %v985
      %v1016 = vpack.c.b16 %v988, %v986
      %v1017 = vpack.c.b16 %v991, %v989
      %v1018 = vpack.c.b16 %v992, %v990
      %v1019 = vpack.c.b16 %v995, %v993
      %v1020 = vpack.c.b16 %v996, %v994
      %v1021 = vpack.c.b16 %v999, %v997
      %v1022 = vpack.c.b16 %v1000, %v998
      %v1023 = vpack.c.b16 %v1003, %v1001
      %v1024 = vpack.c.b16 %v1004, %v1002
      %v1025 = vpack.c.b16 %v1007, %v1005
      %v1026 = vpack.c.b16 %v1008, %v1006
      %v1027 = vpack.c.b16 %v1011, %v1009
      %v1028 = vpack.c.b16 %v1012, %v1010
      %1045 = vmatprep.subr.bf16.mxu0 %v1014
      %1046 = vmatpush1.bf16.msra.mxu0 %v1013
      %1047 = vmatprep.subr.bf16.mxu0 %v1016
      %1048 = vmatpush1.bf16.msra.mxu0 %v1015
      %1049 = vmatprep.subr.bf16.mxu0 %v1018
      %1050 = vmatpush1.bf16.msra.mxu0 %v1017
      %1051 = vmatprep.subr.bf16.mxu0 %v1020
      %1052 = vmatpush1.bf16.msra.mxu0 %v1019
      %1053 = vmatprep.subr.bf16.mxu0 %v1022
      %1054 = vmatpush1.bf16.msra.mxu0 %v1021
      %1055 = vmatprep.subr.bf16.mxu0 %v1024
      %1056 = vmatpush1.bf16.msra.mxu0 %v1023
      %1057 = vmatprep.subr.bf16.mxu0 %v1026
      %1058 = vmatpush1.bf16.msra.mxu0 %v1025
      %1059 = vmatprep.subr.bf16.mxu0 %v1028
      %1060 = vmatpush1.bf16.msra.mxu0 %v1027
      %1061 = vmatprep.subr.bf16.mxu0 0
      %1062 = vmatpush1.bf16.msra.mxu0 0
      %1063 = vmatprep.subr.bf16.mxu0 0
      %1064 = vmatpush1.bf16.msra.mxu0 0
      %1065 = vmatprep.subr.bf16.mxu0 0
      %1066 = vmatpush1.bf16.msra.mxu0 0
      %1067 = vmatprep.subr.bf16.mxu0 0
      %1068 = vmatpush1.bf16.msra.mxu0 0
      %1069 = vmatprep.subr.bf16.mxu0 0
      %1070 = vmatpush1.bf16.msra.mxu0 0
      %1071 = vmatprep.subr.bf16.mxu0 0
      %1072 = vmatpush1.bf16.msra.mxu0 0
      %1073 = vmatprep.subr.bf16.mxu0 0
      %1074 = vmatpush1.bf16.msra.mxu0 0
      %1075 = vmatprep.subr.bf16.mxu0 0
      %1076 = vmatpush1.bf16.msra.mxu0 0
      %1077 = vmatprep.mubr.bf16.mxu0 0
      %1078 = vmatmul.mubr.bf16.gmra.mrb[0].mxu0 %v963
      %v1079 = vpop.f32.mrb[0].mxu0
      %v1080 = vadd.f32 0.0, %v1079
      %v1081 = vpop.f32.mrb[0].mxu0
      %v1082 = vadd.f32 0.0, %v1081
      %v1083 = vpop.f32.mrb[0].mxu0
      %v1084 = vpop.f32.mrb[0].mxu0
      %1085 = vdwg.mxu0
      %v1086 = vadd.f32 %v930, %v1080
      %v1087 = vadd.f32 %v931, %v1082
      %v1088 = vld [vmem:[%s172] sm:$0xe]
      %v1089 = vld [vmem:[%s172 + $0x4] sm:$0x1]
      %s1090 = scalar_lea.vmem %s177, 768
      %v1091 = vld [vmem:[%s1090] sm:$0xff]
      %v1092 = vld [vmem:[%s1090 + $0x8] sm:$0xff]
      %v1093 = vld [vmem:[%s1090 + $0x10] sm:$0xff]
      %v1094 = vld [vmem:[%s1090 + $0x18] sm:$0xff]
      %v1095 = vld [vmem:[%s1090 + $0x20] sm:$0xff]
      %v1096 = vld [vmem:[%s1090 + $0x28] sm:$0xff]
      %v1097 = vld [vmem:[%s1090 + $0x30] sm:$0xff]
      %v1098 = vld [vmem:[%s1090 + $0x38] sm:$0xff]
      %v1099 = vld [vmem:[%s1090 + $0x40] sm:$0xff]
      %v1100 = vld [vmem:[%s1090 + $0x48] sm:$0xff]
      %v1101 = vld [vmem:[%s1090 + $0x50] sm:$0xff]
      %v1102 = vld [vmem:[%s1090 + $0x58] sm:$0xff]
      %v1103 = vld [vmem:[%s1090 + $0x60] sm:$0xff]
      %v1104 = vld [vmem:[%s1090 + $0x68] sm:$0xff]
      %v1105 = vld [vmem:[%s1090 + $0x70] sm:$0xff]
      %v1106 = vld [vmem:[%s1090 + $0x78] sm:$0xff]
      %v1109 = vunpack.c.l.b16 %v1088
      %v1110 = vunpack.c.l.b16 %v1089
      %v1111 = vpack.c.b16 %v1110, %v1109
      %v1113 = vshrl.u32 %v1111, 16
      %v1115 = vrot.slane %v1113, 1
      %v1116 = vshll.u32 %v1111, 16
      %v1118 = vrot.slane %v1116, 2
      %v1119 = vor.u32 %v1115, %v1118
      %v1137 = vunpack.c.l.b16 %v1091
      %v1138 = vunpack.c.h.b16 %v1091
      %v1139 = vunpack.c.l.b16 %v1092
      %v1140 = vunpack.c.h.b16 %v1092
      %v1141 = vunpack.c.l.b16 %v1093
      %v1142 = vunpack.c.h.b16 %v1093
      %v1143 = vunpack.c.l.b16 %v1094
      %v1144 = vunpack.c.h.b16 %v1094
      %v1145 = vunpack.c.l.b16 %v1095
      %v1146 = vunpack.c.h.b16 %v1095
      %v1147 = vunpack.c.l.b16 %v1096
      %v1148 = vunpack.c.h.b16 %v1096
      %v1149 = vunpack.c.l.b16 %v1097
      %v1150 = vunpack.c.h.b16 %v1097
      %v1151 = vunpack.c.l.b16 %v1098
      %v1152 = vunpack.c.h.b16 %v1098
      %v1153 = vunpack.c.l.b16 %v1099
      %v1154 = vunpack.c.h.b16 %v1099
      %v1155 = vunpack.c.l.b16 %v1100
      %v1156 = vunpack.c.h.b16 %v1100
      %v1157 = vunpack.c.l.b16 %v1101
      %v1158 = vunpack.c.h.b16 %v1101
      %v1159 = vunpack.c.l.b16 %v1102
      %v1160 = vunpack.c.h.b16 %v1102
      %v1161 = vunpack.c.l.b16 %v1103
      %v1162 = vunpack.c.h.b16 %v1103
      %v1163 = vunpack.c.l.b16 %v1104
      %v1164 = vunpack.c.h.b16 %v1104
      %v1165 = vunpack.c.l.b16 %v1105
      %v1166 = vunpack.c.h.b16 %v1105
      %v1167 = vunpack.c.l.b16 %v1106
      %v1168 = vunpack.c.h.b16 %v1106
      %v1169 = vpack.c.b16 %v1139, %v1137
      %v1170 = vpack.c.b16 %v1140, %v1138
      %v1171 = vpack.c.b16 %v1143, %v1141
      %v1172 = vpack.c.b16 %v1144, %v1142
      %v1173 = vpack.c.b16 %v1147, %v1145
      %v1174 = vpack.c.b16 %v1148, %v1146
      %v1175 = vpack.c.b16 %v1151, %v1149
      %v1176 = vpack.c.b16 %v1152, %v1150
      %v1177 = vpack.c.b16 %v1155, %v1153
      %v1178 = vpack.c.b16 %v1156, %v1154
      %v1179 = vpack.c.b16 %v1159, %v1157
      %v1180 = vpack.c.b16 %v1160, %v1158
      %v1181 = vpack.c.b16 %v1163, %v1161
      %v1182 = vpack.c.b16 %v1164, %v1162
      %v1183 = vpack.c.b16 %v1167, %v1165
      %v1184 = vpack.c.b16 %v1168, %v1166
      %1201 = vmatprep.subr.bf16.mxu0 %v1170
      %1202 = vmatpush1.bf16.msra.mxu0 %v1169
      %1203 = vmatprep.subr.bf16.mxu0 %v1172
      %1204 = vmatpush1.bf16.msra.mxu0 %v1171
      %1205 = vmatprep.subr.bf16.mxu0 %v1174
      %1206 = vmatpush1.bf16.msra.mxu0 %v1173
      %1207 = vmatprep.subr.bf16.mxu0 %v1176
      %1208 = vmatpush1.bf16.msra.mxu0 %v1175
      %1209 = vmatprep.subr.bf16.mxu0 %v1178
      %1210 = vmatpush1.bf16.msra.mxu0 %v1177
      %1211 = vmatprep.subr.bf16.mxu0 %v1180
      %1212 = vmatpush1.bf16.msra.mxu0 %v1179
      %1213 = vmatprep.subr.bf16.mxu0 %v1182
      %1214 = vmatpush1.bf16.msra.mxu0 %v1181
      %1215 = vmatprep.subr.bf16.mxu0 %v1184
      %1216 = vmatpush1.bf16.msra.mxu0 %v1183
      %1217 = vmatprep.subr.bf16.mxu0 0
      %1218 = vmatpush1.bf16.msra.mxu0 0
      %1219 = vmatprep.subr.bf16.mxu0 0
      %1220 = vmatpush1.bf16.msra.mxu0 0
      %1221 = vmatprep.subr.bf16.mxu0 0
      %1222 = vmatpush1.bf16.msra.mxu0 0
      %1223 = vmatprep.subr.bf16.mxu0 0
      %1224 = vmatpush1.bf16.msra.mxu0 0
      %1225 = vmatprep.subr.bf16.mxu0 0
      %1226 = vmatpush1.bf16.msra.mxu0 0
      %1227 = vmatprep.subr.bf16.mxu0 0
      %1228 = vmatpush1.bf16.msra.mxu0 0
      %1229 = vmatprep.subr.bf16.mxu0 0
      %1230 = vmatpush1.bf16.msra.mxu0 0
      %1231 = vmatprep.subr.bf16.mxu0 0
      %1232 = vmatpush1.bf16.msra.mxu0 0
      %1233 = vmatprep.mubr.bf16.mxu0 0
      %1234 = vmatmul.mubr.bf16.gmra.mrb[0].mxu0 %v1119
      %v1235 = vpop.f32.mrb[0].mxu0
      %v1236 = vadd.f32 0.0, %v1235
      %v1237 = vpop.f32.mrb[0].mxu0
      %v1238 = vadd.f32 0.0, %v1237
      %v1239 = vpop.f32.mrb[0].mxu0
      %v1240 = vpop.f32.mrb[0].mxu0
      %1241 = vdwg.mxu0
      %v1242 = vadd.f32 %v1086, %v1236
      %v1243 = vadd.f32 %v1087, %v1238
      %v1244 = vld [vmem:[%s172 + $0x4] sm:$0xc]
      %v1245 = vld [vmem:[%s172 + $0x8] sm:$0x1]
      %s1246 = scalar_lea.vmem %s177, 896
      %v1247 = vld [vmem:[%s1246] sm:$0xff]
      %v1248 = vld [vmem:[%s1246 + $0x8] sm:$0xff]
      %v1249 = vld [vmem:[%s1246 + $0x10] sm:$0xff]
      %v1250 = vld [vmem:[%s1246 + $0x18] sm:$0xff]
      %v1251 = vld [vmem:[%s1246 + $0x20] sm:$0xff]
      %v1252 = vld [vmem:[%s1246 + $0x28] sm:$0xff]
      %v1253 = vld [vmem:[%s1246 + $0x30] sm:$0xff]
      %v1254 = vld [vmem:[%s1246 + $0x38] sm:$0xff]
      %v1255 = vld [vmem:[%s1246 + $0x40] sm:$0xff]
      %v1256 = vld [vmem:[%s1246 + $0x48] sm:$0xff]
      %v1257 = vld [vmem:[%s1246 + $0x50] sm:$0xff]
      %v1258 = vld [vmem:[%s1246 + $0x58] sm:$0xff]
      %v1259 = vld [vmem:[%s1246 + $0x60] sm:$0xff]
      %v1260 = vld [vmem:[%s1246 + $0x68] sm:$0xff]
      %v1261 = vld [vmem:[%s1246 + $0x70] sm:$0xff]
      %v1262 = vld [vmem:[%s1246 + $0x78] sm:$0xff]
      %v1265 = vunpack.c.l.b16 %v1244
      %v1266 = vunpack.c.l.b16 %v1245
      %v1267 = vpack.c.b16 %v1266, %v1265
      %v1268 = vrot.slane %v1267, 2
      %v1286 = vunpack.c.l.b16 %v1247
      %v1287 = vunpack.c.h.b16 %v1247
      %v1288 = vunpack.c.l.b16 %v1248
      %v1289 = vunpack.c.h.b16 %v1248
      %v1290 = vunpack.c.l.b16 %v1249
      %v1291 = vunpack.c.h.b16 %v1249
      %v1292 = vunpack.c.l.b16 %v1250
      %v1293 = vunpack.c.h.b16 %v1250
      %v1294 = vunpack.c.l.b16 %v1251
      %v1295 = vunpack.c.h.b16 %v1251
      %v1296 = vunpack.c.l.b16 %v1252
      %v1297 = vunpack.c.h.b16 %v1252
      %v1298 = vunpack.c.l.b16 %v1253
      %v1299 = vunpack.c.h.b16 %v1253
      %v1300 = vunpack.c.l.b16 %v1254
      %v1301 = vunpack.c.h.b16 %v1254
      %v1302 = vunpack.c.l.b16 %v1255
      %v1303 = vunpack.c.h.b16 %v1255
      %v1304 = vunpack.c.l.b16 %v1256
      %v1305 = vunpack.c.h.b16 %v1256
      %v1306 = vunpack.c.l.b16 %v1257
      %v1307 = vunpack.c.h.b16 %v1257
      %v1308 = vunpack.c.l.b16 %v1258
      %v1309 = vunpack.c.h.b16 %v1258
      %v1310 = vunpack.c.l.b16 %v1259
      %v1311 = vunpack.c.h.b16 %v1259
      %v1312 = vunpack.c.l.b16 %v1260
      %v1313 = vunpack.c.h.b16 %v1260
      %v1314 = vunpack.c.l.b16 %v1261
      %v1315 = vunpack.c.h.b16 %v1261
      %v1316 = vunpack.c.l.b16 %v1262
      %v1317 = vunpack.c.h.b16 %v1262
      %v1318 = vpack.c.b16 %v1288, %v1286
      %v1319 = vpack.c.b16 %v1289, %v1287
      %v1320 = vpack.c.b16 %v1292, %v1290
      %v1321 = vpack.c.b16 %v1293, %v1291
      %v1322 = vpack.c.b16 %v1296, %v1294
      %v1323 = vpack.c.b16 %v1297, %v1295
      %v1324 = vpack.c.b16 %v1300, %v1298
      %v1325 = vpack.c.b16 %v1301, %v1299
      %v1326 = vpack.c.b16 %v1304, %v1302
      %v1327 = vpack.c.b16 %v1305, %v1303
      %v1328 = vpack.c.b16 %v1308, %v1306
      %v1329 = vpack.c.b16 %v1309, %v1307
      %v1330 = vpack.c.b16 %v1312, %v1310
      %v1331 = vpack.c.b16 %v1313, %v1311
      %v1332 = vpack.c.b16 %v1316, %v1314
      %v1333 = vpack.c.b16 %v1317, %v1315
      %1350 = vmatprep.subr.bf16.mxu0 %v1319
      %1351 = vmatpush1.bf16.msra.mxu0 %v1318
      %1352 = vmatprep.subr.bf16.mxu0 %v1321
      %1353 = vmatpush1.bf16.msra.mxu0 %v1320
      %1354 = vmatprep.subr.bf16.mxu0 %v1323
      %1355 = vmatpush1.bf16.msra.mxu0 %v1322
      %1356 = vmatprep.subr.bf16.mxu0 %v1325
      %1357 = vmatpush1.bf16.msra.mxu0 %v1324
      %1358 = vmatprep.subr.bf16.mxu0 %v1327
      %1359 = vmatpush1.bf16.msra.mxu0 %v1326
      %1360 = vmatprep.subr.bf16.mxu0 %v1329
      %1361 = vmatpush1.bf16.msra.mxu0 %v1328
      %1362 = vmatprep.subr.bf16.mxu0 %v1331
      %1363 = vmatpush1.bf16.msra.mxu0 %v1330
      %1364 = vmatprep.subr.bf16.mxu0 %v1333
      %1365 = vmatpush1.bf16.msra.mxu0 %v1332
      %1366 = vmatprep.subr.bf16.mxu0 0
      %1367 = vmatpush1.bf16.msra.mxu0 0
      %1368 = vmatprep.subr.bf16.mxu0 0
      %1369 = vmatpush1.bf16.msra.mxu0 0
      %1370 = vmatprep.subr.bf16.mxu0 0
      %1371 = vmatpush1.bf16.msra.mxu0 0
      %1372 = vmatprep.subr.bf16.mxu0 0
      %1373 = vmatpush1.bf16.msra.mxu0 0
      %1374 = vmatprep.subr.bf16.mxu0 0
      %1375 = vmatpush1.bf16.msra.mxu0 0
      %1376 = vmatprep.subr.bf16.mxu0 0
      %1377 = vmatpush1.bf16.msra.mxu0 0
      %1378 = vmatprep.subr.bf16.mxu0 0
      %1379 = vmatpush1.bf16.msra.mxu0 0
      %1380 = vmatprep.subr.bf16.mxu0 0
      %1381 = vmatpush1.bf16.msra.mxu0 0
      %1382 = vmatprep.mubr.bf16.mxu0 0
      %1383 = vmatmul.mubr.bf16.gmra.mrb[0].mxu0 %v1268
      %v1384 = vpop.f32.mrb[0].mxu0
      %v1385 = vadd.f32 0.0, %v1384
      %v1386 = vpop.f32.mrb[0].mxu0
      %v1387 = vadd.f32 0.0, %v1386
      %v1388 = vpop.f32.mrb[0].mxu0
      %v1389 = vpop.f32.mrb[0].mxu0
      %1390 = vdwg.mxu0
      %v1391 = vadd.f32 %v1242, %v1385
      %v1392 = vadd.f32 %v1243, %v1387
      %v1393 = vld [vmem:[%s172] sm:$0xc]
      %s1394 = scalar_lea.vmem %s177, 1024
      %v1395 = vld [vmem:[%s1394] sm:$0xff]
      %v1396 = vld [vmem:[%s1394 + $0x8] sm:$0xff]
      %v1397 = vld [vmem:[%s1394 + $0x10] sm:$0xff]
      %v1398 = vld [vmem:[%s1394 + $0x18] sm:$0xff]
      %v1399 = vld [vmem:[%s1394 + $0x20] sm:$0xff]
      %v1400 = vld [vmem:[%s1394 + $0x28] sm:$0xff]
      %v1401 = vld [vmem:[%s1394 + $0x30] sm:$0xff]
      %v1402 = vld [vmem:[%s1394 + $0x38] sm:$0xff]
      %v1403 = vld [vmem:[%s1394 + $0x40] sm:$0xff]
      %v1404 = vld [vmem:[%s1394 + $0x48] sm:$0xff]
      %v1405 = vld [vmem:[%s1394 + $0x50] sm:$0xff]
      %v1406 = vld [vmem:[%s1394 + $0x58] sm:$0xff]
      %v1407 = vld [vmem:[%s1394 + $0x60] sm:$0xff]
      %v1408 = vld [vmem:[%s1394 + $0x68] sm:$0xff]
      %v1409 = vld [vmem:[%s1394 + $0x70] sm:$0xff]
      %v1410 = vld [vmem:[%s1394 + $0x78] sm:$0xff]
      %v1412 = vunpack.c.l.b16 %v1393
      %v1413 = vpack.c.b16 %v1110, %v1412
      %v1414 = vrot.slane %v1413, 2
      %v1432 = vunpack.c.l.b16 %v1395
      %v1433 = vunpack.c.h.b16 %v1395
      %v1434 = vunpack.c.l.b16 %v1396
      %v1435 = vunpack.c.h.b16 %v1396
      %v1436 = vunpack.c.l.b16 %v1397
      %v1437 = vunpack.c.h.b16 %v1397
      %v1438 = vunpack.c.l.b16 %v1398
      %v1439 = vunpack.c.h.b16 %v1398
      %v1440 = vunpack.c.l.b16 %v1399
      %v1441 = vunpack.c.h.b16 %v1399
      %v1442 = vunpack.c.l.b16 %v1400
      %v1443 = vunpack.c.h.b16 %v1400
      %v1444 = vunpack.c.l.b16 %v1401
      %v1445 = vunpack.c.h.b16 %v1401
      %v1446 = vunpack.c.l.b16 %v1402
      %v1447 = vunpack.c.h.b16 %v1402
      %v1448 = vunpack.c.l.b16 %v1403
      %v1449 = vunpack.c.h.b16 %v1403
      %v1450 = vunpack.c.l.b16 %v1404
      %v1451 = vunpack.c.h.b16 %v1404
      %v1452 = vunpack.c.l.b16 %v1405
      %v1453 = vunpack.c.h.b16 %v1405
      %v1454 = vunpack.c.l.b16 %v1406
      %v1455 = vunpack.c.h.b16 %v1406
      %v1456 = vunpack.c.l.b16 %v1407
      %v1457 = vunpack.c.h.b16 %v1407
      %v1458 = vunpack.c.l.b16 %v1408
      %v1459 = vunpack.c.h.b16 %v1408
      %v1460 = vunpack.c.l.b16 %v1409
      %v1461 = vunpack.c.h.b16 %v1409
      %v1462 = vunpack.c.l.b16 %v1410
      %v1463 = vunpack.c.h.b16 %v1410
      %v1464 = vpack.c.b16 %v1434, %v1432
      %v1465 = vpack.c.b16 %v1435, %v1433
      %v1466 = vpack.c.b16 %v1438, %v1436
      %v1467 = vpack.c.b16 %v1439, %v1437
      %v1468 = vpack.c.b16 %v1442, %v1440
      %v1469 = vpack.c.b16 %v1443, %v1441
      %v1470 = vpack.c.b16 %v1446, %v1444
      %v1471 = vpack.c.b16 %v1447, %v1445
      %v1472 = vpack.c.b16 %v1450, %v1448
      %v1473 = vpack.c.b16 %v1451, %v1449
      %v1474 = vpack.c.b16 %v1454, %v1452
      %v1475 = vpack.c.b16 %v1455, %v1453
      %v1476 = vpack.c.b16 %v1458, %v1456
      %v1477 = vpack.c.b16 %v1459, %v1457
      %v1478 = vpack.c.b16 %v1462, %v1460
      %v1479 = vpack.c.b16 %v1463, %v1461
      %1496 = vmatprep.subr.bf16.mxu0 %v1465
      %1497 = vmatpush1.bf16.msra.mxu0 %v1464
      %1498 = vmatprep.subr.bf16.mxu0 %v1467
      %1499 = vmatpush1.bf16.msra.mxu0 %v1466
      %1500 = vmatprep.subr.bf16.mxu0 %v1469
      %1501 = vmatpush1.bf16.msra.mxu0 %v1468
      %1502 = vmatprep.subr.bf16.mxu0 %v1471
      %1503 = vmatpush1.bf16.msra.mxu0 %v1470
      %1504 = vmatprep.subr.bf16.mxu0 %v1473
      %1505 = vmatpush1.bf16.msra.mxu0 %v1472
      %1506 = vmatprep.subr.bf16.mxu0 %v1475
      %1507 = vmatpush1.bf16.msra.mxu0 %v1474
      %1508 = vmatprep.subr.bf16.mxu0 %v1477
      %1509 = vmatpush1.bf16.msra.mxu0 %v1476
      %1510 = vmatprep.subr.bf16.mxu0 %v1479
      %1511 = vmatpush1.bf16.msra.mxu0 %v1478
      %1512 = vmatprep.subr.bf16.mxu0 0
      %1513 = vmatpush1.bf16.msra.mxu0 0
      %1514 = vmatprep.subr.bf16.mxu0 0
      %1515 = vmatpush1.bf16.msra.mxu0 0
      %1516 = vmatprep.subr.bf16.mxu0 0
      %1517 = vmatpush1.bf16.msra.mxu0 0
      %1518 = vmatprep.subr.bf16.mxu0 0
      %1519 = vmatpush1.bf16.msra.mxu0 0
      %1520 = vmatprep.subr.bf16.mxu0 0
      %1521 = vmatpush1.bf16.msra.mxu0 0
      %1522 = vmatprep.subr.bf16.mxu0 0
      %1523 = vmatpush1.bf16.msra.mxu0 0
      %1524 = vmatprep.subr.bf16.mxu0 0
      %1525 = vmatpush1.bf16.msra.mxu0 0
      %1526 = vmatprep.subr.bf16.mxu0 0
      %1527 = vmatpush1.bf16.msra.mxu0 0
      %1528 = vmatprep.mubr.bf16.mxu0 0
      %1529 = vmatmul.mubr.bf16.gmra.mrb[0].mxu0 %v1414
      %v1530 = vpop.f32.mrb[0].mxu0
      %v1531 = vadd.f32 0.0, %v1530
      %v1532 = vpop.f32.mrb[0].mxu0
      %v1533 = vadd.f32 0.0, %v1532
      %v1534 = vpop.f32.mrb[0].mxu0
      %v1535 = vpop.f32.mrb[0].mxu0
      %1536 = vdwg.mxu0
      %v1537 = vadd.f32 %v1391, %v1531
      %v1538 = vadd.f32 %v1392, %v1533
      %v1539 = vpack.c.bf16 %v1537, %v1537
      %v1540 = vpack.c.bf16 %v1538, %v1538
      %v1543 = vunpack.c.l.b16 %v1539
      %v1544 = vunpack.c.l.b16 %v1540
      %v1545 = vpack.c.b16 %v1544, %v1543
      %1547 = vst [vmem:[%s187] sm:$0x77] %v1545
      %s1548 = smul.u32 2, %s17
      %p1549 = scmp.lt.s32.totalorder %s18, 1
      %s1550 = scalar_select %p1549, %s18, 1
      %p1551 = scmp.lt.s32.totalorder %s1548, 1
      %s1552 = scalar_select %p1551, %s1548, 1
      %s1553 = smul.addr %s1550, 2
      %s1554 = sadd.s32 %s1552, %s1553
      %s1555 = smul.addr %s1554, 4
      %s1556 = scalar_lea.vmem %s2, %s1555
      // Predicated region
      $region29: #{discriminator_forward.11} parent=27 // pred_check
        %p1557 = pneg %p97
      $region30: #{discriminator_forward.11} parent=27 // pred_check_branch
        %1559 = sbr.rel (%p1557) target = $region32
      $region31: #{discriminator_forward.11} parent=27 // pred_region
        %s1560 = smul.u32 2, %s17
      $region32: #{discriminator_forward.11} parent=27 // pred_fallthru
        _
    $region28: #{discriminator_forward.11} parent=5 // pred_fallthru
      _
    %p1561 = scmp.le.s32.totalorder 2, %s8
    // Predicated region
    $region33: #{discriminator_forward.11} parent=5 // pred_check
      %p1562 = pneg %p1561
    $region34: #{discriminator_forward.11} parent=5 // pred_check_branch
      %1564 = sbr.rel (%p1562) target = $region36
    $region35: #{discriminator_forward.11} parent=5 // pred_region
      %s1565 = ssub.s32 %s8, 2
      // Predicated region
      $region37: #{discriminator_forward.11} parent=35 // pred_check
        %p1566 = pneg %p103
      $region38: #{discriminator_forward.11} parent=35 // pred_check_branch
        %1568 = sbr.rel (%p1566) target = $region40
      $region39: #{discriminator_forward.11} parent=35 // pred_region
        %s1569 = smul.u32 2, %s19
        %p1570 = scmp.lt.s32.totalorder %s20, 1
        %s1571 = scalar_select %p1570, %s20, 1
        %p1572 = scmp.lt.s32.totalorder %s1569, 1
        %s1573 = scalar_select %p1572, %s1569, 1
        %s1574 = smul.addr %s1571, 2
        %s1575 = sadd.s32 %s1573, %s1574
        %s1576 = smul.addr %s1575, 4
        %s1577 = scalar_lea.vmem %s2, %s1576
      $region40: #{discriminator_forward.11} parent=35 // pred_fallthru
        _
    $region36: #{discriminator_forward.11} parent=5 // pred_fallthru
      _
  $region6: #{discriminator_forward.11} parent=0 // loop_footer
    %s12 = sadd.s32 1, %s8
  $region7: #{discriminator_forward.11} parent=0 // loop_footer_branch
    %7 = sbr.rel target = $region3
  $region8: #{discriminator_forward.11} parent=0 // loop_exit
    _

// kernel: discriminator_forward.14
$region0: #{discriminator_forward.14}
  #allocation0 [shape = 'u32[]', space=smem, size = 0x4, offset = 0x4, fixed_abs, tag = 'smem constant byte address 0x4 - core index']
  #allocation1 [shape = 'u32[144,128]{1,0:T(1,128)}', space=vmem, size = 0x12000, scoped, tag = 'internal scratch']
  %s0 = inlined_call_operand.vmem [shape: bf16[2,4,512], index: 0, kind: input, shape index: {}]
  %s1 = inlined_call_operand.vmem [shape: bf16[2,4,512], index: 1, kind: output, shape index: {}]
  %s2 = sld [smem:[#allocation0]]
  $region37: #{discriminator_forward.14} parent=0
    _
  %s4 = ssub.s32 1, %s2
  %s5 = scalar_select 0, %s4, %s2
  loop: start=0, step=1, limit=10
  $region2: #{discriminator_forward.14} parent=0 // loop_pre_header
    _
  $region3: #{discriminator_forward.14} parent=0 // loop_header
    %s7 = sphi 0, %s11
    %p8 = scmp.ge.s32.totalorder %s7, 10
    %s14 = sphi 0, %s26
    %s15 = sphi 0, %s22
    %s16 = sphi 0, %s14
    %s17 = sphi 0, %s15
    %s18 = sphi 0, %s16
    %s19 = sphi 0, %s17
    %s31 = sphi 0, %s33
    %s34 = sphi 0, %s31
    %s35 = sphi 0, %s34
    %s51 = sphi 0, %s35
    %s59 = sphi 0, %s61
    %s62 = sphi 0, %s59
    %s63 = sphi 0, %s62
    %s79 = sphi 0, %s63
  $region4: #{discriminator_forward.14} parent=0 // loop_header_branch
    %10 = sbr.rel (%p8) target = $region8
  $region5: #{discriminator_forward.14} parent=0 // loop_body
    %s12 = ssub.s32 %s7, 1
    %s13 = ssub.s32 %s7, 2
    %s20 = sadd.s32 1, %s15
    %p21 = scmp.ge.s32.totalorder %s20, 4
    %s22 = scalar_select %p21, 0, %s20
    %s23 = sadd.s32 1, %s14
    %s24 = scalar_select %p21, %s23, %s14
    %p25 = scmp.ge.s32.totalorder %s24, 2
    %s26 = scalar_select %p25, 0, %s24
    %s27 = ssub.s32 %s14, %s26
    %s28 = ssub.s32 %s15, %s22
    %s29 = sor.u32 %s27, %s28
    %p30 = scmp.eq.s32.totalorder %s29, 0
    %s32 = sadd.s32 %s31, 1
    %s33 = scalar_select %p30, %s31, %s32
    %p36 = pneg %p30
    %p37 = scmp.eq.s32.totalorder %s7, 7
    %p38 = por %p36, %p37
    %p39 = scmp.ne.s32.totalorder %s31, %s34
    %p40 = scmp.eq.s32.totalorder %s7, 0
    %p41 = por %p39, %p40
    %p42 = scmp.ne.s32.totalorder %s31, %s34
    %p43 = scmp.eq.s32.totalorder %s12, 7
    %p44 = por %p42, %p43
    %p45 = scmp.ne.s32.totalorder %s34, %s35
    %p46 = scmp.eq.s32.totalorder %s12, 0
    %p47 = por %p45, %p46
    %p48 = scmp.ne.s32.totalorder %s34, %s35
    %p49 = scmp.eq.s32.totalorder %s13, 7
    %p50 = por %p48, %p49
    %p52 = scmp.ne.s32.totalorder %s35, %s51
    %p53 = scmp.eq.s32.totalorder %s13, 0
    %p54 = por %p52, %p53
    %s55 = ssub.s32 %s14, %s26
    %s56 = ssub.s32 %s15, %s22
    %s57 = sor.u32 %s55, %s56
    %p58 = scmp.eq.s32.totalorder %s57, 0
    %s60 = sadd.s32 %s59, 1
    %s61 = scalar_select %p58, %s59, %s60
    %p64 = pneg %p58
    %p65 = scmp.eq.s32.totalorder %s7, 7
    %p66 = por %p64, %p65
    %p67 = scmp.ne.s32.totalorder %s59, %s62
    %p68 = scmp.eq.s32.totalorder %s7, 0
    %p69 = por %p67, %p68
    %p70 = scmp.ne.s32.totalorder %s59, %s62
    %p71 = scmp.eq.s32.totalorder %s12, 7
    %p72 = por %p70, %p71
    %p73 = scmp.ne.s32.totalorder %s62, %s63
    %p74 = scmp.eq.s32.totalorder %s12, 0
    %p75 = por %p73, %p74
    %p76 = scmp.ne.s32.totalorder %s62, %s63
    %p77 = scmp.eq.s32.totalorder %s13, 7
    %p78 = por %p76, %p77
    %p80 = scmp.ne.s32.totalorder %s63, %s79
    %p81 = scmp.eq.s32.totalorder %s13, 0
    %p82 = por %p80, %p81
    %p83 = scmp.le.s32.totalorder 1, %s7
    %p84 = scmp.lt.s32.totalorder %s7, 9
    %p85 = pnand %p83, %p84
    %p86 = pneg %p85
    // Predicated region
    $region9: #{discriminator_forward.14} parent=5 // pred_check
      _
    $region10: #{discriminator_forward.14} parent=5 // pred_check_branch
      %88 = sbr.rel (%p85) target = $region12
    $region11: #{discriminator_forward.14} parent=5 // pred_region
      %s89 = ssub.s32 %s7, 1
    $region12: #{discriminator_forward.14} parent=5 // pred_fallthru
      _
    %p90 = scmp.lt.s32.totalorder %s7, 8
    // Predicated region
    $region13: #{discriminator_forward.14} parent=5 // pred_check
      %p91 = pneg %p90
    $region14: #{discriminator_forward.14} parent=5 // pred_check_branch
      %93 = sbr.rel (%p91) target = $region16
    $region15: #{discriminator_forward.14} parent=5 // pred_region
      // Predicated region
      $region17: #{discriminator_forward.14} parent=15 // pred_check
        %p94 = pneg %p41
      $region18: #{discriminator_forward.14} parent=15 // pred_check_branch
        %96 = sbr.rel (%p94) target = $region20
      $region19: #{discriminator_forward.14} parent=15 // pred_region
        %p97 = scmp.lt.s32.totalorder %s14, 1
        %s98 = scalar_select %p97, %s14, 1
        %p99 = scmp.lt.s32.totalorder %s15, 3
        %s100 = scalar_select %p99, %s15, 3
        %s101 = smul.addr %s98, 4
        %s102 = sadd.s32 %s100, %s101
        %s103 = smul.addr %s102, 2
        %s104 = scalar_lea.vmem %s0, %s103
      $region20: #{discriminator_forward.14} parent=15 // pred_fallthru
        _
    $region16: #{discriminator_forward.14} parent=5 // pred_fallthru
      _
    %p105 = scmp.le.s32.totalorder 1, %s7
    %p106 = scmp.lt.s32.totalorder %s7, 9
    %p107 = pnand %p105, %p106
    %p108 = pneg %p107
    // Predicated region
    $region21: #{discriminator_forward.14} parent=5 // pred_check
      _
    $region22: #{discriminator_forward.14} parent=5 // pred_check_branch
      %110 = sbr.rel (%p107) target = $region24
    $region23: #{discriminator_forward.14} parent=5 // pred_region
      %s111 = ssub.s32 %s7, 1
      %p112 = scmp.lt.s32.totalorder %s16, 1
      %s113 = scalar_select %p112, %s16, 1
      %p114 = scmp.lt.s32.totalorder %s17, 3
      %s115 = scalar_select %p114, %s17, 3
      %s116 = smul.addr %s113, 4
      %s117 = sadd.s32 %s115, %s116
      %s118 = smul.addr %s117, 2
      %s119 = scalar_lea.vmem %s0, %s118
      %p120 = pneg %p47
      %p121 = pneg %p44
      %p122 = pneg %p75
      %p123 = pneg %p72
      %p124 = scmp.lt.s32.totalorder %s16, 1
      %s125 = scalar_select %p124, %s16, 1
      %p126 = scmp.lt.s32.totalorder %s17, 3
      %s127 = scalar_select %p126, %s17, 3
      %s128 = smul.addr %s125, 4
      %s129 = sadd.s32 %s127, %s128
      %s130 = smul.addr %s129, 2
      %s131 = scalar_lea.vmem %s1, %s130
      %p132 = scmp.lt.s32.totalorder %s16, 1
      %s133 = scalar_select %p132, %s16, 1
      %p134 = scmp.lt.s32.totalorder %s17, 3
      %s135 = scalar_select %p134, %s17, 3
      %s136 = smul.addr %s133, 4
      %s137 = sadd.s32 %s135, %s136
      %s138 = smul.addr %s137, 2
      %s139 = scalar_lea.vmem %s0, %s138
      %p140 = scmp.lt.s32.totalorder %s16, 1
      %s141 = scalar_select %p140, %s16, 1
      %p142 = scmp.lt.s32.totalorder %s17, 3
      %s143 = scalar_select %p142, %s17, 3
      %s144 = smul.addr %s141, 4
      %s145 = sadd.s32 %s143, %s144
      %s146 = smul.addr %s145, 2
      %s147 = scalar_lea.vmem %s1, %s146
      %v148 = vld [vmem:[%s139] sm:$0x3]
      %v149 = vunpack.c.l.bf16 %v148
      %vm150 = vcmask 1043456
      %v151 = vsel %vm150, %v149, 0.0
      %v152 = vrot.slane %v151, 4
      %v153 = vadd.f32 %v151, %v152
      %v154 = vrot.slane %v153, 2
      %v155 = vadd.f32 %v153, %v154
      %v156 = vrot.slane %v155, 1
      %v157 = vadd.f32 %v155, %v156
      %v158 = vmul.f32 %v157, 0.25
      %v159 = vmul.f32 %v149, %v149
      %v160 = vsel %vm150, %v159, 0.0
      %v161 = vrot.slane %v160, 4
      %v162 = vadd.f32 %v160, %v161
      %v163 = vrot.slane %v162, 2
      %v164 = vadd.f32 %v162, %v163
      %v165 = vrot.slane %v164, 1
      %v166 = vadd.f32 %v164, %v165
      %v167 = vmul.f32 %v166, 0.25
      %v168 = vmul.f32 %v158, %v158
      %v169 = vsub.f32 %v167, %v168
      %v170 = vmax.f32 %v169, 0.0
      %v171 = vsub.f32 %v149, %v158
      %v172 = vadd.f32 %v170, 1e-05
      %v173 = vrsqrt.pop %v172
      %v174 = vmul.f32 %v171, %v173
      %vm175 = vcmp.ge.f32.partialorder %v174, 0.0
      %v176 = vmul.f32 %v174, 0.2
      %v177 = vsel %vm175, %v174, %v176
      %v178 = vpack.c.bf16 %v177, %v177
      %179 = vst [vmem:[%s147] sm:$0x3] %v178
      %p180 = scmp.lt.s32.totalorder %s16, 1
      %s181 = scalar_select %p180, %s16, 1
      %p182 = scmp.lt.s32.totalorder %s17, 3
      %s183 = scalar_select %p182, %s17, 3
      %s184 = smul.addr %s181, 4
      %s185 = sadd.s32 %s183, %s184
      %s186 = smul.addr %s185, 2
      %s187 = scalar_lea.vmem %s1, %s186
      // Predicated region
      $region25: #{discriminator_forward.14} parent=23 // pred_check
        %p188 = pneg %p72
      $region26: #{discriminator_forward.14} parent=23 // pred_check_branch
        %190 = sbr.rel (%p188) target = $region28
      $region27: #{discriminator_forward.14} parent=23 // pred_region
        _
      $region28: #{discriminator_forward.14} parent=23 // pred_fallthru
        _
    $region24: #{discriminator_forward.14} parent=5 // pred_fallthru
      _
    %p191 = scmp.le.s32.totalorder 2, %s7
    // Predicated region
    $region29: #{discriminator_forward.14} parent=5 // pred_check
      %p192 = pneg %p191
    $region30: #{discriminator_forward.14} parent=5 // pred_check_branch
      %194 = sbr.rel (%p192) target = $region32
    $region31: #{discriminator_forward.14} parent=5 // pred_region
      %s195 = ssub.s32 %s7, 2
      // Predicated region
      $region33: #{discriminator_forward.14} parent=31 // pred_check
        %p196 = pneg %p78
      $region34: #{discriminator_forward.14} parent=31 // pred_check_branch
        %198 = sbr.rel (%p196) target = $region36
      $region35: #{discriminator_forward.14} parent=31 // pred_region
        %p199 = scmp.lt.s32.totalorder %s18, 1
        %s200 = scalar_select %p199, %s18, 1
        %p201 = scmp.lt.s32.totalorder %s19, 3
        %s202 = scalar_select %p201, %s19, 3
        %s203 = smul.addr %s200, 4
        %s204 = sadd.s32 %s202, %s203
        %s205 = smul.addr %s204, 2
        %s206 = scalar_lea.vmem %s1, %s205
      $region36: #{discriminator_forward.14} parent=31 // pred_fallthru
        _
    $region32: #{discriminator_forward.14} parent=5 // pred_fallthru
      _
  $region6: #{discriminator_forward.14} parent=0 // loop_footer
    %s11 = sadd.s32 1, %s7
  $region7: #{discriminator_forward.14} parent=0 // loop_footer_branch
    %6 = sbr.rel target = $region3
  $region8: #{discriminator_forward.14} parent=0 // loop_exit
    _

// kernel: discriminator_forward.13
$region0: #{discriminator_forward.13}
  #allocation0 [shape = 'u32[]', space=smem, size = 0x4, offset = 0x4, fixed_abs, tag = 'smem constant byte address 0x4 - core index']
  #allocation1 [shape = 'u32[144,128]{1,0:T(1,128)}', space=vmem, size = 0x12000, scoped, tag = 'internal scratch']
  %s0 = inlined_call_operand.vmem [shape: bf16[2,20,256], index: 0, kind: input, shape index: {}]
  %s1 = inlined_call_operand.vmem [shape: bf16[9,256,512], index: 1, kind: input, shape index: {}]
  %s2 = inlined_call_operand.vmem [shape: bf16[2,8,512], index: 2, kind: output, shape index: {}]
  %s3 = sld [smem:[#allocation0]]
  $region79: #{discriminator_forward.13} parent=0
    _
  %s5 = ssub.s32 1, %s3
  %s6 = scalar_select 0, %s5, %s3
  $region1: #{discriminator_forward.13} parent=0
    #allocation2 [shape = 'u8[2359296]{0}', space=vmem, size = 0x240000, scoped, tag = 'input window, operand 1']
    loop: start=0, step=1, limit=6
    $region2: #{discriminator_forward.13} parent=1 // loop_pre_header
      _
    $region3: #{discriminator_forward.13} parent=1 // loop_header
      %s8 = sphi 0, %s12
      %p9 = scmp.ge.s32.totalorder %s8, 6
      %s15 = sphi 0, %s27
      %s16 = sphi 0, %s23
      %s17 = sphi 0, %s15
      %s18 = sphi 0, %s16
      %s19 = sphi 0, %s17
      %s20 = sphi 0, %s18
      %s30 = sphi 0, %s32
      %s33 = sphi 0, %s30
      %s34 = sphi 0, %s33
      %s50 = sphi 0, %s34
      %s56 = sphi 0, %s58
      %s59 = sphi 0, %s56
      %s60 = sphi 0, %s59
      %s76 = sphi 0, %s60
      %s84 = sphi 0, %s86
      %s87 = sphi 0, %s84
      %s88 = sphi 0, %s87
      %s104 = sphi 0, %s88
    $region4: #{discriminator_forward.13} parent=1 // loop_header_branch
      %11 = sbr.rel (%p9) target = $region8
    $region5: #{discriminator_forward.13} parent=1 // loop_body
      %s13 = ssub.s32 %s8, 1
      %s14 = ssub.s32 %s8, 2
      %s21 = sadd.s32 1, %s16
      %p22 = scmp.ge.s32.totalorder %s21, 2
      %s23 = scalar_select %p22, 0, %s21
      %s24 = sadd.s32 1, %s15
      %s25 = scalar_select %p22, %s24, %s15
      %p26 = scmp.ge.s32.totalorder %s25, 2
      %s27 = scalar_select %p26, 0, %s25
      %s28 = ssub.s32 %s16, %s23
      %p29 = scmp.eq.s32.totalorder %s28, 0
      %s31 = sadd.s32 %s30, 1
      %s32 = scalar_select %p29, %s30, %s31
      %p35 = pneg %p29
      %p36 = scmp.eq.s32.totalorder %s8, 3
      %p37 = por %p35, %p36
      %p38 = scmp.ne.s32.totalorder %s30, %s33
      %p39 = scmp.eq.s32.totalorder %s8, 0
      %p40 = por %p38, %p39
      %p41 = scmp.ne.s32.totalorder %s30, %s33
      %p42 = scmp.eq.s32.totalorder %s13, 3
      %p43 = por %p41, %p42
      %p44 = scmp.ne.s32.totalorder %s33, %s34
      %p45 = scmp.eq.s32.totalorder %s13, 0
      %p46 = por %p44, %p45
      %p47 = scmp.ne.s32.totalorder %s33, %s34
      %p48 = scmp.eq.s32.totalorder %s14, 3
      %p49 = por %p47, %p48
      %p51 = scmp.ne.s32.totalorder %s34, %s50
      %p52 = scmp.eq.s32.totalorder %s14, 0
      %p53 = por %p51, %p52
      %s54 = ssub.s32 %s15, %s27
      %p55 = scmp.eq.s32.totalorder %s54, 0
      %s57 = sadd.s32 %s56, 1
      %s58 = scalar_select %p55, %s56, %s57
      %p61 = pneg %p55
      %p62 = scmp.eq.s32.totalorder %s8, 3
      %p63 = por %p61, %p62
      %p64 = scmp.ne.s32.totalorder %s56, %s59
      %p65 = scmp.eq.s32.totalorder %s8, 0
      %p66 = por %p64, %p65
      %p67 = scmp.ne.s32.totalorder %s56, %s59
      %p68 = scmp.eq.s32.totalorder %s13, 3
      %p69 = por %p67, %p68
      %p70 = scmp.ne.s32.totalorder %s59, %s60
      %p71 = scmp.eq.s32.totalorder %s13, 0
      %p72 = por %p70, %p71
      %p73 = scmp.ne.s32.totalorder %s59, %s60
      %p74 = scmp.eq.s32.totalorder %s14, 3
      %p75 = por %p73, %p74
      %p77 = scmp.ne.s32.totalorder %s60, %s76
      %p78 = scmp.eq.s32.totalorder %s14, 0
      %p79 = por %p77, %p78
      %s80 = ssub.s32 %s16, %s23
      %s81 = ssub.s32 %s15, %s27
      %s82 = sor.u32 %s80, %s81
      %p83 = scmp.eq.s32.totalorder %s82, 0
      %s85 = sadd.s32 %s84, 1
      %s86 = scalar_select %p83, %s84, %s85
      %p89 = pneg %p83
      %p90 = scmp.eq.s32.totalorder %s8, 3
      %p91 = por %p89, %p90
      %p92 = scmp.ne.s32.totalorder %s84, %s87
      %p93 = scmp.eq.s32.totalorder %s8, 0
      %p94 = por %p92, %p93
      %p95 = scmp.ne.s32.totalorder %s84, %s87
      %p96 = scmp.eq.s32.totalorder %s13, 3
      %p97 = por %p95, %p96
      %p98 = scmp.ne.s32.totalorder %s87, %s88
      %p99 = scmp.eq.s32.totalorder %s13, 0
      %p100 = por %p98, %p99
      %p101 = scmp.ne.s32.totalorder %s87, %s88
      %p102 = scmp.eq.s32.totalorder %s14, 3
      %p103 = por %p101, %p102
      %p105 = scmp.ne.s32.totalorder %s88, %s104
      %p106 = scmp.eq.s32.totalorder %s14, 0
      %p107 = por %p105, %p106
      %p108 = scmp.le.s32.totalorder 1, %s8
      %p109 = scmp.lt.s32.totalorder %s8, 5
      %p110 = pnand %p108, %p109
      %p111 = pneg %p110
      // Predicated region
      $region9: #{discriminator_forward.13} parent=5 // pred_check
        _
      $region10: #{discriminator_forward.13} parent=5 // pred_check_branch
        %113 = sbr.rel (%p110) target = $region12
      $region11: #{discriminator_forward.13} parent=5 // pred_region
        %s114 = ssub.s32 %s8, 1
      $region12: #{discriminator_forward.13} parent=5 // pred_fallthru
        _
      %p115 = scmp.lt.s32.totalorder %s8, 4
      // Predicated region
      $region13: #{discriminator_forward.13} parent=5 // pred_check
        %p116 = pneg %p115
      $region14: #{discriminator_forward.13} parent=5 // pred_check_branch
        %118 = sbr.rel (%p116) target = $region16
      $region15: #{discriminator_forward.13} parent=5 // pred_region
        // Predicated region
        $region17: #{discriminator_forward.13} parent=15 // pred_check
          %p119 = pneg %p40
        $region18: #{discriminator_forward.13} parent=15 // pred_check_branch
          %121 = sbr.rel (%p119) target = $region20
        $region19: #{discriminator_forward.13} parent=15 // pred_region
          %p122 = scmp.lt.s32.totalorder %s16, 1
          %s123 = scalar_select %p122, %s16, 1
          %s124 = smul.addr %s123, 6
          %s125 = smul.addr %s124, 4
          %s126 = scalar_lea.vmem %s0, %s125
        $region20: #{discriminator_forward.13} parent=15 // pred_fallthru
          _
        // Predicated region
        $region21: #{discriminator_forward.13} parent=15 // pred_check
          %p127 = pneg %p66
        $region22: #{discriminator_forward.13} parent=15 // pred_check_branch
          %129 = sbr.rel (%p127) target = $region24
        $region23: #{discriminator_forward.13} parent=15 // pred_region
          %s130 = sand.u32 %s56, 1
          %s131 = sand.u32 %s56, 1
          %s132 = smul.addr %s131, 2304
          %s133 = scalar_lea.vmem [#allocation2], %s132
          %s134 = smul.u32 2, %s15
          %s135 = smul.addr %s134, 4
          %s136 = scalar_lea.vmem %s1, %s135
          // Predicated region
          $region25: #{discriminator_forward.13} parent=23 // pred_check
            _
          $region26: #{discriminator_forward.13} parent=23 // pred_check_branch
            %138 = sbr.rel (0) target = $region28
          $region27: #{discriminator_forward.13} parent=23 // pred_region
            // Predicated region
            $region29: #{discriminator_forward.13} parent=27 // pred_check
              _
            $region30: #{discriminator_forward.13} parent=27 // pred_check_branch
              %140 = sbr.rel (0) target = $region32
            $region31: #{discriminator_forward.13} parent=27 // pred_region
              // Predicated region
              $region44: #{discriminator_forward.13} parent=31 // pred_check
                _
              $region45: #{discriminator_forward.13} parent=31 // pred_check_branch
                %729 = sbr.rel (0) target = $region47
              $region46: #{discriminator_forward.13} parent=31 // pred_region
                loop: start=0, step=1, limit=1
                $region48: #{discriminator_forward.13} parent=46 // loop_pre_header
                  _
                $region49: #{discriminator_forward.13} parent=46 // loop_header
                  %s731 = sphi 0, %s735
                  %p732 = scmp.ge.s32.totalorder %s731, 1
                  %s736 = sphi %s136, %s136
                  %s737 = sphi %s133, %s133
                $region50: #{discriminator_forward.13} parent=46 // loop_header_branch
                  %734 = sbr.rel (%p732) target = $region54
                $region51: #{discriminator_forward.13} parent=46 // loop_body
                  %v738 = vld [vmem:[%s736] sm:$0xff]
                  %739 = vst [vmem:[%s737] sm:$0xff] %v738
                  %v740 = vld [vmem:[%s736 + $0x10] sm:$0xff]
                  %741 = vst [vmem:[%s737 + $0x8] sm:$0xff] %v740
                  %v742 = vld [vmem:[%s736 + $0x20] sm:$0xff]
                  %743 = vst [vmem:[%s737 + $0x10] sm:$0xff] %v742
                  %v744 = vld [vmem:[%s736 + $0x30] sm:$0xff]
                  %745 = vst [vmem:[%s737 + $0x18] sm:$0xff] %v744
                  %v746 = vld [vmem:[%s736 + $0x40] sm:$0xff]
                  %747 = vst [vmem:[%s737 + $0x20] sm:$0xff] %v746
                  %v748 = vld [vmem:[%s736 + $0x50] sm:$0xff]
                  %749 = vst [vmem:[%s737 + $0x28] sm:$0xff] %v748
                  %v750 = vld [vmem:[%s736 + $0x60] sm:$0xff]
                  %751 = vst [vmem:[%s737 + $0x30] sm:$0xff] %v750
                  %v752 = vld [vmem:[%s736 + $0x70] sm:$0xff]
                  %753 = vst [vmem:[%s737 + $0x38] sm:$0xff] %v752
                  %v754 = vld [vmem:[%s736 + $0x80] sm:$0xff]
                  %755 = vst [vmem:[%s737 + $0x40] sm:$0xff] %v754
                  %v756 = vld [vmem:[%s736 + $0x90] sm:$0xff]
                  %757 = vst [vmem:[%s737 + $0x48] sm:$0xff] %v756
                  %v758 = vld [vmem:[%s736 + $0xa0] sm:$0xff]
                  %759 = vst [vmem:[%s737 + $0x50] sm:$0xff] %v758
                  %v760 = vld [vmem:[%s736 + $0xb0] sm:$0xff]
                  %761 = vst [vmem:[%s737 + $0x58] sm:$0xff] %v760
                  %v762 = vld [vmem:[%s736 + $0xc0] sm:$0xff]
                  %763 = vst [vmem:[%s737 + $0x60] sm:$0xff] %v762
                  %v764 = vld [vmem:[%s736 + $0xd0] sm:$0xff]
                  %765 = vst [vmem:[%s737 + $0x68] sm:$0xff] %v764
                  %v766 = vld [vmem:[%s736 + $0xe0] sm:$0xff]
                  %767 = vst [vmem:[%s737 + $0x70] sm:$0xff] %v766
                  %v768 = vld [vmem:[%s736 + $0xf0] sm:$0xff]
                  %769 = vst [vmem:[%s737 + $0x78] sm:$0xff] %v768
                  %v770 = vld [vmem:[%s736 + $0x100] sm:$0xff]
                  %771 = vst [vmem:[%s737 + $0x80] sm:$0xff] %v770
                  %v772 = vld [vmem:[%s736 + $0x110] sm:$0xff]
                  %773 = vst [vmem:[%s737 + $0x88] sm:$0xff] %v772
                  %v774 = vld [vmem:[%s736 + $0x120] sm:$0xff]
                  %775 = vst [vmem:[%s737 + $0x90] sm:$0xff] %v774
                  %v776 = vld [vmem:[%s736 + $0x130] sm:$0xff]
                  %777 = vst [vmem:[%s737 + $0x98] sm:$0xff] %v776
                  %v778 = vld [vmem:[%s736 + $0x140] sm:$0xff]
                  %779 = vst [vmem:[%s737 + $0xa0] sm:$0xff] %v778
                  %v780 = vld [vmem:[%s736 + $0x150] sm:$0xff]
                  %781 = vst [vmem:[%s737 + $0xa8] sm:$0xff] %v780
                  %v782 = vld [vmem:[%s736 + $0x160] sm:$0xff]
                  %783 = vst [vmem:[%s737 + $0xb0] sm:$0xff] %v782
                  %v784 = vld [vmem:[%s736 + $0x170] sm:$0xff]
                  %785 = vst [vmem:[%s737 + $0xb8] sm:$0xff] %v784
                  %v786 = vld [vmem:[%s736 + $0x180] sm:$0xff]
                  %787 = vst [vmem:[%s737 + $0xc0] sm:$0xff] %v786
                  %v788 = vld [vmem:[%s736 + $0x190] sm:$0xff]
                  %789 = vst [vmem:[%s737 + $0xc8] sm:$0xff] %v788
                  %v790 = vld [vmem:[%s736 + $0x1a0] sm:$0xff]
                  %791 = vst [vmem:[%s737 + $0xd0] sm:$0xff] %v790
                  %v792 = vld [vmem:[%s736 + $0x1b0] sm:$0xff]
                  %793 = vst [vmem:[%s737 + $0xd8] sm:$0xff] %v792
                  %v794 = vld [vmem:[%s736 + $0x1c0] sm:$0xff]
                  %795 = vst [vmem:[%s737 + $0xe0] sm:$0xff] %v794
                  %v796 = vld [vmem:[%s736 + $0x1d0] sm:$0xff]
                  %797 = vst [vmem:[%s737 + $0xe8] sm:$0xff] %v796
                  %v798 = vld [vmem:[%s736 + $0x1e0] sm:$0xff]
                  %799 = vst [vmem:[%s737 + $0xf0] sm:$0xff] %v798
                  %v800 = vld [vmem:[%s736 + $0x1f0] sm:$0xff]
                  %801 = vst [vmem:[%s737 + $0xf8] sm:$0xff] %v800
                  %v802 = vld [vmem:[%s736 + $0x200] sm:$0xff]
                  %803 = vst [vmem:[%s737 + $0x100] sm:$0xff] %v802
                  %v804 = vld [vmem:[%s736 + $0x210] sm:$0xff]
                  %805 = vst [vmem:[%s737 + $0x108] sm:$0xff] %v804
                  %v806 = vld [vmem:[%s736 + $0x220] sm:$0xff]
                  %807 = vst [vmem:[%s737 + $0x110] sm:$0xff] %v806
                  %v808 = vld [vmem:[%s736 + $0x230] sm:$0xff]
                  %809 = vst [vmem:[%s737 + $0x118] sm:$0xff] %v808
                  %v810 = vld [vmem:[%s736 + $0x240] sm:$0xff]
                  %811 = vst [vmem:[%s737 + $0x120] sm:$0xff] %v810
                  %v812 = vld [vmem:[%s736 + $0x250] sm:$0xff]
                  %813 = vst [vmem:[%s737 + $0x128] sm:$0xff] %v812
                  %v814 = vld [vmem:[%s736 + $0x260] sm:$0xff]
                  %815 = vst [vmem:[%s737 + $0x130] sm:$0xff] %v814
                  %v816 = vld [vmem:[%s736 + $0x270] sm:$0xff]
                  %817 = vst [vmem:[%s737 + $0x138] sm:$0xff] %v816
                  %v818 = vld [vmem:[%s736 + $0x280] sm:$0xff]
                  %819 = vst [vmem:[%s737 + $0x140] sm:$0xff] %v818
                  %v820 = vld [vmem:[%s736 + $0x290] sm:$0xff]
                  %821 = vst [vmem:[%s737 + $0x148] sm:$0xff] %v820
                  %v822 = vld [vmem:[%s736 + $0x2a0] sm:$0xff]
                  %823 = vst [vmem:[%s737 + $0x150] sm:$0xff] %v822
                  %v824 = vld [vmem:[%s736 + $0x2b0] sm:$0xff]
                  %825 = vst [vmem:[%s737 + $0x158] sm:$0xff] %v824
                  %v826 = vld [vmem:[%s736 + $0x2c0] sm:$0xff]
                  %827 = vst [vmem:[%s737 + $0x160] sm:$0xff] %v826
                  %v828 = vld [vmem:[%s736 + $0x2d0] sm:$0xff]
                  %829 = vst [vmem:[%s737 + $0x168] sm:$0xff] %v828
                  %v830 = vld [vmem:[%s736 + $0x2e0] sm:$0xff]
                  %831 = vst [vmem:[%s737 + $0x170] sm:$0xff] %v830
                  %v832 = vld [vmem:[%s736 + $0x2f0] sm:$0xff]
                  %833 = vst [vmem:[%s737 + $0x178] sm:$0xff] %v832
                  %v834 = vld [vmem:[%s736 + $0x300] sm:$0xff]
                  %835 = vst [vmem:[%s737 + $0x180] sm:$0xff] %v834
                  %v836 = vld [vmem:[%s736 + $0x310] sm:$0xff]
                  %837 = vst [vmem:[%s737 + $0x188] sm:$0xff] %v836
                  %v838 = vld [vmem:[%s736 + $0x320] sm:$0xff]
                  %839 = vst [vmem:[%s737 + $0x190] sm:$0xff] %v838
                  %v840 = vld [vmem:[%s736 + $0x330] sm:$0xff]
                  %841 = vst [vmem:[%s737 + $0x198] sm:$0xff] %v840
                  %v842 = vld [vmem:[%s736 + $0x340] sm:$0xff]
                  %843 = vst [vmem:[%s737 + $0x1a0] sm:$0xff] %v842
                  %v844 = vld [vmem:[%s736 + $0x350] sm:$0xff]
                  %845 = vst [vmem:[%s737 + $0x1a8] sm:$0xff] %v844
                  %v846 = vld [vmem:[%s736 + $0x360] sm:$0xff]
                  %847 = vst [vmem:[%s737 + $0x1b0] sm:$0xff] %v846
                  %v848 = vld [vmem:[%s736 + $0x370] sm:$0xff]
                  %849 = vst [vmem:[%s737 + $0x1b8] sm:$0xff] %v848
                  %v850 = vld [vmem:[%s736 + $0x380] sm:$0xff]
                  %851 = vst [vmem:[%s737 + $0x1c0] sm:$0xff] %v850
                  %v852 = vld [vmem:[%s736 + $0x390] sm:$0xff]
                  %853 = vst [vmem:[%s737 + $0x1c8] sm:$0xff] %v852
                  %v854 = vld [vmem:[%s736 + $0x3a0] sm:$0xff]
                  %855 = vst [vmem:[%s737 + $0x1d0] sm:$0xff] %v854
                  %v856 = vld [vmem:[%s736 + $0x3b0] sm:$0xff]
                  %857 = vst [vmem:[%s737 + $0x1d8] sm:$0xff] %v856
                  %v858 = vld [vmem:[%s736 + $0x3c0] sm:$0xff]
                  %859 = vst [vmem:[%s737 + $0x1e0] sm:$0xff] %v858
                  %v860 = vld [vmem:[%s736 + $0x3d0] sm:$0xff]
                  %861 = vst [vmem:[%s737 + $0x1e8] sm:$0xff] %v860
                  %v862 = vld [vmem:[%s736 + $0x3e0] sm:$0xff]
                  %863 = vst [vmem:[%s737 + $0x1f0] sm:$0xff] %v862
                  %v864 = vld [vmem:[%s736 + $0x3f0] sm:$0xff]
                  %865 = vst [vmem:[%s737 + $0x1f8] sm:$0xff] %v864
                  %v866 = vld [vmem:[%s736 + $0x400] sm:$0xff]
                  %867 = vst [vmem:[%s737 + $0x200] sm:$0xff] %v866
                  %v868 = vld [vmem:[%s736 + $0x410] sm:$0xff]
                  %869 = vst [vmem:[%s737 + $0x208] sm:$0xff] %v868
                  %v870 = vld [vmem:[%s736 + $0x420] sm:$0xff]
                  %871 = vst [vmem:[%s737 + $0x210] sm:$0xff] %v870
                  %v872 = vld [vmem:[%s736 + $0x430] sm:$0xff]
                  %873 = vst [vmem:[%s737 + $0x218] sm:$0xff] %v872
                  %v874 = vld [vmem:[%s736 + $0x440] sm:$0xff]
                  %875 = vst [vmem:[%s737 + $0x220] sm:$0xff] %v874
                  %v876 = vld [vmem:[%s736 + $0x450] sm:$0xff]
                  %877 = vst [vmem:[%s737 + $0x228] sm:$0xff] %v876
                  %v878 = vld [vmem:[%s736 + $0x460] sm:$0xff]
                  %879 = vst [vmem:[%s737 + $0x230] sm:$0xff] %v878
                  %v880 = vld [vmem:[%s736 + $0x470] sm:$0xff]
                  %881 = vst [vmem:[%s737 + $0x238] sm:$0xff] %v880
                  %v882 = vld [vmem:[%s736 + $0x480] sm:$0xff]
                  %883 = vst [vmem:[%s737 + $0x240] sm:$0xff] %v882
                  %v884 = vld [vmem:[%s736 + $0x490] sm:$0xff]
                  %885 = vst [vmem:[%s737 + $0x248] sm:$0xff] %v884
                  %v886 = vld [vmem:[%s736 + $0x4a0] sm:$0xff]
                  %887 = vst [vmem:[%s737 + $0x250] sm:$0xff] %v886
                  %v888 = vld [vmem:[%s736 + $0x4b0] sm:$0xff]
                  %889 = vst [vmem:[%s737 + $0x258] sm:$0xff] %v888
                  %v890 = vld [vmem:[%s736 + $0x4c0] sm:$0xff]
                  %891 = vst [vmem:[%s737 + $0x260] sm:$0xff] %v890
                  %v892 = vld [vmem:[%s736 + $0x4d0] sm:$0xff]
                  %893 = vst [vmem:[%s737 + $0x268] sm:$0xff] %v892
                  %v894 = vld [vmem:[%s736 + $0x4e0] sm:$0xff]
                  %895 = vst [vmem:[%s737 + $0x270] sm:$0xff] %v894
                  %v896 = vld [vmem:[%s736 + $0x4f0] sm:$0xff]
                  %897 = vst [vmem:[%s737 + $0x278] sm:$0xff] %v896
                  %v898 = vld [vmem:[%s736 + $0x500] sm:$0xff]
                  %899 = vst [vmem:[%s737 + $0x280] sm:$0xff] %v898
                  %v900 = vld [vmem:[%s736 + $0x510] sm:$0xff]
                  %901 = vst [vmem:[%s737 + $0x288] sm:$0xff] %v900
                  %v902 = vld [vmem:[%s736 + $0x520] sm:$0xff]
                  %903 = vst [vmem:[%s737 + $0x290] sm:$0xff] %v902
                  %v904 = vld [vmem:[%s736 + $0x530] sm:$0xff]
                  %905 = vst [vmem:[%s737 + $0x298] sm:$0xff] %v904
                  %v906 = vld [vmem:[%s736 + $0x540] sm:$0xff]
                  %907 = vst [vmem:[%s737 + $0x2a0] sm:$0xff] %v906
                  %v908 = vld [vmem:[%s736 + $0x550] sm:$0xff]
                  %909 = vst [vmem:[%s737 + $0x2a8] sm:$0xff] %v908
                  %v910 = vld [vmem:[%s736 + $0x560] sm:$0xff]
                  %911 = vst [vmem:[%s737 + $0x2b0] sm:$0xff] %v910
                  %v912 = vld [vmem:[%s736 + $0x570] sm:$0xff]
                  %913 = vst [vmem:[%s737 + $0x2b8] sm:$0xff] %v912
                  %v914 = vld [vmem:[%s736 + $0x580] sm:$0xff]
                  %915 = vst [vmem:[%s737 + $0x2c0] sm:$0xff] %v914
                  %v916 = vld [vmem:[%s736 + $0x590] sm:$0xff]
                  %917 = vst [vmem:[%s737 + $0x2c8] sm:$0xff] %v916
                  %v918 = vld [vmem:[%s736 + $0x5a0] sm:$0xff]
                  %919 = vst [vmem:[%s737 + $0x2d0] sm:$0xff] %v918
                  %v920 = vld [vmem:[%s736 + $0x5b0] sm:$0xff]
                  %921 = vst [vmem:[%s737 + $0x2d8] sm:$0xff] %v920
                  %v922 = vld [vmem:[%s736 + $0x5c0] sm:$0xff]
                  %923 = vst [vmem:[%s737 + $0x2e0] sm:$0xff] %v922
                  %v924 = vld [vmem:[%s736 + $0x5d0] sm:$0xff]
                  %925 = vst [vmem:[%s737 + $0x2e8] sm:$0xff] %v924
                  %v926 = vld [vmem:[%s736 + $0x5e0] sm:$0xff]
                  %927 = vst [vmem:[%s737 + $0x2f0] sm:$0xff] %v926
                  %v928 = vld [vmem:[%s736 + $0x5f0] sm:$0xff]
                  %929 = vst [vmem:[%s737 + $0x2f8] sm:$0xff] %v928
                  %v930 = vld [vmem:[%s736 + $0x600] sm:$0xff]
                  %931 = vst [vmem:[%s737 + $0x300] sm:$0xff] %v930
                  %v932 = vld [vmem:[%s736 + $0x610] sm:$0xff]
                  %933 = vst [vmem:[%s737 + $0x308] sm:$0xff] %v932
                  %v934 = vld [vmem:[%s736 + $0x620] sm:$0xff]
                  %935 = vst [vmem:[%s737 + $0x310] sm:$0xff] %v934
                  %v936 = vld [vmem:[%s736 + $0x630] sm:$0xff]
                  %937 = vst [vmem:[%s737 + $0x318] sm:$0xff] %v936
                  %v938 = vld [vmem:[%s736 + $0x640] sm:$0xff]
                  %939 = vst [vmem:[%s737 + $0x320] sm:$0xff] %v938
                  %v940 = vld [vmem:[%s736 + $0x650] sm:$0xff]
                  %941 = vst [vmem:[%s737 + $0x328] sm:$0xff] %v940
                  %v942 = vld [vmem:[%s736 + $0x660] sm:$0xff]
                  %943 = vst [vmem:[%s737 + $0x330] sm:$0xff] %v942
                  %v944 = vld [vmem:[%s736 + $0x670] sm:$0xff]
                  %945 = vst [vmem:[%s737 + $0x338] sm:$0xff] %v944
                  %v946 = vld [vmem:[%s736 + $0x680] sm:$0xff]
                  %947 = vst [vmem:[%s737 + $0x340] sm:$0xff] %v946
                  %v948 = vld [vmem:[%s736 + $0x690] sm:$0xff]
                  %949 = vst [vmem:[%s737 + $0x348] sm:$0xff] %v948
                  %v950 = vld [vmem:[%s736 + $0x6a0] sm:$0xff]
                  %951 = vst [vmem:[%s737 + $0x350] sm:$0xff] %v950
                  %v952 = vld [vmem:[%s736 + $0x6b0] sm:$0xff]
                  %953 = vst [vmem:[%s737 + $0x358] sm:$0xff] %v952
                  %v954 = vld [vmem:[%s736 + $0x6c0] sm:$0xff]
                  %955 = vst [vmem:[%s737 + $0x360] sm:$0xff] %v954
                  %v956 = vld [vmem:[%s736 + $0x6d0] sm:$0xff]
                  %957 = vst [vmem:[%s737 + $0x368] sm:$0xff] %v956
                  %v958 = vld [vmem:[%s736 + $0x6e0] sm:$0xff]
                  %959 = vst [vmem:[%s737 + $0x370] sm:$0xff] %v958
                  %v960 = vld [vmem:[%s736 + $0x6f0] sm:$0xff]
                  %961 = vst [vmem:[%s737 + $0x378] sm:$0xff] %v960
                  %v962 = vld [vmem:[%s736 + $0x700] sm:$0xff]
                  %963 = vst [vmem:[%s737 + $0x380] sm:$0xff] %v962
                  %v964 = vld [vmem:[%s736 + $0x710] sm:$0xff]
                  %965 = vst [vmem:[%s737 + $0x388] sm:$0xff] %v964
                  %v966 = vld [vmem:[%s736 + $0x720] sm:$0xff]
                  %967 = vst [vmem:[%s737 + $0x390] sm:$0xff] %v966
                  %v968 = vld [vmem:[%s736 + $0x730] sm:$0xff]
                  %969 = vst [vmem:[%s737 + $0x398] sm:$0xff] %v968
                  %v970 = vld [vmem:[%s736 + $0x740] sm:$0xff]
                  %971 = vst [vmem:[%s737 + $0x3a0] sm:$0xff] %v970
                  %v972 = vld [vmem:[%s736 + $0x750] sm:$0xff]
                  %973 = vst [vmem:[%s737 + $0x3a8] sm:$0xff] %v972
                  %v974 = vld [vmem:[%s736 + $0x760] sm:$0xff]
                  %975 = vst [vmem:[%s737 + $0x3b0] sm:$0xff] %v974
                  %v976 = vld [vmem:[%s736 + $0x770] sm:$0xff]
                  %977 = vst [vmem:[%s737 + $0x3b8] sm:$0xff] %v976
                  %v978 = vld [vmem:[%s736 + $0x780] sm:$0xff]
                  %979 = vst [vmem:[%s737 + $0x3c0] sm:$0xff] %v978
                  %v980 = vld [vmem:[%s736 + $0x790] sm:$0xff]
                  %981 = vst [vmem:[%s737 + $0x3c8] sm:$0xff] %v980
                  %v982 = vld [vmem:[%s736 + $0x7a0] sm:$0xff]
                  %983 = vst [vmem:[%s737 + $0x3d0] sm:$0xff] %v982
                  %v984 = vld [vmem:[%s736 + $0x7b0] sm:$0xff]
                  %985 = vst [vmem:[%s737 + $0x3d8] sm:$0xff] %v984
                  %v986 = vld [vmem:[%s736 + $0x7c0] sm:$0xff]
                  %987 = vst [vmem:[%s737 + $0x3e0] sm:$0xff] %v986
                  %v988 = vld [vmem:[%s736 + $0x7d0] sm:$0xff]
                  %989 = vst [vmem:[%s737 + $0x3e8] sm:$0xff] %v988
                  %v990 = vld [vmem:[%s736 + $0x7e0] sm:$0xff]
                  %991 = vst [vmem:[%s737 + $0x3f0] sm:$0xff] %v990
                  %v992 = vld [vmem:[%s736 + $0x7f0] sm:$0xff]
                  %993 = vst [vmem:[%s737 + $0x3f8] sm:$0xff] %v992
                  %v994 = vld [vmem:[%s736 + $0x800] sm:$0xff]
                  %995 = vst [vmem:[%s737 + $0x400] sm:$0xff] %v994
                  %v996 = vld [vmem:[%s736 + $0x810] sm:$0xff]
                  %997 = vst [vmem:[%s737 + $0x408] sm:$0xff] %v996
                  %v998 = vld [vmem:[%s736 + $0x820] sm:$0xff]
                  %999 = vst [vmem:[%s737 + $0x410] sm:$0xff] %v998
                  %v1000 = vld [vmem:[%s736 + $0x830] sm:$0xff]
                  %1001 = vst [vmem:[%s737 + $0x418] sm:$0xff] %v1000
                  %v1002 = vld [vmem:[%s736 + $0x840] sm:$0xff]
                  %1003 = vst [vmem:[%s737 + $0x420] sm:$0xff] %v1002
                  %v1004 = vld [vmem:[%s736 + $0x850] sm:$0xff]
                  %1005 = vst [vmem:[%s737 + $0x428] sm:$0xff] %v1004
                  %v1006 = vld [vmem:[%s736 + $0x860] sm:$0xff]
                  %1007 = vst [vmem:[%s737 + $0x430] sm:$0xff] %v1006
                  %v1008 = vld [vmem:[%s736 + $0x870] sm:$0xff]
                  %1009 = vst [vmem:[%s737 + $0x438] sm:$0xff] %v1008
                  %v1010 = vld [vmem:[%s736 + $0x880] sm:$0xff]
                  %1011 = vst [vmem:[%s737 + $0x440] sm:$0xff] %v1010
                  %v1012 = vld [vmem:[%s736 + $0x890] sm:$0xff]
                  %1013 = vst [vmem:[%s737 + $0x448] sm:$0xff] %v1012
                  %v1014 = vld [vmem:[%s736 + $0x8a0] sm:$0xff]
                  %1015 = vst [vmem:[%s737 + $0x450] sm:$0xff] %v1014
                  %v1016 = vld [vmem:[%s736 + $0x8b0] sm:$0xff]
                  %1017 = vst [vmem:[%s737 + $0x458] sm:$0xff] %v1016
                  %v1018 = vld [vmem:[%s736 + $0x8c0] sm:$0xff]
                  %1019 = vst [vmem:[%s737 + $0x460] sm:$0xff] %v1018
                  %v1020 = vld [vmem:[%s736 + $0x8d0] sm:$0xff]
                  %1021 = vst [vmem:[%s737 + $0x468] sm:$0xff] %v1020
                  %v1022 = vld [vmem:[%s736 + $0x8e0] sm:$0xff]
                  %1023 = vst [vmem:[%s737 + $0x470] sm:$0xff] %v1022
                  %v1024 = vld [vmem:[%s736 + $0x8f0] sm:$0xff]
                  %1025 = vst [vmem:[%s737 + $0x478] sm:$0xff] %v1024
                  %v1026 = vld [vmem:[%s736 + $0x900] sm:$0xff]
                  %1027 = vst [vmem:[%s737 + $0x480] sm:$0xff] %v1026
                  %v1028 = vld [vmem:[%s736 + $0x910] sm:$0xff]
                  %1029 = vst [vmem:[%s737 + $0x488] sm:$0xff] %v1028
                  %v1030 = vld [vmem:[%s736 + $0x920] sm:$0xff]
                  %1031 = vst [vmem:[%s737 + $0x490] sm:$0xff] %v1030
                  %v1032 = vld [vmem:[%s736 + $0x930] sm:$0xff]
                  %1033 = vst [vmem:[%s737 + $0x498] sm:$0xff] %v1032
                  %v1034 = vld [vmem:[%s736 + $0x940] sm:$0xff]
                  %1035 = vst [vmem:[%s737 + $0x4a0] sm:$0xff] %v1034
                  %v1036 = vld [vmem:[%s736 + $0x950] sm:$0xff]
                  %1037 = vst [vmem:[%s737 + $0x4a8] sm:$0xff] %v1036
                  %v1038 = vld [vmem:[%s736 + $0x960] sm:$0xff]
                  %1039 = vst [vmem:[%s737 + $0x4b0] sm:$0xff] %v1038
                  %v1040 = vld [vmem:[%s736 + $0x970] sm:$0xff]
                  %1041 = vst [vmem:[%s737 + $0x4b8] sm:$0xff] %v1040
                  %v1042 = vld [vmem:[%s736 + $0x980] sm:$0xff]
                  %1043 = vst [vmem:[%s737 + $0x4c0] sm:$0xff] %v1042
                  %v1044 = vld [vmem:[%s736 + $0x990] sm:$0xff]
                  %1045 = vst [vmem:[%s737 + $0x4c8] sm:$0xff] %v1044
                  %v1046 = vld [vmem:[%s736 + $0x9a0] sm:$0xff]
                  %1047 = vst [vmem:[%s737 + $0x4d0] sm:$0xff] %v1046
                  %v1048 = vld [vmem:[%s736 + $0x9b0] sm:$0xff]
                  %1049 = vst [vmem:[%s737 + $0x4d8] sm:$0xff] %v1048
                  %v1050 = vld [vmem:[%s736 + $0x9c0] sm:$0xff]
                  %1051 = vst [vmem:[%s737 + $0x4e0] sm:$0xff] %v1050
                  %v1052 = vld [vmem:[%s736 + $0x9d0] sm:$0xff]
                  %1053 = vst [vmem:[%s737 + $0x4e8] sm:$0xff] %v1052
                  %v1054 = vld [vmem:[%s736 + $0x9e0] sm:$0xff]
                  %1055 = vst [vmem:[%s737 + $0x4f0] sm:$0xff] %v1054
                  %v1056 = vld [vmem:[%s736 + $0x9f0] sm:$0xff]
                  %1057 = vst [vmem:[%s737 + $0x4f8] sm:$0xff] %v1056
                  %v1058 = vld [vmem:[%s736 + $0xa00] sm:$0xff]
                  %1059 = vst [vmem:[%s737 + $0x500] sm:$0xff] %v1058
                  %v1060 = vld [vmem:[%s736 + $0xa10] sm:$0xff]
                  %1061 = vst [vmem:[%s737 + $0x508] sm:$0xff] %v1060
                  %v1062 = vld [vmem:[%s736 + $0xa20] sm:$0xff]
                  %1063 = vst [vmem:[%s737 + $0x510] sm:$0xff] %v1062
                  %v1064 = vld [vmem:[%s736 + $0xa30] sm:$0xff]
                  %1065 = vst [vmem:[%s737 + $0x518] sm:$0xff] %v1064
                  %v1066 = vld [vmem:[%s736 + $0xa40] sm:$0xff]
                  %1067 = vst [vmem:[%s737 + $0x520] sm:$0xff] %v1066
                  %v1068 = vld [vmem:[%s736 + $0xa50] sm:$0xff]
                  %1069 = vst [vmem:[%s737 + $0x528] sm:$0xff] %v1068
                  %v1070 = vld [vmem:[%s736 + $0xa60] sm:$0xff]
                  %1071 = vst [vmem:[%s737 + $0x530] sm:$0xff] %v1070
                  %v1072 = vld [vmem:[%s736 + $0xa70] sm:$0xff]
                  %1073 = vst [vmem:[%s737 + $0x538] sm:$0xff] %v1072
                  %v1074 = vld [vmem:[%s736 + $0xa80] sm:$0xff]
                  %1075 = vst [vmem:[%s737 + $0x540] sm:$0xff] %v1074
                  %v1076 = vld [vmem:[%s736 + $0xa90] sm:$0xff]
                  %1077 = vst [vmem:[%s737 + $0x548] sm:$0xff] %v1076
                  %v1078 = vld [vmem:[%s736 + $0xaa0] sm:$0xff]
                  %1079 = vst [vmem:[%s737 + $0x550] sm:$0xff] %v1078
                  %v1080 = vld [vmem:[%s736 + $0xab0] sm:$0xff]
                  %1081 = vst [vmem:[%s737 + $0x558] sm:$0xff] %v1080
                  %v1082 = vld [vmem:[%s736 + $0xac0] sm:$0xff]
                  %1083 = vst [vmem:[%s737 + $0x560] sm:$0xff] %v1082
                  %v1084 = vld [vmem:[%s736 + $0xad0] sm:$0xff]
                  %1085 = vst [vmem:[%s737 + $0x568] sm:$0xff] %v1084
                  %v1086 = vld [vmem:[%s736 + $0xae0] sm:$0xff]
                  %1087 = vst [vmem:[%s737 + $0x570] sm:$0xff] %v1086
                  %v1088 = vld [vmem:[%s736 + $0xaf0] sm:$0xff]
                  %1089 = vst [vmem:[%s737 + $0x578] sm:$0xff] %v1088
                  %v1090 = vld [vmem:[%s736 + $0xb00] sm:$0xff]
                  %1091 = vst [vmem:[%s737 + $0x580] sm:$0xff] %v1090
                  %v1092 = vld [vmem:[%s736 + $0xb10] sm:$0xff]
                  %1093 = vst [vmem:[%s737 + $0x588] sm:$0xff] %v1092
                  %v1094 = vld [vmem:[%s736 + $0xb20] sm:$0xff]
                  %1095 = vst [vmem:[%s737 + $0x590] sm:$0xff] %v1094
                  %v1096 = vld [vmem:[%s736 + $0xb30] sm:$0xff]
                  %1097 = vst [vmem:[%s737 + $0x598] sm:$0xff] %v1096
                  %v1098 = vld [vmem:[%s736 + $0xb40] sm:$0xff]
                  %1099 = vst [vmem:[%s737 + $0x5a0] sm:$0xff] %v1098
                  %v1100 = vld [vmem:[%s736 + $0xb50] sm:$0xff]
                  %1101 = vst [vmem:[%s737 + $0x5a8] sm:$0xff] %v1100
                  %v1102 = vld [vmem:[%s736 + $0xb60] sm:$0xff]
                  %1103 = vst [vmem:[%s737 + $0x5b0] sm:$0xff] %v1102
                  %v1104 = vld [vmem:[%s736 + $0xb70] sm:$0xff]
                  %1105 = vst [vmem:[%s737 + $0x5b8] sm:$0xff] %v1104
                  %v1106 = vld [vmem:[%s736 + $0xb80] sm:$0xff]
                  %1107 = vst [vmem:[%s737 + $0x5c0] sm:$0xff] %v1106
                  %v1108 = vld [vmem:[%s736 + $0xb90] sm:$0xff]
                  %1109 = vst [vmem:[%s737 + $0x5c8] sm:$0xff] %v1108
                  %v1110 = vld [vmem:[%s736 + $0xba0] sm:$0xff]
                  %1111 = vst [vmem:[%s737 + $0x5d0] sm:$0xff] %v1110
                  %v1112 = vld [vmem:[%s736 + $0xbb0] sm:$0xff]
                  %1113 = vst [vmem:[%s737 + $0x5d8] sm:$0xff] %v1112
                  %v1114 = vld [vmem:[%s736 + $0xbc0] sm:$0xff]
                  %1115 = vst [vmem:[%s737 + $0x5e0] sm:$0xff] %v1114
                  %v1116 = vld [vmem:[%s736 + $0xbd0] sm:$0xff]
                  %1117 = vst [vmem:[%s737 + $0x5e8] sm:$0xff] %v1116
                  %v1118 = vld [vmem:[%s736 + $0xbe0] sm:$0xff]
                  %1119 = vst [vmem:[%s737 + $0x5f0] sm:$0xff] %v1118
                  %v1120 = vld [vmem:[%s736 + $0xbf0] sm:$0xff]
                  %1121 = vst [vmem:[%s737 + $0x5f8] sm:$0xff] %v1120
                  %v1122 = vld [vmem:[%s736 + $0xc00] sm:$0xff]
                  %1123 = vst [vmem:[%s737 + $0x600] sm:$0xff] %v1122
                  %v1124 = vld [vmem:[%s736 + $0xc10] sm:$0xff]
                  %1125 = vst [vmem:[%s737 + $0x608] sm:$0xff] %v1124
                  %v1126 = vld [vmem:[%s736 + $0xc20] sm:$0xff]
                  %1127 = vst [vmem:[%s737 + $0x610] sm:$0xff] %v1126
                  %v1128 = vld [vmem:[%s736 + $0xc30] sm:$0xff]
                  %1129 = vst [vmem:[%s737 + $0x618] sm:$0xff] %v1128
                  %v1130 = vld [vmem:[%s736 + $0xc40] sm:$0xff]
                  %1131 = vst [vmem:[%s737 + $0x620] sm:$0xff] %v1130
                  %v1132 = vld [vmem:[%s736 + $0xc50] sm:$0xff]
                  %1133 = vst [vmem:[%s737 + $0x628] sm:$0xff] %v1132
                  %v1134 = vld [vmem:[%s736 + $0xc60] sm:$0xff]
                  %1135 = vst [vmem:[%s737 + $0x630] sm:$0xff] %v1134
                  %v1136 = vld [vmem:[%s736 + $0xc70] sm:$0xff]
                  %1137 = vst [vmem:[%s737 + $0x638] sm:$0xff] %v1136
                  %v1138 = vld [vmem:[%s736 + $0xc80] sm:$0xff]
                  %1139 = vst [vmem:[%s737 + $0x640] sm:$0xff] %v1138
                  %v1140 = vld [vmem:[%s736 + $0xc90] sm:$0xff]
                  %1141 = vst [vmem:[%s737 + $0x648] sm:$0xff] %v1140
                  %v1142 = vld [vmem:[%s736 + $0xca0] sm:$0xff]
                  %1143 = vst [vmem:[%s737 + $0x650] sm:$0xff] %v1142
                  %v1144 = vld [vmem:[%s736 + $0xcb0] sm:$0xff]
                  %1145 = vst [vmem:[%s737 + $0x658] sm:$0xff] %v1144
                  %v1146 = vld [vmem:[%s736 + $0xcc0] sm:$0xff]
                  %1147 = vst [vmem:[%s737 + $0x660] sm:$0xff] %v1146
                  %v1148 = vld [vmem:[%s736 + $0xcd0] sm:$0xff]
                  %1149 = vst [vmem:[%s737 + $0x668] sm:$0xff] %v1148
                  %v1150 = vld [vmem:[%s736 + $0xce0] sm:$0xff]
                  %1151 = vst [vmem:[%s737 + $0x670] sm:$0xff] %v1150
                  %v1152 = vld [vmem:[%s736 + $0xcf0] sm:$0xff]
                  %1153 = vst [vmem:[%s737 + $0x678] sm:$0xff] %v1152
                  %v1154 = vld [vmem:[%s736 + $0xd00] sm:$0xff]
                  %1155 = vst [vmem:[%s737 + $0x680] sm:$0xff] %v1154
                  %v1156 = vld [vmem:[%s736 + $0xd10] sm:$0xff]
                  %1157 = vst [vmem:[%s737 + $0x688] sm:$0xff] %v1156
                  %v1158 = vld [vmem:[%s736 + $0xd20] sm:$0xff]
                  %1159 = vst [vmem:[%s737 + $0x690] sm:$0xff] %v1158
                  %v1160 = vld [vmem:[%s736 + $0xd30] sm:$0xff]
                  %1161 = vst [vmem:[%s737 + $0x698] sm:$0xff] %v1160
                  %v1162 = vld [vmem:[%s736 + $0xd40] sm:$0xff]
                  %1163 = vst [vmem:[%s737 + $0x6a0] sm:$0xff] %v1162
                  %v1164 = vld [vmem:[%s736 + $0xd50] sm:$0xff]
                  %1165 = vst [vmem:[%s737 + $0x6a8] sm:$0xff] %v1164
                  %v1166 = vld [vmem:[%s736 + $0xd60] sm:$0xff]
                  %1167 = vst [vmem:[%s737 + $0x6b0] sm:$0xff] %v1166
                  %v1168 = vld [vmem:[%s736 + $0xd70] sm:$0xff]
                  %1169 = vst [vmem:[%s737 + $0x6b8] sm:$0xff] %v1168
                  %v1170 = vld [vmem:[%s736 + $0xd80] sm:$0xff]
                  %1171 = vst [vmem:[%s737 + $0x6c0] sm:$0xff] %v1170
                  %v1172 = vld [vmem:[%s736 + $0xd90] sm:$0xff]
                  %1173 = vst [vmem:[%s737 + $0x6c8] sm:$0xff] %v1172
                  %v1174 = vld [vmem:[%s736 + $0xda0] sm:$0xff]
                  %1175 = vst [vmem:[%s737 + $0x6d0] sm:$0xff] %v1174
                  %v1176 = vld [vmem:[%s736 + $0xdb0] sm:$0xff]
                  %1177 = vst [vmem:[%s737 + $0x6d8] sm:$0xff] %v1176
                  %v1178 = vld [vmem:[%s736 + $0xdc0] sm:$0xff]
                  %1179 = vst [vmem:[%s737 + $0x6e0] sm:$0xff] %v1178
                  %v1180 = vld [vmem:[%s736 + $0xdd0] sm:$0xff]
                  %1181 = vst [vmem:[%s737 + $0x6e8] sm:$0xff] %v1180
                  %v1182 = vld [vmem:[%s736 + $0xde0] sm:$0xff]
                  %1183 = vst [vmem:[%s737 + $0x6f0] sm:$0xff] %v1182
                  %v1184 = vld [vmem:[%s736 + $0xdf0] sm:$0xff]
                  %1185 = vst [vmem:[%s737 + $0x6f8] sm:$0xff] %v1184
                  %v1186 = vld [vmem:[%s736 + $0xe00] sm:$0xff]
                  %1187 = vst [vmem:[%s737 + $0x700] sm:$0xff] %v1186
                  %v1188 = vld [vmem:[%s736 + $0xe10] sm:$0xff]
                  %1189 = vst [vmem:[%s737 + $0x708] sm:$0xff] %v1188
                  %v1190 = vld [vmem:[%s736 + $0xe20] sm:$0xff]
                  %1191 = vst [vmem:[%s737 + $0x710] sm:$0xff] %v1190
                  %v1192 = vld [vmem:[%s736 + $0xe30] sm:$0xff]
                  %1193 = vst [vmem:[%s737 + $0x718] sm:$0xff] %v1192
                  %v1194 = vld [vmem:[%s736 + $0xe40] sm:$0xff]
                  %1195 = vst [vmem:[%s737 + $0x720] sm:$0xff] %v1194
                  %v1196 = vld [vmem:[%s736 + $0xe50] sm:$0xff]
                  %1197 = vst [vmem:[%s737 + $0x728] sm:$0xff] %v1196
                  %v1198 = vld [vmem:[%s736 + $0xe60] sm:$0xff]
                  %1199 = vst [vmem:[%s737 + $0x730] sm:$0xff] %v1198
                  %v1200 = vld [vmem:[%s736 + $0xe70] sm:$0xff]
                  %1201 = vst [vmem:[%s737 + $0x738] sm:$0xff] %v1200
                  %v1202 = vld [vmem:[%s736 + $0xe80] sm:$0xff]
                  %1203 = vst [vmem:[%s737 + $0x740] sm:$0xff] %v1202
                  %v1204 = vld [vmem:[%s736 + $0xe90] sm:$0xff]
                  %1205 = vst [vmem:[%s737 + $0x748] sm:$0xff] %v1204
                  %v1206 = vld [vmem:[%s736 + $0xea0] sm:$0xff]
                  %1207 = vst [vmem:[%s737 + $0x750] sm:$0xff] %v1206
                  %v1208 = vld [vmem:[%s736 + $0xeb0] sm:$0xff]
                  %1209 = vst [vmem:[%s737 + $0x758] sm:$0xff] %v1208
                  %v1210 = vld [vmem:[%s736 + $0xec0] sm:$0xff]
                  %1211 = vst [vmem:[%s737 + $0x760] sm:$0xff] %v1210
                  %v1212 = vld [vmem:[%s736 + $0xed0] sm:$0xff]
                  %1213 = vst [vmem:[%s737 + $0x768] sm:$0xff] %v1212
                  %v1214 = vld [vmem:[%s736 + $0xee0] sm:$0xff]
                  %1215 = vst [vmem:[%s737 + $0x770] sm:$0xff] %v1214
                  %v1216 = vld [vmem:[%s736 + $0xef0] sm:$0xff]
                  %1217 = vst [vmem:[%s737 + $0x778] sm:$0xff] %v1216
                  %v1218 = vld [vmem:[%s736 + $0xf00] sm:$0xff]
                  %1219 = vst [vmem:[%s737 + $0x780] sm:$0xff] %v1218
                  %v1220 = vld [vmem:[%s736 + $0xf10] sm:$0xff]
                  %1221 = vst [vmem:[%s737 + $0x788] sm:$0xff] %v1220
                  %v1222 = vld [vmem:[%s736 + $0xf20] sm:$0xff]
                  %1223 = vst [vmem:[%s737 + $0x790] sm:$0xff] %v1222
                  %v1224 = vld [vmem:[%s736 + $0xf30] sm:$0xff]
                  %1225 = vst [vmem:[%s737 + $0x798] sm:$0xff] %v1224
                  %v1226 = vld [vmem:[%s736 + $0xf40] sm:$0xff]
                  %1227 = vst [vmem:[%s737 + $0x7a0] sm:$0xff] %v1226
                  %v1228 = vld [vmem:[%s736 + $0xf50] sm:$0xff]
                  %1229 = vst [vmem:[%s737 + $0x7a8] sm:$0xff] %v1228
                  %v1230 = vld [vmem:[%s736 + $0xf60] sm:$0xff]
                  %1231 = vst [vmem:[%s737 + $0x7b0] sm:$0xff] %v1230
                  %v1232 = vld [vmem:[%s736 + $0xf70] sm:$0xff]
                  %1233 = vst [vmem:[%s737 + $0x7b8] sm:$0xff] %v1232
                  %v1234 = vld [vmem:[%s736 + $0xf80] sm:$0xff]
                  %1235 = vst [vmem:[%s737 + $0x7c0] sm:$0xff] %v1234
                  %v1236 = vld [vmem:[%s736 + $0xf90] sm:$0xff]
                  %1237 = vst [vmem:[%s737 + $0x7c8] sm:$0xff] %v1236
                  %v1238 = vld [vmem:[%s736 + $0xfa0] sm:$0xff]
                  %1239 = vst [vmem:[%s737 + $0x7d0] sm:$0xff] %v1238
                  %v1240 = vld [vmem:[%s736 + $0xfb0] sm:$0xff]
                  %1241 = vst [vmem:[%s737 + $0x7d8] sm:$0xff] %v1240
                  %v1242 = vld [vmem:[%s736 + $0xfc0] sm:$0xff]
                  %1243 = vst [vmem:[%s737 + $0x7e0] sm:$0xff] %v1242
                  %v1244 = vld [vmem:[%s736 + $0xfd0] sm:$0xff]
                  %1245 = vst [vmem:[%s737 + $0x7e8] sm:$0xff] %v1244
                  %v1246 = vld [vmem:[%s736 + $0xfe0] sm:$0xff]
                  %1247 = vst [vmem:[%s737 + $0x7f0] sm:$0xff] %v1246
                  %v1248 = vld [vmem:[%s736 + $0xff0] sm:$0xff]
                  %1249 = vst [vmem:[%s737 + $0x7f8] sm:$0xff] %v1248
                  %v1250 = vld [vmem:[%s736 + $0x1000] sm:$0xff]
                  %1251 = vst [vmem:[%s737 + $0x800] sm:$0xff] %v1250
                  %v1252 = vld [vmem:[%s736 + $0x1010] sm:$0xff]
                  %1253 = vst [vmem:[%s737 + $0x808] sm:$0xff] %v1252
                  %v1254 = vld [vmem:[%s736 + $0x1020] sm:$0xff]
                  %1255 = vst [vmem:[%s737 + $0x810] sm:$0xff] %v1254
                  %v1256 = vld [vmem:[%s736 + $0x1030] sm:$0xff]
                  %1257 = vst [vmem:[%s737 + $0x818] sm:$0xff] %v1256
                  %v1258 = vld [vmem:[%s736 + $0x1040] sm:$0xff]
                  %1259 = vst [vmem:[%s737 + $0x820] sm:$0xff] %v1258
                  %v1260 = vld [vmem:[%s736 + $0x1050] sm:$0xff]
                  %1261 = vst [vmem:[%s737 + $0x828] sm:$0xff] %v1260
                  %v1262 = vld [vmem:[%s736 + $0x1060] sm:$0xff]
                  %1263 = vst [vmem:[%s737 + $0x830] sm:$0xff] %v1262
                  %v1264 = vld [vmem:[%s736 + $0x1070] sm:$0xff]
                  %1265 = vst [vmem:[%s737 + $0x838] sm:$0xff] %v1264
                  %v1266 = vld [vmem:[%s736 + $0x1080] sm:$0xff]
                  %1267 = vst [vmem:[%s737 + $0x840] sm:$0xff] %v1266
                  %v1268 = vld [vmem:[%s736 + $0x1090] sm:$0xff]
                  %1269 = vst [vmem:[%s737 + $0x848] sm:$0xff] %v1268
                  %v1270 = vld [vmem:[%s736 + $0x10a0] sm:$0xff]
                  %1271 = vst [vmem:[%s737 + $0x850] sm:$0xff] %v1270
                  %v1272 = vld [vmem:[%s736 + $0x10b0] sm:$0xff]
                  %1273 = vst [vmem:[%s737 + $0x858] sm:$0xff] %v1272
                  %v1274 = vld [vmem:[%s736 + $0x10c0] sm:$0xff]
                  %1275 = vst [vmem:[%s737 + $0x860] sm:$0xff] %v1274
                  %v1276 = vld [vmem:[%s736 + $0x10d0] sm:$0xff]
                  %1277 = vst [vmem:[%s737 + $0x868] sm:$0xff] %v1276
                  %v1278 = vld [vmem:[%s736 + $0x10e0] sm:$0xff]
                  %1279 = vst [vmem:[%s737 + $0x870] sm:$0xff] %v1278
                  %v1280 = vld [vmem:[%s736 + $0x10f0] sm:$0xff]
                  %1281 = vst [vmem:[%s737 + $0x878] sm:$0xff] %v1280
                  %v1282 = vld [vmem:[%s736 + $0x1100] sm:$0xff]
                  %1283 = vst [vmem:[%s737 + $0x880] sm:$0xff] %v1282
                  %v1284 = vld [vmem:[%s736 + $0x1110] sm:$0xff]
                  %1285 = vst [vmem:[%s737 + $0x888] sm:$0xff] %v1284
                  %v1286 = vld [vmem:[%s736 + $0x1120] sm:$0xff]
                  %1287 = vst [vmem:[%s737 + $0x890] sm:$0xff] %v1286
                  %v1288 = vld [vmem:[%s736 + $0x1130] sm:$0xff]
                  %1289 = vst [vmem:[%s737 + $0x898] sm:$0xff] %v1288
                  %v1290 = vld [vmem:[%s736 + $0x1140] sm:$0xff]
                  %1291 = vst [vmem:[%s737 + $0x8a0] sm:$0xff] %v1290
                  %v1292 = vld [vmem:[%s736 + $0x1150] sm:$0xff]
                  %1293 = vst [vmem:[%s737 + $0x8a8] sm:$0xff] %v1292
                  %v1294 = vld [vmem:[%s736 + $0x1160] sm:$0xff]
                  %1295 = vst [vmem:[%s737 + $0x8b0] sm:$0xff] %v1294
                  %v1296 = vld [vmem:[%s736 + $0x1170] sm:$0xff]
                  %1297 = vst [vmem:[%s737 + $0x8b8] sm:$0xff] %v1296
                  %v1298 = vld [vmem:[%s736 + $0x1180] sm:$0xff]
                  %1299 = vst [vmem:[%s737 + $0x8c0] sm:$0xff] %v1298
                  %v1300 = vld [vmem:[%s736 + $0x1190] sm:$0xff]
                  %1301 = vst [vmem:[%s737 + $0x8c8] sm:$0xff] %v1300
                  %v1302 = vld [vmem:[%s736 + $0x11a0] sm:$0xff]
                  %1303 = vst [vmem:[%s737 + $0x8d0] sm:$0xff] %v1302
                  %v1304 = vld [vmem:[%s736 + $0x11b0] sm:$0xff]
                  %1305 = vst [vmem:[%s737 + $0x8d8] sm:$0xff] %v1304
                  %v1306 = vld [vmem:[%s736 + $0x11c0] sm:$0xff]
                  %1307 = vst [vmem:[%s737 + $0x8e0] sm:$0xff] %v1306
                  %v1308 = vld [vmem:[%s736 + $0x11d0] sm:$0xff]
                  %1309 = vst [vmem:[%s737 + $0x8e8] sm:$0xff] %v1308
                  %v1310 = vld [vmem:[%s736 + $0x11e0] sm:$0xff]
                  %1311 = vst [vmem:[%s737 + $0x8f0] sm:$0xff] %v1310
                  %v1312 = vld [vmem:[%s736 + $0x11f0] sm:$0xff]
                  %1313 = vst [vmem:[%s737 + $0x8f8] sm:$0xff] %v1312
                $region52: #{discriminator_forward.13} parent=46 // loop_footer
                  %s735 = sadd.s32 1, %s731
                $region53: #{discriminator_forward.13} parent=46 // loop_footer_branch
                  %730 = sbr.rel target = $region49
                $region54: #{discriminator_forward.13} parent=46 // loop_exit
                  _
              $region47: #{discriminator_forward.13} parent=31 // pred_fallthru
                _
              // Predicated region
              $region55: #{discriminator_forward.13} parent=31 // pred_check
                _
              $region56: #{discriminator_forward.13} parent=31 // pred_check_branch
                %1315 = sbr.rel target = $region58
              $region57: #{discriminator_forward.13} parent=31 // pred_region
                _
              $region58: #{discriminator_forward.13} parent=31 // pred_fallthru
                _
            $region32: #{discriminator_forward.13} parent=27 // pred_fallthru
              _
            // Predicated region
            $region33: #{discriminator_forward.13} parent=27 // pred_check
              _
            $region34: #{discriminator_forward.13} parent=27 // pred_check_branch
              %142 = sbr.rel target = $region36
            $region35: #{discriminator_forward.13} parent=27 // pred_region
              loop: start=0, step=1, limit=1
              $region37: #{discriminator_forward.13} parent=35 // loop_pre_header
                _
              $region38: #{discriminator_forward.13} parent=35 // loop_header
                %s145 = sphi 0, %s149
                %p146 = scmp.ge.s32.totalorder %s145, 1
                %s150 = sphi %s136, %s136
                %s151 = sphi %s133, %s133
              $region39: #{discriminator_forward.13} parent=35 // loop_header_branch
                %148 = sbr.rel (%p146) target = $region43
              $region40: #{discriminator_forward.13} parent=35 // loop_body
                %v152 = vld [vmem:[%s150] sm:$0xff]
                %153 = vst [vmem:[%s151] sm:$0xff] %v152
                %v154 = vld [vmem:[%s150 + $0x10] sm:$0xff]
                %155 = vst [vmem:[%s151 + $0x8] sm:$0xff] %v154
                %v156 = vld [vmem:[%s150 + $0x20] sm:$0xff]
                %157 = vst [vmem:[%s151 + $0x10] sm:$0xff] %v156
                %v158 = vld [vmem:[%s150 + $0x30] sm:$0xff]
                %159 = vst [vmem:[%s151 + $0x18] sm:$0xff] %v158
                %v160 = vld [vmem:[%s150 + $0x40] sm:$0xff]
                %161 = vst [vmem:[%s151 + $0x20] sm:$0xff] %v160
                %v162 = vld [vmem:[%s150 + $0x50] sm:$0xff]
                %163 = vst [vmem:[%s151 + $0x28] sm:$0xff] %v162
                %v164 = vld [vmem:[%s150 + $0x60] sm:$0xff]
                %165 = vst [vmem:[%s151 + $0x30] sm:$0xff] %v164
                %v166 = vld [vmem:[%s150 + $0x70] sm:$0xff]
                %167 = vst [vmem:[%s151 + $0x38] sm:$0xff] %v166
                %v168 = vld [vmem:[%s150 + $0x80] sm:$0xff]
                %169 = vst [vmem:[%s151 + $0x40] sm:$0xff] %v168
                %v170 = vld [vmem:[%s150 + $0x90] sm:$0xff]
                %171 = vst [vmem:[%s151 + $0x48] sm:$0xff] %v170
                %v172 = vld [vmem:[%s150 + $0xa0] sm:$0xff]
                %173 = vst [vmem:[%s151 + $0x50] sm:$0xff] %v172
                %v174 = vld [vmem:[%s150 + $0xb0] sm:$0xff]
                %175 = vst [vmem:[%s151 + $0x58] sm:$0xff] %v174
                %v176 = vld [vmem:[%s150 + $0xc0] sm:$0xff]
                %177 = vst [vmem:[%s151 + $0x60] sm:$0xff] %v176
                %v178 = vld [vmem:[%s150 + $0xd0] sm:$0xff]
                %179 = vst [vmem:[%s151 + $0x68] sm:$0xff] %v178
                %v180 = vld [vmem:[%s150 + $0xe0] sm:$0xff]
                %181 = vst [vmem:[%s151 + $0x70] sm:$0xff] %v180
                %v182 = vld [vmem:[%s150 + $0xf0] sm:$0xff]
                %183 = vst [vmem:[%s151 + $0x78] sm:$0xff] %v182
                %v184 = vld [vmem:[%s150 + $0x100] sm:$0xff]
                %185 = vst [vmem:[%s151 + $0x80] sm:$0xff] %v184
                %v186 = vld [vmem:[%s150 + $0x110] sm:$0xff]
                %187 = vst [vmem:[%s151 + $0x88] sm:$0xff] %v186
                %v188 = vld [vmem:[%s150 + $0x120] sm:$0xff]
                %189 = vst [vmem:[%s151 + $0x90] sm:$0xff] %v188
                %v190 = vld [vmem:[%s150 + $0x130] sm:$0xff]
                %191 = vst [vmem:[%s151 + $0x98] sm:$0xff] %v190
                %v192 = vld [vmem:[%s150 + $0x140] sm:$0xff]
                %193 = vst [vmem:[%s151 + $0xa0] sm:$0xff] %v192
                %v194 = vld [vmem:[%s150 + $0x150] sm:$0xff]
                %195 = vst [vmem:[%s151 + $0xa8] sm:$0xff] %v194
                %v196 = vld [vmem:[%s150 + $0x160] sm:$0xff]
                %197 = vst [vmem:[%s151 + $0xb0] sm:$0xff] %v196
                %v198 = vld [vmem:[%s150 + $0x170] sm:$0xff]
                %199 = vst [vmem:[%s151 + $0xb8] sm:$0xff] %v198
                %v200 = vld [vmem:[%s150 + $0x180] sm:$0xff]
                %201 = vst [vmem:[%s151 + $0xc0] sm:$0xff] %v200
                %v202 = vld [vmem:[%s150 + $0x190] sm:$0xff]
                %203 = vst [vmem:[%s151 + $0xc8] sm:$0xff] %v202
                %v204 = vld [vmem:[%s150 + $0x1a0] sm:$0xff]
                %205 = vst [vmem:[%s151 + $0xd0] sm:$0xff] %v204
                %v206 = vld [vmem:[%s150 + $0x1b0] sm:$0xff]
                %207 = vst [vmem:[%s151 + $0xd8] sm:$0xff] %v206
                %v208 = vld [vmem:[%s150 + $0x1c0] sm:$0xff]
                %209 = vst [vmem:[%s151 + $0xe0] sm:$0xff] %v208
                %v210 = vld [vmem:[%s150 + $0x1d0] sm:$0xff]
                %211 = vst [vmem:[%s151 + $0xe8] sm:$0xff] %v210
                %v212 = vld [vmem:[%s150 + $0x1e0] sm:$0xff]
                %213 = vst [vmem:[%s151 + $0xf0] sm:$0xff] %v212
                %v214 = vld [vmem:[%s150 + $0x1f0] sm:$0xff]
                %215 = vst [vmem:[%s151 + $0xf8] sm:$0xff] %v214
                %v216 = vld [vmem:[%s150 + $0x200] sm:$0xff]
                %217 = vst [vmem:[%s151 + $0x100] sm:$0xff] %v216
                %v218 = vld [vmem:[%s150 + $0x210] sm:$0xff]
                %219 = vst [vmem:[%s151 + $0x108] sm:$0xff] %v218
                %v220 = vld [vmem:[%s150 + $0x220] sm:$0xff]
                %221 = vst [vmem:[%s151 + $0x110] sm:$0xff] %v220
                %v222 = vld [vmem:[%s150 + $0x230] sm:$0xff]
                %223 = vst [vmem:[%s151 + $0x118] sm:$0xff] %v222
                %v224 = vld [vmem:[%s150 + $0x240] sm:$0xff]
                %225 = vst [vmem:[%s151 + $0x120] sm:$0xff] %v224
                %v226 = vld [vmem:[%s150 + $0x250] sm:$0xff]
                %227 = vst [vmem:[%s151 + $0x128] sm:$0xff] %v226
                %v228 = vld [vmem:[%s150 + $0x260] sm:$0xff]
                %229 = vst [vmem:[%s151 + $0x130] sm:$0xff] %v228
                %v230 = vld [vmem:[%s150 + $0x270] sm:$0xff]
                %231 = vst [vmem:[%s151 + $0x138] sm:$0xff] %v230
                %v232 = vld [vmem:[%s150 + $0x280] sm:$0xff]
                %233 = vst [vmem:[%s151 + $0x140] sm:$0xff] %v232
                %v234 = vld [vmem:[%s150 + $0x290] sm:$0xff]
                %235 = vst [vmem:[%s151 + $0x148] sm:$0xff] %v234
                %v236 = vld [vmem:[%s150 + $0x2a0] sm:$0xff]
                %237 = vst [vmem:[%s151 + $0x150] sm:$0xff] %v236
                %v238 = vld [vmem:[%s150 + $0x2b0] sm:$0xff]
                %239 = vst [vmem:[%s151 + $0x158] sm:$0xff] %v238
                %v240 = vld [vmem:[%s150 + $0x2c0] sm:$0xff]
                %241 = vst [vmem:[%s151 + $0x160] sm:$0xff] %v240
                %v242 = vld [vmem:[%s150 + $0x2d0] sm:$0xff]
                %243 = vst [vmem:[%s151 + $0x168] sm:$0xff] %v242
                %v244 = vld [vmem:[%s150 + $0x2e0] sm:$0xff]
                %245 = vst [vmem:[%s151 + $0x170] sm:$0xff] %v244
                %v246 = vld [vmem:[%s150 + $0x2f0] sm:$0xff]
                %247 = vst [vmem:[%s151 + $0x178] sm:$0xff] %v246
                %v248 = vld [vmem:[%s150 + $0x300] sm:$0xff]
                %249 = vst [vmem:[%s151 + $0x180] sm:$0xff] %v248
                %v250 = vld [vmem:[%s150 + $0x310] sm:$0xff]
                %251 = vst [vmem:[%s151 + $0x188] sm:$0xff] %v250
                %v252 = vld [vmem:[%s150 + $0x320] sm:$0xff]
                %253 = vst [vmem:[%s151 + $0x190] sm:$0xff] %v252
                %v254 = vld [vmem:[%s150 + $0x330] sm:$0xff]
                %255 = vst [vmem:[%s151 + $0x198] sm:$0xff] %v254
                %v256 = vld [vmem:[%s150 + $0x340] sm:$0xff]
                %257 = vst [vmem:[%s151 + $0x1a0] sm:$0xff] %v256
                %v258 = vld [vmem:[%s150 + $0x350] sm:$0xff]
                %259 = vst [vmem:[%s151 + $0x1a8] sm:$0xff] %v258
                %v260 = vld [vmem:[%s150 + $0x360] sm:$0xff]
                %261 = vst [vmem:[%s151 + $0x1b0] sm:$0xff] %v260
                %v262 = vld [vmem:[%s150 + $0x370] sm:$0xff]
                %263 = vst [vmem:[%s151 + $0x1b8] sm:$0xff] %v262
                %v264 = vld [vmem:[%s150 + $0x380] sm:$0xff]
                %265 = vst [vmem:[%s151 + $0x1c0] sm:$0xff] %v264
                %v266 = vld [vmem:[%s150 + $0x390] sm:$0xff]
                %267 = vst [vmem:[%s151 + $0x1c8] sm:$0xff] %v266
                %v268 = vld [vmem:[%s150 + $0x3a0] sm:$0xff]
                %269 = vst [vmem:[%s151 + $0x1d0] sm:$0xff] %v268
                %v270 = vld [vmem:[%s150 + $0x3b0] sm:$0xff]
                %271 = vst [vmem:[%s151 + $0x1d8] sm:$0xff] %v270
                %v272 = vld [vmem:[%s150 + $0x3c0] sm:$0xff]
                %273 = vst [vmem:[%s151 + $0x1e0] sm:$0xff] %v272
                %v274 = vld [vmem:[%s150 + $0x3d0] sm:$0xff]
                %275 = vst [vmem:[%s151 + $0x1e8] sm:$0xff] %v274
                %v276 = vld [vmem:[%s150 + $0x3e0] sm:$0xff]
                %277 = vst [vmem:[%s151 + $0x1f0] sm:$0xff] %v276
                %v278 = vld [vmem:[%s150 + $0x3f0] sm:$0xff]
                %279 = vst [vmem:[%s151 + $0x1f8] sm:$0xff] %v278
                %v280 = vld [vmem:[%s150 + $0x400] sm:$0xff]
                %281 = vst [vmem:[%s151 + $0x200] sm:$0xff] %v280
                %v282 = vld [vmem:[%s150 + $0x410] sm:$0xff]
                %283 = vst [vmem:[%s151 + $0x208] sm:$0xff] %v282
                %v284 = vld [vmem:[%s150 + $0x420] sm:$0xff]
                %285 = vst [vmem:[%s151 + $0x210] sm:$0xff] %v284
                %v286 = vld [vmem:[%s150 + $0x430] sm:$0xff]
                %287 = vst [vmem:[%s151 + $0x218] sm:$0xff] %v286
                %v288 = vld [vmem:[%s150 + $0x440] sm:$0xff]
                %289 = vst [vmem:[%s151 + $0x220] sm:$0xff] %v288
                %v290 = vld [vmem:[%s150 + $0x450] sm:$0xff]
                %291 = vst [vmem:[%s151 + $0x228] sm:$0xff] %v290
                %v292 = vld [vmem:[%s150 + $0x460] sm:$0xff]
                %293 = vst [vmem:[%s151 + $0x230] sm:$0xff] %v292
                %v294 = vld [vmem:[%s150 + $0x470] sm:$0xff]
                %295 = vst [vmem:[%s151 + $0x238] sm:$0xff] %v294
                %v296 = vld [vmem:[%s150 + $0x480] sm:$0xff]
                %297 = vst [vmem:[%s151 + $0x240] sm:$0xff] %v296
                %v298 = vld [vmem:[%s150 + $0x490] sm:$0xff]
                %299 = vst [vmem:[%s151 + $0x248] sm:$0xff] %v298
                %v300 = vld [vmem:[%s150 + $0x4a0] sm:$0xff]
                %301 = vst [vmem:[%s151 + $0x250] sm:$0xff] %v300
                %v302 = vld [vmem:[%s150 + $0x4b0] sm:$0xff]
                %303 = vst [vmem:[%s151 + $0x258] sm:$0xff] %v302
                %v304 = vld [vmem:[%s150 + $0x4c0] sm:$0xff]
                %305 = vst [vmem:[%s151 + $0x260] sm:$0xff] %v304
                %v306 = vld [vmem:[%s150 + $0x4d0] sm:$0xff]
                %307 = vst [vmem:[%s151 + $0x268] sm:$0xff] %v306
                %v308 = vld [vmem:[%s150 + $0x4e0] sm:$0xff]
                %309 = vst [vmem:[%s151 + $0x270] sm:$0xff] %v308
                %v310 = vld [vmem:[%s150 + $0x4f0] sm:$0xff]
                %311 = vst [vmem:[%s151 + $0x278] sm:$0xff] %v310
                %v312 = vld [vmem:[%s150 + $0x500] sm:$0xff]
                %313 = vst [vmem:[%s151 + $0x280] sm:$0xff] %v312
                %v314 = vld [vmem:[%s150 + $0x510] sm:$0xff]
                %315 = vst [vmem:[%s151 + $0x288] sm:$0xff] %v314
                %v316 = vld [vmem:[%s150 + $0x520] sm:$0xff]
                %317 = vst [vmem:[%s151 + $0x290] sm:$0xff] %v316
                %v318 = vld [vmem:[%s150 + $0x530] sm:$0xff]
                %319 = vst [vmem:[%s151 + $0x298] sm:$0xff] %v318
                %v320 = vld [vmem:[%s150 + $0x540] sm:$0xff]
                %321 = vst [vmem:[%s151 + $0x2a0] sm:$0xff] %v320
                %v322 = vld [vmem:[%s150 + $0x550] sm:$0xff]
                %323 = vst [vmem:[%s151 + $0x2a8] sm:$0xff] %v322
                %v324 = vld [vmem:[%s150 + $0x560] sm:$0xff]
                %325 = vst [vmem:[%s151 + $0x2b0] sm:$0xff] %v324
                %v326 = vld [vmem:[%s150 + $0x570] sm:$0xff]
                %327 = vst [vmem:[%s151 + $0x2b8] sm:$0xff] %v326
                %v328 = vld [vmem:[%s150 + $0x580] sm:$0xff]
                %329 = vst [vmem:[%s151 + $0x2c0] sm:$0xff] %v328
                %v330 = vld [vmem:[%s150 + $0x590] sm:$0xff]
                %331 = vst [vmem:[%s151 + $0x2c8] sm:$0xff] %v330
                %v332 = vld [vmem:[%s150 + $0x5a0] sm:$0xff]
                %333 = vst [vmem:[%s151 + $0x2d0] sm:$0xff] %v332
                %v334 = vld [vmem:[%s150 + $0x5b0] sm:$0xff]
                %335 = vst [vmem:[%s151 + $0x2d8] sm:$0xff] %v334
                %v336 = vld [vmem:[%s150 + $0x5c0] sm:$0xff]
                %337 = vst [vmem:[%s151 + $0x2e0] sm:$0xff] %v336
                %v338 = vld [vmem:[%s150 + $0x5d0] sm:$0xff]
                %339 = vst [vmem:[%s151 + $0x2e8] sm:$0xff] %v338
                %v340 = vld [vmem:[%s150 + $0x5e0] sm:$0xff]
                %341 = vst [vmem:[%s151 + $0x2f0] sm:$0xff] %v340
                %v342 = vld [vmem:[%s150 + $0x5f0] sm:$0xff]
                %343 = vst [vmem:[%s151 + $0x2f8] sm:$0xff] %v342
                %v344 = vld [vmem:[%s150 + $0x600] sm:$0xff]
                %345 = vst [vmem:[%s151 + $0x300] sm:$0xff] %v344
                %v346 = vld [vmem:[%s150 + $0x610] sm:$0xff]
                %347 = vst [vmem:[%s151 + $0x308] sm:$0xff] %v346
                %v348 = vld [vmem:[%s150 + $0x620] sm:$0xff]
                %349 = vst [vmem:[%s151 + $0x310] sm:$0xff] %v348
                %v350 = vld [vmem:[%s150 + $0x630] sm:$0xff]
                %351 = vst [vmem:[%s151 + $0x318] sm:$0xff] %v350
                %v352 = vld [vmem:[%s150 + $0x640] sm:$0xff]
                %353 = vst [vmem:[%s151 + $0x320] sm:$0xff] %v352
                %v354 = vld [vmem:[%s150 + $0x650] sm:$0xff]
                %355 = vst [vmem:[%s151 + $0x328] sm:$0xff] %v354
                %v356 = vld [vmem:[%s150 + $0x660] sm:$0xff]
                %357 = vst [vmem:[%s151 + $0x330] sm:$0xff] %v356
                %v358 = vld [vmem:[%s150 + $0x670] sm:$0xff]
                %359 = vst [vmem:[%s151 + $0x338] sm:$0xff] %v358
                %v360 = vld [vmem:[%s150 + $0x680] sm:$0xff]
                %361 = vst [vmem:[%s151 + $0x340] sm:$0xff] %v360
                %v362 = vld [vmem:[%s150 + $0x690] sm:$0xff]
                %363 = vst [vmem:[%s151 + $0x348] sm:$0xff] %v362
                %v364 = vld [vmem:[%s150 + $0x6a0] sm:$0xff]
                %365 = vst [vmem:[%s151 + $0x350] sm:$0xff] %v364
                %v366 = vld [vmem:[%s150 + $0x6b0] sm:$0xff]
                %367 = vst [vmem:[%s151 + $0x358] sm:$0xff] %v366
                %v368 = vld [vmem:[%s150 + $0x6c0] sm:$0xff]
                %369 = vst [vmem:[%s151 + $0x360] sm:$0xff] %v368
                %v370 = vld [vmem:[%s150 + $0x6d0] sm:$0xff]
                %371 = vst [vmem:[%s151 + $0x368] sm:$0xff] %v370
                %v372 = vld [vmem:[%s150 + $0x6e0] sm:$0xff]
                %373 = vst [vmem:[%s151 + $0x370] sm:$0xff] %v372
                %v374 = vld [vmem:[%s150 + $0x6f0] sm:$0xff]
                %375 = vst [vmem:[%s151 + $0x378] sm:$0xff] %v374
                %v376 = vld [vmem:[%s150 + $0x700] sm:$0xff]
                %377 = vst [vmem:[%s151 + $0x380] sm:$0xff] %v376
                %v378 = vld [vmem:[%s150 + $0x710] sm:$0xff]
                %379 = vst [vmem:[%s151 + $0x388] sm:$0xff] %v378
                %v380 = vld [vmem:[%s150 + $0x720] sm:$0xff]
                %381 = vst [vmem:[%s151 + $0x390] sm:$0xff] %v380
                %v382 = vld [vmem:[%s150 + $0x730] sm:$0xff]
                %383 = vst [vmem:[%s151 + $0x398] sm:$0xff] %v382
                %v384 = vld [vmem:[%s150 + $0x740] sm:$0xff]
                %385 = vst [vmem:[%s151 + $0x3a0] sm:$0xff] %v384
                %v386 = vld [vmem:[%s150 + $0x750] sm:$0xff]
                %387 = vst [vmem:[%s151 + $0x3a8] sm:$0xff] %v386
                %v388 = vld [vmem:[%s150 + $0x760] sm:$0xff]
                %389 = vst [vmem:[%s151 + $0x3b0] sm:$0xff] %v388
                %v390 = vld [vmem:[%s150 + $0x770] sm:$0xff]
                %391 = vst [vmem:[%s151 + $0x3b8] sm:$0xff] %v390
                %v392 = vld [vmem:[%s150 + $0x780] sm:$0xff]
                %393 = vst [vmem:[%s151 + $0x3c0] sm:$0xff] %v392
                %v394 = vld [vmem:[%s150 + $0x790] sm:$0xff]
                %395 = vst [vmem:[%s151 + $0x3c8] sm:$0xff] %v394
                %v396 = vld [vmem:[%s150 + $0x7a0] sm:$0xff]
                %397 = vst [vmem:[%s151 + $0x3d0] sm:$0xff] %v396
                %v398 = vld [vmem:[%s150 + $0x7b0] sm:$0xff]
                %399 = vst [vmem:[%s151 + $0x3d8] sm:$0xff] %v398
                %v400 = vld [vmem:[%s150 + $0x7c0] sm:$0xff]
                %401 = vst [vmem:[%s151 + $0x3e0] sm:$0xff] %v400
                %v402 = vld [vmem:[%s150 + $0x7d0] sm:$0xff]
                %403 = vst [vmem:[%s151 + $0x3e8] sm:$0xff] %v402
                %v404 = vld [vmem:[%s150 + $0x7e0] sm:$0xff]
                %405 = vst [vmem:[%s151 + $0x3f0] sm:$0xff] %v404
                %v406 = vld [vmem:[%s150 + $0x7f0] sm:$0xff]
                %407 = vst [vmem:[%s151 + $0x3f8] sm:$0xff] %v406
                %v408 = vld [vmem:[%s150 + $0x800] sm:$0xff]
                %409 = vst [vmem:[%s151 + $0x400] sm:$0xff] %v408
                %v410 = vld [vmem:[%s150 + $0x810] sm:$0xff]
                %411 = vst [vmem:[%s151 + $0x408] sm:$0xff] %v410
                %v412 = vld [vmem:[%s150 + $0x820] sm:$0xff]
                %413 = vst [vmem:[%s151 + $0x410] sm:$0xff] %v412
                %v414 = vld [vmem:[%s150 + $0x830] sm:$0xff]
                %415 = vst [vmem:[%s151 + $0x418] sm:$0xff] %v414
                %v416 = vld [vmem:[%s150 + $0x840] sm:$0xff]
                %417 = vst [vmem:[%s151 + $0x420] sm:$0xff] %v416
                %v418 = vld [vmem:[%s150 + $0x850] sm:$0xff]
                %419 = vst [vmem:[%s151 + $0x428] sm:$0xff] %v418
                %v420 = vld [vmem:[%s150 + $0x860] sm:$0xff]
                %421 = vst [vmem:[%s151 + $0x430] sm:$0xff] %v420
                %v422 = vld [vmem:[%s150 + $0x870] sm:$0xff]
                %423 = vst [vmem:[%s151 + $0x438] sm:$0xff] %v422
                %v424 = vld [vmem:[%s150 + $0x880] sm:$0xff]
                %425 = vst [vmem:[%s151 + $0x440] sm:$0xff] %v424
                %v426 = vld [vmem:[%s150 + $0x890] sm:$0xff]
                %427 = vst [vmem:[%s151 + $0x448] sm:$0xff] %v426
                %v428 = vld [vmem:[%s150 + $0x8a0] sm:$0xff]
                %429 = vst [vmem:[%s151 + $0x450] sm:$0xff] %v428
                %v430 = vld [vmem:[%s150 + $0x8b0] sm:$0xff]
                %431 = vst [vmem:[%s151 + $0x458] sm:$0xff] %v430
                %v432 = vld [vmem:[%s150 + $0x8c0] sm:$0xff]
                %433 = vst [vmem:[%s151 + $0x460] sm:$0xff] %v432
                %v434 = vld [vmem:[%s150 + $0x8d0] sm:$0xff]
                %435 = vst [vmem:[%s151 + $0x468] sm:$0xff] %v434
                %v436 = vld [vmem:[%s150 + $0x8e0] sm:$0xff]
                %437 = vst [vmem:[%s151 + $0x470] sm:$0xff] %v436
                %v438 = vld [vmem:[%s150 + $0x8f0] sm:$0xff]
                %439 = vst [vmem:[%s151 + $0x478] sm:$0xff] %v438
                %v440 = vld [vmem:[%s150 + $0x900] sm:$0xff]
                %441 = vst [vmem:[%s151 + $0x480] sm:$0xff] %v440
                %v442 = vld [vmem:[%s150 + $0x910] sm:$0xff]
                %443 = vst [vmem:[%s151 + $0x488] sm:$0xff] %v442
                %v444 = vld [vmem:[%s150 + $0x920] sm:$0xff]
                %445 = vst [vmem:[%s151 + $0x490] sm:$0xff] %v444
                %v446 = vld [vmem:[%s150 + $0x930] sm:$0xff]
                %447 = vst [vmem:[%s151 + $0x498] sm:$0xff] %v446
                %v448 = vld [vmem:[%s150 + $0x940] sm:$0xff]
                %449 = vst [vmem:[%s151 + $0x4a0] sm:$0xff] %v448
                %v450 = vld [vmem:[%s150 + $0x950] sm:$0xff]
                %451 = vst [vmem:[%s151 + $0x4a8] sm:$0xff] %v450
                %v452 = vld [vmem:[%s150 + $0x960] sm:$0xff]
                %453 = vst [vmem:[%s151 + $0x4b0] sm:$0xff] %v452
                %v454 = vld [vmem:[%s150 + $0x970] sm:$0xff]
                %455 = vst [vmem:[%s151 + $0x4b8] sm:$0xff] %v454
                %v456 = vld [vmem:[%s150 + $0x980] sm:$0xff]
                %457 = vst [vmem:[%s151 + $0x4c0] sm:$0xff] %v456
                %v458 = vld [vmem:[%s150 + $0x990] sm:$0xff]
                %459 = vst [vmem:[%s151 + $0x4c8] sm:$0xff] %v458
                %v460 = vld [vmem:[%s150 + $0x9a0] sm:$0xff]
                %461 = vst [vmem:[%s151 + $0x4d0] sm:$0xff] %v460
                %v462 = vld [vmem:[%s150 + $0x9b0] sm:$0xff]
                %463 = vst [vmem:[%s151 + $0x4d8] sm:$0xff] %v462
                %v464 = vld [vmem:[%s150 + $0x9c0] sm:$0xff]
                %465 = vst [vmem:[%s151 + $0x4e0] sm:$0xff] %v464
                %v466 = vld [vmem:[%s150 + $0x9d0] sm:$0xff]
                %467 = vst [vmem:[%s151 + $0x4e8] sm:$0xff] %v466
                %v468 = vld [vmem:[%s150 + $0x9e0] sm:$0xff]
                %469 = vst [vmem:[%s151 + $0x4f0] sm:$0xff] %v468
                %v470 = vld [vmem:[%s150 + $0x9f0] sm:$0xff]
                %471 = vst [vmem:[%s151 + $0x4f8] sm:$0xff] %v470
                %v472 = vld [vmem:[%s150 + $0xa00] sm:$0xff]
                %473 = vst [vmem:[%s151 + $0x500] sm:$0xff] %v472
                %v474 = vld [vmem:[%s150 + $0xa10] sm:$0xff]
                %475 = vst [vmem:[%s151 + $0x508] sm:$0xff] %v474
                %v476 = vld [vmem:[%s150 + $0xa20] sm:$0xff]
                %477 = vst [vmem:[%s151 + $0x510] sm:$0xff] %v476
                %v478 = vld [vmem:[%s150 + $0xa30] sm:$0xff]
                %479 = vst [vmem:[%s151 + $0x518] sm:$0xff] %v478
                %v480 = vld [vmem:[%s150 + $0xa40] sm:$0xff]
                %481 = vst [vmem:[%s151 + $0x520] sm:$0xff] %v480
                %v482 = vld [vmem:[%s150 + $0xa50] sm:$0xff]
                %483 = vst [vmem:[%s151 + $0x528] sm:$0xff] %v482
                %v484 = vld [vmem:[%s150 + $0xa60] sm:$0xff]
                %485 = vst [vmem:[%s151 + $0x530] sm:$0xff] %v484
                %v486 = vld [vmem:[%s150 + $0xa70] sm:$0xff]
                %487 = vst [vmem:[%s151 + $0x538] sm:$0xff] %v486
                %v488 = vld [vmem:[%s150 + $0xa80] sm:$0xff]
                %489 = vst [vmem:[%s151 + $0x540] sm:$0xff] %v488
                %v490 = vld [vmem:[%s150 + $0xa90] sm:$0xff]
                %491 = vst [vmem:[%s151 + $0x548] sm:$0xff] %v490
                %v492 = vld [vmem:[%s150 + $0xaa0] sm:$0xff]
                %493 = vst [vmem:[%s151 + $0x550] sm:$0xff] %v492
                %v494 = vld [vmem:[%s150 + $0xab0] sm:$0xff]
                %495 = vst [vmem:[%s151 + $0x558] sm:$0xff] %v494
                %v496 = vld [vmem:[%s150 + $0xac0] sm:$0xff]
                %497 = vst [vmem:[%s151 + $0x560] sm:$0xff] %v496
                %v498 = vld [vmem:[%s150 + $0xad0] sm:$0xff]
                %499 = vst [vmem:[%s151 + $0x568] sm:$0xff] %v498
                %v500 = vld [vmem:[%s150 + $0xae0] sm:$0xff]
                %501 = vst [vmem:[%s151 + $0x570] sm:$0xff] %v500
                %v502 = vld [vmem:[%s150 + $0xaf0] sm:$0xff]
                %503 = vst [vmem:[%s151 + $0x578] sm:$0xff] %v502
                %v504 = vld [vmem:[%s150 + $0xb00] sm:$0xff]
                %505 = vst [vmem:[%s151 + $0x580] sm:$0xff] %v504
                %v506 = vld [vmem:[%s150 + $0xb10] sm:$0xff]
                %507 = vst [vmem:[%s151 + $0x588] sm:$0xff] %v506
                %v508 = vld [vmem:[%s150 + $0xb20] sm:$0xff]
                %509 = vst [vmem:[%s151 + $0x590] sm:$0xff] %v508
                %v510 = vld [vmem:[%s150 + $0xb30] sm:$0xff]
                %511 = vst [vmem:[%s151 + $0x598] sm:$0xff] %v510
                %v512 = vld [vmem:[%s150 + $0xb40] sm:$0xff]
                %513 = vst [vmem:[%s151 + $0x5a0] sm:$0xff] %v512
                %v514 = vld [vmem:[%s150 + $0xb50] sm:$0xff]
                %515 = vst [vmem:[%s151 + $0x5a8] sm:$0xff] %v514
                %v516 = vld [vmem:[%s150 + $0xb60] sm:$0xff]
                %517 = vst [vmem:[%s151 + $0x5b0] sm:$0xff] %v516
                %v518 = vld [vmem:[%s150 + $0xb70] sm:$0xff]
                %519 = vst [vmem:[%s151 + $0x5b8] sm:$0xff] %v518
                %v520 = vld [vmem:[%s150 + $0xb80] sm:$0xff]
                %521 = vst [vmem:[%s151 + $0x5c0] sm:$0xff] %v520
                %v522 = vld [vmem:[%s150 + $0xb90] sm:$0xff]
                %523 = vst [vmem:[%s151 + $0x5c8] sm:$0xff] %v522
                %v524 = vld [vmem:[%s150 + $0xba0] sm:$0xff]
                %525 = vst [vmem:[%s151 + $0x5d0] sm:$0xff] %v524
                %v526 = vld [vmem:[%s150 + $0xbb0] sm:$0xff]
                %527 = vst [vmem:[%s151 + $0x5d8] sm:$0xff] %v526
                %v528 = vld [vmem:[%s150 + $0xbc0] sm:$0xff]
                %529 = vst [vmem:[%s151 + $0x5e0] sm:$0xff] %v528
                %v530 = vld [vmem:[%s150 + $0xbd0] sm:$0xff]
                %531 = vst [vmem:[%s151 + $0x5e8] sm:$0xff] %v530
                %v532 = vld [vmem:[%s150 + $0xbe0] sm:$0xff]
                %533 = vst [vmem:[%s151 + $0x5f0] sm:$0xff] %v532
                %v534 = vld [vmem:[%s150 + $0xbf0] sm:$0xff]
                %535 = vst [vmem:[%s151 + $0x5f8] sm:$0xff] %v534
                %v536 = vld [vmem:[%s150 + $0xc00] sm:$0xff]
                %537 = vst [vmem:[%s151 + $0x600] sm:$0xff] %v536
                %v538 = vld [vmem:[%s150 + $0xc10] sm:$0xff]
                %539 = vst [vmem:[%s151 + $0x608] sm:$0xff] %v538
                %v540 = vld [vmem:[%s150 + $0xc20] sm:$0xff]
                %541 = vst [vmem:[%s151 + $0x610] sm:$0xff] %v540
                %v542 = vld [vmem:[%s150 + $0xc30] sm:$0xff]
                %543 = vst [vmem:[%s151 + $0x618] sm:$0xff] %v542
                %v544 = vld [vmem:[%s150 + $0xc40] sm:$0xff]
                %545 = vst [vmem:[%s151 + $0x620] sm:$0xff] %v544
                %v546 = vld [vmem:[%s150 + $0xc50] sm:$0xff]
                %547 = vst [vmem:[%s151 + $0x628] sm:$0xff] %v546
                %v548 = vld [vmem:[%s150 + $0xc60] sm:$0xff]
                %549 = vst [vmem:[%s151 + $0x630] sm:$0xff] %v548
                %v550 = vld [vmem:[%s150 + $0xc70] sm:$0xff]
                %551 = vst [vmem:[%s151 + $0x638] sm:$0xff] %v550
                %v552 = vld [vmem:[%s150 + $0xc80] sm:$0xff]
                %553 = vst [vmem:[%s151 + $0x640] sm:$0xff] %v552
                %v554 = vld [vmem:[%s150 + $0xc90] sm:$0xff]
                %555 = vst [vmem:[%s151 + $0x648] sm:$0xff] %v554
                %v556 = vld [vmem:[%s150 + $0xca0] sm:$0xff]
                %557 = vst [vmem:[%s151 + $0x650] sm:$0xff] %v556
                %v558 = vld [vmem:[%s150 + $0xcb0] sm:$0xff]
                %559 = vst [vmem:[%s151 + $0x658] sm:$0xff] %v558
                %v560 = vld [vmem:[%s150 + $0xcc0] sm:$0xff]
                %561 = vst [vmem:[%s151 + $0x660] sm:$0xff] %v560
                %v562 = vld [vmem:[%s150 + $0xcd0] sm:$0xff]
                %563 = vst [vmem:[%s151 + $0x668] sm:$0xff] %v562
                %v564 = vld [vmem:[%s150 + $0xce0] sm:$0xff]
                %565 = vst [vmem:[%s151 + $0x670] sm:$0xff] %v564
                %v566 = vld [vmem:[%s150 + $0xcf0] sm:$0xff]
                %567 = vst [vmem:[%s151 + $0x678] sm:$0xff] %v566
                %v568 = vld [vmem:[%s150 + $0xd00] sm:$0xff]
                %569 = vst [vmem:[%s151 + $0x680] sm:$0xff] %v568
                %v570 = vld [vmem:[%s150 + $0xd10] sm:$0xff]
                %571 = vst [vmem:[%s151 + $0x688] sm:$0xff] %v570
                %v572 = vld [vmem:[%s150 + $0xd20] sm:$0xff]
                %573 = vst [vmem:[%s151 + $0x690] sm:$0xff] %v572
                %v574 = vld [vmem:[%s150 + $0xd30] sm:$0xff]
                %575 = vst [vmem:[%s151 + $0x698] sm:$0xff] %v574
                %v576 = vld [vmem:[%s150 + $0xd40] sm:$0xff]
                %577 = vst [vmem:[%s151 + $0x6a0] sm:$0xff] %v576
                %v578 = vld [vmem:[%s150 + $0xd50] sm:$0xff]
                %579 = vst [vmem:[%s151 + $0x6a8] sm:$0xff] %v578
                %v580 = vld [vmem:[%s150 + $0xd60] sm:$0xff]
                %581 = vst [vmem:[%s151 + $0x6b0] sm:$0xff] %v580
                %v582 = vld [vmem:[%s150 + $0xd70] sm:$0xff]
                %583 = vst [vmem:[%s151 + $0x6b8] sm:$0xff] %v582
                %v584 = vld [vmem:[%s150 + $0xd80] sm:$0xff]
                %585 = vst [vmem:[%s151 + $0x6c0] sm:$0xff] %v584
                %v586 = vld [vmem:[%s150 + $0xd90] sm:$0xff]
                %587 = vst [vmem:[%s151 + $0x6c8] sm:$0xff] %v586
                %v588 = vld [vmem:[%s150 + $0xda0] sm:$0xff]
                %589 = vst [vmem:[%s151 + $0x6d0] sm:$0xff] %v588
                %v590 = vld [vmem:[%s150 + $0xdb0] sm:$0xff]
                %591 = vst [vmem:[%s151 + $0x6d8] sm:$0xff] %v590
                %v592 = vld [vmem:[%s150 + $0xdc0] sm:$0xff]
                %593 = vst [vmem:[%s151 + $0x6e0] sm:$0xff] %v592
                %v594 = vld [vmem:[%s150 + $0xdd0] sm:$0xff]
                %595 = vst [vmem:[%s151 + $0x6e8] sm:$0xff] %v594
                %v596 = vld [vmem:[%s150 + $0xde0] sm:$0xff]
                %597 = vst [vmem:[%s151 + $0x6f0] sm:$0xff] %v596
                %v598 = vld [vmem:[%s150 + $0xdf0] sm:$0xff]
                %599 = vst [vmem:[%s151 + $0x6f8] sm:$0xff] %v598
                %v600 = vld [vmem:[%s150 + $0xe00] sm:$0xff]
                %601 = vst [vmem:[%s151 + $0x700] sm:$0xff] %v600
                %v602 = vld [vmem:[%s150 + $0xe10] sm:$0xff]
                %603 = vst [vmem:[%s151 + $0x708] sm:$0xff] %v602
                %v604 = vld [vmem:[%s150 + $0xe20] sm:$0xff]
                %605 = vst [vmem:[%s151 + $0x710] sm:$0xff] %v604
                %v606 = vld [vmem:[%s150 + $0xe30] sm:$0xff]
                %607 = vst [vmem:[%s151 + $0x718] sm:$0xff] %v606
                %v608 = vld [vmem:[%s150 + $0xe40] sm:$0xff]
                %609 = vst [vmem:[%s151 + $0x720] sm:$0xff] %v608
                %v610 = vld [vmem:[%s150 + $0xe50] sm:$0xff]
                %611 = vst [vmem:[%s151 + $0x728] sm:$0xff] %v610
                %v612 = vld [vmem:[%s150 + $0xe60] sm:$0xff]
                %613 = vst [vmem:[%s151 + $0x730] sm:$0xff] %v612
                %v614 = vld [vmem:[%s150 + $0xe70] sm:$0xff]
                %615 = vst [vmem:[%s151 + $0x738] sm:$0xff] %v614
                %v616 = vld [vmem:[%s150 + $0xe80] sm:$0xff]
                %617 = vst [vmem:[%s151 + $0x740] sm:$0xff] %v616
                %v618 = vld [vmem:[%s150 + $0xe90] sm:$0xff]
                %619 = vst [vmem:[%s151 + $0x748] sm:$0xff] %v618
                %v620 = vld [vmem:[%s150 + $0xea0] sm:$0xff]
                %621 = vst [vmem:[%s151 + $0x750] sm:$0xff] %v620
                %v622 = vld [vmem:[%s150 + $0xeb0] sm:$0xff]
                %623 = vst [vmem:[%s151 + $0x758] sm:$0xff] %v622
                %v624 = vld [vmem:[%s150 + $0xec0] sm:$0xff]
                %625 = vst [vmem:[%s151 + $0x760] sm:$0xff] %v624
                %v626 = vld [vmem:[%s150 + $0xed0] sm:$0xff]
                %627 = vst [vmem:[%s151 + $0x768] sm:$0xff] %v626
                %v628 = vld [vmem:[%s150 + $0xee0] sm:$0xff]
                %629 = vst [vmem:[%s151 + $0x770] sm:$0xff] %v628
                %v630 = vld [vmem:[%s150 + $0xef0] sm:$0xff]
                %631 = vst [vmem:[%s151 + $0x778] sm:$0xff] %v630
                %v632 = vld [vmem:[%s150 + $0xf00] sm:$0xff]
                %633 = vst [vmem:[%s151 + $0x780] sm:$0xff] %v632
                %v634 = vld [vmem:[%s150 + $0xf10] sm:$0xff]
                %635 = vst [vmem:[%s151 + $0x788] sm:$0xff] %v634
                %v636 = vld [vmem:[%s150 + $0xf20] sm:$0xff]
                %637 = vst [vmem:[%s151 + $0x790] sm:$0xff] %v636
                %v638 = vld [vmem:[%s150 + $0xf30] sm:$0xff]
                %639 = vst [vmem:[%s151 + $0x798] sm:$0xff] %v638
                %v640 = vld [vmem:[%s150 + $0xf40] sm:$0xff]
                %641 = vst [vmem:[%s151 + $0x7a0] sm:$0xff] %v640
                %v642 = vld [vmem:[%s150 + $0xf50] sm:$0xff]
                %643 = vst [vmem:[%s151 + $0x7a8] sm:$0xff] %v642
                %v644 = vld [vmem:[%s150 + $0xf60] sm:$0xff]
                %645 = vst [vmem:[%s151 + $0x7b0] sm:$0xff] %v644
                %v646 = vld [vmem:[%s150 + $0xf70] sm:$0xff]
                %647 = vst [vmem:[%s151 + $0x7b8] sm:$0xff] %v646
                %v648 = vld [vmem:[%s150 + $0xf80] sm:$0xff]
                %649 = vst [vmem:[%s151 + $0x7c0] sm:$0xff] %v648
                %v650 = vld [vmem:[%s150 + $0xf90] sm:$0xff]
                %651 = vst [vmem:[%s151 + $0x7c8] sm:$0xff] %v650
                %v652 = vld [vmem:[%s150 + $0xfa0] sm:$0xff]
                %653 = vst [vmem:[%s151 + $0x7d0] sm:$0xff] %v652
                %v654 = vld [vmem:[%s150 + $0xfb0] sm:$0xff]
                %655 = vst [vmem:[%s151 + $0x7d8] sm:$0xff] %v654
                %v656 = vld [vmem:[%s150 + $0xfc0] sm:$0xff]
                %657 = vst [vmem:[%s151 + $0x7e0] sm:$0xff] %v656
                %v658 = vld [vmem:[%s150 + $0xfd0] sm:$0xff]
                %659 = vst [vmem:[%s151 + $0x7e8] sm:$0xff] %v658
                %v660 = vld [vmem:[%s150 + $0xfe0] sm:$0xff]
                %661 = vst [vmem:[%s151 + $0x7f0] sm:$0xff] %v660
                %v662 = vld [vmem:[%s150 + $0xff0] sm:$0xff]
                %663 = vst [vmem:[%s151 + $0x7f8] sm:$0xff] %v662
                %v664 = vld [vmem:[%s150 + $0x1000] sm:$0xff]
                %665 = vst [vmem:[%s151 + $0x800] sm:$0xff] %v664
                %v666 = vld [vmem:[%s150 + $0x1010] sm:$0xff]
                %667 = vst [vmem:[%s151 + $0x808] sm:$0xff] %v666
                %v668 = vld [vmem:[%s150 + $0x1020] sm:$0xff]
                %669 = vst [vmem:[%s151 + $0x810] sm:$0xff] %v668
                %v670 = vld [vmem:[%s150 + $0x1030] sm:$0xff]
                %671 = vst [vmem:[%s151 + $0x818] sm:$0xff] %v670
                %v672 = vld [vmem:[%s150 + $0x1040] sm:$0xff]
                %673 = vst [vmem:[%s151 + $0x820] sm:$0xff] %v672
                %v674 = vld [vmem:[%s150 + $0x1050] sm:$0xff]
                %675 = vst [vmem:[%s151 + $0x828] sm:$0xff] %v674
                %v676 = vld [vmem:[%s150 + $0x1060] sm:$0xff]
                %677 = vst [vmem:[%s151 + $0x830] sm:$0xff] %v676
                %v678 = vld [vmem:[%s150 + $0x1070] sm:$0xff]
                %679 = vst [vmem:[%s151 + $0x838] sm:$0xff] %v678
                %v680 = vld [vmem:[%s150 + $0x1080] sm:$0xff]
                %681 = vst [vmem:[%s151 + $0x840] sm:$0xff] %v680
                %v682 = vld [vmem:[%s150 + $0x1090] sm:$0xff]
                %683 = vst [vmem:[%s151 + $0x848] sm:$0xff] %v682
                %v684 = vld [vmem:[%s150 + $0x10a0] sm:$0xff]
                %685 = vst [vmem:[%s151 + $0x850] sm:$0xff] %v684
                %v686 = vld [vmem:[%s150 + $0x10b0] sm:$0xff]
                %687 = vst [vmem:[%s151 + $0x858] sm:$0xff] %v686
                %v688 = vld [vmem:[%s150 + $0x10c0] sm:$0xff]
                %689 = vst [vmem:[%s151 + $0x860] sm:$0xff] %v688
                %v690 = vld [vmem:[%s150 + $0x10d0] sm:$0xff]
                %691 = vst [vmem:[%s151 + $0x868] sm:$0xff] %v690
                %v692 = vld [vmem:[%s150 + $0x10e0] sm:$0xff]
                %693 = vst [vmem:[%s151 + $0x870] sm:$0xff] %v692
                %v694 = vld [vmem:[%s150 + $0x10f0] sm:$0xff]
                %695 = vst [vmem:[%s151 + $0x878] sm:$0xff] %v694
                %v696 = vld [vmem:[%s150 + $0x1100] sm:$0xff]
                %697 = vst [vmem:[%s151 + $0x880] sm:$0xff] %v696
                %v698 = vld [vmem:[%s150 + $0x1110] sm:$0xff]
                %699 = vst [vmem:[%s151 + $0x888] sm:$0xff] %v698
                %v700 = vld [vmem:[%s150 + $0x1120] sm:$0xff]
                %701 = vst [vmem:[%s151 + $0x890] sm:$0xff] %v700
                %v702 = vld [vmem:[%s150 + $0x1130] sm:$0xff]
                %703 = vst [vmem:[%s151 + $0x898] sm:$0xff] %v702
                %v704 = vld [vmem:[%s150 + $0x1140] sm:$0xff]
                %705 = vst [vmem:[%s151 + $0x8a0] sm:$0xff] %v704
                %v706 = vld [vmem:[%s150 + $0x1150] sm:$0xff]
                %707 = vst [vmem:[%s151 + $0x8a8] sm:$0xff] %v706
                %v708 = vld [vmem:[%s150 + $0x1160] sm:$0xff]
                %709 = vst [vmem:[%s151 + $0x8b0] sm:$0xff] %v708
                %v710 = vld [vmem:[%s150 + $0x1170] sm:$0xff]
                %711 = vst [vmem:[%s151 + $0x8b8] sm:$0xff] %v710
                %v712 = vld [vmem:[%s150 + $0x1180] sm:$0xff]
                %713 = vst [vmem:[%s151 + $0x8c0] sm:$0xff] %v712
                %v714 = vld [vmem:[%s150 + $0x1190] sm:$0xff]
                %715 = vst [vmem:[%s151 + $0x8c8] sm:$0xff] %v714
                %v716 = vld [vmem:[%s150 + $0x11a0] sm:$0xff]
                %717 = vst [vmem:[%s151 + $0x8d0] sm:$0xff] %v716
                %v718 = vld [vmem:[%s150 + $0x11b0] sm:$0xff]
                %719 = vst [vmem:[%s151 + $0x8d8] sm:$0xff] %v718
                %v720 = vld [vmem:[%s150 + $0x11c0] sm:$0xff]
                %721 = vst [vmem:[%s151 + $0x8e0] sm:$0xff] %v720
                %v722 = vld [vmem:[%s150 + $0x11d0] sm:$0xff]
                %723 = vst [vmem:[%s151 + $0x8e8] sm:$0xff] %v722
                %v724 = vld [vmem:[%s150 + $0x11e0] sm:$0xff]
                %725 = vst [vmem:[%s151 + $0x8f0] sm:$0xff] %v724
                %v726 = vld [vmem:[%s150 + $0x11f0] sm:$0xff]
                %727 = vst [vmem:[%s151 + $0x8f8] sm:$0xff] %v726
              $region41: #{discriminator_forward.13} parent=35 // loop_footer
                %s149 = sadd.s32 1, %s145
              $region42: #{discriminator_forward.13} parent=35 // loop_footer_branch
                %144 = sbr.rel target = $region38
              $region43: #{discriminator_forward.13} parent=35 // loop_exit
                _
            $region36: #{discriminator_forward.13} parent=27 // pred_fallthru
              _
          $region28: #{discriminator_forward.13} parent=23 // pred_fallthru
            _
          %1316 = vnop
        $region24: #{discriminator_forward.13} parent=15 // pred_fallthru
          _
      $region16: #{discriminator_forward.13} parent=5 // pred_fallthru
        _
      %p1317 = scmp.le.s32.totalorder 1, %s8
      %p1318 = scmp.lt.s32.totalorder %s8, 5
      %p1319 = pnand %p1317, %p1318
      %p1320 = pneg %p1319
      // Predicated region
      $region59: #{discriminator_forward.13} parent=5 // pred_check
        _
      $region60: #{discriminator_forward.13} parent=5 // pred_check_branch
        %1322 = sbr.rel (%p1319) target = $region62
      $region61: #{discriminator_forward.13} parent=5 // pred_region
        %s1323 = ssub.s32 %s8, 1
        %s1324 = sand.u32 %s59, 1
        %s1325 = sand.u32 %s59, 1
        %s1326 = smul.addr %s1325, 2304
        %s1327 = scalar_lea.vmem [#allocation2], %s1326
        // Predicated region
        $region63: #{discriminator_forward.13} parent=61 // pred_check
          %p1328 = pneg %p72
        $region64: #{discriminator_forward.13} parent=61 // pred_check_branch
          %1330 = sbr.rel (%p1328) target = $region66
        $region65: #{discriminator_forward.13} parent=61 // pred_region
          _
        $region66: #{discriminator_forward.13} parent=61 // pred_fallthru
          _
        %p1331 = scmp.lt.s32.totalorder %s18, 1
        %s1332 = scalar_select %p1331, %s18, 1
        %s1333 = smul.addr %s1332, 6
        %s1334 = smul.addr %s1333, 4
        %s1335 = scalar_lea.vmem %s0, %s1334
        %p1336 = pneg %p46
        %p1337 = pneg %p43
        %s1338 = sand.u32 %s59, 1
        %s1339 = sand.u32 %s59, 1
        %s1340 = smul.addr %s1339, 2304
        %s1341 = scalar_lea.vmem [#allocation2], %s1340
        %p1342 = pneg %p72
        %p1343 = pneg %p69
        %p1344 = pneg %p100
        %p1345 = pneg %p97
        %s1346 = smul.u32 2, %s17
        %p1347 = scmp.lt.s32.totalorder %s18, 1
        %s1348 = scalar_select %p1347, %s18, 1
        %p1349 = scmp.lt.s32.totalorder %s1346, 3
        %s1350 = scalar_select %p1349, %s1346, 3
        %s1351 = smul.addr %s1348, 4
        %s1352 = sadd.s32 %s1350, %s1351
        %s1353 = smul.addr %s1352, 4
        %s1354 = scalar_lea.vmem %s2, %s1353
        %p1355 = scmp.lt.s32.totalorder %s18, 1
        %s1356 = scalar_select %p1355, %s18, 1
        %s1357 = smul.addr %s1356, 6
        %s1358 = smul.addr %s1357, 4
        %s1359 = scalar_lea.vmem %s0, %s1358
        %s1360 = smul.u32 2, %s17
        %s1361 = smul.u32 2, %s17
        %p1362 = scmp.lt.s32.totalorder %s18, 1
        %s1363 = scalar_select %p1362, %s18, 1
        %p1364 = scmp.lt.s32.totalorder %s1361, 3
        %s1365 = scalar_select %p1364, %s1361, 3
        %s1366 = smul.addr %s1363, 4
        %s1367 = sadd.s32 %s1365, %s1366
        %s1368 = smul.addr %s1367, 4
        %s1369 = scalar_lea.vmem %s2, %s1368
        %s1370 = smul.u32 2, %s17
        %v1371 = vld [vmem:[%s1359] sm:$0xff]
        %v1372 = vld [vmem:[%s1327] sm:$0xff]
        %v1373 = vld [vmem:[%s1327 + $0x8] sm:$0xff]
        %v1374 = vld [vmem:[%s1327 + $0x10] sm:$0xff]
        %v1375 = vld [vmem:[%s1327 + $0x18] sm:$0xff]
        %v1376 = vld [vmem:[%s1327 + $0x20] sm:$0xff]
        %v1377 = vld [vmem:[%s1327 + $0x28] sm:$0xff]
        %v1378 = vld [vmem:[%s1327 + $0x30] sm:$0xff]
        %v1379 = vld [vmem:[%s1327 + $0x38] sm:$0xff]
        %v1380 = vld [vmem:[%s1327 + $0x40] sm:$0xff]
        %v1381 = vld [vmem:[%s1327 + $0x48] sm:$0xff]
        %v1382 = vld [vmem:[%s1327 + $0x50] sm:$0xff]
        %v1383 = vld [vmem:[%s1327 + $0x58] sm:$0xff]
        %v1384 = vld [vmem:[%s1327 + $0x60] sm:$0xff]
        %v1385 = vld [vmem:[%s1327 + $0x68] sm:$0xff]
        %v1386 = vld [vmem:[%s1327 + $0x70] sm:$0xff]
        %v1387 = vld [vmem:[%s1327 + $0x78] sm:$0xff]
        %v1388 = vld [vmem:[%s1327 + $0x80] sm:$0xff]
        %v1389 = vld [vmem:[%s1327 + $0x88] sm:$0xff]
        %v1390 = vld [vmem:[%s1327 + $0x90] sm:$0xff]
        %v1391 = vld [vmem:[%s1327 + $0x98] sm:$0xff]
        %v1392 = vld [vmem:[%s1327 + $0xa0] sm:$0xff]
        %v1393 = vld [vmem:[%s1327 + $0xa8] sm:$0xff]
        %v1394 = vld [vmem:[%s1327 + $0xb0] sm:$0xff]
        %v1395 = vld [vmem:[%s1327 + $0xb8] sm:$0xff]
        %v1396 = vld [vmem:[%s1327 + $0xc0] sm:$0xff]
        %v1397 = vld [vmem:[%s1327 + $0xc8] sm:$0xff]
        %v1398 = vld [vmem:[%s1327 + $0xd0] sm:$0xff]
        %v1399 = vld [vmem:[%s1327 + $0xd8] sm:$0xff]
        %v1400 = vld [vmem:[%s1327 + $0xe0] sm:$0xff]
        %v1401 = vld [vmem:[%s1327 + $0xe8] sm:$0xff]
        %v1402 = vld [vmem:[%s1327 + $0xf0] sm:$0xff]
        %v1403 = vld [vmem:[%s1327 + $0xf8] sm:$0xff]
        %v1404 = vld [vmem:[%s1359 + $0x8] sm:$0x11]
        %s1405 = scalar_lea.vmem %s1327, 256 [#allocation2]
        %v1406 = vld [vmem:[%s1405] sm:$0xff]
        %v1407 = vld [vmem:[%s1405 + $0x8] sm:$0xff]
        %v1408 = vld [vmem:[%s1405 + $0x10] sm:$0xff]
        %v1409 = vld [vmem:[%s1405 + $0x18] sm:$0xff]
        %v1410 = vld [vmem:[%s1405 + $0x20] sm:$0xff]
        %v1411 = vld [vmem:[%s1405 + $0x28] sm:$0xff]
        %v1412 = vld [vmem:[%s1405 + $0x30] sm:$0xff]
        %v1413 = vld [vmem:[%s1405 + $0x38] sm:$0xff]
        %v1414 = vld [vmem:[%s1405 + $0x40] sm:$0xff]
        %v1415 = vld [vmem:[%s1405 + $0x48] sm:$0xff]
        %v1416 = vld [vmem:[%s1405 + $0x50] sm:$0xff]
        %v1417 = vld [vmem:[%s1405 + $0x58] sm:$0xff]
        %v1418 = vld [vmem:[%s1405 + $0x60] sm:$0xff]
        %v1419 = vld [vmem:[%s1405 + $0x68] sm:$0xff]
        %v1420 = vld [vmem:[%s1405 + $0x70] sm:$0xff]
        %v1421 = vld [vmem:[%s1405 + $0x78] sm:$0xff]
        %v1422 = vld [vmem:[%s1405 + $0x80] sm:$0xff]
        %v1423 = vld [vmem:[%s1405 + $0x88] sm:$0xff]
        %v1424 = vld [vmem:[%s1405 + $0x90] sm:$0xff]
        %v1425 = vld [vmem:[%s1405 + $0x98] sm:$0xff]
        %v1426 = vld [vmem:[%s1405 + $0xa0] sm:$0xff]
        %v1427 = vld [vmem:[%s1405 + $0xa8] sm:$0xff]
        %v1428 = vld [vmem:[%s1405 + $0xb0] sm:$0xff]
        %v1429 = vld [vmem:[%s1405 + $0xb8] sm:$0xff]
        %v1430 = vld [vmem:[%s1405 + $0xc0] sm:$0xff]
        %v1431 = vld [vmem:[%s1405 + $0xc8] sm:$0xff]
        %v1432 = vld [vmem:[%s1405 + $0xd0] sm:$0xff]
        %v1433 = vld [vmem:[%s1405 + $0xd8] sm:$0xff]
        %v1434 = vld [vmem:[%s1405 + $0xe0] sm:$0xff]
        %v1435 = vld [vmem:[%s1405 + $0xe8] sm:$0xff]
        %v1436 = vld [vmem:[%s1405 + $0xf0] sm:$0xff]
        %v1437 = vld [vmem:[%s1405 + $0xf8] sm:$0xff]
        %v1440 = vunpack.c.l.b16 %v1371
        %v1441 = vunpack.c.h.b16 %v1371
        %v1442 = vunpack.c.l.b16 %v1404
        %v1443 = vunpack.c.h.b16 %v1404
        %v1444 = vpack.c.b16 %v1442, %v1440
        %v1445 = vpack.c.b16 %v1443, %v1441
        %v1447 = vshrl.u32 %v1444, 16
        %v1449 = vshll.u32 %v1444, 16
        %v1451 = vrot.slane %v1449, 1
        %v1452 = vor.u32 %v1447, %v1451
        %v1454 = vshrl.u32 %v1445, 16
        %v1456 = vshll.u32 %v1445, 16
        %v1458 = vrot.slane %v1456, 1
        %v1459 = vor.u32 %v1454, %v1458
        %v1494 = vunpack.c.l.b16 %v1406
        %v1495 = vunpack.c.h.b16 %v1406
        %v1496 = vunpack.c.l.b16 %v1407
        %v1497 = vunpack.c.h.b16 %v1407
        %v1498 = vunpack.c.l.b16 %v1408
        %v1499 = vunpack.c.h.b16 %v1408
        %v1500 = vunpack.c.l.b16 %v1409
        %v1501 = vunpack.c.h.b16 %v1409
        %v1502 = vunpack.c.l.b16 %v1410
        %v1503 = vunpack.c.h.b16 %v1410
        %v1504 = vunpack.c.l.b16 %v1411
        %v1505 = vunpack.c.h.b16 %v1411
        %v1506 = vunpack.c.l.b16 %v1412
        %v1507 = vunpack.c.h.b16 %v1412
        %v1508 = vunpack.c.l.b16 %v1413
        %v1509 = vunpack.c.h.b16 %v1413
        %v1510 = vunpack.c.l.b16 %v1414
        %v1511 = vunpack.c.h.b16 %v1414
        %v1512 = vunpack.c.l.b16 %v1415
        %v1513 = vunpack.c.h.b16 %v1415
        %v1514 = vunpack.c.l.b16 %v1416
        %v1515 = vunpack.c.h.b16 %v1416
        %v1516 = vunpack.c.l.b16 %v1417
        %v1517 = vunpack.c.h.b16 %v1417
        %v1518 = vunpack.c.l.b16 %v1418
        %v1519 = vunpack.c.h.b16 %v1418
        %v1520 = vunpack.c.l.b16 %v1419
        %v1521 = vunpack.c.h.b16 %v1419
        %v1522 = vunpack.c.l.b16 %v1420
        %v1523 = vunpack.c.h.b16 %v1420
        %v1524 = vunpack.c.l.b16 %v1421
        %v1525 = vunpack.c.h.b16 %v1421
        %v1526 = vunpack.c.l.b16 %v1422
        %v1527 = vunpack.c.h.b16 %v1422
        %v1528 = vunpack.c.l.b16 %v1423
        %v1529 = vunpack.c.h.b16 %v1423
        %v1530 = vunpack.c.l.b16 %v1424
        %v1531 = vunpack.c.h.b16 %v1424
        %v1532 = vunpack.c.l.b16 %v1425
        %v1533 = vunpack.c.h.b16 %v1425
        %v1534 = vunpack.c.l.b16 %v1426
        %v1535 = vunpack.c.h.b16 %v1426
        %v1536 = vunpack.c.l.b16 %v1427
        %v1537 = vunpack.c.h.b16 %v1427
        %v1538 = vunpack.c.l.b16 %v1428
        %v1539 = vunpack.c.h.b16 %v1428
        %v1540 = vunpack.c.l.b16 %v1429
        %v1541 = vunpack.c.h.b16 %v1429
        %v1542 = vunpack.c.l.b16 %v1430
        %v1543 = vunpack.c.h.b16 %v1430
        %v1544 = vunpack.c.l.b16 %v1431
        %v1545 = vunpack.c.h.b16 %v1431
        %v1546 = vunpack.c.l.b16 %v1432
        %v1547 = vunpack.c.h.b16 %v1432
        %v1548 = vunpack.c.l.b16 %v1433
        %v1549 = vunpack.c.h.b16 %v1433
        %v1550 = vunpack.c.l.b16 %v1434
        %v1551 = vunpack.c.h.b16 %v1434
        %v1552 = vunpack.c.l.b16 %v1435
        %v1553 = vunpack.c.h.b16 %v1435
        %v1554 = vunpack.c.l.b16 %v1436
        %v1555 = vunpack.c.h.b16 %v1436
        %v1556 = vunpack.c.l.b16 %v1437
        %v1557 = vunpack.c.h.b16 %v1437
        %v1558 = vpack.c.b16 %v1496, %v1494
        %v1559 = vpack.c.b16 %v1497, %v1495
        %v1560 = vpack.c.b16 %v1500, %v1498
        %v1561 = vpack.c.b16 %v1501, %v1499
        %v1562 = vpack.c.b16 %v1504, %v1502
        %v1563 = vpack.c.b16 %v1505, %v1503
        %v1564 = vpack.c.b16 %v1508, %v1506
        %v1565 = vpack.c.b16 %v1509, %v1507
        %v1566 = vpack.c.b16 %v1512, %v1510
        %v1567 = vpack.c.b16 %v1513, %v1511
        %v1568 = vpack.c.b16 %v1516, %v1514
        %v1569 = vpack.c.b16 %v1517, %v1515
        %v1570 = vpack.c.b16 %v1520, %v1518
        %v1571 = vpack.c.b16 %v1521, %v1519
        %v1572 = vpack.c.b16 %v1524, %v1522
        %v1573 = vpack.c.b16 %v1525, %v1523
        %v1574 = vpack.c.b16 %v1528, %v1526
        %v1575 = vpack.c.b16 %v1529, %v1527
        %v1576 = vpack.c.b16 %v1532, %v1530
        %v1577 = vpack.c.b16 %v1533, %v1531
        %v1578 = vpack.c.b16 %v1536, %v1534
        %v1579 = vpack.c.b16 %v1537, %v1535
        %v1580 = vpack.c.b16 %v1540, %v1538
        %v1581 = vpack.c.b16 %v1541, %v1539
        %v1582 = vpack.c.b16 %v1544, %v1542
        %v1583 = vpack.c.b16 %v1545, %v1543
        %v1584 = vpack.c.b16 %v1548, %v1546
        %v1585 = vpack.c.b16 %v1549, %v1547
        %v1586 = vpack.c.b16 %v1552, %v1550
        %v1587 = vpack.c.b16 %v1553, %v1551
        %v1588 = vpack.c.b16 %v1556, %v1554
        %v1589 = vpack.c.b16 %v1557, %v1555
        %1622 = vmatprep.subr.bf16.mxu0 %v1559
        %1623 = vmatpush1.bf16.msra.mxu0 %v1558
        %1624 = vmatprep.subr.bf16.mxu0 %v1561
        %1625 = vmatpush1.bf16.msra.mxu0 %v1560
        %1626 = vmatprep.subr.bf16.mxu0 %v1563
        %1627 = vmatpush1.bf16.msra.mxu0 %v1562
        %1628 = vmatprep.subr.bf16.mxu0 %v1565
        %1629 = vmatpush1.bf16.msra.mxu0 %v1564
        %1630 = vmatprep.subr.bf16.mxu0 %v1567
        %1631 = vmatpush1.bf16.msra.mxu0 %v1566
        %1632 = vmatprep.subr.bf16.mxu0 %v1569
        %1633 = vmatpush1.bf16.msra.mxu0 %v1568
        %1634 = vmatprep.subr.bf16.mxu0 %v1571
        %1635 = vmatpush1.bf16.msra.mxu0 %v1570
        %1636 = vmatprep.subr.bf16.mxu0 %v1573
        %1637 = vmatpush1.bf16.msra.mxu0 %v1572
        %1638 = vmatprep.subr.bf16.mxu0 %v1575
        %1639 = vmatpush1.bf16.msra.mxu0 %v1574
        %1640 = vmatprep.subr.bf16.mxu0 %v1577
        %1641 = vmatpush1.bf16.msra.mxu0 %v1576
        %1642 = vmatprep.subr.bf16.mxu0 %v1579
        %1643 = vmatpush1.bf16.msra.mxu0 %v1578
        %1644 = vmatprep.subr.bf16.mxu0 %v1581
        %1645 = vmatpush1.bf16.msra.mxu0 %v1580
        %1646 = vmatprep.subr.bf16.mxu0 %v1583
        %1647 = vmatpush1.bf16.msra.mxu0 %v1582
        %1648 = vmatprep.subr.bf16.mxu0 %v1585
        %1649 = vmatpush1.bf16.msra.mxu0 %v1584
        %1650 = vmatprep.subr.bf16.mxu0 %v1587
        %1651 = vmatpush1.bf16.msra.mxu0 %v1586
        %1652 = vmatprep.subr.bf16.mxu0 %v1589
        %1653 = vmatpush1.bf16.msra.mxu0 %v1588
        %1654 = vmatprep.mubr.bf16.mxu0 %v1459
        %1655 = vmatmul.mubr.bf16.gmra.mrb[0].mxu0 %v1452
        %v1656 = vpop.f32.mrb[0].mxu0
        %v1657 = vadd.f32 0.0, %v1656
        %v1658 = vpop.f32.mrb[0].mxu0
        %v1659 = vadd.f32 0.0, %v1658
        %v1660 = vpop.f32.mrb[0].mxu0
        %v1661 = vpop.f32.mrb[0].mxu0
        %1662 = vdwg.mxu0
        %v1663 = vpack.c.b16 %v1440, %v1440
        %v1664 = vpack.c.b16 %v1441, %v1441
        %v1699 = vunpack.c.l.b16 %v1372
        %v1700 = vunpack.c.h.b16 %v1372
        %v1701 = vunpack.c.l.b16 %v1373
        %v1702 = vunpack.c.h.b16 %v1373
        %v1703 = vunpack.c.l.b16 %v1374
        %v1704 = vunpack.c.h.b16 %v1374
        %v1705 = vunpack.c.l.b16 %v1375
        %v1706 = vunpack.c.h.b16 %v1375
        %v1707 = vunpack.c.l.b16 %v1376
        %v1708 = vunpack.c.h.b16 %v1376
        %v1709 = vunpack.c.l.b16 %v1377
        %v1710 = vunpack.c.h.b16 %v1377
        %v1711 = vunpack.c.l.b16 %v1378
        %v1712 = vunpack.c.h.b16 %v1378
        %v1713 = vunpack.c.l.b16 %v1379
        %v1714 = vunpack.c.h.b16 %v1379
        %v1715 = vunpack.c.l.b16 %v1380
        %v1716 = vunpack.c.h.b16 %v1380
        %v1717 = vunpack.c.l.b16 %v1381
        %v1718 = vunpack.c.h.b16 %v1381
        %v1719 = vunpack.c.l.b16 %v1382
        %v1720 = vunpack.c.h.b16 %v1382
        %v1721 = vunpack.c.l.b16 %v1383
        %v1722 = vunpack.c.h.b16 %v1383
        %v1723 = vunpack.c.l.b16 %v1384
        %v1724 = vunpack.c.h.b16 %v1384
        %v1725 = vunpack.c.l.b16 %v1385
        %v1726 = vunpack.c.h.b16 %v1385
        %v1727 = vunpack.c.l.b16 %v1386
        %v1728 = vunpack.c.h.b16 %v1386
        %v1729 = vunpack.c.l.b16 %v1387
        %v1730 = vunpack.c.h.b16 %v1387
        %v1731 = vunpack.c.l.b16 %v1388
        %v1732 = vunpack.c.h.b16 %v1388
        %v1733 = vunpack.c.l.b16 %v1389
        %v1734 = vunpack.c.h.b16 %v1389
        %v1735 = vunpack.c.l.b16 %v1390
        %v1736 = vunpack.c.h.b16 %v1390
        %v1737 = vunpack.c.l.b16 %v1391
        %v1738 = vunpack.c.h.b16 %v1391
        %v1739 = vunpack.c.l.b16 %v1392
        %v1740 = vunpack.c.h.b16 %v1392
        %v1741 = vunpack.c.l.b16 %v1393
        %v1742 = vunpack.c.h.b16 %v1393
        %v1743 = vunpack.c.l.b16 %v1394
        %v1744 = vunpack.c.h.b16 %v1394
        %v1745 = vunpack.c.l.b16 %v1395
        %v1746 = vunpack.c.h.b16 %v1395
        %v1747 = vunpack.c.l.b16 %v1396
        %v1748 = vunpack.c.h.b16 %v1396
        %v1749 = vunpack.c.l.b16 %v1397
        %v1750 = vunpack.c.h.b16 %v1397
        %v1751 = vunpack.c.l.b16 %v1398
        %v1752 = vunpack.c.h.b16 %v1398
        %v1753 = vunpack.c.l.b16 %v1399
        %v1754 = vunpack.c.h.b16 %v1399
        %v1755 = vunpack.c.l.b16 %v1400
        %v1756 = vunpack.c.h.b16 %v1400
        %v1757 = vunpack.c.l.b16 %v1401
        %v1758 = vunpack.c.h.b16 %v1401
        %v1759 = vunpack.c.l.b16 %v1402
        %v1760 = vunpack.c.h.b16 %v1402
        %v1761 = vunpack.c.l.b16 %v1403
        %v1762 = vunpack.c.h.b16 %v1403
        %v1763 = vpack.c.b16 %v1701, %v1699
        %v1764 = vpack.c.b16 %v1702, %v1700
        %v1765 = vpack.c.b16 %v1705, %v1703
        %v1766 = vpack.c.b16 %v1706, %v1704
        %v1767 = vpack.c.b16 %v1709, %v1707
        %v1768 = vpack.c.b16 %v1710, %v1708
        %v1769 = vpack.c.b16 %v1713, %v1711
        %v1770 = vpack.c.b16 %v1714, %v1712
        %v1771 = vpack.c.b16 %v1717, %v1715
        %v1772 = vpack.c.b16 %v1718, %v1716
        %v1773 = vpack.c.b16 %v1721, %v1719
        %v1774 = vpack.c.b16 %v1722, %v1720
        %v1775 = vpack.c.b16 %v1725, %v1723
        %v1776 = vpack.c.b16 %v1726, %v1724
        %v1777 = vpack.c.b16 %v1729, %v1727
        %v1778 = vpack.c.b16 %v1730, %v1728
        %v1779 = vpack.c.b16 %v1733, %v1731
        %v1780 = vpack.c.b16 %v1734, %v1732
        %v1781 = vpack.c.b16 %v1737, %v1735
        %v1782 = vpack.c.b16 %v1738, %v1736
        %v1783 = vpack.c.b16 %v1741, %v1739
        %v1784 = vpack.c.b16 %v1742, %v1740
        %v1785 = vpack.c.b16 %v1745, %v1743
        %v1786 = vpack.c.b16 %v1746, %v1744
        %v1787 = vpack.c.b16 %v1749, %v1747
        %v1788 = vpack.c.b16 %v1750, %v1748
        %v1789 = vpack.c.b16 %v1753, %v1751
        %v1790 = vpack.c.b16 %v1754, %v1752
        %v1791 = vpack.c.b16 %v1757, %v1755
        %v1792 = vpack.c.b16 %v1758, %v1756
        %v1793 = vpack.c.b16 %v1761, %v1759
        %v1794 = vpack.c.b16 %v1762, %v1760
        %1827 = vmatprep.subr.bf16.mxu0 %v1764
        %1828 = vmatpush1.bf16.msra.mxu0 %v1763
        %1829 = vmatprep.subr.bf16.mxu0 %v1766
        %1830 = vmatpush1.bf16.msra.mxu0 %v1765
        %1831 = vmatprep.subr.bf16.mxu0 %v1768
        %1832 = vmatpush1.bf16.msra.mxu0 %v1767
        %1833 = vmatprep.subr.bf16.mxu0 %v1770
        %1834 = vmatpush1.bf16.msra.mxu0 %v1769
        %1835 = vmatprep.subr.bf16.mxu0 %v1772
        %1836 = vmatpush1.bf16.msra.mxu0 %v1771
        %1837 = vmatprep.subr.bf16.mxu0 %v1774
        %1838 = vmatpush1.bf16.msra.mxu0 %v1773
        %1839 = vmatprep.subr.bf16.mxu0 %v1776
        %1840 = vmatpush1.bf16.msra.mxu0 %v1775
        %1841 = vmatprep.subr.bf16.mxu0 %v1778
        %1842 = vmatpush1.bf16.msra.mxu0 %v1777
        %1843 = vmatprep.subr.bf16.mxu0 %v1780
        %1844 = vmatpush1.bf16.msra.mxu0 %v1779
        %1845 = vmatprep.subr.bf16.mxu0 %v1782
        %1846 = vmatpush1.bf16.msra.mxu0 %v1781
        %1847 = vmatprep.subr.bf16.mxu0 %v1784
        %1848 = vmatpush1.bf16.msra.mxu0 %v1783
        %1849 = vmatprep.subr.bf16.mxu0 %v1786
        %1850 = vmatpush1.bf16.msra.mxu0 %v1785
        %1851 = vmatprep.subr.bf16.mxu0 %v1788
        %1852 = vmatpush1.bf16.msra.mxu0 %v1787
        %1853 = vmatprep.subr.bf16.mxu0 %v1790
        %1854 = vmatpush1.bf16.msra.mxu0 %v1789
        %1855 = vmatprep.subr.bf16.mxu0 %v1792
        %1856 = vmatpush1.bf16.msra.mxu0 %v1791
        %1857 = vmatprep.subr.bf16.mxu0 %v1794
        %1858 = vmatpush1.bf16.msra.mxu0 %v1793
        %1859 = vmatprep.mubr.bf16.mxu0 %v1664
        %1860 = vmatmul.mubr.bf16.gmra.mrb[0].mxu0 %v1663
        %v1861 = vpop.f32.mrb[0].mxu0
        %v1862 = vadd.f32 %v1657, %v1861
        %v1863 = vpop.f32.mrb[0].mxu0
        %v1864 = vadd.f32 %v1659, %v1863
        %v1865 = vpop.f32.mrb[0].mxu0
        %v1866 = vpop.f32.mrb[0].mxu0
        %1867 = vdwg.mxu0
        %v1868 = vld [vmem:[%s1359] sm:$0xee]
        %s1869 = scalar_lea.vmem %s1327, 512 [#allocation2]
        %v1870 = vld [vmem:[%s1869] sm:$0xff]
        %v1871 = vld [vmem:[%s1869 + $0x8] sm:$0xff]
        %v1872 = vld [vmem:[%s1869 + $0x10] sm:$0xff]
        %v1873 = vld [vmem:[%s1869 + $0x18] sm:$0xff]
        %v1874 = vld [vmem:[%s1869 + $0x20] sm:$0xff]
        %v1875 = vld [vmem:[%s1869 + $0x28] sm:$0xff]
        %v1876 = vld [vmem:[%s1869 + $0x30] sm:$0xff]
        %v1877 = vld [vmem:[%s1869 + $0x38] sm:$0xff]
        %v1878 = vld [vmem:[%s1869 + $0x40] sm:$0xff]
        %v1879 = vld [vmem:[%s1869 + $0x48] sm:$0xff]
        %v1880 = vld [vmem:[%s1869 + $0x50] sm:$0xff]
        %v1881 = vld [vmem:[%s1869 + $0x58] sm:$0xff]
        %v1882 = vld [vmem:[%s1869 + $0x60] sm:$0xff]
        %v1883 = vld [vmem:[%s1869 + $0x68] sm:$0xff]
        %v1884 = vld [vmem:[%s1869 + $0x70] sm:$0xff]
        %v1885 = vld [vmem:[%s1869 + $0x78] sm:$0xff]
        %v1886 = vld [vmem:[%s1869 + $0x80] sm:$0xff]
        %v1887 = vld [vmem:[%s1869 + $0x88] sm:$0xff]
        %v1888 = vld [vmem:[%s1869 + $0x90] sm:$0xff]
        %v1889 = vld [vmem:[%s1869 + $0x98] sm:$0xff]
        %v1890 = vld [vmem:[%s1869 + $0xa0] sm:$0xff]
        %v1891 = vld [vmem:[%s1869 + $0xa8] sm:$0xff]
        %v1892 = vld [vmem:[%s1869 + $0xb0] sm:$0xff]
        %v1893 = vld [vmem:[%s1869 + $0xb8] sm:$0xff]
        %v1894 = vld [vmem:[%s1869 + $0xc0] sm:$0xff]
        %v1895 = vld [vmem:[%s1869 + $0xc8] sm:$0xff]
        %v1896 = vld [vmem:[%s1869 + $0xd0] sm:$0xff]
        %v1897 = vld [vmem:[%s1869 + $0xd8] sm:$0xff]
        %v1898 = vld [vmem:[%s1869 + $0xe0] sm:$0xff]
        %v1899 = vld [vmem:[%s1869 + $0xe8] sm:$0xff]
        %v1900 = vld [vmem:[%s1869 + $0xf0] sm:$0xff]
        %v1901 = vld [vmem:[%s1869 + $0xf8] sm:$0xff]
        %v1903 = vunpack.c.l.b16 %v1868
        %v1904 = vunpack.c.h.b16 %v1868
        %v1905 = vpack.c.b16 %v1442, %v1903
        %v1906 = vpack.c.b16 %v1443, %v1904
        %v1907 = vrot.slane %v1905, 1
        %v1908 = vrot.slane %v1906, 1
        %v1943 = vunpack.c.l.b16 %v1870
        %v1944 = vunpack.c.h.b16 %v1870
        %v1945 = vunpack.c.l.b16 %v1871
        %v1946 = vunpack.c.h.b16 %v1871
        %v1947 = vunpack.c.l.b16 %v1872
        %v1948 = vunpack.c.h.b16 %v1872
        %v1949 = vunpack.c.l.b16 %v1873
        %v1950 = vunpack.c.h.b16 %v1873
        %v1951 = vunpack.c.l.b16 %v1874
        %v1952 = vunpack.c.h.b16 %v1874
        %v1953 = vunpack.c.l.b16 %v1875
        %v1954 = vunpack.c.h.b16 %v1875
        %v1955 = vunpack.c.l.b16 %v1876
        %v1956 = vunpack.c.h.b16 %v1876
        %v1957 = vunpack.c.l.b16 %v1877
        %v1958 = vunpack.c.h.b16 %v1877
        %v1959 = vunpack.c.l.b16 %v1878
        %v1960 = vunpack.c.h.b16 %v1878
        %v1961 = vunpack.c.l.b16 %v1879
        %v1962 = vunpack.c.h.b16 %v1879
        %v1963 = vunpack.c.l.b16 %v1880
        %v1964 = vunpack.c.h.b16 %v1880
        %v1965 = vunpack.c.l.b16 %v1881
        %v1966 = vunpack.c.h.b16 %v1881
        %v1967 = vunpack.c.l.b16 %v1882
        %v1968 = vunpack.c.h.b16 %v1882
        %v1969 = vunpack.c.l.b16 %v1883
        %v1970 = vunpack.c.h.b16 %v1883
        %v1971 = vunpack.c.l.b16 %v1884
        %v1972 = vunpack.c.h.b16 %v1884
        %v1973 = vunpack.c.l.b16 %v1885
        %v1974 = vunpack.c.h.b16 %v1885
        %v1975 = vunpack.c.l.b16 %v1886
        %v1976 = vunpack.c.h.b16 %v1886
        %v1977 = vunpack.c.l.b16 %v1887
        %v1978 = vunpack.c.h.b16 %v1887
        %v1979 = vunpack.c.l.b16 %v1888
        %v1980 = vunpack.c.h.b16 %v1888
        %v1981 = vunpack.c.l.b16 %v1889
        %v1982 = vunpack.c.h.b16 %v1889
        %v1983 = vunpack.c.l.b16 %v1890
        %v1984 = vunpack.c.h.b16 %v1890
        %v1985 = vunpack.c.l.b16 %v1891
        %v1986 = vunpack.c.h.b16 %v1891
        %v1987 = vunpack.c.l.b16 %v1892
        %v1988 = vunpack.c.h.b16 %v1892
        %v1989 = vunpack.c.l.b16 %v1893
        %v1990 = vunpack.c.h.b16 %v1893
        %v1991 = vunpack.c.l.b16 %v1894
        %v1992 = vunpack.c.h.b16 %v1894
        %v1993 = vunpack.c.l.b16 %v1895
        %v1994 = vunpack.c.h.b16 %v1895
        %v1995 = vunpack.c.l.b16 %v1896
        %v1996 = vunpack.c.h.b16 %v1896
        %v1997 = vunpack.c.l.b16 %v1897
        %v1998 = vunpack.c.h.b16 %v1897
        %v1999 = vunpack.c.l.b16 %v1898
        %v2000 = vunpack.c.h.b16 %v1898
        %v2001 = vunpack.c.l.b16 %v1899
        %v2002 = vunpack.c.h.b16 %v1899
        %v2003 = vunpack.c.l.b16 %v1900
        %v2004 = vunpack.c.h.b16 %v1900
        %v2005 = vunpack.c.l.b16 %v1901
        %v2006 = vunpack.c.h.b16 %v1901
        %v2007 = vpack.c.b16 %v1945, %v1943
        %v2008 = vpack.c.b16 %v1946, %v1944
        %v2009 = vpack.c.b16 %v1949, %v1947
        %v2010 = vpack.c.b16 %v1950, %v1948
        %v2011 = vpack.c.b16 %v1953, %v1951
        %v2012 = vpack.c.b16 %v1954, %v1952
        %v2013 = vpack.c.b16 %v1957, %v1955
        %v2014 = vpack.c.b16 %v1958, %v1956
        %v2015 = vpack.c.b16 %v1961, %v1959
        %v2016 = vpack.c.b16 %v1962, %v1960
        %v2017 = vpack.c.b16 %v1965, %v1963
        %v2018 = vpack.c.b16 %v1966, %v1964
        %v2019 = vpack.c.b16 %v1969, %v1967
        %v2020 = vpack.c.b16 %v1970, %v1968
        %v2021 = vpack.c.b16 %v1973, %v1971
        %v2022 = vpack.c.b16 %v1974, %v1972
        %v2023 = vpack.c.b16 %v1977, %v1975
        %v2024 = vpack.c.b16 %v1978, %v1976
        %v2025 = vpack.c.b16 %v1981, %v1979
        %v2026 = vpack.c.b16 %v1982, %v1980
        %v2027 = vpack.c.b16 %v1985, %v1983
        %v2028 = vpack.c.b16 %v1986, %v1984
        %v2029 = vpack.c.b16 %v1989, %v1987
        %v2030 = vpack.c.b16 %v1990, %v1988
        %v2031 = vpack.c.b16 %v1993, %v1991
        %v2032 = vpack.c.b16 %v1994, %v1992
        %v2033 = vpack.c.b16 %v1997, %v1995
        %v2034 = vpack.c.b16 %v1998, %v1996
        %v2035 = vpack.c.b16 %v2001, %v1999
        %v2036 = vpack.c.b16 %v2002, %v2000
        %v2037 = vpack.c.b16 %v2005, %v2003
        %v2038 = vpack.c.b16 %v2006, %v2004
        %2071 = vmatprep.subr.bf16.mxu0 %v2008
        %2072 = vmatpush1.bf16.msra.mxu0 %v2007
        %2073 = vmatprep.subr.bf16.mxu0 %v2010
        %2074 = vmatpush1.bf16.msra.mxu0 %v2009
        %2075 = vmatprep.subr.bf16.mxu0 %v2012
        %2076 = vmatpush1.bf16.msra.mxu0 %v2011
        %2077 = vmatprep.subr.bf16.mxu0 %v2014
        %2078 = vmatpush1.bf16.msra.mxu0 %v2013
        %2079 = vmatprep.subr.bf16.mxu0 %v2016
        %2080 = vmatpush1.bf16.msra.mxu0 %v2015
        %2081 = vmatprep.subr.bf16.mxu0 %v2018
        %2082 = vmatpush1.bf16.msra.mxu0 %v2017
        %2083 = vmatprep.subr.bf16.mxu0 %v2020
        %2084 = vmatpush1.bf16.msra.mxu0 %v2019
        %2085 = vmatprep.subr.bf16.mxu0 %v2022
        %2086 = vmatpush1.bf16.msra.mxu0 %v2021
        %2087 = vmatprep.subr.bf16.mxu0 %v2024
        %2088 = vmatpush1.bf16.msra.mxu0 %v2023
        %2089 = vmatprep.subr.bf16.mxu0 %v2026
        %2090 = vmatpush1.bf16.msra.mxu0 %v2025
        %2091 = vmatprep.subr.bf16.mxu0 %v2028
        %2092 = vmatpush1.bf16.msra.mxu0 %v2027
        %2093 = vmatprep.subr.bf16.mxu0 %v2030
        %2094 = vmatpush1.bf16.msra.mxu0 %v2029
        %2095 = vmatprep.subr.bf16.mxu0 %v2032
        %2096 = vmatpush1.bf16.msra.mxu0 %v2031
        %2097 = vmatprep.subr.bf16.mxu0 %v2034
        %2098 = vmatpush1.bf16.msra.mxu0 %v2033
        %2099 = vmatprep.subr.bf16.mxu0 %v2036
        %2100 = vmatpush1.bf16.msra.mxu0 %v2035
        %2101 = vmatprep.subr.bf16.mxu0 %v2038
        %2102 = vmatpush1.bf16.msra.mxu0 %v2037
        %2103 = vmatprep.mubr.bf16.mxu0 %v1908
        %2104 = vmatmul.mubr.bf16.gmra.mrb[0].mxu0 %v1907
        %v2105 = vpop.f32.mrb[0].mxu0
        %v2106 = vadd.f32 0.0, %v2105
        %v2107 = vpop.f32.mrb[0].mxu0
        %v2108 = vadd.f32 0.0, %v2107
        %v2109 = vpop.f32.mrb[0].mxu0
        %v2110 = vpop.f32.mrb[0].mxu0
        %2111 = vdwg.mxu0
        %v2112 = vadd.f32 %v1862, %v2106
        %v2113 = vadd.f32 %v1864, %v2108
        %v2114 = vld [vmem:[%s1359] sm:$0xcc]
        %v2115 = vld [vmem:[%s1359 + $0x8] sm:$0x33]
        %s2116 = scalar_lea.vmem %s1327, 768 [#allocation2]
        %v2117 = vld [vmem:[%s2116] sm:$0xff]
        %v2118 = vld [vmem:[%s2116 + $0x8] sm:$0xff]
        %v2119 = vld [vmem:[%s2116 + $0x10] sm:$0xff]
        %v2120 = vld [vmem:[%s2116 + $0x18] sm:$0xff]
        %v2121 = vld [vmem:[%s2116 + $0x20] sm:$0xff]
        %v2122 = vld [vmem:[%s2116 + $0x28] sm:$0xff]
        %v2123 = vld [vmem:[%s2116 + $0x30] sm:$0xff]
        %v2124 = vld [vmem:[%s2116 + $0x38] sm:$0xff]
        %v2125 = vld [vmem:[%s2116 + $0x40] sm:$0xff]
        %v2126 = vld [vmem:[%s2116 + $0x48] sm:$0xff]
        %v2127 = vld [vmem:[%s2116 + $0x50] sm:$0xff]
        %v2128 = vld [vmem:[%s2116 + $0x58] sm:$0xff]
        %v2129 = vld [vmem:[%s2116 + $0x60] sm:$0xff]
        %v2130 = vld [vmem:[%s2116 + $0x68] sm:$0xff]
        %v2131 = vld [vmem:[%s2116 + $0x70] sm:$0xff]
        %v2132 = vld [vmem:[%s2116 + $0x78] sm:$0xff]
        %v2133 = vld [vmem:[%s2116 + $0x80] sm:$0xff]
        %v2134 = vld [vmem:[%s2116 + $0x88] sm:$0xff]
        %v2135 = vld [vmem:[%s2116 + $0x90] sm:$0xff]
        %v2136 = vld [vmem:[%s2116 + $0x98] sm:$0xff]
        %v2137 = vld [vmem:[%s2116 + $0xa0] sm:$0xff]
        %v2138 = vld [vmem:[%s2116 + $0xa8] sm:$0xff]
        %v2139 = vld [vmem:[%s2116 + $0xb0] sm:$0xff]
        %v2140 = vld [vmem:[%s2116 + $0xb8] sm:$0xff]
        %v2141 = vld [vmem:[%s2116 + $0xc0] sm:$0xff]
        %v2142 = vld [vmem:[%s2116 + $0xc8] sm:$0xff]
        %v2143 = vld [vmem:[%s2116 + $0xd0] sm:$0xff]
        %v2144 = vld [vmem:[%s2116 + $0xd8] sm:$0xff]
        %v2145 = vld [vmem:[%s2116 + $0xe0] sm:$0xff]
        %v2146 = vld [vmem:[%s2116 + $0xe8] sm:$0xff]
        %v2147 = vld [vmem:[%s2116 + $0xf0] sm:$0xff]
        %v2148 = vld [vmem:[%s2116 + $0xf8] sm:$0xff]
        %v2151 = vunpack.c.l.b16 %v2114
        %v2152 = vunpack.c.h.b16 %v2114
        %v2153 = vunpack.c.l.b16 %v2115
        %v2154 = vunpack.c.h.b16 %v2115
        %v2155 = vpack.c.b16 %v2153, %v2151
        %v2156 = vpack.c.b16 %v2154, %v2152
        %v2157 = vrot.slane %v2155, 2
        %v2158 = vrot.slane %v2156, 2
        %v2193 = vunpack.c.l.b16 %v2117
        %v2194 = vunpack.c.h.b16 %v2117
        %v2195 = vunpack.c.l.b16 %v2118
        %v2196 = vunpack.c.h.b16 %v2118
        %v2197 = vunpack.c.l.b16 %v2119
        %v2198 = vunpack.c.h.b16 %v2119
        %v2199 = vunpack.c.l.b16 %v2120
        %v2200 = vunpack.c.h.b16 %v2120
        %v2201 = vunpack.c.l.b16 %v2121
        %v2202 = vunpack.c.h.b16 %v2121
        %v2203 = vunpack.c.l.b16 %v2122
        %v2204 = vunpack.c.h.b16 %v2122
        %v2205 = vunpack.c.l.b16 %v2123
        %v2206 = vunpack.c.h.b16 %v2123
        %v2207 = vunpack.c.l.b16 %v2124
        %v2208 = vunpack.c.h.b16 %v2124
        %v2209 = vunpack.c.l.b16 %v2125
        %v2210 = vunpack.c.h.b16 %v2125
        %v2211 = vunpack.c.l.b16 %v2126
        %v2212 = vunpack.c.h.b16 %v2126
        %v2213 = vunpack.c.l.b16 %v2127
        %v2214 = vunpack.c.h.b16 %v2127
        %v2215 = vunpack.c.l.b16 %v2128
        %v2216 = vunpack.c.h.b16 %v2128
        %v2217 = vunpack.c.l.b16 %v2129
        %v2218 = vunpack.c.h.b16 %v2129
        %v2219 = vunpack.c.l.b16 %v2130
        %v2220 = vunpack.c.h.b16 %v2130
        %v2221 = vunpack.c.l.b16 %v2131
        %v2222 = vunpack.c.h.b16 %v2131
        %v2223 = vunpack.c.l.b16 %v2132
        %v2224 = vunpack.c.h.b16 %v2132
        %v2225 = vunpack.c.l.b16 %v2133
        %v2226 = vunpack.c.h.b16 %v2133
        %v2227 = vunpack.c.l.b16 %v2134
        %v2228 = vunpack.c.h.b16 %v2134
        %v2229 = vunpack.c.l.b16 %v2135
        %v2230 = vunpack.c.h.b16 %v2135
        %v2231 = vunpack.c.l.b16 %v2136
        %v2232 = vunpack.c.h.b16 %v2136
        %v2233 = vunpack.c.l.b16 %v2137
        %v2234 = vunpack.c.h.b16 %v2137
        %v2235 = vunpack.c.l.b16 %v2138
        %v2236 = vunpack.c.h.b16 %v2138
        %v2237 = vunpack.c.l.b16 %v2139
        %v2238 = vunpack.c.h.b16 %v2139
        %v2239 = vunpack.c.l.b16 %v2140
        %v2240 = vunpack.c.h.b16 %v2140
        %v2241 = vunpack.c.l.b16 %v2141
        %v2242 = vunpack.c.h.b16 %v2141
        %v2243 = vunpack.c.l.b16 %v2142
        %v2244 = vunpack.c.h.b16 %v2142
        %v2245 = vunpack.c.l.b16 %v2143
        %v2246 = vunpack.c.h.b16 %v2143
        %v2247 = vunpack.c.l.b16 %v2144
        %v2248 = vunpack.c.h.b16 %v2144
        %v2249 = vunpack.c.l.b16 %v2145
        %v2250 = vunpack.c.h.b16 %v2145
        %v2251 = vunpack.c.l.b16 %v2146
        %v2252 = vunpack.c.h.b16 %v2146
        %v2253 = vunpack.c.l.b16 %v2147
        %v2254 = vunpack.c.h.b16 %v2147
        %v2255 = vunpack.c.l.b16 %v2148
        %v2256 = vunpack.c.h.b16 %v2148
        %v2257 = vpack.c.b16 %v2195, %v2193
        %v2258 = vpack.c.b16 %v2196, %v2194
        %v2259 = vpack.c.b16 %v2199, %v2197
        %v2260 = vpack.c.b16 %v2200, %v2198
        %v2261 = vpack.c.b16 %v2203, %v2201
        %v2262 = vpack.c.b16 %v2204, %v2202
        %v2263 = vpack.c.b16 %v2207, %v2205
        %v2264 = vpack.c.b16 %v2208, %v2206
        %v2265 = vpack.c.b16 %v2211, %v2209
        %v2266 = vpack.c.b16 %v2212, %v2210
        %v2267 = vpack.c.b16 %v2215, %v2213
        %v2268 = vpack.c.b16 %v2216, %v2214
        %v2269 = vpack.c.b16 %v2219, %v2217
        %v2270 = vpack.c.b16 %v2220, %v2218
        %v2271 = vpack.c.b16 %v2223, %v2221
        %v2272 = vpack.c.b16 %v2224, %v2222
        %v2273 = vpack.c.b16 %v2227, %v2225
        %v2274 = vpack.c.b16 %v2228, %v2226
        %v2275 = vpack.c.b16 %v2231, %v2229
        %v2276 = vpack.c.b16 %v2232, %v2230
        %v2277 = vpack.c.b16 %v2235, %v2233
        %v2278 = vpack.c.b16 %v2236, %v2234
        %v2279 = vpack.c.b16 %v2239, %v2237
        %v2280 = vpack.c.b16 %v2240, %v2238
        %v2281 = vpack.c.b16 %v2243, %v2241
        %v2282 = vpack.c.b16 %v2244, %v2242
        %v2283 = vpack.c.b16 %v2247, %v2245
        %v2284 = vpack.c.b16 %v2248, %v2246
        %v2285 = vpack.c.b16 %v2251, %v2249
        %v2286 = vpack.c.b16 %v2252, %v2250
        %v2287 = vpack.c.b16 %v2255, %v2253
        %v2288 = vpack.c.b16 %v2256, %v2254
        %2321 = vmatprep.subr.bf16.mxu0 %v2258
        %2322 = vmatpush1.bf16.msra.mxu0 %v2257
        %2323 = vmatprep.subr.bf16.mxu0 %v2260
        %2324 = vmatpush1.bf16.msra.mxu0 %v2259
        %2325 = vmatprep.subr.bf16.mxu0 %v2262
        %2326 = vmatpush1.bf16.msra.mxu0 %v2261
        %2327 = vmatprep.subr.bf16.mxu0 %v2264
        %2328 = vmatpush1.bf16.msra.mxu0 %v2263
        %2329 = vmatprep.subr.bf16.mxu0 %v2266
        %2330 = vmatpush1.bf16.msra.mxu0 %v2265
        %2331 = vmatprep.subr.bf16.mxu0 %v2268
        %2332 = vmatpush1.bf16.msra.mxu0 %v2267
        %2333 = vmatprep.subr.bf16.mxu0 %v2270
        %2334 = vmatpush1.bf16.msra.mxu0 %v2269
        %2335 = vmatprep.subr.bf16.mxu0 %v2272
        %2336 = vmatpush1.bf16.msra.mxu0 %v2271
        %2337 = vmatprep.subr.bf16.mxu0 %v2274
        %2338 = vmatpush1.bf16.msra.mxu0 %v2273
        %2339 = vmatprep.subr.bf16.mxu0 %v2276
        %2340 = vmatpush1.bf16.msra.mxu0 %v2275
        %2341 = vmatprep.subr.bf16.mxu0 %v2278
        %2342 = vmatpush1.bf16.msra.mxu0 %v2277
        %2343 = vmatprep.subr.bf16.mxu0 %v2280
        %2344 = vmatpush1.bf16.msra.mxu0 %v2279
        %2345 = vmatprep.subr.bf16.mxu0 %v2282
        %2346 = vmatpush1.bf16.msra.mxu0 %v2281
        %2347 = vmatprep.subr.bf16.mxu0 %v2284
        %2348 = vmatpush1.bf16.msra.mxu0 %v2283
        %2349 = vmatprep.subr.bf16.mxu0 %v2286
        %2350 = vmatpush1.bf16.msra.mxu0 %v2285
        %2351 = vmatprep.subr.bf16.mxu0 %v2288
        %2352 = vmatpush1.bf16.msra.mxu0 %v2287
        %2353 = vmatprep.mubr.bf16.mxu0 %v2158
        %2354 = vmatmul.mubr.bf16.gmra.mrb[0].mxu0 %v2157
        %v2355 = vpop.f32.mrb[0].mxu0
        %v2356 = vadd.f32 0.0, %v2355
        %v2357 = vpop.f32.mrb[0].mxu0
        %v2358 = vadd.f32 0.0, %v2357
        %v2359 = vpop.f32.mrb[0].mxu0
        %v2360 = vpop.f32.mrb[0].mxu0
        %2361 = vdwg.mxu0
        %v2362 = vadd.f32 %v2112, %v2356
        %v2363 = vadd.f32 %v2113, %v2358
        %v2364 = vld [vmem:[%s1359 + $0x8] sm:$0x77]
        %s2365 = scalar_lea.vmem %s1327, 1024 [#allocation2]
        %v2366 = vld [vmem:[%s2365] sm:$0xff]
        %v2367 = vld [vmem:[%s2365 + $0x8] sm:$0xff]
        %v2368 = vld [vmem:[%s2365 + $0x10] sm:$0xff]
        %v2369 = vld [vmem:[%s2365 + $0x18] sm:$0xff]
        %v2370 = vld [vmem:[%s2365 + $0x20] sm:$0xff]
        %v2371 = vld [vmem:[%s2365 + $0x28] sm:$0xff]
        %v2372 = vld [vmem:[%s2365 + $0x30] sm:$0xff]
        %v2373 = vld [vmem:[%s2365 + $0x38] sm:$0xff]
        %v2374 = vld [vmem:[%s2365 + $0x40] sm:$0xff]
        %v2375 = vld [vmem:[%s2365 + $0x48] sm:$0xff]
        %v2376 = vld [vmem:[%s2365 + $0x50] sm:$0xff]
        %v2377 = vld [vmem:[%s2365 + $0x58] sm:$0xff]
        %v2378 = vld [vmem:[%s2365 + $0x60] sm:$0xff]
        %v2379 = vld [vmem:[%s2365 + $0x68] sm:$0xff]
        %v2380 = vld [vmem:[%s2365 + $0x70] sm:$0xff]
        %v2381 = vld [vmem:[%s2365 + $0x78] sm:$0xff]
        %v2382 = vld [vmem:[%s2365 + $0x80] sm:$0xff]
        %v2383 = vld [vmem:[%s2365 + $0x88] sm:$0xff]
        %v2384 = vld [vmem:[%s2365 + $0x90] sm:$0xff]
        %v2385 = vld [vmem:[%s2365 + $0x98] sm:$0xff]
        %v2386 = vld [vmem:[%s2365 + $0xa0] sm:$0xff]
        %v2387 = vld [vmem:[%s2365 + $0xa8] sm:$0xff]
        %v2388 = vld [vmem:[%s2365 + $0xb0] sm:$0xff]
        %v2389 = vld [vmem:[%s2365 + $0xb8] sm:$0xff]
        %v2390 = vld [vmem:[%s2365 + $0xc0] sm:$0xff]
        %v2391 = vld [vmem:[%s2365 + $0xc8] sm:$0xff]
        %v2392 = vld [vmem:[%s2365 + $0xd0] sm:$0xff]
        %v2393 = vld [vmem:[%s2365 + $0xd8] sm:$0xff]
        %v2394 = vld [vmem:[%s2365 + $0xe0] sm:$0xff]
        %v2395 = vld [vmem:[%s2365 + $0xe8] sm:$0xff]
        %v2396 = vld [vmem:[%s2365 + $0xf0] sm:$0xff]
        %v2397 = vld [vmem:[%s2365 + $0xf8] sm:$0xff]
        %v2399 = vunpack.c.l.b16 %v2364
        %v2400 = vunpack.c.h.b16 %v2364
        %v2401 = vpack.c.b16 %v2399, %v2151
        %v2402 = vpack.c.b16 %v2400, %v2152
        %v2404 = vshrl.u32 %v2401, 16
        %v2406 = vrot.slane %v2404, 2
        %v2407 = vshll.u32 %v2401, 16
        %v2409 = vrot.slane %v2407, 3
        %v2410 = vor.u32 %v2406, %v2409
        %v2412 = vshrl.u32 %v2402, 16
        %v2414 = vrot.slane %v2412, 2
        %v2415 = vshll.u32 %v2402, 16
        %v2417 = vrot.slane %v2415, 3
        %v2418 = vor.u32 %v2414, %v2417
        %v2453 = vunpack.c.l.b16 %v2366
        %v2454 = vunpack.c.h.b16 %v2366
        %v2455 = vunpack.c.l.b16 %v2367
        %v2456 = vunpack.c.h.b16 %v2367
        %v2457 = vunpack.c.l.b16 %v2368
        %v2458 = vunpack.c.h.b16 %v2368
        %v2459 = vunpack.c.l.b16 %v2369
        %v2460 = vunpack.c.h.b16 %v2369
        %v2461 = vunpack.c.l.b16 %v2370
        %v2462 = vunpack.c.h.b16 %v2370
        %v2463 = vunpack.c.l.b16 %v2371
        %v2464 = vunpack.c.h.b16 %v2371
        %v2465 = vunpack.c.l.b16 %v2372
        %v2466 = vunpack.c.h.b16 %v2372
        %v2467 = vunpack.c.l.b16 %v2373
        %v2468 = vunpack.c.h.b16 %v2373
        %v2469 = vunpack.c.l.b16 %v2374
        %v2470 = vunpack.c.h.b16 %v2374
        %v2471 = vunpack.c.l.b16 %v2375
        %v2472 = vunpack.c.h.b16 %v2375
        %v2473 = vunpack.c.l.b16 %v2376
        %v2474 = vunpack.c.h.b16 %v2376
        %v2475 = vunpack.c.l.b16 %v2377
        %v2476 = vunpack.c.h.b16 %v2377
        %v2477 = vunpack.c.l.b16 %v2378
        %v2478 = vunpack.c.h.b16 %v2378
        %v2479 = vunpack.c.l.b16 %v2379
        %v2480 = vunpack.c.h.b16 %v2379
        %v2481 = vunpack.c.l.b16 %v2380
        %v2482 = vunpack.c.h.b16 %v2380
        %v2483 = vunpack.c.l.b16 %v2381
        %v2484 = vunpack.c.h.b16 %v2381
        %v2485 = vunpack.c.l.b16 %v2382
        %v2486 = vunpack.c.h.b16 %v2382
        %v2487 = vunpack.c.l.b16 %v2383
        %v2488 = vunpack.c.h.b16 %v2383
        %v2489 = vunpack.c.l.b16 %v2384
        %v2490 = vunpack.c.h.b16 %v2384
        %v2491 = vunpack.c.l.b16 %v2385
        %v2492 = vunpack.c.h.b16 %v2385
        %v2493 = vunpack.c.l.b16 %v2386
        %v2494 = vunpack.c.h.b16 %v2386
        %v2495 = vunpack.c.l.b16 %v2387
        %v2496 = vunpack.c.h.b16 %v2387
        %v2497 = vunpack.c.l.b16 %v2388
        %v2498 = vunpack.c.h.b16 %v2388
        %v2499 = vunpack.c.l.b16 %v2389
        %v2500 = vunpack.c.h.b16 %v2389
        %v2501 = vunpack.c.l.b16 %v2390
        %v2502 = vunpack.c.h.b16 %v2390
        %v2503 = vunpack.c.l.b16 %v2391
        %v2504 = vunpack.c.h.b16 %v2391
        %v2505 = vunpack.c.l.b16 %v2392
        %v2506 = vunpack.c.h.b16 %v2392
        %v2507 = vunpack.c.l.b16 %v2393
        %v2508 = vunpack.c.h.b16 %v2393
        %v2509 = vunpack.c.l.b16 %v2394
        %v2510 = vunpack.c.h.b16 %v2394
        %v2511 = vunpack.c.l.b16 %v2395
        %v2512 = vunpack.c.h.b16 %v2395
        %v2513 = vunpack.c.l.b16 %v2396
        %v2514 = vunpack.c.h.b16 %v2396
        %v2515 = vunpack.c.l.b16 %v2397
        %v2516 = vunpack.c.h.b16 %v2397
        %v2517 = vpack.c.b16 %v2455, %v2453
        %v2518 = vpack.c.b16 %v2456, %v2454
        %v2519 = vpack.c.b16 %v2459, %v2457
        %v2520 = vpack.c.b16 %v2460, %v2458
        %v2521 = vpack.c.b16 %v2463, %v2461
        %v2522 = vpack.c.b16 %v2464, %v2462
        %v2523 = vpack.c.b16 %v2467, %v2465
        %v2524 = vpack.c.b16 %v2468, %v2466
        %v2525 = vpack.c.b16 %v2471, %v2469
        %v2526 = vpack.c.b16 %v2472, %v2470
        %v2527 = vpack.c.b16 %v2475, %v2473
        %v2528 = vpack.c.b16 %v2476, %v2474
        %v2529 = vpack.c.b16 %v2479, %v2477
        %v2530 = vpack.c.b16 %v2480, %v2478
        %v2531 = vpack.c.b16 %v2483, %v2481
        %v2532 = vpack.c.b16 %v2484, %v2482
        %v2533 = vpack.c.b16 %v2487, %v2485
        %v2534 = vpack.c.b16 %v2488, %v2486
        %v2535 = vpack.c.b16 %v2491, %v2489
        %v2536 = vpack.c.b16 %v2492, %v2490
        %v2537 = vpack.c.b16 %v2495, %v2493
        %v2538 = vpack.c.b16 %v2496, %v2494
        %v2539 = vpack.c.b16 %v2499, %v2497
        %v2540 = vpack.c.b16 %v2500, %v2498
        %v2541 = vpack.c.b16 %v2503, %v2501
        %v2542 = vpack.c.b16 %v2504, %v2502
        %v2543 = vpack.c.b16 %v2507, %v2505
        %v2544 = vpack.c.b16 %v2508, %v2506
        %v2545 = vpack.c.b16 %v2511, %v2509
        %v2546 = vpack.c.b16 %v2512, %v2510
        %v2547 = vpack.c.b16 %v2515, %v2513
        %v2548 = vpack.c.b16 %v2516, %v2514
        %2581 = vmatprep.subr.bf16.mxu0 %v2518
        %2582 = vmatpush1.bf16.msra.mxu0 %v2517
        %2583 = vmatprep.subr.bf16.mxu0 %v2520
        %2584 = vmatpush1.bf16.msra.mxu0 %v2519
        %2585 = vmatprep.subr.bf16.mxu0 %v2522
        %2586 = vmatpush1.bf16.msra.mxu0 %v2521
        %2587 = vmatprep.subr.bf16.mxu0 %v2524
        %2588 = vmatpush1.bf16.msra.mxu0 %v2523
        %2589 = vmatprep.subr.bf16.mxu0 %v2526
        %2590 = vmatpush1.bf16.msra.mxu0 %v2525
        %2591 = vmatprep.subr.bf16.mxu0 %v2528
        %2592 = vmatpush1.bf16.msra.mxu0 %v2527
        %2593 = vmatprep.subr.bf16.mxu0 %v2530
        %2594 = vmatpush1.bf16.msra.mxu0 %v2529
        %2595 = vmatprep.subr.bf16.mxu0 %v2532
        %2596 = vmatpush1.bf16.msra.mxu0 %v2531
        %2597 = vmatprep.subr.bf16.mxu0 %v2534
        %2598 = vmatpush1.bf16.msra.mxu0 %v2533
        %2599 = vmatprep.subr.bf16.mxu0 %v2536
        %2600 = vmatpush1.bf16.msra.mxu0 %v2535
        %2601 = vmatprep.subr.bf16.mxu0 %v2538
        %2602 = vmatpush1.bf16.msra.mxu0 %v2537
        %2603 = vmatprep.subr.bf16.mxu0 %v2540
        %2604 = vmatpush1.bf16.msra.mxu0 %v2539
        %2605 = vmatprep.subr.bf16.mxu0 %v2542
        %2606 = vmatpush1.bf16.msra.mxu0 %v2541
        %2607 = vmatprep.subr.bf16.mxu0 %v2544
        %2608 = vmatpush1.bf16.msra.mxu0 %v2543
        %2609 = vmatprep.subr.bf16.mxu0 %v2546
        %2610 = vmatpush1.bf16.msra.mxu0 %v2545
        %2611 = vmatprep.subr.bf16.mxu0 %v2548
        %2612 = vmatpush1.bf16.msra.mxu0 %v2547
        %2613 = vmatprep.mubr.bf16.mxu0 %v2418
        %2614 = vmatmul.mubr.bf16.gmra.mrb[0].mxu0 %v2410
        %v2615 = vpop.f32.mrb[0].mxu0
        %v2616 = vadd.f32 0.0, %v2615
        %v2617 = vpop.f32.mrb[0].mxu0
        %v2618 = vadd.f32 0.0, %v2617
        %v2619 = vpop.f32.mrb[0].mxu0
        %v2620 = vpop.f32.mrb[0].mxu0
        %2621 = vdwg.mxu0
        %v2622 = vadd.f32 %v2362, %v2616
        %v2623 = vadd.f32 %v2363, %v2618
        %v2624 = vld [vmem:[%s1359] sm:$0x88]
        %s2625 = scalar_lea.vmem %s1327, 1280 [#allocation2]
        %v2626 = vld [vmem:[%s2625] sm:$0xff]
        %v2627 = vld [vmem:[%s2625 + $0x8] sm:$0xff]
        %v2628 = vld [vmem:[%s2625 + $0x10] sm:$0xff]
        %v2629 = vld [vmem:[%s2625 + $0x18] sm:$0xff]
        %v2630 = vld [vmem:[%s2625 + $0x20] sm:$0xff]
        %v2631 = vld [vmem:[%s2625 + $0x28] sm:$0xff]
        %v2632 = vld [vmem:[%s2625 + $0x30] sm:$0xff]
        %v2633 = vld [vmem:[%s2625 + $0x38] sm:$0xff]
        %v2634 = vld [vmem:[%s2625 + $0x40] sm:$0xff]
        %v2635 = vld [vmem:[%s2625 + $0x48] sm:$0xff]
        %v2636 = vld [vmem:[%s2625 + $0x50] sm:$0xff]
        %v2637 = vld [vmem:[%s2625 + $0x58] sm:$0xff]
        %v2638 = vld [vmem:[%s2625 + $0x60] sm:$0xff]
        %v2639 = vld [vmem:[%s2625 + $0x68] sm:$0xff]
        %v2640 = vld [vmem:[%s2625 + $0x70] sm:$0xff]
        %v2641 = vld [vmem:[%s2625 + $0x78] sm:$0xff]
        %v2642 = vld [vmem:[%s2625 + $0x80] sm:$0xff]
        %v2643 = vld [vmem:[%s2625 + $0x88] sm:$0xff]
        %v2644 = vld [vmem:[%s2625 + $0x90] sm:$0xff]
        %v2645 = vld [vmem:[%s2625 + $0x98] sm:$0xff]
        %v2646 = vld [vmem:[%s2625 + $0xa0] sm:$0xff]
        %v2647 = vld [vmem:[%s2625 + $0xa8] sm:$0xff]
        %v2648 = vld [vmem:[%s2625 + $0xb0] sm:$0xff]
        %v2649 = vld [vmem:[%s2625 + $0xb8] sm:$0xff]
        %v2650 = vld [vmem:[%s2625 + $0xc0] sm:$0xff]
        %v2651 = vld [vmem:[%s2625 + $0xc8] sm:$0xff]
        %v2652 = vld [vmem:[%s2625 + $0xd0] sm:$0xff]
        %v2653 = vld [vmem:[%s2625 + $0xd8] sm:$0xff]
        %v2654 = vld [vmem:[%s2625 + $0xe0] sm:$0xff]
        %v2655 = vld [vmem:[%s2625 + $0xe8] sm:$0xff]
        %v2656 = vld [vmem:[%s2625 + $0xf0] sm:$0xff]
        %v2657 = vld [vmem:[%s2625 + $0xf8] sm:$0xff]
        %v2659 = vunpack.c.l.b16 %v2624
        %v2660 = vunpack.c.h.b16 %v2624
        %v2661 = vpack.c.b16 %v2399, %v2659
        %v2662 = vpack.c.b16 %v2400, %v2660
        %v2663 = vrot.slane %v2661, 3
        %v2664 = vrot.slane %v2662, 3
        %v2699 = vunpack.c.l.b16 %v2626
        %v2700 = vunpack.c.h.b16 %v2626
        %v2701 = vunpack.c.l.b16 %v2627
        %v2702 = vunpack.c.h.b16 %v2627
        %v2703 = vunpack.c.l.b16 %v2628
        %v2704 = vunpack.c.h.b16 %v2628
        %v2705 = vunpack.c.l.b16 %v2629
        %v2706 = vunpack.c.h.b16 %v2629
        %v2707 = vunpack.c.l.b16 %v2630
        %v2708 = vunpack.c.h.b16 %v2630
        %v2709 = vunpack.c.l.b16 %v2631
        %v2710 = vunpack.c.h.b16 %v2631
        %v2711 = vunpack.c.l.b16 %v2632
        %v2712 = vunpack.c.h.b16 %v2632
        %v2713 = vunpack.c.l.b16 %v2633
        %v2714 = vunpack.c.h.b16 %v2633
        %v2715 = vunpack.c.l.b16 %v2634
        %v2716 = vunpack.c.h.b16 %v2634
        %v2717 = vunpack.c.l.b16 %v2635
        %v2718 = vunpack.c.h.b16 %v2635
        %v2719 = vunpack.c.l.b16 %v2636
        %v2720 = vunpack.c.h.b16 %v2636
        %v2721 = vunpack.c.l.b16 %v2637
        %v2722 = vunpack.c.h.b16 %v2637
        %v2723 = vunpack.c.l.b16 %v2638
        %v2724 = vunpack.c.h.b16 %v2638
        %v2725 = vunpack.c.l.b16 %v2639
        %v2726 = vunpack.c.h.b16 %v2639
        %v2727 = vunpack.c.l.b16 %v2640
        %v2728 = vunpack.c.h.b16 %v2640
        %v2729 = vunpack.c.l.b16 %v2641
        %v2730 = vunpack.c.h.b16 %v2641
        %v2731 = vunpack.c.l.b16 %v2642
        %v2732 = vunpack.c.h.b16 %v2642
        %v2733 = vunpack.c.l.b16 %v2643
        %v2734 = vunpack.c.h.b16 %v2643
        %v2735 = vunpack.c.l.b16 %v2644
        %v2736 = vunpack.c.h.b16 %v2644
        %v2737 = vunpack.c.l.b16 %v2645
        %v2738 = vunpack.c.h.b16 %v2645
        %v2739 = vunpack.c.l.b16 %v2646
        %v2740 = vunpack.c.h.b16 %v2646
        %v2741 = vunpack.c.l.b16 %v2647
        %v2742 = vunpack.c.h.b16 %v2647
        %v2743 = vunpack.c.l.b16 %v2648
        %v2744 = vunpack.c.h.b16 %v2648
        %v2745 = vunpack.c.l.b16 %v2649
        %v2746 = vunpack.c.h.b16 %v2649
        %v2747 = vunpack.c.l.b16 %v2650
        %v2748 = vunpack.c.h.b16 %v2650
        %v2749 = vunpack.c.l.b16 %v2651
        %v2750 = vunpack.c.h.b16 %v2651
        %v2751 = vunpack.c.l.b16 %v2652
        %v2752 = vunpack.c.h.b16 %v2652
        %v2753 = vunpack.c.l.b16 %v2653
        %v2754 = vunpack.c.h.b16 %v2653
        %v2755 = vunpack.c.l.b16 %v2654
        %v2756 = vunpack.c.h.b16 %v2654
        %v2757 = vunpack.c.l.b16 %v2655
        %v2758 = vunpack.c.h.b16 %v2655
        %v2759 = vunpack.c.l.b16 %v2656
        %v2760 = vunpack.c.h.b16 %v2656
        %v2761 = vunpack.c.l.b16 %v2657
        %v2762 = vunpack.c.h.b16 %v2657
        %v2763 = vpack.c.b16 %v2701, %v2699
        %v2764 = vpack.c.b16 %v2702, %v2700
        %v2765 = vpack.c.b16 %v2705, %v2703
        %v2766 = vpack.c.b16 %v2706, %v2704
        %v2767 = vpack.c.b16 %v2709, %v2707
        %v2768 = vpack.c.b16 %v2710, %v2708
        %v2769 = vpack.c.b16 %v2713, %v2711
        %v2770 = vpack.c.b16 %v2714, %v2712
        %v2771 = vpack.c.b16 %v2717, %v2715
        %v2772 = vpack.c.b16 %v2718, %v2716
        %v2773 = vpack.c.b16 %v2721, %v2719
        %v2774 = vpack.c.b16 %v2722, %v2720
        %v2775 = vpack.c.b16 %v2725, %v2723
        %v2776 = vpack.c.b16 %v2726, %v2724
        %v2777 = vpack.c.b16 %v2729, %v2727
        %v2778 = vpack.c.b16 %v2730, %v2728
        %v2779 = vpack.c.b16 %v2733, %v2731
        %v2780 = vpack.c.b16 %v2734, %v2732
        %v2781 = vpack.c.b16 %v2737, %v2735
        %v2782 = vpack.c.b16 %v2738, %v2736
        %v2783 = vpack.c.b16 %v2741, %v2739
        %v2784 = vpack.c.b16 %v2742, %v2740
        %v2785 = vpack.c.b16 %v2745, %v2743
        %v2786 = vpack.c.b16 %v2746, %v2744
        %v2787 = vpack.c.b16 %v2749, %v2747
        %v2788 = vpack.c.b16 %v2750, %v2748
        %v2789 = vpack.c.b16 %v2753, %v2751
        %v2790 = vpack.c.b16 %v2754, %v2752
        %v2791 = vpack.c.b16 %v2757, %v2755
        %v2792 = vpack.c.b16 %v2758, %v2756
        %v2793 = vpack.c.b16 %v2761, %v2759
        %v2794 = vpack.c.b16 %v2762, %v2760
        %2827 = vmatprep.subr.bf16.mxu0 %v2764
        %2828 = vmatpush1.bf16.msra.mxu0 %v2763
        %2829 = vmatprep.subr.bf16.mxu0 %v2766
        %2830 = vmatpush1.bf16.msra.mxu0 %v2765
        %2831 = vmatprep.subr.bf16.mxu0 %v2768
        %2832 = vmatpush1.bf16.msra.mxu0 %v2767
        %2833 = vmatprep.subr.bf16.mxu0 %v2770
        %2834 = vmatpush1.bf16.msra.mxu0 %v2769
        %2835 = vmatprep.subr.bf16.mxu0 %v2772
        %2836 = vmatpush1.bf16.msra.mxu0 %v2771
        %2837 = vmatprep.subr.bf16.mxu0 %v2774
        %2838 = vmatpush1.bf16.msra.mxu0 %v2773
        %2839 = vmatprep.subr.bf16.mxu0 %v2776
        %2840 = vmatpush1.bf16.msra.mxu0 %v2775
        %2841 = vmatprep.subr.bf16.mxu0 %v2778
        %2842 = vmatpush1.bf16.msra.mxu0 %v2777
        %2843 = vmatprep.subr.bf16.mxu0 %v2780
        %2844 = vmatpush1.bf16.msra.mxu0 %v2779
        %2845 = vmatprep.subr.bf16.mxu0 %v2782
        %2846 = vmatpush1.bf16.msra.mxu0 %v2781
        %2847 = vmatprep.subr.bf16.mxu0 %v2784
        %2848 = vmatpush1.bf16.msra.mxu0 %v2783
        %2849 = vmatprep.subr.bf16.mxu0 %v2786
        %2850 = vmatpush1.bf16.msra.mxu0 %v2785
        %2851 = vmatprep.subr.bf16.mxu0 %v2788
        %2852 = vmatpush1.bf16.msra.mxu0 %v2787
        %2853 = vmatprep.subr.bf16.mxu0 %v2790
        %2854 = vmatpush1.bf16.msra.mxu0 %v2789
        %2855 = vmatprep.subr.bf16.mxu0 %v2792
        %2856 = vmatpush1.bf16.msra.mxu0 %v2791
        %2857 = vmatprep.subr.bf16.mxu0 %v2794
        %2858 = vmatpush1.bf16.msra.mxu0 %v2793
        %2859 = vmatprep.mubr.bf16.mxu0 %v2664
        %2860 = vmatmul.mubr.bf16.gmra.mrb[0].mxu0 %v2663
        %v2861 = vpop.f32.mrb[0].mxu0
        %v2862 = vadd.f32 0.0, %v2861
        %v2863 = vpop.f32.mrb[0].mxu0
        %v2864 = vadd.f32 0.0, %v2863
        %v2865 = vpop.f32.mrb[0].mxu0
        %v2866 = vpop.f32.mrb[0].mxu0
        %2867 = vdwg.mxu0
        %v2868 = vadd.f32 %v2622, %v2862
        %v2869 = vadd.f32 %v2623, %v2864
        %v2870 = vld [vmem:[%s1359 + $0x8] sm:$0xff]
        %s2871 = scalar_lea.vmem %s1327, 1536 [#allocation2]
        %v2872 = vld [vmem:[%s2871] sm:$0xff]
        %v2873 = vld [vmem:[%s2871 + $0x8] sm:$0xff]
        %v2874 = vld [vmem:[%s2871 + $0x10] sm:$0xff]
        %v2875 = vld [vmem:[%s2871 + $0x18] sm:$0xff]
        %v2876 = vld [vmem:[%s2871 + $0x20] sm:$0xff]
        %v2877 = vld [vmem:[%s2871 + $0x28] sm:$0xff]
        %v2878 = vld [vmem:[%s2871 + $0x30] sm:$0xff]
        %v2879 = vld [vmem:[%s2871 + $0x38] sm:$0xff]
        %v2880 = vld [vmem:[%s2871 + $0x40] sm:$0xff]
        %v2881 = vld [vmem:[%s2871 + $0x48] sm:$0xff]
        %v2882 = vld [vmem:[%s2871 + $0x50] sm:$0xff]
        %v2883 = vld [vmem:[%s2871 + $0x58] sm:$0xff]
        %v2884 = vld [vmem:[%s2871 + $0x60] sm:$0xff]
        %v2885 = vld [vmem:[%s2871 + $0x68] sm:$0xff]
        %v2886 = vld [vmem:[%s2871 + $0x70] sm:$0xff]
        %v2887 = vld [vmem:[%s2871 + $0x78] sm:$0xff]
        %v2888 = vld [vmem:[%s2871 + $0x80] sm:$0xff]
        %v2889 = vld [vmem:[%s2871 + $0x88] sm:$0xff]
        %v2890 = vld [vmem:[%s2871 + $0x90] sm:$0xff]
        %v2891 = vld [vmem:[%s2871 + $0x98] sm:$0xff]
        %v2892 = vld [vmem:[%s2871 + $0xa0] sm:$0xff]
        %v2893 = vld [vmem:[%s2871 + $0xa8] sm:$0xff]
        %v2894 = vld [vmem:[%s2871 + $0xb0] sm:$0xff]
        %v2895 = vld [vmem:[%s2871 + $0xb8] sm:$0xff]
        %v2896 = vld [vmem:[%s2871 + $0xc0] sm:$0xff]
        %v2897 = vld [vmem:[%s2871 + $0xc8] sm:$0xff]
        %v2898 = vld [vmem:[%s2871 + $0xd0] sm:$0xff]
        %v2899 = vld [vmem:[%s2871 + $0xd8] sm:$0xff]
        %v2900 = vld [vmem:[%s2871 + $0xe0] sm:$0xff]
        %v2901 = vld [vmem:[%s2871 + $0xe8] sm:$0xff]
        %v2902 = vld [vmem:[%s2871 + $0xf0] sm:$0xff]
        %v2903 = vld [vmem:[%s2871 + $0xf8] sm:$0xff]
        %v2905 = vunpack.c.l.b16 %v2870
        %v2906 = vunpack.c.h.b16 %v2870
        %v2907 = vpack.c.b16 %v2905, %v2905
        %v2908 = vpack.c.b16 %v2906, %v2906
        %v2943 = vunpack.c.l.b16 %v2872
        %v2944 = vunpack.c.h.b16 %v2872
        %v2945 = vunpack.c.l.b16 %v2873
        %v2946 = vunpack.c.h.b16 %v2873
        %v2947 = vunpack.c.l.b16 %v2874
        %v2948 = vunpack.c.h.b16 %v2874
        %v2949 = vunpack.c.l.b16 %v2875
        %v2950 = vunpack.c.h.b16 %v2875
        %v2951 = vunpack.c.l.b16 %v2876
        %v2952 = vunpack.c.h.b16 %v2876
        %v2953 = vunpack.c.l.b16 %v2877
        %v2954 = vunpack.c.h.b16 %v2877
        %v2955 = vunpack.c.l.b16 %v2878
        %v2956 = vunpack.c.h.b16 %v2878
        %v2957 = vunpack.c.l.b16 %v2879
        %v2958 = vunpack.c.h.b16 %v2879
        %v2959 = vunpack.c.l.b16 %v2880
        %v2960 = vunpack.c.h.b16 %v2880
        %v2961 = vunpack.c.l.b16 %v2881
        %v2962 = vunpack.c.h.b16 %v2881
        %v2963 = vunpack.c.l.b16 %v2882
        %v2964 = vunpack.c.h.b16 %v2882
        %v2965 = vunpack.c.l.b16 %v2883
        %v2966 = vunpack.c.h.b16 %v2883
        %v2967 = vunpack.c.l.b16 %v2884
        %v2968 = vunpack.c.h.b16 %v2884
        %v2969 = vunpack.c.l.b16 %v2885
        %v2970 = vunpack.c.h.b16 %v2885
        %v2971 = vunpack.c.l.b16 %v2886
        %v2972 = vunpack.c.h.b16 %v2886
        %v2973 = vunpack.c.l.b16 %v2887
        %v2974 = vunpack.c.h.b16 %v2887
        %v2975 = vunpack.c.l.b16 %v2888
        %v2976 = vunpack.c.h.b16 %v2888
        %v2977 = vunpack.c.l.b16 %v2889
        %v2978 = vunpack.c.h.b16 %v2889
        %v2979 = vunpack.c.l.b16 %v2890
        %v2980 = vunpack.c.h.b16 %v2890
        %v2981 = vunpack.c.l.b16 %v2891
        %v2982 = vunpack.c.h.b16 %v2891
        %v2983 = vunpack.c.l.b16 %v2892
        %v2984 = vunpack.c.h.b16 %v2892
        %v2985 = vunpack.c.l.b16 %v2893
        %v2986 = vunpack.c.h.b16 %v2893
        %v2987 = vunpack.c.l.b16 %v2894
        %v2988 = vunpack.c.h.b16 %v2894
        %v2989 = vunpack.c.l.b16 %v2895
        %v2990 = vunpack.c.h.b16 %v2895
        %v2991 = vunpack.c.l.b16 %v2896
        %v2992 = vunpack.c.h.b16 %v2896
        %v2993 = vunpack.c.l.b16 %v2897
        %v2994 = vunpack.c.h.b16 %v2897
        %v2995 = vunpack.c.l.b16 %v2898
        %v2996 = vunpack.c.h.b16 %v2898
        %v2997 = vunpack.c.l.b16 %v2899
        %v2998 = vunpack.c.h.b16 %v2899
        %v2999 = vunpack.c.l.b16 %v2900
        %v3000 = vunpack.c.h.b16 %v2900
        %v3001 = vunpack.c.l.b16 %v2901
        %v3002 = vunpack.c.h.b16 %v2901
        %v3003 = vunpack.c.l.b16 %v2902
        %v3004 = vunpack.c.h.b16 %v2902
        %v3005 = vunpack.c.l.b16 %v2903
        %v3006 = vunpack.c.h.b16 %v2903
        %v3007 = vpack.c.b16 %v2945, %v2943
        %v3008 = vpack.c.b16 %v2946, %v2944
        %v3009 = vpack.c.b16 %v2949, %v2947
        %v3010 = vpack.c.b16 %v2950, %v2948
        %v3011 = vpack.c.b16 %v2953, %v2951
        %v3012 = vpack.c.b16 %v2954, %v2952
        %v3013 = vpack.c.b16 %v2957, %v2955
        %v3014 = vpack.c.b16 %v2958, %v2956
        %v3015 = vpack.c.b16 %v2961, %v2959
        %v3016 = vpack.c.b16 %v2962, %v2960
        %v3017 = vpack.c.b16 %v2965, %v2963
        %v3018 = vpack.c.b16 %v2966, %v2964
        %v3019 = vpack.c.b16 %v2969, %v2967
        %v3020 = vpack.c.b16 %v2970, %v2968
        %v3021 = vpack.c.b16 %v2973, %v2971
        %v3022 = vpack.c.b16 %v2974, %v2972
        %v3023 = vpack.c.b16 %v2977, %v2975
        %v3024 = vpack.c.b16 %v2978, %v2976
        %v3025 = vpack.c.b16 %v2981, %v2979
        %v3026 = vpack.c.b16 %v2982, %v2980
        %v3027 = vpack.c.b16 %v2985, %v2983
        %v3028 = vpack.c.b16 %v2986, %v2984
        %v3029 = vpack.c.b16 %v2989, %v2987
        %v3030 = vpack.c.b16 %v2990, %v2988
        %v3031 = vpack.c.b16 %v2993, %v2991
        %v3032 = vpack.c.b16 %v2994, %v2992
        %v3033 = vpack.c.b16 %v2997, %v2995
        %v3034 = vpack.c.b16 %v2998, %v2996
        %v3035 = vpack.c.b16 %v3001, %v2999
        %v3036 = vpack.c.b16 %v3002, %v3000
        %v3037 = vpack.c.b16 %v3005, %v3003
        %v3038 = vpack.c.b16 %v3006, %v3004
        %3071 = vmatprep.subr.bf16.mxu0 %v3008
        %3072 = vmatpush1.bf16.msra.mxu0 %v3007
        %3073 = vmatprep.subr.bf16.mxu0 %v3010
        %3074 = vmatpush1.bf16.msra.mxu0 %v3009
        %3075 = vmatprep.subr.bf16.mxu0 %v3012
        %3076 = vmatpush1.bf16.msra.mxu0 %v3011
        %3077 = vmatprep.subr.bf16.mxu0 %v3014
        %3078 = vmatpush1.bf16.msra.mxu0 %v3013
        %3079 = vmatprep.subr.bf16.mxu0 %v3016
        %3080 = vmatpush1.bf16.msra.mxu0 %v3015
        %3081 = vmatprep.subr.bf16.mxu0 %v3018
        %3082 = vmatpush1.bf16.msra.mxu0 %v3017
        %3083 = vmatprep.subr.bf16.mxu0 %v3020
        %3084 = vmatpush1.bf16.msra.mxu0 %v3019
        %3085 = vmatprep.subr.bf16.mxu0 %v3022
        %3086 = vmatpush1.bf16.msra.mxu0 %v3021
        %3087 = vmatprep.subr.bf16.mxu0 %v3024
        %3088 = vmatpush1.bf16.msra.mxu0 %v3023
        %3089 = vmatprep.subr.bf16.mxu0 %v3026
        %3090 = vmatpush1.bf16.msra.mxu0 %v3025
        %3091 = vmatprep.subr.bf16.mxu0 %v3028
        %3092 = vmatpush1.bf16.msra.mxu0 %v3027
        %3093 = vmatprep.subr.bf16.mxu0 %v3030
        %3094 = vmatpush1.bf16.msra.mxu0 %v3029
        %3095 = vmatprep.subr.bf16.mxu0 %v3032
        %3096 = vmatpush1.bf16.msra.mxu0 %v3031
        %3097 = vmatprep.subr.bf16.mxu0 %v3034
        %3098 = vmatpush1.bf16.msra.mxu0 %v3033
        %3099 = vmatprep.subr.bf16.mxu0 %v3036
        %3100 = vmatpush1.bf16.msra.mxu0 %v3035
        %3101 = vmatprep.subr.bf16.mxu0 %v3038
        %3102 = vmatpush1.bf16.msra.mxu0 %v3037
        %3103 = vmatprep.mubr.bf16.mxu0 %v2908
        %3104 = vmatmul.mubr.bf16.gmra.mrb[0].mxu0 %v2907
        %v3105 = vpop.f32.mrb[0].mxu0
        %v3106 = vadd.f32 0.0, %v3105
        %v3107 = vpop.f32.mrb[0].mxu0
        %v3108 = vadd.f32 0.0, %v3107
        %v3109 = vpop.f32.mrb[0].mxu0
        %v3110 = vpop.f32.mrb[0].mxu0
        %3111 = vdwg.mxu0
        %v3112 = vadd.f32 %v2868, %v3106
        %v3113 = vadd.f32 %v2869, %v3108
        %v3114 = vld [vmem:[%s1359 + $0x8] sm:$0xff]
        %v3115 = vld [vmem:[%s1359 + $0x10] sm:$0x11]
        %s3116 = scalar_lea.vmem %s1327, 1792 [#allocation2]
        %v3117 = vld [vmem:[%s3116] sm:$0xff]
        %v3118 = vld [vmem:[%s3116 + $0x8] sm:$0xff]
        %v3119 = vld [vmem:[%s3116 + $0x10] sm:$0xff]
        %v3120 = vld [vmem:[%s3116 + $0x18] sm:$0xff]
        %v3121 = vld [vmem:[%s3116 + $0x20] sm:$0xff]
        %v3122 = vld [vmem:[%s3116 + $0x28] sm:$0xff]
        %v3123 = vld [vmem:[%s3116 + $0x30] sm:$0xff]
        %v3124 = vld [vmem:[%s3116 + $0x38] sm:$0xff]
        %v3125 = vld [vmem:[%s3116 + $0x40] sm:$0xff]
        %v3126 = vld [vmem:[%s3116 + $0x48] sm:$0xff]
        %v3127 = vld [vmem:[%s3116 + $0x50] sm:$0xff]
        %v3128 = vld [vmem:[%s3116 + $0x58] sm:$0xff]
        %v3129 = vld [vmem:[%s3116 + $0x60] sm:$0xff]
        %v3130 = vld [vmem:[%s3116 + $0x68] sm:$0xff]
        %v3131 = vld [vmem:[%s3116 + $0x70] sm:$0xff]
        %v3132 = vld [vmem:[%s3116 + $0x78] sm:$0xff]
        %v3133 = vld [vmem:[%s3116 + $0x80] sm:$0xff]
        %v3134 = vld [vmem:[%s3116 + $0x88] sm:$0xff]
        %v3135 = vld [vmem:[%s3116 + $0x90] sm:$0xff]
        %v3136 = vld [vmem:[%s3116 + $0x98] sm:$0xff]
        %v3137 = vld [vmem:[%s3116 + $0xa0] sm:$0xff]
        %v3138 = vld [vmem:[%s3116 + $0xa8] sm:$0xff]
        %v3139 = vld [vmem:[%s3116 + $0xb0] sm:$0xff]
        %v3140 = vld [vmem:[%s3116 + $0xb8] sm:$0xff]
        %v3141 = vld [vmem:[%s3116 + $0xc0] sm:$0xff]
        %v3142 = vld [vmem:[%s3116 + $0xc8] sm:$0xff]
        %v3143 = vld [vmem:[%s3116 + $0xd0] sm:$0xff]
        %v3144 = vld [vmem:[%s3116 + $0xd8] sm:$0xff]
        %v3145 = vld [vmem:[%s3116 + $0xe0] sm:$0xff]
        %v3146 = vld [vmem:[%s3116 + $0xe8] sm:$0xff]
        %v3147 = vld [vmem:[%s3116 + $0xf0] sm:$0xff]
        %v3148 = vld [vmem:[%s3116 + $0xf8] sm:$0xff]
        %v3151 = vunpack.c.l.b16 %v3114
        %v3152 = vunpack.c.h.b16 %v3114
        %v3153 = vunpack.c.l.b16 %v3115
        %v3154 = vunpack.c.h.b16 %v3115
        %v3155 = vpack.c.b16 %v3153, %v3151
        %v3156 = vpack.c.b16 %v3154, %v3152
        %v3158 = vshrl.u32 %v3155, 16
        %v3160 = vshll.u32 %v3155, 16
        %v3162 = vrot.slane %v3160, 1
        %v3163 = vor.u32 %v3158, %v3162
        %v3165 = vshrl.u32 %v3156, 16
        %v3167 = vshll.u32 %v3156, 16
        %v3169 = vrot.slane %v3167, 1
        %v3170 = vor.u32 %v3165, %v3169
        %v3205 = vunpack.c.l.b16 %v3117
        %v3206 = vunpack.c.h.b16 %v3117
        %v3207 = vunpack.c.l.b16 %v3118
        %v3208 = vunpack.c.h.b16 %v3118
        %v3209 = vunpack.c.l.b16 %v3119
        %v3210 = vunpack.c.h.b16 %v3119
        %v3211 = vunpack.c.l.b16 %v3120
        %v3212 = vunpack.c.h.b16 %v3120
        %v3213 = vunpack.c.l.b16 %v3121
        %v3214 = vunpack.c.h.b16 %v3121
        %v3215 = vunpack.c.l.b16 %v3122
        %v3216 = vunpack.c.h.b16 %v3122
        %v3217 = vunpack.c.l.b16 %v3123
        %v3218 = vunpack.c.h.b16 %v3123
        %v3219 = vunpack.c.l.b16 %v3124
        %v3220 = vunpack.c.h.b16 %v3124
        %v3221 = vunpack.c.l.b16 %v3125
        %v3222 = vunpack.c.h.b16 %v3125
        %v3223 = vunpack.c.l.b16 %v3126
        %v3224 = vunpack.c.h.b16 %v3126
        %v3225 = vunpack.c.l.b16 %v3127
        %v3226 = vunpack.c.h.b16 %v3127
        %v3227 = vunpack.c.l.b16 %v3128
        %v3228 = vunpack.c.h.b16 %v3128
        %v3229 = vunpack.c.l.b16 %v3129
        %v3230 = vunpack.c.h.b16 %v3129
        %v3231 = vunpack.c.l.b16 %v3130
        %v3232 = vunpack.c.h.b16 %v3130
        %v3233 = vunpack.c.l.b16 %v3131
        %v3234 = vunpack.c.h.b16 %v3131
        %v3235 = vunpack.c.l.b16 %v3132
        %v3236 = vunpack.c.h.b16 %v3132
        %v3237 = vunpack.c.l.b16 %v3133
        %v3238 = vunpack.c.h.b16 %v3133
        %v3239 = vunpack.c.l.b16 %v3134
        %v3240 = vunpack.c.h.b16 %v3134
        %v3241 = vunpack.c.l.b16 %v3135
        %v3242 = vunpack.c.h.b16 %v3135
        %v3243 = vunpack.c.l.b16 %v3136
        %v3244 = vunpack.c.h.b16 %v3136
        %v3245 = vunpack.c.l.b16 %v3137
        %v3246 = vunpack.c.h.b16 %v3137
        %v3247 = vunpack.c.l.b16 %v3138
        %v3248 = vunpack.c.h.b16 %v3138
        %v3249 = vunpack.c.l.b16 %v3139
        %v3250 = vunpack.c.h.b16 %v3139
        %v3251 = vunpack.c.l.b16 %v3140
        %v3252 = vunpack.c.h.b16 %v3140
        %v3253 = vunpack.c.l.b16 %v3141
        %v3254 = vunpack.c.h.b16 %v3141
        %v3255 = vunpack.c.l.b16 %v3142
        %v3256 = vunpack.c.h.b16 %v3142
        %v3257 = vunpack.c.l.b16 %v3143
        %v3258 = vunpack.c.h.b16 %v3143
        %v3259 = vunpack.c.l.b16 %v3144
        %v3260 = vunpack.c.h.b16 %v3144
        %v3261 = vunpack.c.l.b16 %v3145
        %v3262 = vunpack.c.h.b16 %v3145
        %v3263 = vunpack.c.l.b16 %v3146
        %v3264 = vunpack.c.h.b16 %v3146
        %v3265 = vunpack.c.l.b16 %v3147
        %v3266 = vunpack.c.h.b16 %v3147
        %v3267 = vunpack.c.l.b16 %v3148
        %v3268 = vunpack.c.h.b16 %v3148
        %v3269 = vpack.c.b16 %v3207, %v3205
        %v3270 = vpack.c.b16 %v3208, %v3206
        %v3271 = vpack.c.b16 %v3211, %v3209
        %v3272 = vpack.c.b16 %v3212, %v3210
        %v3273 = vpack.c.b16 %v3215, %v3213
        %v3274 = vpack.c.b16 %v3216, %v3214
        %v3275 = vpack.c.b16 %v3219, %v3217
        %v3276 = vpack.c.b16 %v3220, %v3218
        %v3277 = vpack.c.b16 %v3223, %v3221
        %v3278 = vpack.c.b16 %v3224, %v3222
        %v3279 = vpack.c.b16 %v3227, %v3225
        %v3280 = vpack.c.b16 %v3228, %v3226
        %v3281 = vpack.c.b16 %v3231, %v3229
        %v3282 = vpack.c.b16 %v3232, %v3230
        %v3283 = vpack.c.b16 %v3235, %v3233
        %v3284 = vpack.c.b16 %v3236, %v3234
        %v3285 = vpack.c.b16 %v3239, %v3237
        %v3286 = vpack.c.b16 %v3240, %v3238
        %v3287 = vpack.c.b16 %v3243, %v3241
        %v3288 = vpack.c.b16 %v3244, %v3242
        %v3289 = vpack.c.b16 %v3247, %v3245
        %v3290 = vpack.c.b16 %v3248, %v3246
        %v3291 = vpack.c.b16 %v3251, %v3249
        %v3292 = vpack.c.b16 %v3252, %v3250
        %v3293 = vpack.c.b16 %v3255, %v3253
        %v3294 = vpack.c.b16 %v3256, %v3254
        %v3295 = vpack.c.b16 %v3259, %v3257
        %v3296 = vpack.c.b16 %v3260, %v3258
        %v3297 = vpack.c.b16 %v3263, %v3261
        %v3298 = vpack.c.b16 %v3264, %v3262
        %v3299 = vpack.c.b16 %v3267, %v3265
        %v3300 = vpack.c.b16 %v3268, %v3266
        %3333 = vmatprep.subr.bf16.mxu0 %v3270
        %3334 = vmatpush1.bf16.msra.mxu0 %v3269
        %3335 = vmatprep.subr.bf16.mxu0 %v3272
        %3336 = vmatpush1.bf16.msra.mxu0 %v3271
        %3337 = vmatprep.subr.bf16.mxu0 %v3274
        %3338 = vmatpush1.bf16.msra.mxu0 %v3273
        %3339 = vmatprep.subr.bf16.mxu0 %v3276
        %3340 = vmatpush1.bf16.msra.mxu0 %v3275
        %3341 = vmatprep.subr.bf16.mxu0 %v3278
        %3342 = vmatpush1.bf16.msra.mxu0 %v3277
        %3343 = vmatprep.subr.bf16.mxu0 %v3280
        %3344 = vmatpush1.bf16.msra.mxu0 %v3279
        %3345 = vmatprep.subr.bf16.mxu0 %v3282
        %3346 = vmatpush1.bf16.msra.mxu0 %v3281
        %3347 = vmatprep.subr.bf16.mxu0 %v3284
        %3348 = vmatpush1.bf16.msra.mxu0 %v3283
        %3349 = vmatprep.subr.bf16.mxu0 %v3286
        %3350 = vmatpush1.bf16.msra.mxu0 %v3285
        %3351 = vmatprep.subr.bf16.mxu0 %v3288
        %3352 = vmatpush1.bf16.msra.mxu0 %v3287
        %3353 = vmatprep.subr.bf16.mxu0 %v3290
        %3354 = vmatpush1.bf16.msra.mxu0 %v3289
        %3355 = vmatprep.subr.bf16.mxu0 %v3292
        %3356 = vmatpush1.bf16.msra.mxu0 %v3291
        %3357 = vmatprep.subr.bf16.mxu0 %v3294
        %3358 = vmatpush1.bf16.msra.mxu0 %v3293
        %3359 = vmatprep.subr.bf16.mxu0 %v3296
        %3360 = vmatpush1.bf16.msra.mxu0 %v3295
        %3361 = vmatprep.subr.bf16.mxu0 %v3298
        %3362 = vmatpush1.bf16.msra.mxu0 %v3297
        %3363 = vmatprep.subr.bf16.mxu0 %v3300
        %3364 = vmatpush1.bf16.msra.mxu0 %v3299
        %3365 = vmatprep.mubr.bf16.mxu0 %v3170
        %3366 = vmatmul.mubr.bf16.gmra.mrb[0].mxu0 %v3163
        %v3367 = vpop.f32.mrb[0].mxu0
        %v3368 = vadd.f32 0.0, %v3367
        %v3369 = vpop.f32.mrb[0].mxu0
        %v3370 = vadd.f32 0.0, %v3369
        %v3371 = vpop.f32.mrb[0].mxu0
        %v3372 = vpop.f32.mrb[0].mxu0
        %3373 = vdwg.mxu0
        %v3374 = vadd.f32 %v3112, %v3368
        %v3375 = vadd.f32 %v3113, %v3370
        %v3376 = vld [vmem:[%s1359 + $0x8] sm:$0xee]
        %s3377 = scalar_lea.vmem %s1327, 2048 [#allocation2]
        %v3378 = vld [vmem:[%s3377] sm:$0xff]
        %v3379 = vld [vmem:[%s3377 + $0x8] sm:$0xff]
        %v3380 = vld [vmem:[%s3377 + $0x10] sm:$0xff]
        %v3381 = vld [vmem:[%s3377 + $0x18] sm:$0xff]
        %v3382 = vld [vmem:[%s3377 + $0x20] sm:$0xff]
        %v3383 = vld [vmem:[%s3377 + $0x28] sm:$0xff]
        %v3384 = vld [vmem:[%s3377 + $0x30] sm:$0xff]
        %v3385 = vld [vmem:[%s3377 + $0x38] sm:$0xff]
        %v3386 = vld [vmem:[%s3377 + $0x40] sm:$0xff]
        %v3387 = vld [vmem:[%s3377 + $0x48] sm:$0xff]
        %v3388 = vld [vmem:[%s3377 + $0x50] sm:$0xff]
        %v3389 = vld [vmem:[%s3377 + $0x58] sm:$0xff]
        %v3390 = vld [vmem:[%s3377 + $0x60] sm:$0xff]
        %v3391 = vld [vmem:[%s3377 + $0x68] sm:$0xff]
        %v3392 = vld [vmem:[%s3377 + $0x70] sm:$0xff]
        %v3393 = vld [vmem:[%s3377 + $0x78] sm:$0xff]
        %v3394 = vld [vmem:[%s3377 + $0x80] sm:$0xff]
        %v3395 = vld [vmem:[%s3377 + $0x88] sm:$0xff]
        %v3396 = vld [vmem:[%s3377 + $0x90] sm:$0xff]
        %v3397 = vld [vmem:[%s3377 + $0x98] sm:$0xff]
        %v3398 = vld [vmem:[%s3377 + $0xa0] sm:$0xff]
        %v3399 = vld [vmem:[%s3377 + $0xa8] sm:$0xff]
        %v3400 = vld [vmem:[%s3377 + $0xb0] sm:$0xff]
        %v3401 = vld [vmem:[%s3377 + $0xb8] sm:$0xff]
        %v3402 = vld [vmem:[%s3377 + $0xc0] sm:$0xff]
        %v3403 = vld [vmem:[%s3377 + $0xc8] sm:$0xff]
        %v3404 = vld [vmem:[%s3377 + $0xd0] sm:$0xff]
        %v3405 = vld [vmem:[%s3377 + $0xd8] sm:$0xff]
        %v3406 = vld [vmem:[%s3377 + $0xe0] sm:$0xff]
        %v3407 = vld [vmem:[%s3377 + $0xe8] sm:$0xff]
        %v3408 = vld [vmem:[%s3377 + $0xf0] sm:$0xff]
        %v3409 = vld [vmem:[%s3377 + $0xf8] sm:$0xff]
        %v3411 = vunpack.c.l.b16 %v3376
        %v3412 = vunpack.c.h.b16 %v3376
        %v3413 = vpack.c.b16 %v3153, %v3411
        %v3414 = vpack.c.b16 %v3154, %v3412
        %v3415 = vrot.slane %v3413, 1
        %v3416 = vrot.slane %v3414, 1
        %v3451 = vunpack.c.l.b16 %v3378
        %v3452 = vunpack.c.h.b16 %v3378
        %v3453 = vunpack.c.l.b16 %v3379
        %v3454 = vunpack.c.h.b16 %v3379
        %v3455 = vunpack.c.l.b16 %v3380
        %v3456 = vunpack.c.h.b16 %v3380
        %v3457 = vunpack.c.l.b16 %v3381
        %v3458 = vunpack.c.h.b16 %v3381
        %v3459 = vunpack.c.l.b16 %v3382
        %v3460 = vunpack.c.h.b16 %v3382
        %v3461 = vunpack.c.l.b16 %v3383
        %v3462 = vunpack.c.h.b16 %v3383
        %v3463 = vunpack.c.l.b16 %v3384
        %v3464 = vunpack.c.h.b16 %v3384
        %v3465 = vunpack.c.l.b16 %v3385
        %v3466 = vunpack.c.h.b16 %v3385
        %v3467 = vunpack.c.l.b16 %v3386
        %v3468 = vunpack.c.h.b16 %v3386
        %v3469 = vunpack.c.l.b16 %v3387
        %v3470 = vunpack.c.h.b16 %v3387
        %v3471 = vunpack.c.l.b16 %v3388
        %v3472 = vunpack.c.h.b16 %v3388
        %v3473 = vunpack.c.l.b16 %v3389
        %v3474 = vunpack.c.h.b16 %v3389
        %v3475 = vunpack.c.l.b16 %v3390
        %v3476 = vunpack.c.h.b16 %v3390
        %v3477 = vunpack.c.l.b16 %v3391
        %v3478 = vunpack.c.h.b16 %v3391
        %v3479 = vunpack.c.l.b16 %v3392
        %v3480 = vunpack.c.h.b16 %v3392
        %v3481 = vunpack.c.l.b16 %v3393
        %v3482 = vunpack.c.h.b16 %v3393
        %v3483 = vunpack.c.l.b16 %v3394
        %v3484 = vunpack.c.h.b16 %v3394
        %v3485 = vunpack.c.l.b16 %v3395
        %v3486 = vunpack.c.h.b16 %v3395
        %v3487 = vunpack.c.l.b16 %v3396
        %v3488 = vunpack.c.h.b16 %v3396
        %v3489 = vunpack.c.l.b16 %v3397
        %v3490 = vunpack.c.h.b16 %v3397
        %v3491 = vunpack.c.l.b16 %v3398
        %v3492 = vunpack.c.h.b16 %v3398
        %v3493 = vunpack.c.l.b16 %v3399
        %v3494 = vunpack.c.h.b16 %v3399
        %v3495 = vunpack.c.l.b16 %v3400
        %v3496 = vunpack.c.h.b16 %v3400
        %v3497 = vunpack.c.l.b16 %v3401
        %v3498 = vunpack.c.h.b16 %v3401
        %v3499 = vunpack.c.l.b16 %v3402
        %v3500 = vunpack.c.h.b16 %v3402
        %v3501 = vunpack.c.l.b16 %v3403
        %v3502 = vunpack.c.h.b16 %v3403
        %v3503 = vunpack.c.l.b16 %v3404
        %v3504 = vunpack.c.h.b16 %v3404
        %v3505 = vunpack.c.l.b16 %v3405
        %v3506 = vunpack.c.h.b16 %v3405
        %v3507 = vunpack.c.l.b16 %v3406
        %v3508 = vunpack.c.h.b16 %v3406
        %v3509 = vunpack.c.l.b16 %v3407
        %v3510 = vunpack.c.h.b16 %v3407
        %v3511 = vunpack.c.l.b16 %v3408
        %v3512 = vunpack.c.h.b16 %v3408
        %v3513 = vunpack.c.l.b16 %v3409
        %v3514 = vunpack.c.h.b16 %v3409
        %v3515 = vpack.c.b16 %v3453, %v3451
        %v3516 = vpack.c.b16 %v3454, %v3452
        %v3517 = vpack.c.b16 %v3457, %v3455
        %v3518 = vpack.c.b16 %v3458, %v3456
        %v3519 = vpack.c.b16 %v3461, %v3459
        %v3520 = vpack.c.b16 %v3462, %v3460
        %v3521 = vpack.c.b16 %v3465, %v3463
        %v3522 = vpack.c.b16 %v3466, %v3464
        %v3523 = vpack.c.b16 %v3469, %v3467
        %v3524 = vpack.c.b16 %v3470, %v3468
        %v3525 = vpack.c.b16 %v3473, %v3471
        %v3526 = vpack.c.b16 %v3474, %v3472
        %v3527 = vpack.c.b16 %v3477, %v3475
        %v3528 = vpack.c.b16 %v3478, %v3476
        %v3529 = vpack.c.b16 %v3481, %v3479
        %v3530 = vpack.c.b16 %v3482, %v3480
        %v3531 = vpack.c.b16 %v3485, %v3483
        %v3532 = vpack.c.b16 %v3486, %v3484
        %v3533 = vpack.c.b16 %v3489, %v3487
        %v3534 = vpack.c.b16 %v3490, %v3488
        %v3535 = vpack.c.b16 %v3493, %v3491
        %v3536 = vpack.c.b16 %v3494, %v3492
        %v3537 = vpack.c.b16 %v3497, %v3495
        %v3538 = vpack.c.b16 %v3498, %v3496
        %v3539 = vpack.c.b16 %v3501, %v3499
        %v3540 = vpack.c.b16 %v3502, %v3500
        %v3541 = vpack.c.b16 %v3505, %v3503
        %v3542 = vpack.c.b16 %v3506, %v3504
        %v3543 = vpack.c.b16 %v3509, %v3507
        %v3544 = vpack.c.b16 %v3510, %v3508
        %v3545 = vpack.c.b16 %v3513, %v3511
        %v3546 = vpack.c.b16 %v3514, %v3512
        %3579 = vmatprep.subr.bf16.mxu0 %v3516
        %3580 = vmatpush1.bf16.msra.mxu0 %v3515
        %3581 = vmatprep.subr.bf16.mxu0 %v3518
        %3582 = vmatpush1.bf16.msra.mxu0 %v3517
        %3583 = vmatprep.subr.bf16.mxu0 %v3520
        %3584 = vmatpush1.bf16.msra.mxu0 %v3519
        %3585 = vmatprep.subr.bf16.mxu0 %v3522
        %3586 = vmatpush1.bf16.msra.mxu0 %v3521
        %3587 = vmatprep.subr.bf16.mxu0 %v3524
        %3588 = vmatpush1.bf16.msra.mxu0 %v3523
        %3589 = vmatprep.subr.bf16.mxu0 %v3526
        %3590 = vmatpush1.bf16.msra.mxu0 %v3525
        %3591 = vmatprep.subr.bf16.mxu0 %v3528
        %3592 = vmatpush1.bf16.msra.mxu0 %v3527
        %3593 = vmatprep.subr.bf16.mxu0 %v3530
        %3594 = vmatpush1.bf16.msra.mxu0 %v3529
        %3595 = vmatprep.subr.bf16.mxu0 %v3532
        %3596 = vmatpush1.bf16.msra.mxu0 %v3531
        %3597 = vmatprep.subr.bf16.mxu0 %v3534
        %3598 = vmatpush1.bf16.msra.mxu0 %v3533
        %3599 = vmatprep.subr.bf16.mxu0 %v3536
        %3600 = vmatpush1.bf16.msra.mxu0 %v3535
        %3601 = vmatprep.subr.bf16.mxu0 %v3538
        %3602 = vmatpush1.bf16.msra.mxu0 %v3537
        %3603 = vmatprep.subr.bf16.mxu0 %v3540
        %3604 = vmatpush1.bf16.msra.mxu0 %v3539
        %3605 = vmatprep.subr.bf16.mxu0 %v3542
        %3606 = vmatpush1.bf16.msra.mxu0 %v3541
        %3607 = vmatprep.subr.bf16.mxu0 %v3544
        %3608 = vmatpush1.bf16.msra.mxu0 %v3543
        %3609 = vmatprep.subr.bf16.mxu0 %v3546
        %3610 = vmatpush1.bf16.msra.mxu0 %v3545
        %3611 = vmatprep.mubr.bf16.mxu0 %v3416
        %3612 = vmatmul.mubr.bf16.gmra.mrb[0].mxu0 %v3415
        %v3613 = vpop.f32.mrb[0].mxu0
        %v3614 = vadd.f32 0.0, %v3613
        %v3615 = vpop.f32.mrb[0].mxu0
        %v3616 = vadd.f32 0.0, %v3615
        %v3617 = vpop.f32.mrb[0].mxu0
        %v3618 = vpop.f32.mrb[0].mxu0
        %3619 = vdwg.mxu0
        %v3620 = vadd.f32 %v3374, %v3614
        %v3621 = vadd.f32 %v3375, %v3616
        %v3622 = vpack.c.bf16 %v3620, %v3620
        %v3623 = vpack.c.bf16 %v3621, %v3621
        %v3626 = vunpack.c.l.b16 %v3622
        %v3627 = vunpack.c.l.b16 %v3623
        %v3628 = vpack.c.b16 %v3627, %v3626
        %3630 = vst [vmem:[%s1369] sm:$0xff] %v3628
        %s3631 = smul.u32 2, %s17
        %p3632 = scmp.lt.s32.totalorder %s18, 1
        %s3633 = scalar_select %p3632, %s18, 1
        %p3634 = scmp.lt.s32.totalorder %s3631, 3
        %s3635 = scalar_select %p3634, %s3631, 3
        %s3636 = smul.addr %s3633, 4
        %s3637 = sadd.s32 %s3635, %s3636
        %s3638 = smul.addr %s3637, 4
        %s3639 = scalar_lea.vmem %s2, %s3638
        // Predicated region
        $region67: #{discriminator_forward.13} parent=61 // pred_check
          %p3640 = pneg %p97
        $region68: #{discriminator_forward.13} parent=61 // pred_check_branch
          %3642 = sbr.rel (%p3640) target = $region70
        $region69: #{discriminator_forward.13} parent=61 // pred_region
          %s3643 = smul.u32 2, %s17
        $region70: #{discriminator_forward.13} parent=61 // pred_fallthru
          _
      $region62: #{discriminator_forward.13} parent=5 // pred_fallthru
        _
      %p3644 = scmp.le.s32.totalorder 2, %s8
      // Predicated region
      $region71: #{discriminator_forward.13} parent=5 // pred_check
        %p3645 = pneg %p3644
      $region72: #{discriminator_forward.13} parent=5 // pred_check_branch
        %3647 = sbr.rel (%p3645) target = $region74
      $region73: #{discriminator_forward.13} parent=5 // pred_region
        %s3648 = ssub.s32 %s8, 2
        // Predicated region
        $region75: #{discriminator_forward.13} parent=73 // pred_check
          %p3649 = pneg %p103
        $region76: #{discriminator_forward.13} parent=73 // pred_check_branch
          %3651 = sbr.rel (%p3649) target = $region78
        $region77: #{discriminator_forward.13} parent=73 // pred_region
          %s3652 = smul.u32 2, %s19
          %p3653 = scmp.lt.s32.totalorder %s20, 1
          %s3654 = scalar_select %p3653, %s20, 1
          %p3655 = scmp.lt.s32.totalorder %s3652, 3
          %s3656 = scalar_select %p3655, %s3652, 3
          %s3657 = smul.addr %s3654, 4
          %s3658 = sadd.s32 %s3656, %s3657
          %s3659 = smul.addr %s3658, 4
          %s3660 = scalar_lea.vmem %s2, %s3659
        $region78: #{discriminator_forward.13} parent=73 // pred_fallthru
          _
      $region74: #{discriminator_forward.13} parent=5 // pred_fallthru
        _
    $region6: #{discriminator_forward.13} parent=1 // loop_footer
      %s12 = sadd.s32 1, %s8
    $region7: #{discriminator_forward.13} parent=1 // loop_footer_branch
      %7 = sbr.rel target = $region3
    $region8: #{discriminator_forward.13} parent=1 // loop_exit
      _

// kernel: discriminator_forward.15
$region0: #{discriminator_forward.15}
  #allocation0 [shape = 'u32[]', space=smem, size = 0x4, offset = 0x4, fixed_abs, tag = 'smem constant byte address 0x4 - core index']
  #allocation1 [shape = 'u32[144,128]{1,0:T(1,128)}', space=vmem, size = 0x12000, scoped, tag = 'internal scratch']
  #allocation2 [shape = 'f32[1,1]{1,0:T(1,128)S(1)}', space=vmem, size = 0x200, scoped, tag = 'scoped memory for discriminator_forward.15']
  %s0 = inlined_call_operand.vmem [shape: bf16[2,20,512], index: 0, kind: input, shape index: {}]
  %s1 = inlined_call_operand.vmem [shape: f32[9,1,512], index: 1, kind: input, shape index: {}]
  %s2 = inlined_call_operand.<no memory space> [shape: f32[1,1], index: 2, kind: input, shape index: {}]
  %s3 = inlined_call_operand.vmem [shape: f32[2,8,1], index: 3, kind: output, shape index: {}]
  %s4 = sld [smem:[#allocation0]]
  $region45: #{discriminator_forward.15} parent=0
    _
  %s6 = ssub.s32 1, %s4
  %s7 = scalar_select 0, %s6, %s4
  %v8 = vstv %s2
  %9 = vst [vmem:[#allocation2] sm:$0x1] %v8
  loop: start=0, step=1, limit=4
  $region2: #{discriminator_forward.15} parent=0 // loop_pre_header
    _
  $region3: #{discriminator_forward.15} parent=0 // loop_header
    %s11 = sphi 0, %s15
    %p12 = scmp.ge.s32.totalorder %s11, 4
    %s18 = sphi 0, %s30
    %s19 = sphi 0, %s26
    %s20 = sphi 0, %s18
    %s21 = sphi 0, %s19
    %s22 = sphi 0, %s20
    %s23 = sphi 0, %s21
    %s33 = sphi 0, %s35
    %s36 = sphi 0, %s33
    %s37 = sphi 0, %s36
    %s53 = sphi 0, %s37
    %s57 = sphi 0, %s57
    %s59 = sphi 0, %s57
    %s60 = sphi 0, %s59
    %s74 = sphi 0, %s60
    %s80 = sphi 0, %s82
    %s83 = sphi 0, %s80
    %s84 = sphi 0, %s83
    %s100 = sphi 0, %s84
    %s108 = sphi 0, %s110
    %s111 = sphi 0, %s108
    %s112 = sphi 0, %s111
    %s128 = sphi 0, %s112
  $region4: #{discriminator_forward.15} parent=0 // loop_header_branch
    %14 = sbr.rel (%p12) target = $region8
  $region5: #{discriminator_forward.15} parent=0 // loop_body
    %s16 = ssub.s32 %s11, 1
    %s17 = ssub.s32 %s11, 2
    %s24 = sadd.s32 1, %s19
    %p25 = scmp.ge.s32.totalorder %s24, 2
    %s26 = scalar_select %p25, 0, %s24
    %s27 = sadd.s32 1, %s18
    %s28 = scalar_select %p25, %s27, %s18
    %p29 = scmp.ge.s32.totalorder %s28, 1
    %s30 = scalar_select %p29, 0, %s28
    %s31 = ssub.s32 %s19, %s26
    %p32 = scmp.eq.s32.totalorder %s31, 0
    %s34 = sadd.s32 %s33, 1
    %s35 = scalar_select %p32, %s33, %s34
    %p38 = pneg %p32
    %p39 = scmp.eq.s32.totalorder %s11, 1
    %p40 = por %p38, %p39
    %p41 = scmp.ne.s32.totalorder %s33, %s36
    %p42 = scmp.eq.s32.totalorder %s11, 0
    %p43 = por %p41, %p42
    %p44 = scmp.ne.s32.totalorder %s33, %s36
    %p45 = scmp.eq.s32.totalorder %s16, 1
    %p46 = por %p44, %p45
    %p47 = scmp.ne.s32.totalorder %s36, %s37
    %p48 = scmp.eq.s32.totalorder %s16, 0
    %p49 = por %p47, %p48
    %p50 = scmp.ne.s32.totalorder %s36, %s37
    %p51 = scmp.eq.s32.totalorder %s17, 1
    %p52 = por %p50, %p51
    %p54 = scmp.ne.s32.totalorder %s37, %s53
    %p55 = scmp.eq.s32.totalorder %s17, 0
    %p56 = por %p54, %p55
    %s58 = sadd.s32 %s57, 1
    %p61 = scmp.eq.s32.totalorder %s11, 1
    %p62 = scmp.ne.s32.totalorder %s57, %s59
    %p63 = scmp.eq.s32.totalorder %s11, 0
    %p64 = por %p62, %p63
    %p65 = scmp.ne.s32.totalorder %s57, %s59
    %p66 = scmp.eq.s32.totalorder %s16, 1
    %p67 = por %p65, %p66
    %p68 = scmp.ne.s32.totalorder %s59, %s60
    %p69 = scmp.eq.s32.totalorder %s16, 0
    %p70 = por %p68, %p69
    %p71 = scmp.ne.s32.totalorder %s59, %s60
    %p72 = scmp.eq.s32.totalorder %s17, 1
    %p73 = por %p71, %p72
    %p75 = scmp.ne.s32.totalorder %s60, %s74
    %p76 = scmp.eq.s32.totalorder %s17, 0
    %p77 = por %p75, %p76
    %s78 = ssub.s32 %s18, %s30
    %p79 = scmp.eq.s32.totalorder %s78, 0
    %s81 = sadd.s32 %s80, 1
    %s82 = scalar_select %p79, %s80, %s81
    %p85 = pneg %p79
    %p86 = scmp.eq.s32.totalorder %s11, 1
    %p87 = por %p85, %p86
    %p88 = scmp.ne.s32.totalorder %s80, %s83
    %p89 = scmp.eq.s32.totalorder %s11, 0
    %p90 = por %p88, %p89
    %p91 = scmp.ne.s32.totalorder %s80, %s83
    %p92 = scmp.eq.s32.totalorder %s16, 1
    %p93 = por %p91, %p92
    %p94 = scmp.ne.s32.totalorder %s83, %s84
    %p95 = scmp.eq.s32.totalorder %s16, 0
    %p96 = por %p94, %p95
    %p97 = scmp.ne.s32.totalorder %s83, %s84
    %p98 = scmp.eq.s32.totalorder %s17, 1
    %p99 = por %p97, %p98
    %p101 = scmp.ne.s32.totalorder %s84, %s100
    %p102 = scmp.eq.s32.totalorder %s17, 0
    %p103 = por %p101, %p102
    %s104 = ssub.s32 %s19, %s26
    %s105 = ssub.s32 %s18, %s30
    %s106 = sor.u32 %s104, %s105
    %p107 = scmp.eq.s32.totalorder %s106, 0
    %s109 = sadd.s32 %s108, 1
    %s110 = scalar_select %p107, %s108, %s109
    %p113 = pneg %p107
    %p114 = scmp.eq.s32.totalorder %s11, 1
    %p115 = por %p113, %p114
    %p116 = scmp.ne.s32.totalorder %s108, %s111
    %p117 = scmp.eq.s32.totalorder %s11, 0
    %p118 = por %p116, %p117
    %p119 = scmp.ne.s32.totalorder %s108, %s111
    %p120 = scmp.eq.s32.totalorder %s16, 1
    %p121 = por %p119, %p120
    %p122 = scmp.ne.s32.totalorder %s111, %s112
    %p123 = scmp.eq.s32.totalorder %s16, 0
    %p124 = por %p122, %p123
    %p125 = scmp.ne.s32.totalorder %s111, %s112
    %p126 = scmp.eq.s32.totalorder %s17, 1
    %p127 = por %p125, %p126
    %p129 = scmp.ne.s32.totalorder %s112, %s128
    %p130 = scmp.eq.s32.totalorder %s17, 0
    %p131 = por %p129, %p130
    %p132 = scmp.le.s32.totalorder 1, %s11
    %p133 = scmp.lt.s32.totalorder %s11, 3
    %p134 = pnand %p132, %p133
    %p135 = pneg %p134
    // Predicated region
    $region9: #{discriminator_forward.15} parent=5 // pred_check
      _
    $region10: #{discriminator_forward.15} parent=5 // pred_check_branch
      %137 = sbr.rel (%p134) target = $region12
    $region11: #{discriminator_forward.15} parent=5 // pred_region
      %s138 = ssub.s32 %s11, 1
      // Predicated region
      $region13: #{discriminator_forward.15} parent=11 // pred_check
        %p139 = pneg %p70
      $region14: #{discriminator_forward.15} parent=11 // pred_check_branch
        %141 = sbr.rel (%p139) target = $region16
      $region15: #{discriminator_forward.15} parent=11 // pred_region
        _
      $region16: #{discriminator_forward.15} parent=11 // pred_fallthru
        _
      // Predicated region
      $region17: #{discriminator_forward.15} parent=11 // pred_check
        %p142 = pneg %p96
      $region18: #{discriminator_forward.15} parent=11 // pred_check_branch
        %144 = sbr.rel (%p142) target = $region20
      $region19: #{discriminator_forward.15} parent=11 // pred_region
        %p145 = scmp.lt.s32.totalorder %s20, 0
        %s146 = scalar_select %p145, %s20, 0
        %s147 = scalar_lea.vmem [#allocation2], %s146
      $region20: #{discriminator_forward.15} parent=11 // pred_fallthru
        _
    $region12: #{discriminator_forward.15} parent=5 // pred_fallthru
      _
    %p148 = scmp.lt.s32.totalorder %s11, 2
    // Predicated region
    $region21: #{discriminator_forward.15} parent=5 // pred_check
      %p149 = pneg %p148
    $region22: #{discriminator_forward.15} parent=5 // pred_check_branch
      %151 = sbr.rel (%p149) target = $region24
    $region23: #{discriminator_forward.15} parent=5 // pred_region
      // Predicated region
      $region25: #{discriminator_forward.15} parent=23 // pred_check
        %p152 = pneg %p43
      $region26: #{discriminator_forward.15} parent=23 // pred_check_branch
        %154 = sbr.rel (%p152) target = $region28
      $region27: #{discriminator_forward.15} parent=23 // pred_region
        %p155 = scmp.lt.s32.totalorder %s19, 1
        %s156 = scalar_select %p155, %s19, 1
        %s157 = smul.addr %s156, 12
        %s158 = smul.addr %s157, 4
        %s159 = scalar_lea.vmem %s0, %s158
      $region28: #{discriminator_forward.15} parent=23 // pred_fallthru
        _
    $region24: #{discriminator_forward.15} parent=5 // pred_fallthru
      _
    %p160 = scmp.le.s32.totalorder 1, %s11
    %p161 = scmp.lt.s32.totalorder %s11, 3
    %p162 = pnand %p160, %p161
    %p163 = pneg %p162
    // Predicated region
    $region29: #{discriminator_forward.15} parent=5 // pred_check
      _
    $region30: #{discriminator_forward.15} parent=5 // pred_check_branch
      %165 = sbr.rel (%p162) target = $region32
    $region31: #{discriminator_forward.15} parent=5 // pred_region
      %s166 = ssub.s32 %s11, 1
      %p167 = scmp.lt.s32.totalorder %s21, 1
      %s168 = scalar_select %p167, %s21, 1
      %s169 = smul.addr %s168, 12
      %s170 = smul.addr %s169, 4
      %s171 = scalar_lea.vmem %s0, %s170
      %p172 = pneg %p49
      %p173 = pneg %p46
      %p174 = pneg %p70
      %p175 = pneg %p67
      %p176 = scmp.lt.s32.totalorder %s20, 0
      %s177 = scalar_select %p176, %s20, 0
      %s178 = scalar_lea.vmem [#allocation2], %s177
      %p179 = pneg %p96
      %p180 = pneg %p93
      %p181 = pneg %p124
      %p182 = pneg %p121
      %p183 = scmp.lt.s32.totalorder %s21, 1
      %s184 = scalar_select %p183, %s21, 1
      %p185 = scmp.lt.s32.totalorder %s20, 0
      %s186 = scalar_select %p185, %s20, 0
      %s187 = sadd.s32 %s186, %s184
      %s188 = smul.addr %s187, 8
      %s189 = scalar_lea.vmem %s3, %s188
      %p190 = scmp.lt.s32.totalorder %s21, 1
      %s191 = scalar_select %p190, %s21, 1
      %s192 = smul.addr %s191, 12
      %s193 = smul.addr %s192, 4
      %s194 = scalar_lea.vmem %s0, %s193
      %p195 = scmp.lt.s32.totalorder %s20, 0
      %s196 = scalar_select %p195, %s20, 0
      %s197 = scalar_lea.vmem [#allocation2], %s196
      %p198 = scmp.lt.s32.totalorder %s21, 1
      %s199 = scalar_select %p198, %s21, 1
      %p200 = scmp.lt.s32.totalorder %s20, 0
      %s201 = scalar_select %p200, %s20, 0
      %s202 = sadd.s32 %s201, %s199
      %s203 = smul.addr %s202, 8
      %s204 = scalar_lea.vmem %s3, %s203
      %v205 = vld [vmem:[%s194] sm:$0xff]
      %v206 = vld [vmem:[%s194 + $0x8] sm:$0xff]
      %v207 = vld [vmem:[%s1] sm:$0xf]
      %v208 = vunpack.c.l.bf16 %v205
      %v209 = vunpack.c.h.bf16 %v205
      %v210 = vunpack.c.l.bf16 %v206
      %v211 = vunpack.c.h.bf16 %v206
      %v213 = vlaneseq
      %v214 = vshrl.u32 %v213, 7
      %v215 = vsub.s32 0, %v214
      %v216 = vrot.slane %v207, %v215
      %v217 = vlaneseq
      %v218 = vshrl.u32 %v217, 7
      %v219 = vsub.s32 1, %v218
      %v220 = vrot.slane %v207, %v219
      %v221 = vlaneseq
      %v222 = vshrl.u32 %v221, 7
      %v223 = vsub.s32 2, %v222
      %v224 = vrot.slane %v207, %v223
      %v225 = vlaneseq
      %v226 = vshrl.u32 %v225, 7
      %v227 = vsub.s32 3, %v226
      %v228 = vrot.slane %v207, %v227
      %v233 = vmul.f32 %v208, %v216
      %v234 = vmul.f32 %v209, %v220
      %v235 = vmul.f32 %v210, %v224
      %v236 = vmul.f32 %v211, %v228
      %v237 = vadd.f32 %v233, %v234
      %v238 = vadd.f32 %v237, %v235
      %v239 = vadd.f32 %v238, %v236
      %240 = vadd.xlane.f32.xlu0 %v239
      %v241 = vpop.xlane.xlu0 %240
      %v242 = vadd.f32 %v241, 0.0
      %v243 = vld [vmem:[%s194 + $0x10] sm:$0x11]
      %v244 = vld [vmem:[%s194 + $0x18] sm:$0x11]
      %s245 = scalar_lea.vmem %s1, 4
      %v246 = vld [vmem:[%s245] sm:$0xf]
      %v247 = vunpack.c.l.bf16 %v243
      %v248 = vunpack.c.h.bf16 %v243
      %v249 = vunpack.c.l.bf16 %v244
      %v250 = vunpack.c.h.bf16 %v244
      %v252 = vlaneseq
      %v253 = vshrl.u32 %v252, 7
      %v254 = vsub.s32 0, %v253
      %v255 = vrot.slane %v246, %v254
      %v256 = vlaneseq
      %v257 = vshrl.u32 %v256, 7
      %v258 = vsub.s32 1, %v257
      %v259 = vrot.slane %v246, %v258
      %v260 = vlaneseq
      %v261 = vshrl.u32 %v260, 7
      %v262 = vsub.s32 2, %v261
      %v263 = vrot.slane %v246, %v262
      %v264 = vlaneseq
      %v265 = vshrl.u32 %v264, 7
      %v266 = vsub.s32 3, %v265
      %v267 = vrot.slane %v246, %v266
      %v272 = vmul.f32 %v208, %v255
      %v273 = vmul.f32 %v209, %v259
      %v274 = vmul.f32 %v210, %v263
      %v275 = vmul.f32 %v211, %v267
      %v276 = vmul.f32 %v247, %v255
      %v277 = vmul.f32 %v248, %v259
      %v278 = vmul.f32 %v249, %v263
      %v279 = vmul.f32 %v250, %v267
      %vm280 = vcmask 1047553
      %v281 = vsel %vm280, %v272, 0.0
      %v282 = vsel %vm280, %v273, 0.0
      %v283 = vadd.f32 %v281, %v282
      %v284 = vsel %vm280, %v274, 0.0
      %v285 = vadd.f32 %v283, %v284
      %v286 = vsel %vm280, %v275, 0.0
      %v287 = vadd.f32 %v285, %v286
      %288 = vadd.xlane.f32.xlu0 %v287
      %v289 = vpop.xlane.xlu0 %288
      %vm290 = vcmask 1040384
      %v291 = vsel %vm290, %v276, 0.0
      %v292 = vsel %vm290, %v277, 0.0
      %v293 = vadd.f32 %v291, %v292
      %v294 = vsel %vm290, %v278, 0.0
      %v295 = vadd.f32 %v293, %v294
      %v296 = vsel %vm290, %v279, 0.0
      %v297 = vadd.f32 %v295, %v296
      %298 = vadd.xlane.f32.xlu0 %v297
      %v299 = vpop.xlane.xlu0 %298
      %vm302 = vcmask 1046528
      %v303 = vrot.slane %v289, 1
      %v304 = vrot.slane %v299, 1
      %v305 = vsel %vm302, %v303, %v304
      %v307 = vadd.f32 %v242, %v305
      %v308 = vld [vmem:[%s194] sm:$0xee]
      %v309 = vld [vmem:[%s194 + $0x8] sm:$0xee]
      %s310 = scalar_lea.vmem %s1, 8
      %v311 = vld [vmem:[%s310] sm:$0xf]
      %v312 = vunpack.c.l.bf16 %v308
      %v313 = vunpack.c.h.bf16 %v308
      %v314 = vunpack.c.l.bf16 %v309
      %v315 = vunpack.c.h.bf16 %v309
      %v317 = vlaneseq
      %v318 = vshrl.u32 %v317, 7
      %v319 = vsub.s32 0, %v318
      %v320 = vrot.slane %v311, %v319
      %v321 = vlaneseq
      %v322 = vshrl.u32 %v321, 7
      %v323 = vsub.s32 1, %v322
      %v324 = vrot.slane %v311, %v323
      %v325 = vlaneseq
      %v326 = vshrl.u32 %v325, 7
      %v327 = vsub.s32 2, %v326
      %v328 = vrot.slane %v311, %v327
      %v329 = vlaneseq
      %v330 = vshrl.u32 %v329, 7
      %v331 = vsub.s32 3, %v330
      %v332 = vrot.slane %v311, %v331
      %v337 = vmul.f32 %v312, %v320
      %v338 = vmul.f32 %v313, %v324
      %v339 = vmul.f32 %v314, %v328
      %v340 = vmul.f32 %v315, %v332
      %v341 = vmul.f32 %v247, %v320
      %v342 = vmul.f32 %v248, %v324
      %v343 = vmul.f32 %v249, %v328
      %v344 = vmul.f32 %v250, %v332
      %vm345 = vcmask 1047554
      %v346 = vsel %vm345, %v337, 0.0
      %v347 = vsel %vm345, %v338, 0.0
      %v348 = vadd.f32 %v346, %v347
      %v349 = vsel %vm345, %v339, 0.0
      %v350 = vadd.f32 %v348, %v349
      %v351 = vsel %vm345, %v340, 0.0
      %v352 = vadd.f32 %v350, %v351
      %353 = vadd.xlane.f32.xlu0 %v352
      %v354 = vpop.xlane.xlu0 %353
      %vm355 = vcmask 1041408
      %v356 = vsel %vm355, %v341, 0.0
      %v357 = vsel %vm355, %v342, 0.0
      %v358 = vadd.f32 %v356, %v357
      %v359 = vsel %vm355, %v343, 0.0
      %v360 = vadd.f32 %v358, %v359
      %v361 = vsel %vm355, %v344, 0.0
      %v362 = vadd.f32 %v360, %v361
      %363 = vadd.xlane.f32.xlu0 %v362
      %v364 = vpop.xlane.xlu0 %363
      %vm367 = vcmask 1045504
      %v368 = vrot.slane %v354, 2
      %v369 = vrot.slane %v364, 2
      %v370 = vsel %vm367, %v368, %v369
      %v372 = vadd.f32 %v307, %v370
      %v373 = vld [vmem:[%s194] sm:$0xcc]
      %v374 = vld [vmem:[%s194 + $0x8] sm:$0xcc]
      %v375 = vld [vmem:[%s194 + $0x10] sm:$0x33]
      %v376 = vld [vmem:[%s194 + $0x18] sm:$0x33]
      %s377 = scalar_lea.vmem %s1, 12
      %v378 = vld [vmem:[%s377] sm:$0xf]
      %v379 = vunpack.c.l.bf16 %v373
      %v380 = vunpack.c.h.bf16 %v373
      %v381 = vunpack.c.l.bf16 %v374
      %v382 = vunpack.c.h.bf16 %v374
      %v383 = vunpack.c.l.bf16 %v375
      %v384 = vunpack.c.h.bf16 %v375
      %v385 = vunpack.c.l.bf16 %v376
      %v386 = vunpack.c.h.bf16 %v376
      %v388 = vlaneseq
      %v389 = vshrl.u32 %v388, 7
      %v390 = vsub.s32 0, %v389
      %v391 = vrot.slane %v378, %v390
      %v392 = vlaneseq
      %v393 = vshrl.u32 %v392, 7
      %v394 = vsub.s32 1, %v393
      %v395 = vrot.slane %v378, %v394
      %v396 = vlaneseq
      %v397 = vshrl.u32 %v396, 7
      %v398 = vsub.s32 2, %v397
      %v399 = vrot.slane %v378, %v398
      %v400 = vlaneseq
      %v401 = vshrl.u32 %v400, 7
      %v402 = vsub.s32 3, %v401
      %v403 = vrot.slane %v378, %v402
      %v408 = vmul.f32 %v379, %v391
      %v409 = vmul.f32 %v380, %v395
      %v410 = vmul.f32 %v381, %v399
      %v411 = vmul.f32 %v382, %v403
      %v412 = vmul.f32 %v383, %v391
      %v413 = vmul.f32 %v384, %v395
      %v414 = vmul.f32 %v385, %v399
      %v415 = vmul.f32 %v386, %v403
      %vm416 = vcmask 1047556
      %v417 = vsel %vm416, %v408, 0.0
      %v418 = vsel %vm416, %v409, 0.0
      %v419 = vadd.f32 %v417, %v418
      %v420 = vsel %vm416, %v410, 0.0
      %v421 = vadd.f32 %v419, %v420
      %v422 = vsel %vm416, %v411, 0.0
      %v423 = vadd.f32 %v421, %v422
      %424 = vadd.xlane.f32.xlu0 %v423
      %v425 = vpop.xlane.xlu0 %424
      %vm426 = vcmask 1043456
      %v427 = vsel %vm426, %v412, 0.0
      %v428 = vsel %vm426, %v413, 0.0
      %v429 = vadd.f32 %v427, %v428
      %v430 = vsel %vm426, %v414, 0.0
      %v431 = vadd.f32 %v429, %v430
      %v432 = vsel %vm426, %v415, 0.0
      %v433 = vadd.f32 %v431, %v432
      %434 = vadd.xlane.f32.xlu0 %v433
      %v435 = vpop.xlane.xlu0 %434
      %v438 = vrot.slane %v425, 4
      %v439 = vrot.slane %v435, 4
      %v440 = vsel %vm426, %v438, %v439
      %v442 = vadd.f32 %v372, %v440
      %v443 = vld [vmem:[%s194 + $0x10] sm:$0x77]
      %v444 = vld [vmem:[%s194 + $0x18] sm:$0x77]
      %s445 = scalar_lea.vmem %s1, 16
      %v446 = vld [vmem:[%s445] sm:$0xf]
      %v447 = vunpack.c.l.bf16 %v443
      %v448 = vunpack.c.h.bf16 %v443
      %v449 = vunpack.c.l.bf16 %v444
      %v450 = vunpack.c.h.bf16 %v444
      %v452 = vlaneseq
      %v453 = vshrl.u32 %v452, 7
      %v454 = vsub.s32 0, %v453
      %v455 = vrot.slane %v446, %v454
      %v456 = vlaneseq
      %v457 = vshrl.u32 %v456, 7
      %v458 = vsub.s32 1, %v457
      %v459 = vrot.slane %v446, %v458
      %v460 = vlaneseq
      %v461 = vshrl.u32 %v460, 7
      %v462 = vsub.s32 2, %v461
      %v463 = vrot.slane %v446, %v462
      %v464 = vlaneseq
      %v465 = vshrl.u32 %v464, 7
      %v466 = vsub.s32 3, %v465
      %v467 = vrot.slane %v446, %v466
      %v472 = vmul.f32 %v379, %v455
      %v473 = vmul.f32 %v380, %v459
      %v474 = vmul.f32 %v381, %v463
      %v475 = vmul.f32 %v382, %v467
      %v476 = vmul.f32 %v447, %v455
      %v477 = vmul.f32 %v448, %v459
      %v478 = vmul.f32 %v449, %v463
      %v479 = vmul.f32 %v450, %v467
      %vm480 = vcmask 1047557
      %v481 = vsel %vm480, %v472, 0.0
      %v482 = vsel %vm480, %v473, 0.0
      %v483 = vadd.f32 %v481, %v482
      %v484 = vsel %vm480, %v474, 0.0
      %v485 = vadd.f32 %v483, %v484
      %v486 = vsel %vm480, %v475, 0.0
      %v487 = vadd.f32 %v485, %v486
      %488 = vadd.xlane.f32.xlu0 %v487
      %v489 = vpop.xlane.xlu0 %488
      %vm490 = vcmask 1044480
      %v491 = vsel %vm490, %v476, 0.0
      %v492 = vsel %vm490, %v477, 0.0
      %v493 = vadd.f32 %v491, %v492
      %v494 = vsel %vm490, %v478, 0.0
      %v495 = vadd.f32 %v493, %v494
      %v496 = vsel %vm490, %v479, 0.0
      %v497 = vadd.f32 %v495, %v496
      %498 = vadd.xlane.f32.xlu0 %v497
      %v499 = vpop.xlane.xlu0 %498
      %vm502 = vcmask 1042432
      %v503 = vrot.slane %v489, 5
      %v504 = vrot.slane %v499, 5
      %v505 = vsel %vm502, %v503, %v504
      %v507 = vadd.f32 %v442, %v505
      %v508 = vld [vmem:[%s194] sm:$0x88]
      %v509 = vld [vmem:[%s194 + $0x8] sm:$0x88]
      %s510 = scalar_lea.vmem %s1, 20
      %v511 = vld [vmem:[%s510] sm:$0xf]
      %v512 = vunpack.c.l.bf16 %v508
      %v513 = vunpack.c.h.bf16 %v508
      %v514 = vunpack.c.l.bf16 %v509
      %v515 = vunpack.c.h.bf16 %v509
      %v517 = vlaneseq
      %v518 = vshrl.u32 %v517, 7
      %v519 = vsub.s32 0, %v518
      %v520 = vrot.slane %v511, %v519
      %v521 = vlaneseq
      %v522 = vshrl.u32 %v521, 7
      %v523 = vsub.s32 1, %v522
      %v524 = vrot.slane %v511, %v523
      %v525 = vlaneseq
      %v526 = vshrl.u32 %v525, 7
      %v527 = vsub.s32 2, %v526
      %v528 = vrot.slane %v511, %v527
      %v529 = vlaneseq
      %v530 = vshrl.u32 %v529, 7
      %v531 = vsub.s32 3, %v530
      %v532 = vrot.slane %v511, %v531
      %v537 = vmul.f32 %v512, %v520
      %v538 = vmul.f32 %v513, %v524
      %v539 = vmul.f32 %v514, %v528
      %v540 = vmul.f32 %v515, %v532
      %v541 = vmul.f32 %v447, %v520
      %v542 = vmul.f32 %v448, %v524
      %v543 = vmul.f32 %v449, %v528
      %v544 = vmul.f32 %v450, %v532
      %vm545 = vcmask 1047558
      %v546 = vsel %vm545, %v537, 0.0
      %v547 = vsel %vm545, %v538, 0.0
      %v548 = vadd.f32 %v546, %v547
      %v549 = vsel %vm545, %v539, 0.0
      %v550 = vadd.f32 %v548, %v549
      %v551 = vsel %vm545, %v540, 0.0
      %v552 = vadd.f32 %v550, %v551
      %553 = vadd.xlane.f32.xlu0 %v552
      %v554 = vpop.xlane.xlu0 %553
      %v555 = vsel %vm367, %v541, 0.0
      %v556 = vsel %vm367, %v542, 0.0
      %v557 = vadd.f32 %v555, %v556
      %v558 = vsel %vm367, %v543, 0.0
      %v559 = vadd.f32 %v557, %v558
      %v560 = vsel %vm367, %v544, 0.0
      %v561 = vadd.f32 %v559, %v560
      %562 = vadd.xlane.f32.xlu0 %v561
      %v563 = vpop.xlane.xlu0 %562
      %v566 = vrot.slane %v554, 6
      %v567 = vrot.slane %v563, 6
      %v568 = vsel %vm355, %v566, %v567
      %v570 = vadd.f32 %v507, %v568
      %v571 = vld [vmem:[%s194 + $0x10] sm:$0xff]
      %v572 = vld [vmem:[%s194 + $0x18] sm:$0xff]
      %s573 = scalar_lea.vmem %s1, 24
      %v574 = vld [vmem:[%s573] sm:$0xf]
      %v575 = vunpack.c.l.bf16 %v571
      %v576 = vunpack.c.h.bf16 %v571
      %v577 = vunpack.c.l.bf16 %v572
      %v578 = vunpack.c.h.bf16 %v572
      %v580 = vlaneseq
      %v581 = vshrl.u32 %v580, 7
      %v582 = vsub.s32 0, %v581
      %v583 = vrot.slane %v574, %v582
      %v584 = vlaneseq
      %v585 = vshrl.u32 %v584, 7
      %v586 = vsub.s32 1, %v585
      %v587 = vrot.slane %v574, %v586
      %v588 = vlaneseq
      %v589 = vshrl.u32 %v588, 7
      %v590 = vsub.s32 2, %v589
      %v591 = vrot.slane %v574, %v590
      %v592 = vlaneseq
      %v593 = vshrl.u32 %v592, 7
      %v594 = vsub.s32 3, %v593
      %v595 = vrot.slane %v574, %v594
      %v600 = vmul.f32 %v575, %v583
      %v601 = vmul.f32 %v576, %v587
      %v602 = vmul.f32 %v577, %v591
      %v603 = vmul.f32 %v578, %v595
      %v604 = vadd.f32 %v600, %v601
      %v605 = vadd.f32 %v604, %v602
      %v606 = vadd.f32 %v605, %v603
      %607 = vadd.xlane.f32.xlu0 %v606
      %v608 = vpop.xlane.xlu0 %607
      %v609 = vadd.f32 %v570, %v608
      %v610 = vld [vmem:[%s194 + $0x20] sm:$0x11]
      %v611 = vld [vmem:[%s194 + $0x28] sm:$0x11]
      %s612 = scalar_lea.vmem %s1, 28
      %v613 = vld [vmem:[%s612] sm:$0xf]
      %v614 = vunpack.c.l.bf16 %v610
      %v615 = vunpack.c.h.bf16 %v610
      %v616 = vunpack.c.l.bf16 %v611
      %v617 = vunpack.c.h.bf16 %v611
      %v619 = vlaneseq
      %v620 = vshrl.u32 %v619, 7
      %v621 = vsub.s32 0, %v620
      %v622 = vrot.slane %v613, %v621
      %v623 = vlaneseq
      %v624 = vshrl.u32 %v623, 7
      %v625 = vsub.s32 1, %v624
      %v626 = vrot.slane %v613, %v625
      %v627 = vlaneseq
      %v628 = vshrl.u32 %v627, 7
      %v629 = vsub.s32 2, %v628
      %v630 = vrot.slane %v613, %v629
      %v631 = vlaneseq
      %v632 = vshrl.u32 %v631, 7
      %v633 = vsub.s32 3, %v632
      %v634 = vrot.slane %v613, %v633
      %v639 = vmul.f32 %v575, %v622
      %v640 = vmul.f32 %v576, %v626
      %v641 = vmul.f32 %v577, %v630
      %v642 = vmul.f32 %v578, %v634
      %v643 = vmul.f32 %v614, %v622
      %v644 = vmul.f32 %v615, %v626
      %v645 = vmul.f32 %v616, %v630
      %v646 = vmul.f32 %v617, %v634
      %v647 = vsel %vm280, %v639, 0.0
      %v648 = vsel %vm280, %v640, 0.0
      %v649 = vadd.f32 %v647, %v648
      %v650 = vsel %vm280, %v641, 0.0
      %v651 = vadd.f32 %v649, %v650
      %v652 = vsel %vm280, %v642, 0.0
      %v653 = vadd.f32 %v651, %v652
      %654 = vadd.xlane.f32.xlu0 %v653
      %v655 = vpop.xlane.xlu0 %654
      %v656 = vsel %vm290, %v643, 0.0
      %v657 = vsel %vm290, %v644, 0.0
      %v658 = vadd.f32 %v656, %v657
      %v659 = vsel %vm290, %v645, 0.0
      %v660 = vadd.f32 %v658, %v659
      %v661 = vsel %vm290, %v646, 0.0
      %v662 = vadd.f32 %v660, %v661
      %663 = vadd.xlane.f32.xlu0 %v662
      %v664 = vpop.xlane.xlu0 %663
      %v667 = vrot.slane %v655, 1
      %v668 = vrot.slane %v664, 1
      %v669 = vsel %vm302, %v667, %v668
      %v671 = vadd.f32 %v609, %v669
      %v672 = vld [vmem:[%s194 + $0x10] sm:$0xee]
      %v673 = vld [vmem:[%s194 + $0x18] sm:$0xee]
      %s674 = scalar_lea.vmem %s1, 32
      %v675 = vld [vmem:[%s674] sm:$0xf]
      %v676 = vunpack.c.l.bf16 %v672
      %v677 = vunpack.c.h.bf16 %v672
      %v678 = vunpack.c.l.bf16 %v673
      %v679 = vunpack.c.h.bf16 %v673
      %v681 = vlaneseq
      %v682 = vshrl.u32 %v681, 7
      %v683 = vsub.s32 0, %v682
      %v684 = vrot.slane %v675, %v683
      %v685 = vlaneseq
      %v686 = vshrl.u32 %v685, 7
      %v687 = vsub.s32 1, %v686
      %v688 = vrot.slane %v675, %v687
      %v689 = vlaneseq
      %v690 = vshrl.u32 %v689, 7
      %v691 = vsub.s32 2, %v690
      %v692 = vrot.slane %v675, %v691
      %v693 = vlaneseq
      %v694 = vshrl.u32 %v693, 7
      %v695 = vsub.s32 3, %v694
      %v696 = vrot.slane %v675, %v695
      %v701 = vmul.f32 %v676, %v684
      %v702 = vmul.f32 %v677, %v688
      %v703 = vmul.f32 %v678, %v692
      %v704 = vmul.f32 %v679, %v696
      %v705 = vmul.f32 %v614, %v684
      %v706 = vmul.f32 %v615, %v688
      %v707 = vmul.f32 %v616, %v692
      %v708 = vmul.f32 %v617, %v696
      %v709 = vsel %vm345, %v701, 0.0
      %v710 = vsel %vm345, %v702, 0.0
      %v711 = vadd.f32 %v709, %v710
      %v712 = vsel %vm345, %v703, 0.0
      %v713 = vadd.f32 %v711, %v712
      %v714 = vsel %vm345, %v704, 0.0
      %v715 = vadd.f32 %v713, %v714
      %716 = vadd.xlane.f32.xlu0 %v715
      %v717 = vpop.xlane.xlu0 %716
      %v718 = vsel %vm355, %v705, 0.0
      %v719 = vsel %vm355, %v706, 0.0
      %v720 = vadd.f32 %v718, %v719
      %v721 = vsel %vm355, %v707, 0.0
      %v722 = vadd.f32 %v720, %v721
      %v723 = vsel %vm355, %v708, 0.0
      %v724 = vadd.f32 %v722, %v723
      %725 = vadd.xlane.f32.xlu0 %v724
      %v726 = vpop.xlane.xlu0 %725
      %v729 = vrot.slane %v717, 2
      %v730 = vrot.slane %v726, 2
      %v731 = vsel %vm367, %v729, %v730
      %v733 = vadd.f32 %v671, %v731
      %v734 = vld [vmem:[%s197] sm:$0x1]
      %v736 = vlaneseq
      %v737 = vshrl.u32 %v736, 7
      %v738 = vsub.s32 0, %v737
      %v739 = vrot.slane %v734, %v738
      %v741 = vadd.f32 %v733, %v739
      %vm742 = vcmask 7168
      %743 = vst.msk [vmem:[%s204] sm:$0xff] %vm742, %v741
      %p744 = scmp.lt.s32.totalorder %s21, 1
      %s745 = scalar_select %p744, %s21, 1
      %p746 = scmp.lt.s32.totalorder %s20, 0
      %s747 = scalar_select %p746, %s20, 0
      %s748 = sadd.s32 %s747, %s745
      %s749 = smul.addr %s748, 8
      %s750 = scalar_lea.vmem %s3, %s749
      // Predicated region
      $region33: #{discriminator_forward.15} parent=31 // pred_check
        %p751 = pneg %p121
      $region34: #{discriminator_forward.15} parent=31 // pred_check_branch
        %753 = sbr.rel (%p751) target = $region36
      $region35: #{discriminator_forward.15} parent=31 // pred_region
        _
      $region36: #{discriminator_forward.15} parent=31 // pred_fallthru
        _
    $region32: #{discriminator_forward.15} parent=5 // pred_fallthru
      _
    %p754 = scmp.le.s32.totalorder 2, %s11
    // Predicated region
    $region37: #{discriminator_forward.15} parent=5 // pred_check
      %p755 = pneg %p754
    $region38: #{discriminator_forward.15} parent=5 // pred_check_branch
      %757 = sbr.rel (%p755) target = $region40
    $region39: #{discriminator_forward.15} parent=5 // pred_region
      %s758 = ssub.s32 %s11, 2
      // Predicated region
      $region41: #{discriminator_forward.15} parent=39 // pred_check
        %p759 = pneg %p127
      $region42: #{discriminator_forward.15} parent=39 // pred_check_branch
        %761 = sbr.rel (%p759) target = $region44
      $region43: #{discriminator_forward.15} parent=39 // pred_region
        %p762 = scmp.lt.s32.totalorder %s23, 1
        %s763 = scalar_select %p762, %s23, 1
        %p764 = scmp.lt.s32.totalorder %s22, 0
        %s765 = scalar_select %p764, %s22, 0
        %s766 = sadd.s32 %s765, %s763
        %s767 = smul.addr %s766, 8
        %s768 = scalar_lea.vmem %s3, %s767
      $region44: #{discriminator_forward.15} parent=39 // pred_fallthru
        _
    $region40: #{discriminator_forward.15} parent=5 // pred_fallthru
      _
  $region6: #{discriminator_forward.15} parent=0 // loop_footer
    %s15 = sadd.s32 1, %s11
  $region7: #{discriminator_forward.15} parent=0 // loop_footer_branch
    %10 = sbr.rel target = $region3
  $region8: #{discriminator_forward.15} parent=0 // loop_exit
    _

</llo_original>
